<compile_context>
chip_gen: v5e
topology: v5e:2x2
jax: 0.10.0
libtpu: 0.0.40
codegen_flags: <defaults>
</compile_context>

<pallas_src>
import functools

import jax
import jax.numpy as jnp
from jax.experimental import pallas as pl
from jax.experimental.pallas import tpu as pltpu


def _plain_dyn_block_kernel(x_ref, hxsq_ref, m_ref, a_ref, o_ref, *, k):
    """One row-tile of the fused dynamic EdgeConv (kNN select + max aggregate).

    x_ref:    (N, C)      f32  -- all node features (resident; centre rows sliced out)
    hxsq_ref: (1, N)      f32  -- 0.5 * ||x_j||^2 per node (precomputed in wrapper)
    m_ref:    (N, C)      bf16 -- neighbour projection  M = x @ Wn
    a_ref:    (tile_n, C) f32  -- centre projection     A = x @ (Wc - Wn) + b, this tile
    o_ref:    (tile_n, C) f32  -- output tile
    """
    tile_n, c = o_ref.shape
    n_total = x_ref.shape[0]

    row0 = pl.multiple_of(pl.program_id(0) * tile_n, tile_n)
    xt = x_ref[pl.ds(row0, tile_n), :]          # centre rows of this tile
    xf = x_ref[...]                             # all candidate neighbours

    # Halved squared-distance score (MXU, f32): 0.5*||x_j||^2 - x_i . x_j.  The
    # per-row constant 0.5*||x_i||^2 is dropped and the global 0.5 scale is folded
    # into hxsq -- neither changes per-row ordering, so kNN selection is exact.
    inner = jax.lax.dot_general(
        xt, xf, dimension_numbers=(((1,), (1,)), ((), ())),
        preferred_element_type=jnp.float32)     # (tile_n, N)
    dist = hxsq_ref[...] - inner

    col = jax.lax.broadcasted_iota(jnp.int32, (tile_n, n_total), 1)
    oob = jnp.int32(n_total)
    inf = jnp.float32(jnp.inf)

    # k rounds of exact lowest-index argmin -> one-hot mask; masks are collected and
    # applied in one batched MXU gather below, so the serial chain is VPU/XLU only.
    sels = []
    for _ in range(k):                          # static unroll (k = 9)
        dmin = jnp.min(dist, axis=-1, keepdims=True)
        is_min = dist == dmin
        jstar = jnp.min(jnp.where(is_min, col, oob), axis=-1, keepdims=True)
        sel = col == jstar                      # exactly one-hot rows
        sels.append(sel.astype(jnp.bfloat16))
        dist = jnp.where(sel, inf, dist)        # mark neighbour as visited

    # One batched one-hot gather: (k*tile_n, N) bf16 @ (N, C) bf16 -> f32 accumulate.
    sel_all = jnp.concatenate(sels, axis=0)
    gathered = jnp.dot(sel_all, m_ref[...], preferred_element_type=jnp.float32)

    acc = gathered[0:tile_n, :]
    for r in range(1, k):                       # static slices, elementwise max (VPU)
        acc = jnp.maximum(acc, gathered[r * tile_n:(r + 1) * tile_n, :])

    o_ref[...] = jnp.maximum(a_ref[...] + acc, 0.0)       # ReLU


def plain_dyn_block(x, w, b, *, k=9, batch=None, tile_n=128):
    """Fused PlainDynBlock.forward.

    x: [N, C] f32 node features
    w: [C, 2C] f32 (torch nn.Linear weight layout for Linear(2C -> C))
    b: [C] f32
    Returns (out [N, C] f32, batch).
    """
    if batch is not None:
        # TODO(synk): per-graph kNN masking for batched graphs (batch vector); only the
        # single-graph (batch=None) path is implemented.
        raise NotImplementedError("only the single-graph (batch=None) path")
    n, c = x.shape
    assert w.shape == (c, 2 * c) and b.shape == (c,)
    assert n > k, "need more nodes than neighbours"
    assert c % 128 == 0, "keep the channel (lane) dim a multiple of 128"
    tile_n = min(tile_n, n)
    assert tile_n % 8 == 0 and n % tile_n == 0, "pad N to a multiple of tile_n"
    # TODO(synk): for very large graphs (where the (k*tile_n, N) bf16 mask approaches
    # VMEM scale), chunk the neighbour axis with an online per-row top-k.

    hp = jax.lax.Precision.HIGHEST
    wc = w[:, :c].T                                       # x_i path        (C, C)
    wn = w[:, c:].T                                       # x_j path        (C, C)
    # Node-level projections hoisted out of the kernel (computed once by XLA).
    m = jnp.dot(x, wn, precision=hp).astype(jnp.bfloat16)             # (N, C) bf16
    a = jnp.dot(x, wc - wn, precision=hp) + b[None, :]                # (N, C) f32
    hxsq = 0.5 * jnp.sum(x * x, axis=-1)[None, :]                     # (1, N) f32

    num_tiles = n // tile_n
    kernel = functools.partial(_plain_dyn_block_kernel, k=k)

    cost = pl.CostEstimate(
        flops=int(2 * n * n * c * (1 + k)),               # dist matmul + one-hot gathers
        transcendentals=0,
        bytes_accessed=int(n * c * (4 + 2 + 4 + 4) + 4 * n))

    out = pl.pallas_call(
        kernel,
        out_shape=jax.ShapeDtypeStruct((n, c), jnp.float32),
        grid_spec=pltpu.PrefetchScalarGridSpec(
            num_scalar_prefetch=0,
            grid=(num_tiles,),
            in_specs=[
                pl.BlockSpec((n, c), lambda i: (0, 0)),        # x, all nodes (f32)
                pl.BlockSpec((1, n), lambda i: (0, 0)),        # 0.5*||x_j||^2
                pl.BlockSpec((n, c), lambda i: (0, 0)),        # M = x @ Wn (bf16)
                pl.BlockSpec((tile_n, c), lambda i: (i, 0)),   # A row tile (f32)
            ],
            out_specs=pl.BlockSpec((tile_n, c), lambda i: (i, 0)),
        ),
        compiler_params=pltpu.CompilerParams(
            dimension_semantics=("parallel",),
            vmem_limit_bytes=64 * 1024 * 1024),
        cost_estimate=cost,
    )(x, hxsq, m, a)
    return out, batch


def plain_dyn_block_ref(x, w, b, *, k=9):
    """Pure-JAX reference of PlainDynBlock.forward (single graph, batch=None)."""
    hp = jax.lax.Precision.HIGHEST
    inner = -2.0 * jnp.dot(x, x.T, precision=hp)
    sq = jnp.sum(x * x, axis=-1, keepdims=True)
    dist = sq + inner + sq.T                              # pairwise_distance(x)
    # k nearest per node (self included); stable argsort == lowest-index tie-break,
    # matching the kernel's selection order.
    nn_idx = jnp.argsort(dist, axis=-1)[:, :k]            # (N, k)
    x_i = jnp.broadcast_to(x[:, None, :], (x.shape[0], k, x.shape[1]))
    x_j = x[nn_idx]                                       # (N, k, C)
    msg = jnp.concatenate([x_i, x_j - x_i], axis=-1)      # (N, k, 2C)
    msg = jnp.maximum(jnp.einsum("nkf,cf->nkc", msg, w, precision=hp) + b, 0.0)
    return jnp.max(msg, axis=1)                           # max aggregation


if __name__ == "__main__":
    key = jax.random.PRNGKey(0)
    n_nodes, channels, k = 256, 128, 9                    # small, lane-dense demo

    kx, kw, kb = jax.random.split(key, 3)
    # Small-integer features keep the pairwise distances exactly representable in f32,
    # so the kernel's kNN selection matches the reference's bit-for-bit.
    x = jax.random.randint(kx, (n_nodes, channels), -3, 4).astype(jnp.float32)
    bound = 1.0 / (2 * channels) ** 0.5                   # torch Linear default init
    w = jax.random.uniform(kw, (channels, 2 * channels), jnp.float32,
                           minval=-bound, maxval=bound)
    b = jax.random.uniform(kb, (channels,), jnp.float32,
                           minval=-bound, maxval=bound)

    out, out_batch = plain_dyn_block(x, w, b, k=k, batch=None, tile_n=128)
    out = jax.block_until_ready(out)

    ref = plain_dyn_block_ref(x, w, b, k=k)
    assert out.shape == (n_nodes, channels)
    assert out_batch is None
    max_err = float(jnp.max(jnp.abs(out - ref)))
    # Tolerance covers bf16 rounding of the hoisted M = x @ Wn (one-hot gather is
    # otherwise exact); the kNN selection itself is bit-exact on these inputs.
    assert jnp.allclose(out, ref, atol=2e-2, rtol=2e-2), f"max |err| = {max_err}"
    print("KERNEL_OK")
</pallas_src>

<mosaic_0001>
module attributes {stable_mosaic.version = 11 : i64} {
  func.func @_plain_dyn_block_kernel(%arg0: i32, %arg1: memref<256x128xf32, #tpu.memory_space<vmem>>, %arg2: memref<1x256xf32, #tpu.memory_space<vmem>>, %arg3: memref<256x128xbf16, #tpu.memory_space<vmem>>, %arg4: memref<128x128xf32, #tpu.memory_space<vmem>>, %arg5: memref<128x128xf32, #tpu.memory_space<vmem>>) attributes {dimension_semantics = [#tpu.dimension_semantics<parallel>], iteration_bounds = array<i64: 2>, scalar_prefetch = 0 : i64, scratch_operands = 0 : i64, tpu.core_type = #tpu.core_type<tc>, window_params = [{pipeline_mode = #tpu.pipeline_mode<synchronous>, transform_indices = @transform_0, window_bounds = array<i64: 256, 128>}, {pipeline_mode = #tpu.pipeline_mode<synchronous>, transform_indices = @transform_1, window_bounds = array<i64: 1, 256>}, {pipeline_mode = #tpu.pipeline_mode<synchronous>, transform_indices = @transform_2, window_bounds = array<i64: 256, 128>}, {transform_indices = @transform_3, window_bounds = array<i64: 128, 128>}, {transform_indices = @transform_4, window_bounds = array<i64: 128, 128>}]} {
    %c128_i32 = arith.constant 128 : i32
    %0 = arith.muli %arg0, %c128_i32 : i32
    %1 = tpu.assume_multiple %0, 128 : i32
    %2 = arith.index_cast %1 : i32 to index
    %c0 = arith.constant 0 : index
    %3 = vector.load %arg1[%2, %c0] : memref<256x128xf32, #tpu.memory_space<vmem>>, vector<128x128xf32>
    %c0_0 = arith.constant 0 : index
    %c0_1 = arith.constant 0 : index
    %4 = vector.load %arg1[%c0_0, %c0_1] : memref<256x128xf32, #tpu.memory_space<vmem>>, vector<256x128xf32>
    %cst = arith.constant dense<0.000000e+00> : vector<128x256xf32>
    %5 = tpu.matmul %3, %4, %cst {dimension_numbers = #tpu.dot_dimension_numbers<[1], [1], [0], [0], [0, 0, 1, 0], [], []>} : vector<128x128xf32>, vector<256x128xf32>, vector<128x256xf32> -> vector<128x256xf32>
    %c0_2 = arith.constant 0 : index
    %c0_3 = arith.constant 0 : index
    %6 = vector.load %arg2[%c0_2, %c0_3] : memref<1x256xf32, #tpu.memory_space<vmem>>, vector<1x256xf32>
    %7 = vector.broadcast %6 : vector<1x256xf32> to vector<128x256xf32>
    %8 = arith.subf %7, %5 : vector<128x256xf32>
    %9 = tpu.iota {dimensions = array<i32: 1>} : vector<128x256xi32>
    %cst_4 = arith.constant dense<0x7F800000> : vector<128xf32>
    %10 = vector.multi_reduction <minimumf>, %8, %cst_4 [1] : vector<128x256xf32> to vector<128xf32>
    %11 = vector.shape_cast %10 : vector<128xf32> to vector<128x1xf32>
    %12 = vector.broadcast %11 : vector<128x1xf32> to vector<128x256xf32>
    %13 = arith.cmpf oeq, %8, %12 : vector<128x256xf32>
    %c256_i32 = arith.constant 256 : i32
    %14 = vector.broadcast %c256_i32 : i32 to vector<128x256xi32>
    %15 = arith.select %13, %9, %14 : vector<128x256xi1>, vector<128x256xi32>
    %cst_5 = arith.constant dense<2147483647> : vector<128xi32>
    %16 = vector.multi_reduction <minsi>, %15, %cst_5 [1] : vector<128x256xi32> to vector<128xi32>
    %17 = vector.shape_cast %16 : vector<128xi32> to vector<128x1xi32>
    %18 = vector.broadcast %17 : vector<128x1xi32> to vector<128x256xi32>
    %19 = arith.cmpi eq, %9, %18 : vector<128x256xi32>
    %20 = arith.extui %19 : vector<128x256xi1> to vector<128x256xi32>
    %21 = arith.sitofp %20 : vector<128x256xi32> to vector<128x256xf32>
    %22 = arith.truncf %21 : vector<128x256xf32> to vector<128x256xbf16>
    %cst_6 = arith.constant 0x7F800000 : f32
    %23 = vector.broadcast %cst_6 : f32 to vector<128x256xf32>
    %24 = arith.select %19, %23, %8 : vector<128x256xi1>, vector<128x256xf32>
    %cst_7 = arith.constant dense<0x7F800000> : vector<128xf32>
    %25 = vector.multi_reduction <minimumf>, %24, %cst_7 [1] : vector<128x256xf32> to vector<128xf32>
    %26 = vector.shape_cast %25 : vector<128xf32> to vector<128x1xf32>
    %27 = vector.broadcast %26 : vector<128x1xf32> to vector<128x256xf32>
    %28 = arith.cmpf oeq, %24, %27 : vector<128x256xf32>
    %c256_i32_8 = arith.constant 256 : i32
    %29 = vector.broadcast %c256_i32_8 : i32 to vector<128x256xi32>
    %30 = arith.select %28, %9, %29 : vector<128x256xi1>, vector<128x256xi32>
    %cst_9 = arith.constant dense<2147483647> : vector<128xi32>
    %31 = vector.multi_reduction <minsi>, %30, %cst_9 [1] : vector<128x256xi32> to vector<128xi32>
    %32 = vector.shape_cast %31 : vector<128xi32> to vector<128x1xi32>
    %33 = vector.broadcast %32 : vector<128x1xi32> to vector<128x256xi32>
    %34 = arith.cmpi eq, %9, %33 : vector<128x256xi32>
    %35 = arith.extui %34 : vector<128x256xi1> to vector<128x256xi32>
    %36 = arith.sitofp %35 : vector<128x256xi32> to vector<128x256xf32>
    %37 = arith.truncf %36 : vector<128x256xf32> to vector<128x256xbf16>
    %cst_10 = arith.constant 0x7F800000 : f32
    %38 = vector.broadcast %cst_10 : f32 to vector<128x256xf32>
    %39 = arith.select %34, %38, %24 : vector<128x256xi1>, vector<128x256xf32>
    %cst_11 = arith.constant dense<0x7F800000> : vector<128xf32>
    %40 = vector.multi_reduction <minimumf>, %39, %cst_11 [1] : vector<128x256xf32> to vector<128xf32>
    %41 = vector.shape_cast %40 : vector<128xf32> to vector<128x1xf32>
    %42 = vector.broadcast %41 : vector<128x1xf32> to vector<128x256xf32>
    %43 = arith.cmpf oeq, %39, %42 : vector<128x256xf32>
    %c256_i32_12 = arith.constant 256 : i32
    %44 = vector.broadcast %c256_i32_12 : i32 to vector<128x256xi32>
    %45 = arith.select %43, %9, %44 : vector<128x256xi1>, vector<128x256xi32>
    %cst_13 = arith.constant dense<2147483647> : vector<128xi32>
    %46 = vector.multi_reduction <minsi>, %45, %cst_13 [1] : vector<128x256xi32> to vector<128xi32>
    %47 = vector.shape_cast %46 : vector<128xi32> to vector<128x1xi32>
    %48 = vector.broadcast %47 : vector<128x1xi32> to vector<128x256xi32>
    %49 = arith.cmpi eq, %9, %48 : vector<128x256xi32>
    %50 = arith.extui %49 : vector<128x256xi1> to vector<128x256xi32>
    %51 = arith.sitofp %50 : vector<128x256xi32> to vector<128x256xf32>
    %52 = arith.truncf %51 : vector<128x256xf32> to vector<128x256xbf16>
    %cst_14 = arith.constant 0x7F800000 : f32
    %53 = vector.broadcast %cst_14 : f32 to vector<128x256xf32>
    %54 = arith.select %49, %53, %39 : vector<128x256xi1>, vector<128x256xf32>
    %cst_15 = arith.constant dense<0x7F800000> : vector<128xf32>
    %55 = vector.multi_reduction <minimumf>, %54, %cst_15 [1] : vector<128x256xf32> to vector<128xf32>
    %56 = vector.shape_cast %55 : vector<128xf32> to vector<128x1xf32>
    %57 = vector.broadcast %56 : vector<128x1xf32> to vector<128x256xf32>
    %58 = arith.cmpf oeq, %54, %57 : vector<128x256xf32>
    %c256_i32_16 = arith.constant 256 : i32
    %59 = vector.broadcast %c256_i32_16 : i32 to vector<128x256xi32>
    %60 = arith.select %58, %9, %59 : vector<128x256xi1>, vector<128x256xi32>
    %cst_17 = arith.constant dense<2147483647> : vector<128xi32>
    %61 = vector.multi_reduction <minsi>, %60, %cst_17 [1] : vector<128x256xi32> to vector<128xi32>
    %62 = vector.shape_cast %61 : vector<128xi32> to vector<128x1xi32>
    %63 = vector.broadcast %62 : vector<128x1xi32> to vector<128x256xi32>
    %64 = arith.cmpi eq, %9, %63 : vector<128x256xi32>
    %65 = arith.extui %64 : vector<128x256xi1> to vector<128x256xi32>
    %66 = arith.sitofp %65 : vector<128x256xi32> to vector<128x256xf32>
    %67 = arith.truncf %66 : vector<128x256xf32> to vector<128x256xbf16>
    %cst_18 = arith.constant 0x7F800000 : f32
    %68 = vector.broadcast %cst_18 : f32 to vector<128x256xf32>
    %69 = arith.select %64, %68, %54 : vector<128x256xi1>, vector<128x256xf32>
    %cst_19 = arith.constant dense<0x7F800000> : vector<128xf32>
    %70 = vector.multi_reduction <minimumf>, %69, %cst_19 [1] : vector<128x256xf32> to vector<128xf32>
    %71 = vector.shape_cast %70 : vector<128xf32> to vector<128x1xf32>
    %72 = vector.broadcast %71 : vector<128x1xf32> to vector<128x256xf32>
    %73 = arith.cmpf oeq, %69, %72 : vector<128x256xf32>
    %c256_i32_20 = arith.constant 256 : i32
    %74 = vector.broadcast %c256_i32_20 : i32 to vector<128x256xi32>
    %75 = arith.select %73, %9, %74 : vector<128x256xi1>, vector<128x256xi32>
    %cst_21 = arith.constant dense<2147483647> : vector<128xi32>
    %76 = vector.multi_reduction <minsi>, %75, %cst_21 [1] : vector<128x256xi32> to vector<128xi32>
    %77 = vector.shape_cast %76 : vector<128xi32> to vector<128x1xi32>
    %78 = vector.broadcast %77 : vector<128x1xi32> to vector<128x256xi32>
    %79 = arith.cmpi eq, %9, %78 : vector<128x256xi32>
    %80 = arith.extui %79 : vector<128x256xi1> to vector<128x256xi32>
    %81 = arith.sitofp %80 : vector<128x256xi32> to vector<128x256xf32>
    %82 = arith.truncf %81 : vector<128x256xf32> to vector<128x256xbf16>
    %cst_22 = arith.constant 0x7F800000 : f32
    %83 = vector.broadcast %cst_22 : f32 to vector<128x256xf32>
    %84 = arith.select %79, %83, %69 : vector<128x256xi1>, vector<128x256xf32>
    %cst_23 = arith.constant dense<0x7F800000> : vector<128xf32>
    %85 = vector.multi_reduction <minimumf>, %84, %cst_23 [1] : vector<128x256xf32> to vector<128xf32>
    %86 = vector.shape_cast %85 : vector<128xf32> to vector<128x1xf32>
    %87 = vector.broadcast %86 : vector<128x1xf32> to vector<128x256xf32>
    %88 = arith.cmpf oeq, %84, %87 : vector<128x256xf32>
    %c256_i32_24 = arith.constant 256 : i32
    %89 = vector.broadcast %c256_i32_24 : i32 to vector<128x256xi32>
    %90 = arith.select %88, %9, %89 : vector<128x256xi1>, vector<128x256xi32>
    %cst_25 = arith.constant dense<2147483647> : vector<128xi32>
    %91 = vector.multi_reduction <minsi>, %90, %cst_25 [1] : vector<128x256xi32> to vector<128xi32>
    %92 = vector.shape_cast %91 : vector<128xi32> to vector<128x1xi32>
    %93 = vector.broadcast %92 : vector<128x1xi32> to vector<128x256xi32>
    %94 = arith.cmpi eq, %9, %93 : vector<128x256xi32>
    %95 = arith.extui %94 : vector<128x256xi1> to vector<128x256xi32>
    %96 = arith.sitofp %95 : vector<128x256xi32> to vector<128x256xf32>
    %97 = arith.truncf %96 : vector<128x256xf32> to vector<128x256xbf16>
    %cst_26 = arith.constant 0x7F800000 : f32
    %98 = vector.broadcast %cst_26 : f32 to vector<128x256xf32>
    %99 = arith.select %94, %98, %84 : vector<128x256xi1>, vector<128x256xf32>
    %cst_27 = arith.constant dense<0x7F800000> : vector<128xf32>
    %100 = vector.multi_reduction <minimumf>, %99, %cst_27 [1] : vector<128x256xf32> to vector<128xf32>
    %101 = vector.shape_cast %100 : vector<128xf32> to vector<128x1xf32>
    %102 = vector.broadcast %101 : vector<128x1xf32> to vector<128x256xf32>
    %103 = arith.cmpf oeq, %99, %102 : vector<128x256xf32>
    %c256_i32_28 = arith.constant 256 : i32
    %104 = vector.broadcast %c256_i32_28 : i32 to vector<128x256xi32>
    %105 = arith.select %103, %9, %104 : vector<128x256xi1>, vector<128x256xi32>
    %cst_29 = arith.constant dense<2147483647> : vector<128xi32>
    %106 = vector.multi_reduction <minsi>, %105, %cst_29 [1] : vector<128x256xi32> to vector<128xi32>
    %107 = vector.shape_cast %106 : vector<128xi32> to vector<128x1xi32>
    %108 = vector.broadcast %107 : vector<128x1xi32> to vector<128x256xi32>
    %109 = arith.cmpi eq, %9, %108 : vector<128x256xi32>
    %110 = arith.extui %109 : vector<128x256xi1> to vector<128x256xi32>
    %111 = arith.sitofp %110 : vector<128x256xi32> to vector<128x256xf32>
    %112 = arith.truncf %111 : vector<128x256xf32> to vector<128x256xbf16>
    %cst_30 = arith.constant 0x7F800000 : f32
    %113 = vector.broadcast %cst_30 : f32 to vector<128x256xf32>
    %114 = arith.select %109, %113, %99 : vector<128x256xi1>, vector<128x256xf32>
    %cst_31 = arith.constant dense<0x7F800000> : vector<128xf32>
    %115 = vector.multi_reduction <minimumf>, %114, %cst_31 [1] : vector<128x256xf32> to vector<128xf32>
    %116 = vector.shape_cast %115 : vector<128xf32> to vector<128x1xf32>
    %117 = vector.broadcast %116 : vector<128x1xf32> to vector<128x256xf32>
    %118 = arith.cmpf oeq, %114, %117 : vector<128x256xf32>
    %c256_i32_32 = arith.constant 256 : i32
    %119 = vector.broadcast %c256_i32_32 : i32 to vector<128x256xi32>
    %120 = arith.select %118, %9, %119 : vector<128x256xi1>, vector<128x256xi32>
    %cst_33 = arith.constant dense<2147483647> : vector<128xi32>
    %121 = vector.multi_reduction <minsi>, %120, %cst_33 [1] : vector<128x256xi32> to vector<128xi32>
    %122 = vector.shape_cast %121 : vector<128xi32> to vector<128x1xi32>
    %123 = vector.broadcast %122 : vector<128x1xi32> to vector<128x256xi32>
    %124 = arith.cmpi eq, %9, %123 : vector<128x256xi32>
    %125 = arith.extui %124 : vector<128x256xi1> to vector<128x256xi32>
    %126 = arith.sitofp %125 : vector<128x256xi32> to vector<128x256xf32>
    %127 = arith.truncf %126 : vector<128x256xf32> to vector<128x256xbf16>
    %cst_34 = arith.constant 0x7F800000 : f32
    %128 = vector.broadcast %cst_34 : f32 to vector<128x256xf32>
    %129 = arith.select %124, %128, %114 : vector<128x256xi1>, vector<128x256xf32>
    %cst_35 = arith.constant dense<0x7F800000> : vector<128xf32>
    %130 = vector.multi_reduction <minimumf>, %129, %cst_35 [1] : vector<128x256xf32> to vector<128xf32>
    %131 = vector.shape_cast %130 : vector<128xf32> to vector<128x1xf32>
    %132 = vector.broadcast %131 : vector<128x1xf32> to vector<128x256xf32>
    %133 = arith.cmpf oeq, %129, %132 : vector<128x256xf32>
    %c256_i32_36 = arith.constant 256 : i32
    %134 = vector.broadcast %c256_i32_36 : i32 to vector<128x256xi32>
    %135 = arith.select %133, %9, %134 : vector<128x256xi1>, vector<128x256xi32>
    %cst_37 = arith.constant dense<2147483647> : vector<128xi32>
    %136 = vector.multi_reduction <minsi>, %135, %cst_37 [1] : vector<128x256xi32> to vector<128xi32>
    %137 = vector.shape_cast %136 : vector<128xi32> to vector<128x1xi32>
    %138 = vector.broadcast %137 : vector<128x1xi32> to vector<128x256xi32>
    %139 = arith.cmpi eq, %9, %138 : vector<128x256xi32>
    %140 = arith.extui %139 : vector<128x256xi1> to vector<128x256xi32>
    %141 = arith.sitofp %140 : vector<128x256xi32> to vector<128x256xf32>
    %142 = arith.truncf %141 : vector<128x256xf32> to vector<128x256xbf16>
    %143 = tpu.concatenate %22, %37, %52, %67, %82, %97, %112, %127, %142 in 0 : vector<128x256xbf16>, vector<128x256xbf16>, vector<128x256xbf16>, vector<128x256xbf16>, vector<128x256xbf16>, vector<128x256xbf16>, vector<128x256xbf16>, vector<128x256xbf16>, vector<128x256xbf16> -> vector<1152x256xbf16>
    %c0_38 = arith.constant 0 : index
    %c0_39 = arith.constant 0 : index
    %144 = vector.load %arg3[%c0_38, %c0_39] : memref<256x128xbf16, #tpu.memory_space<vmem>>, vector<256x128xbf16>
    %cst_40 = arith.constant dense<0.000000e+00> : vector<1152x128xf32>
    %145 = tpu.matmul %143, %144, %cst_40 {dimension_numbers = #tpu.dot_dimension_numbers<[1], [0], [0], [1], [0, 0, 1, 1], [], []>} : vector<1152x256xbf16>, vector<256x128xbf16>, vector<1152x128xf32> -> vector<1152x128xf32>
    %146 = vector.extract_strided_slice %145 {offsets = [0, 0], sizes = [128, 128], strides = [1, 1]} : vector<1152x128xf32> to vector<128x128xf32>
    %147 = vector.extract_strided_slice %145 {offsets = [128, 0], sizes = [128, 128], strides = [1, 1]} : vector<1152x128xf32> to vector<128x128xf32>
    %148 = arith.maximumf %146, %147 : vector<128x128xf32>
    %149 = vector.extract_strided_slice %145 {offsets = [256, 0], sizes = [128, 128], strides = [1, 1]} : vector<1152x128xf32> to vector<128x128xf32>
    %150 = arith.maximumf %148, %149 : vector<128x128xf32>
    %151 = vector.extract_strided_slice %145 {offsets = [384, 0], sizes = [128, 128], strides = [1, 1]} : vector<1152x128xf32> to vector<128x128xf32>
    %152 = arith.maximumf %150, %151 : vector<128x128xf32>
    %153 = vector.extract_strided_slice %145 {offsets = [512, 0], sizes = [128, 128], strides = [1, 1]} : vector<1152x128xf32> to vector<128x128xf32>
    %154 = arith.maximumf %152, %153 : vector<128x128xf32>
    %155 = vector.extract_strided_slice %145 {offsets = [640, 0], sizes = [128, 128], strides = [1, 1]} : vector<1152x128xf32> to vector<128x128xf32>
    %156 = arith.maximumf %154, %155 : vector<128x128xf32>
    %157 = vector.extract_strided_slice %145 {offsets = [768, 0], sizes = [128, 128], strides = [1, 1]} : vector<1152x128xf32> to vector<128x128xf32>
    %158 = arith.maximumf %156, %157 : vector<128x128xf32>
    %159 = vector.extract_strided_slice %145 {offsets = [896, 0], sizes = [128, 128], strides = [1, 1]} : vector<1152x128xf32> to vector<128x128xf32>
    %160 = arith.maximumf %158, %159 : vector<128x128xf32>
    %161 = vector.extract_strided_slice %145 {offsets = [1024, 0], sizes = [128, 128], strides = [1, 1]} : vector<1152x128xf32> to vector<128x128xf32>
    %162 = arith.maximumf %160, %161 : vector<128x128xf32>
    %c0_41 = arith.constant 0 : index
    %c0_42 = arith.constant 0 : index
    %163 = vector.load %arg4[%c0_41, %c0_42] : memref<128x128xf32, #tpu.memory_space<vmem>>, vector<128x128xf32>
    %164 = arith.addf %163, %162 : vector<128x128xf32>
    %cst_43 = arith.constant 0.000000e+00 : f32
    %165 = vector.broadcast %cst_43 : f32 to vector<128x128xf32>
    %166 = arith.maximumf %164, %165 : vector<128x128xf32>
    %c0_44 = arith.constant 0 : index
    %c0_45 = arith.constant 0 : index
    %167 = vector.load %arg5[%c0_44, %c0_45] : memref<128x128xf32, #tpu.memory_space<vmem>>, vector<128x128xf32>
    tpu.vector_store %arg5[%c0_44, %c0_45], %166 {strides = array<i32>} : memref<128x128xf32, #tpu.memory_space<vmem>>, vector<128x128xf32>,
    return
  }
  func.func @transform_0(%arg0: i32) -> (i32, i32) {
    %c0_i32 = arith.constant 0 : i32
    %c0_i32_0 = arith.constant 0 : i32
    %c0_i32_1 = arith.constant 0 : i32
    return %c0_i32, %c0_i32_0 : i32, i32
  }
  func.func @transform_1(%arg0: i32) -> (i32, i32) {
    %c0_i32 = arith.constant 0 : i32
    %c0_i32_0 = arith.constant 0 : i32
    %c0_i32_1 = arith.constant 0 : i32
    return %c0_i32, %c0_i32_0 : i32, i32
  }
  func.func @transform_2(%arg0: i32) -> (i32, i32) {
    %c0_i32 = arith.constant 0 : i32
    %c0_i32_0 = arith.constant 0 : i32
    %c0_i32_1 = arith.constant 0 : i32
    return %c0_i32, %c0_i32_0 : i32, i32
  }
  func.func @transform_3(%arg0: i32) -> (i32, i32) {
    %c0_i32 = arith.constant 0 : i32
    %c0_i32_0 = arith.constant 0 : i32
    return %arg0, %c0_i32 : i32, i32
  }
  func.func @transform_4(%arg0: i32) -> (i32, i32) {
    %c0_i32 = arith.constant 0 : i32
    %c0_i32_0 = arith.constant 0 : i32
    return %arg0, %c0_i32 : i32, i32
  }
}

</mosaic_0001>

<llo_original>
// kernel: tpu_custom_call.1
$region0: #{tpu_custom_call.1}
  #allocation0 [shape = 'u32[]', space=smem, size = 0x4, offset = 0x4, fixed_abs, tag = 'smem constant byte address 0x4 - core index']
  #allocation1 [shape = 'u32[72,128]{1,0:T(1,128)}', space=vmem, size = 0x9000, scoped, tag = 'internal scratch']
  %s0 = inlined_call_operand.hbm [shape: f32[256,128], index: 0, kind: input, shape index: {}]
  %s1 = inlined_call_operand.hbm [shape: f32[1,256], index: 1, kind: input, shape index: {}]
  %s2 = inlined_call_operand.hbm [shape: bf16[256,128], index: 2, kind: input, shape index: {}]
  %s3 = inlined_call_operand.hbm [shape: f32[256,128], index: 3, kind: input, shape index: {}]
  %s4 = inlined_call_operand.hbm [shape: f32[256,128], index: 4, kind: output, shape index: {}]
  %s5 = sld [smem:[#allocation0]]
  $region65: #{tpu_custom_call.1} parent=0
    _
  %s7 = ssub.s32 1, %s5
  %s8 = scalar_select 0, %s7, %s5
  $region1: #{tpu_custom_call.1} parent=0
    #allocation2 [shape = 'u8[131072]{0}', space=vmem, size = 0x20000, scoped, tag = 'input window, operand 0, single buffered']
    #allocation3 [shape = 's32[2]{0}', space=sflag, size = 0x8, scoped, tag = 'scoped memory for tpu_custom_call.1']
    #allocation4 [shape = 's32[2]{0}', space=sflag, size = 0x8, scoped, tag = 'scoped memory for tpu_custom_call.1']
    #allocation5 [shape = 'u8[1024]{0}', space=vmem, size = 0x400, scoped, tag = 'input window, operand 1, single buffered']
    #allocation6 [shape = 's32[1]{0}', space=sflag, size = 0x4, scoped, tag = 'scoped memory for tpu_custom_call.1']
    #allocation7 [shape = 'u8[65536]{0}', space=vmem, size = 0x10000, scoped, tag = 'input window, operand 2, single buffered']
    #allocation8 [shape = 'u8[131072]{0}', space=vmem, size = 0x20000, scoped, tag = 'input window, operand 3']
    #allocation9 [shape = 's32[2]{0}', space=sflag, size = 0x8, scoped, tag = 'scoped memory for tpu_custom_call.1']
    #allocation10 [shape = 'u8[131072]{0}', space=vmem, size = 0x20000, scoped, tag = 'output window, operand 0']
    %9 = vsyncpa [#allocation3], 0
    %10 = vsyncpa [#allocation6], 0
    %11 = vsyncpa [#allocation9], 0
    %s12 = scalar_lea.sflag [#allocation9], 1
    %13 = vsyncpa %s12, 0
    %14 = vsyncpa [#allocation4], 0
    %s15 = scalar_lea.sflag [#allocation4], 1
    %16 = vsyncpa %s15, 0
    loop: start=0, step=1, limit=4
    $region2: #{tpu_custom_call.1} parent=1 // loop_pre_header
      _
    $region3: #{tpu_custom_call.1} parent=1 // loop_header
      %s18 = sphi 0, %s22
      %p19 = scmp.ge.s32.totalorder %s18, 4
      %s26 = sphi 0, %s26
      %s28 = sphi 0, %s26
      %s29 = sphi 0, %s28
      %s43 = sphi 0, %s29
      %s47 = sphi 0, %s47
      %s49 = sphi 0, %s47
      %s50 = sphi 0, %s49
      %s64 = sphi 0, %s50
      %s68 = sphi 0, %s68
      %s70 = sphi 0, %s68
      %s71 = sphi 0, %s70
      %s85 = sphi 0, %s71
      %s91 = sphi 0, %s93
      %s94 = sphi 0, %s91
      %s95 = sphi 0, %s94
      %s111 = sphi 0, %s95
      %s117 = sphi 0, %s119
      %s120 = sphi 0, %s117
      %s121 = sphi 0, %s120
      %s137 = sphi 0, %s121
    $region4: #{tpu_custom_call.1} parent=1 // loop_header_branch
      %21 = sbr.rel (%p19) target = $region8
    $region5: #{tpu_custom_call.1} parent=1 // loop_body
      %s23 = ssub.s32 %s18, 1
      %s24 = ssub.s32 %s18, 2
      %s25 = sadd.s32 %s18, 1
      %s27 = sadd.s32 %s26, 1
      %p30 = scmp.eq.s32.totalorder %s18, 1
      %p31 = scmp.ne.s32.totalorder %s26, %s28
      %p32 = scmp.eq.s32.totalorder %s18, 0
      %p33 = por %p31, %p32
      %p34 = scmp.ne.s32.totalorder %s26, %s28
      %p35 = scmp.eq.s32.totalorder %s23, 1
      %p36 = por %p34, %p35
      %p37 = scmp.ne.s32.totalorder %s28, %s29
      %p38 = scmp.eq.s32.totalorder %s23, 0
      %p39 = por %p37, %p38
      %p40 = scmp.ne.s32.totalorder %s28, %s29
      %p41 = scmp.eq.s32.totalorder %s24, 1
      %p42 = por %p40, %p41
      %p44 = scmp.ne.s32.totalorder %s29, %s43
      %p45 = scmp.eq.s32.totalorder %s24, 0
      %p46 = por %p44, %p45
      %s48 = sadd.s32 %s47, 1
      %p51 = scmp.eq.s32.totalorder %s18, 1
      %p52 = scmp.ne.s32.totalorder %s47, %s49
      %p53 = scmp.eq.s32.totalorder %s18, 0
      %p54 = por %p52, %p53
      %p55 = scmp.ne.s32.totalorder %s47, %s49
      %p56 = scmp.eq.s32.totalorder %s23, 1
      %p57 = por %p55, %p56
      %p58 = scmp.ne.s32.totalorder %s49, %s50
      %p59 = scmp.eq.s32.totalorder %s23, 0
      %p60 = por %p58, %p59
      %p61 = scmp.ne.s32.totalorder %s49, %s50
      %p62 = scmp.eq.s32.totalorder %s24, 1
      %p63 = por %p61, %p62
      %p65 = scmp.ne.s32.totalorder %s50, %s64
      %p66 = scmp.eq.s32.totalorder %s24, 0
      %p67 = por %p65, %p66
      %s69 = sadd.s32 %s68, 1
      %p72 = scmp.eq.s32.totalorder %s18, 1
      %p73 = scmp.ne.s32.totalorder %s68, %s70
      %p74 = scmp.eq.s32.totalorder %s18, 0
      %p75 = por %p73, %p74
      %p76 = scmp.ne.s32.totalorder %s68, %s70
      %p77 = scmp.eq.s32.totalorder %s23, 1
      %p78 = por %p76, %p77
      %p79 = scmp.ne.s32.totalorder %s70, %s71
      %p80 = scmp.eq.s32.totalorder %s23, 0
      %p81 = por %p79, %p80
      %p82 = scmp.ne.s32.totalorder %s70, %s71
      %p83 = scmp.eq.s32.totalorder %s24, 1
      %p84 = por %p82, %p83
      %p86 = scmp.ne.s32.totalorder %s71, %s85
      %p87 = scmp.eq.s32.totalorder %s24, 0
      %p88 = por %p86, %p87
      %s89 = ssub.s32 %s18, %s25
      %p90 = scmp.eq.s32.totalorder %s89, 0
      %s92 = sadd.s32 %s91, 1
      %s93 = scalar_select %p90, %s91, %s92
      %p96 = pneg %p90
      %p97 = scmp.eq.s32.totalorder %s18, 1
      %p98 = por %p96, %p97
      %p99 = scmp.ne.s32.totalorder %s91, %s94
      %p100 = scmp.eq.s32.totalorder %s18, 0
      %p101 = por %p99, %p100
      %p102 = scmp.ne.s32.totalorder %s91, %s94
      %p103 = scmp.eq.s32.totalorder %s23, 1
      %p104 = por %p102, %p103
      %p105 = scmp.ne.s32.totalorder %s94, %s95
      %p106 = scmp.eq.s32.totalorder %s23, 0
      %p107 = por %p105, %p106
      %p108 = scmp.ne.s32.totalorder %s94, %s95
      %p109 = scmp.eq.s32.totalorder %s24, 1
      %p110 = por %p108, %p109
      %p112 = scmp.ne.s32.totalorder %s95, %s111
      %p113 = scmp.eq.s32.totalorder %s24, 0
      %p114 = por %p112, %p113
      %s115 = ssub.s32 %s18, %s25
      %p116 = scmp.eq.s32.totalorder %s115, 0
      %s118 = sadd.s32 %s117, 1
      %s119 = scalar_select %p116, %s117, %s118
      %p122 = pneg %p116
      %p123 = scmp.eq.s32.totalorder %s18, 1
      %p124 = por %p122, %p123
      %p125 = scmp.ne.s32.totalorder %s117, %s120
      %p126 = scmp.eq.s32.totalorder %s18, 0
      %p127 = por %p125, %p126
      %p128 = scmp.ne.s32.totalorder %s117, %s120
      %p129 = scmp.eq.s32.totalorder %s23, 1
      %p130 = por %p128, %p129
      %p131 = scmp.ne.s32.totalorder %s120, %s121
      %p132 = scmp.eq.s32.totalorder %s23, 0
      %p133 = por %p131, %p132
      %p134 = scmp.ne.s32.totalorder %s120, %s121
      %p135 = scmp.eq.s32.totalorder %s24, 1
      %p136 = por %p134, %p135
      %p138 = scmp.ne.s32.totalorder %s121, %s137
      %p139 = scmp.eq.s32.totalorder %s24, 0
      %p140 = por %p138, %p139
      %p141 = scmp.le.s32.totalorder 1, %s18
      %p142 = scmp.lt.s32.totalorder %s18, 3
      %p143 = pnand %p141, %p142
      %p144 = pneg %p143
      // Predicated region
      $region9: #{tpu_custom_call.1} parent=5 // pred_check
        _
      $region10: #{tpu_custom_call.1} parent=5 // pred_check_branch
        %146 = sbr.rel (%p143) target = $region12
      $region11: #{tpu_custom_call.1} parent=5 // pred_region
        %s147 = ssub.s32 %s18, 1
        // Predicated region
        $region13: #{tpu_custom_call.1} parent=11 // pred_check
          %p148 = pneg %p39
        $region14: #{tpu_custom_call.1} parent=11 // pred_check_branch
          %150 = sbr.rel (%p148) target = $region16
        $region15: #{tpu_custom_call.1} parent=11 // pred_region
          %152 = vsyncadd [#allocation3], 0
          %s153 = sshll.u32 %s0, 4
          %s154 = int_to_ptr.hbm [resolvable:$true] %s153
          %s155 = sshll.u32 [#allocation2], 4
          %s156 = int_to_ptr.vmem [resolvable:$true] %s155
          %161 = dma.hbm_to_vmem [thread:$0]  %s154, 4096, %s156, [#allocation3], 128, 128, 8
        $region16: #{tpu_custom_call.1} parent=11 // pred_fallthru
          _
        // Predicated region
        $region17: #{tpu_custom_call.1} parent=11 // pred_check
          %p162 = pneg %p60
        $region18: #{tpu_custom_call.1} parent=11 // pred_check_branch
          %164 = sbr.rel (%p162) target = $region20
        $region19: #{tpu_custom_call.1} parent=11 // pred_region
          %166 = vsyncadd [#allocation6], 0
          %s168 = sshll.u32 %s1, 4
          %s169 = int_to_ptr.hbm [resolvable:$true] %s168
          %s170 = sshll.u32 [#allocation5], 4
          %s171 = int_to_ptr.vmem [resolvable:$true] %s170
          %173 = dma.hbm_to_vmem [thread:$0]  %s169, 32, %s171, [#allocation6]
        $region20: #{tpu_custom_call.1} parent=11 // pred_fallthru
          _
        // Predicated region
        $region21: #{tpu_custom_call.1} parent=11 // pred_check
          %p174 = pneg %p81
        $region22: #{tpu_custom_call.1} parent=11 // pred_check_branch
          %176 = sbr.rel (%p174) target = $region24
        $region23: #{tpu_custom_call.1} parent=11 // pred_region
          %178 = vsyncadd [#allocation6], 0
          %s179 = sshll.u32 %s2, 4
          %s180 = int_to_ptr.hbm [resolvable:$true] %s179
          %s181 = sshll.u32 [#allocation7], 4
          %s182 = int_to_ptr.vmem [resolvable:$true] %s181
          %187 = dma.hbm_to_vmem [thread:$0]  %s180, 2048, %s182, [#allocation6], 64, 64, 4
        $region24: #{tpu_custom_call.1} parent=11 // pred_fallthru
          _
      $region12: #{tpu_custom_call.1} parent=5 // pred_fallthru
        _
      %p188 = scmp.lt.s32.totalorder %s18, 2
      // Predicated region
      $region25: #{tpu_custom_call.1} parent=5 // pred_check
        %p189 = pneg %p188
      $region26: #{tpu_custom_call.1} parent=5 // pred_check_branch
        %191 = sbr.rel (%p189) target = $region28
      $region27: #{tpu_custom_call.1} parent=5 // pred_region
        // Predicated region
        $region29: #{tpu_custom_call.1} parent=27 // pred_check
          %p192 = pneg %p101
        $region30: #{tpu_custom_call.1} parent=27 // pred_check_branch
          %194 = sbr.rel (%p192) target = $region32
        $region31: #{tpu_custom_call.1} parent=27 // pred_region
          %s195 = sand.u32 %s91, 1
          %s196 = scalar_lea.sflag [#allocation9], %s195
          %s197 = sand.u32 %s91, 1
          %s198 = smul.addr %s197, 128
          %s199 = scalar_lea.vmem [#allocation8], %s198
          %s200 = smul.u32 16, %s18
          %202 = vsyncadd %s196, 0
          %s203 = smul.addr %s200, 8
          %s204 = scalar_lea.hbm %s3, %s203
          %s205 = sshll.u32 %s204, 4
          %s206 = int_to_ptr.hbm [resolvable:$true] %s205
          %s207 = sshll.u32 %s199, 4
          %s208 = int_to_ptr.vmem [resolvable:$true] %s207
          %213 = dma.hbm_to_vmem [thread:$0]  %s206, 2048, %s208, %s196, 128, 128, 8
        $region32: #{tpu_custom_call.1} parent=27 // pred_fallthru
          _
      $region28: #{tpu_custom_call.1} parent=5 // pred_fallthru
        _
      %p214 = scmp.le.s32.totalorder 1, %s18
      %p215 = scmp.lt.s32.totalorder %s18, 3
      %p216 = pnand %p214, %p215
      %p217 = pneg %p216
      // Predicated region
      $region33: #{tpu_custom_call.1} parent=5 // pred_check
        _
      $region34: #{tpu_custom_call.1} parent=5 // pred_check_branch
        %219 = sbr.rel (%p216) target = $region36
      $region35: #{tpu_custom_call.1} parent=5 // pred_region
        %s220 = ssub.s32 %s18, 1
        // Predicated region
        $region37: #{tpu_custom_call.1} parent=35 // pred_check
          %p221 = pneg %p39
        $region38: #{tpu_custom_call.1} parent=35 // pred_check_branch
          %223 = sbr.rel (%p221) target = $region40
        $region39: #{tpu_custom_call.1} parent=35 // pred_region
          %225 = dma.done [#allocation3], 4096
        $region40: #{tpu_custom_call.1} parent=35 // pred_fallthru
          _
        // Predicated region
        $region41: #{tpu_custom_call.1} parent=35 // pred_check
          %p226 = pneg %p60
        $region42: #{tpu_custom_call.1} parent=35 // pred_check_branch
          %228 = sbr.rel (%p226) target = $region44
        $region43: #{tpu_custom_call.1} parent=35 // pred_region
          %230 = dma.done [#allocation6], 32
        $region44: #{tpu_custom_call.1} parent=35 // pred_fallthru
          _
        // Predicated region
        $region45: #{tpu_custom_call.1} parent=35 // pred_check
          %p231 = pneg %p81
        $region46: #{tpu_custom_call.1} parent=35 // pred_check_branch
          %233 = sbr.rel (%p231) target = $region48
        $region47: #{tpu_custom_call.1} parent=35 // pred_region
          %235 = dma.done [#allocation6], 2048
        $region48: #{tpu_custom_call.1} parent=35 // pred_fallthru
          _
        %s236 = sand.u32 %s94, 1
        %s237 = scalar_lea.sflag [#allocation9], %s236
        %s238 = sand.u32 %s94, 1
        %s239 = smul.addr %s238, 128
        %s240 = scalar_lea.vmem [#allocation8], %s239
        // Predicated region
        $region49: #{tpu_custom_call.1} parent=35 // pred_check
          %p241 = pneg %p107
        $region50: #{tpu_custom_call.1} parent=35 // pred_check_branch
          %243 = sbr.rel (%p241) target = $region52
        $region51: #{tpu_custom_call.1} parent=35 // pred_region
          %245 = dma.done %s237, 2048
        $region52: #{tpu_custom_call.1} parent=35 // pred_fallthru
          _
        %p246 = pneg %p39
        %p247 = pneg %p36
        %p248 = pneg %p60
        %p249 = pneg %p57
        %p250 = pneg %p81
        %p251 = pneg %p78
        %s252 = sand.u32 %s94, 1
        %s253 = scalar_lea.sflag [#allocation9], %s252
        %s254 = sand.u32 %s94, 1
        %s255 = smul.addr %s254, 128
        %s256 = scalar_lea.vmem [#allocation8], %s255
        %p257 = pneg %p107
        %p258 = pneg %p104
        %p259 = pneg %p133
        %p260 = pneg %p130
        %s261 = sand.u32 %s120, 1
        %s262 = scalar_lea.sflag [#allocation4], %s261
        %s263 = sand.u32 %s120, 1
        %s264 = smul.addr %s263, 128
        %s265 = scalar_lea.vmem [#allocation10], %s264
        %s266 = smul.u32 16, %s23
        %s267 = smul.u32 16, %s23
        %s268 = smul.u32 %s23, 128
        %s269 = scalar_lea.vmem [#allocation2], %s268
        %v270 = vld [vmem:[%s269] sm:$0xff]
        %v271 = vld [vmem:[%s269 + $0x8] sm:$0xff]
        %v272 = vld [vmem:[%s269 + $0x10] sm:$0xff]
        %v273 = vld [vmem:[%s269 + $0x18] sm:$0xff]
        %v274 = vld [vmem:[%s269 + $0x20] sm:$0xff]
        %v275 = vld [vmem:[%s269 + $0x28] sm:$0xff]
        %v276 = vld [vmem:[%s269 + $0x30] sm:$0xff]
        %v277 = vld [vmem:[%s269 + $0x38] sm:$0xff]
        %v278 = vld [vmem:[%s269 + $0x40] sm:$0xff]
        %v279 = vld [vmem:[%s269 + $0x48] sm:$0xff]
        %v280 = vld [vmem:[%s269 + $0x50] sm:$0xff]
        %v281 = vld [vmem:[%s269 + $0x58] sm:$0xff]
        %v282 = vld [vmem:[%s269 + $0x60] sm:$0xff]
        %v283 = vld [vmem:[%s269 + $0x68] sm:$0xff]
        %v284 = vld [vmem:[%s269 + $0x70] sm:$0xff]
        %v285 = vld [vmem:[%s269 + $0x78] sm:$0xff]
        %v286 = vld [vmem:[#allocation2] sm:$0xff]
        %v287 = vld [vmem:[#allocation2 + $0x8] sm:$0xff]
        %v288 = vld [vmem:[#allocation2 + $0x10] sm:$0xff]
        %v289 = vld [vmem:[#allocation2 + $0x18] sm:$0xff]
        %v290 = vld [vmem:[#allocation2 + $0x20] sm:$0xff]
        %v291 = vld [vmem:[#allocation2 + $0x28] sm:$0xff]
        %v292 = vld [vmem:[#allocation2 + $0x30] sm:$0xff]
        %v293 = vld [vmem:[#allocation2 + $0x38] sm:$0xff]
        %v294 = vld [vmem:[#allocation2 + $0x40] sm:$0xff]
        %v295 = vld [vmem:[#allocation2 + $0x48] sm:$0xff]
        %v296 = vld [vmem:[#allocation2 + $0x50] sm:$0xff]
        %v297 = vld [vmem:[#allocation2 + $0x58] sm:$0xff]
        %v298 = vld [vmem:[#allocation2 + $0x60] sm:$0xff]
        %v299 = vld [vmem:[#allocation2 + $0x68] sm:$0xff]
        %v300 = vld [vmem:[#allocation2 + $0x70] sm:$0xff]
        %v301 = vld [vmem:[#allocation2 + $0x78] sm:$0xff]
        %v302 = vld [vmem:[#allocation2 + $0x80] sm:$0xff]
        %v303 = vld [vmem:[#allocation2 + $0x88] sm:$0xff]
        %v304 = vld [vmem:[#allocation2 + $0x90] sm:$0xff]
        %v305 = vld [vmem:[#allocation2 + $0x98] sm:$0xff]
        %v306 = vld [vmem:[#allocation2 + $0xa0] sm:$0xff]
        %v307 = vld [vmem:[#allocation2 + $0xa8] sm:$0xff]
        %v308 = vld [vmem:[#allocation2 + $0xb0] sm:$0xff]
        %v309 = vld [vmem:[#allocation2 + $0xb8] sm:$0xff]
        %v310 = vld [vmem:[#allocation2 + $0xc0] sm:$0xff]
        %v311 = vld [vmem:[#allocation2 + $0xc8] sm:$0xff]
        %v312 = vld [vmem:[#allocation2 + $0xd0] sm:$0xff]
        %v313 = vld [vmem:[#allocation2 + $0xd8] sm:$0xff]
        %v314 = vld [vmem:[#allocation2 + $0xe0] sm:$0xff]
        %v315 = vld [vmem:[#allocation2 + $0xe8] sm:$0xff]
        %v316 = vld [vmem:[#allocation2 + $0xf0] sm:$0xff]
        %v317 = vld [vmem:[#allocation2 + $0xf8] sm:$0xff]
        %318 = vmatpush.xpose.msra.mxu0 %v301
        %319 = vmatpush.xpose.msra.mxu0 %v300
        %320 = vmatpush.xpose.msra.mxu0 %v299
        %321 = vmatpush.xpose.msra.mxu0 %v298
        %322 = vmatpush.xpose.msra.mxu0 %v297
        %323 = vmatpush.xpose.msra.mxu0 %v296
        %324 = vmatpush.xpose.msra.mxu0 %v295
        %325 = vmatpush.xpose.msra.mxu0 %v294
        %326 = vmatpush.xpose.msra.mxu0 %v293
        %327 = vmatpush.xpose.msra.mxu0 %v292
        %328 = vmatpush.xpose.msra.mxu0 %v291
        %329 = vmatpush.xpose.msra.mxu0 %v290
        %330 = vmatpush.xpose.msra.mxu0 %v289
        %331 = vmatpush.xpose.msra.mxu0 %v288
        %332 = vmatpush.xpose.msra.mxu0 %v287
        %333 = vmatpush.xpose.msra.mxu0 %v286
        %334 = vmatmul.f32.gmra.mxu0 %v270
        %v335 = vpop.f32.mrf.mxu0
        %v336 = vadd.f32 0.0, %v335
        %337 = vmatmul.f32.gmra.mxu0 %v271
        %v338 = vpop.f32.mrf.mxu0
        %v339 = vadd.f32 0.0, %v338
        %340 = vmatmul.f32.gmra.mxu0 %v272
        %v341 = vpop.f32.mrf.mxu0
        %v342 = vadd.f32 0.0, %v341
        %343 = vmatmul.f32.gmra.mxu0 %v273
        %v344 = vpop.f32.mrf.mxu0
        %v345 = vadd.f32 0.0, %v344
        %346 = vmatmul.f32.gmra.mxu0 %v274
        %v347 = vpop.f32.mrf.mxu0
        %v348 = vadd.f32 0.0, %v347
        %349 = vmatmul.f32.gmra.mxu0 %v275
        %v350 = vpop.f32.mrf.mxu0
        %v351 = vadd.f32 0.0, %v350
        %352 = vmatmul.f32.gmra.mxu0 %v276
        %v353 = vpop.f32.mrf.mxu0
        %v354 = vadd.f32 0.0, %v353
        %355 = vmatmul.f32.gmra.mxu0 %v277
        %v356 = vpop.f32.mrf.mxu0
        %v357 = vadd.f32 0.0, %v356
        %358 = vmatmul.f32.gmra.mxu0 %v278
        %v359 = vpop.f32.mrf.mxu0
        %v360 = vadd.f32 0.0, %v359
        %361 = vmatmul.f32.gmra.mxu0 %v279
        %v362 = vpop.f32.mrf.mxu0
        %v363 = vadd.f32 0.0, %v362
        %364 = vmatmul.f32.gmra.mxu0 %v280
        %v365 = vpop.f32.mrf.mxu0
        %v366 = vadd.f32 0.0, %v365
        %367 = vmatmul.f32.gmra.mxu0 %v281
        %v368 = vpop.f32.mrf.mxu0
        %v369 = vadd.f32 0.0, %v368
        %370 = vmatmul.f32.gmra.mxu0 %v282
        %v371 = vpop.f32.mrf.mxu0
        %v372 = vadd.f32 0.0, %v371
        %373 = vmatmul.f32.gmra.mxu0 %v283
        %v374 = vpop.f32.mrf.mxu0
        %v375 = vadd.f32 0.0, %v374
        %376 = vmatmul.f32.gmra.mxu0 %v284
        %v377 = vpop.f32.mrf.mxu0
        %v378 = vadd.f32 0.0, %v377
        %379 = vmatmul.f32.gmra.mxu0 %v285
        %v380 = vpop.f32.mrf.mxu0
        %v381 = vadd.f32 0.0, %v380
        %382 = vdwg.mxu0
        %383 = vmatpush.xpose.msra.mxu0 %v317
        %384 = vmatpush.xpose.msra.mxu0 %v316
        %385 = vmatpush.xpose.msra.mxu0 %v315
        %386 = vmatpush.xpose.msra.mxu0 %v314
        %387 = vmatpush.xpose.msra.mxu0 %v313
        %388 = vmatpush.xpose.msra.mxu0 %v312
        %389 = vmatpush.xpose.msra.mxu0 %v311
        %390 = vmatpush.xpose.msra.mxu0 %v310
        %391 = vmatpush.xpose.msra.mxu0 %v309
        %392 = vmatpush.xpose.msra.mxu0 %v308
        %393 = vmatpush.xpose.msra.mxu0 %v307
        %394 = vmatpush.xpose.msra.mxu0 %v306
        %395 = vmatpush.xpose.msra.mxu0 %v305
        %396 = vmatpush.xpose.msra.mxu0 %v304
        %397 = vmatpush.xpose.msra.mxu0 %v303
        %398 = vmatpush.xpose.msra.mxu0 %v302
        %399 = vmatmul.f32.gmra.mxu0 %v270
        %v400 = vpop.f32.mrf.mxu0
        %v401 = vadd.f32 0.0, %v400
        %402 = vmatmul.f32.gmra.mxu0 %v271
        %v403 = vpop.f32.mrf.mxu0
        %v404 = vadd.f32 0.0, %v403
        %405 = vmatmul.f32.gmra.mxu0 %v272
        %v406 = vpop.f32.mrf.mxu0
        %v407 = vadd.f32 0.0, %v406
        %408 = vmatmul.f32.gmra.mxu0 %v273
        %v409 = vpop.f32.mrf.mxu0
        %v410 = vadd.f32 0.0, %v409
        %411 = vmatmul.f32.gmra.mxu0 %v274
        %v412 = vpop.f32.mrf.mxu0
        %v413 = vadd.f32 0.0, %v412
        %414 = vmatmul.f32.gmra.mxu0 %v275
        %v415 = vpop.f32.mrf.mxu0
        %v416 = vadd.f32 0.0, %v415
        %417 = vmatmul.f32.gmra.mxu0 %v276
        %v418 = vpop.f32.mrf.mxu0
        %v419 = vadd.f32 0.0, %v418
        %420 = vmatmul.f32.gmra.mxu0 %v277
        %v421 = vpop.f32.mrf.mxu0
        %v422 = vadd.f32 0.0, %v421
        %423 = vmatmul.f32.gmra.mxu0 %v278
        %v424 = vpop.f32.mrf.mxu0
        %v425 = vadd.f32 0.0, %v424
        %426 = vmatmul.f32.gmra.mxu0 %v279
        %v427 = vpop.f32.mrf.mxu0
        %v428 = vadd.f32 0.0, %v427
        %429 = vmatmul.f32.gmra.mxu0 %v280
        %v430 = vpop.f32.mrf.mxu0
        %v431 = vadd.f32 0.0, %v430
        %432 = vmatmul.f32.gmra.mxu0 %v281
        %v433 = vpop.f32.mrf.mxu0
        %v434 = vadd.f32 0.0, %v433
        %435 = vmatmul.f32.gmra.mxu0 %v282
        %v436 = vpop.f32.mrf.mxu0
        %v437 = vadd.f32 0.0, %v436
        %438 = vmatmul.f32.gmra.mxu0 %v283
        %v439 = vpop.f32.mrf.mxu0
        %v440 = vadd.f32 0.0, %v439
        %441 = vmatmul.f32.gmra.mxu0 %v284
        %v442 = vpop.f32.mrf.mxu0
        %v443 = vadd.f32 0.0, %v442
        %444 = vmatmul.f32.gmra.mxu0 %v285
        %v445 = vpop.f32.mrf.mxu0
        %v446 = vadd.f32 0.0, %v445
        %447 = vdwg.mxu0
        %v448 = vld [vmem:[#allocation5] sm:$0x3]
        %v450 = vperm.slane %v448, 0
        %v451 = vperm.slane %v448, 1
        %v454 = vsub.f32 %v450, %v336
        %v455 = vsub.f32 %v451, %v401
        %v456 = vsub.f32 %v450, %v339
        %v457 = vsub.f32 %v451, %v404
        %v458 = vsub.f32 %v450, %v342
        %v459 = vsub.f32 %v451, %v407
        %v460 = vsub.f32 %v450, %v345
        %v461 = vsub.f32 %v451, %v410
        %v462 = vsub.f32 %v450, %v348
        %v463 = vsub.f32 %v451, %v413
        %v464 = vsub.f32 %v450, %v351
        %v465 = vsub.f32 %v451, %v416
        %v466 = vsub.f32 %v450, %v354
        %v467 = vsub.f32 %v451, %v419
        %v468 = vsub.f32 %v450, %v357
        %v469 = vsub.f32 %v451, %v422
        %v470 = vsub.f32 %v450, %v360
        %v471 = vsub.f32 %v451, %v425
        %v472 = vsub.f32 %v450, %v363
        %v473 = vsub.f32 %v451, %v428
        %v474 = vsub.f32 %v450, %v366
        %v475 = vsub.f32 %v451, %v431
        %v476 = vsub.f32 %v450, %v369
        %v477 = vsub.f32 %v451, %v434
        %v478 = vsub.f32 %v450, %v372
        %v479 = vsub.f32 %v451, %v437
        %v480 = vsub.f32 %v450, %v375
        %v481 = vsub.f32 %v451, %v440
        %v482 = vsub.f32 %v450, %v378
        %v483 = vsub.f32 %v451, %v443
        %v484 = vsub.f32 %v450, %v381
        %v485 = vsub.f32 %v451, %v446
        %v486 = vlaneseq
        %v487 = vand.u32 %v486, 127
        %v488 = vadd.s32 %v487, 128
        %v489 = vmin.f32 %v454, %v455
        %490 = vmin.xlane.f32.xlu0 %v489
        %v491 = vpop.xlane.xlu0 %490
        %v492 = vmin.f32 %v456, %v457
        %493 = vmin.xlane.f32.xlu0 %v492
        %v494 = vpop.xlane.xlu0 %493
        %v495 = vmin.f32 %v458, %v459
        %496 = vmin.xlane.f32.xlu0 %v495
        %v497 = vpop.xlane.xlu0 %496
        %v498 = vmin.f32 %v460, %v461
        %499 = vmin.xlane.f32.xlu0 %v498
        %v500 = vpop.xlane.xlu0 %499
        %v501 = vmin.f32 %v462, %v463
        %502 = vmin.xlane.f32.xlu0 %v501
        %v503 = vpop.xlane.xlu0 %502
        %v504 = vmin.f32 %v464, %v465
        %505 = vmin.xlane.f32.xlu0 %v504
        %v506 = vpop.xlane.xlu0 %505
        %v507 = vmin.f32 %v466, %v467
        %508 = vmin.xlane.f32.xlu0 %v507
        %v509 = vpop.xlane.xlu0 %508
        %v510 = vmin.f32 %v468, %v469
        %511 = vmin.xlane.f32.xlu0 %v510
        %v512 = vpop.xlane.xlu0 %511
        %v513 = vmin.f32 %v470, %v471
        %514 = vmin.xlane.f32.xlu0 %v513
        %v515 = vpop.xlane.xlu0 %514
        %v516 = vmin.f32 %v472, %v473
        %517 = vmin.xlane.f32.xlu0 %v516
        %v518 = vpop.xlane.xlu0 %517
        %v519 = vmin.f32 %v474, %v475
        %520 = vmin.xlane.f32.xlu0 %v519
        %v521 = vpop.xlane.xlu0 %520
        %v522 = vmin.f32 %v476, %v477
        %523 = vmin.xlane.f32.xlu0 %v522
        %v524 = vpop.xlane.xlu0 %523
        %v525 = vmin.f32 %v478, %v479
        %526 = vmin.xlane.f32.xlu0 %v525
        %v527 = vpop.xlane.xlu0 %526
        %v528 = vmin.f32 %v480, %v481
        %529 = vmin.xlane.f32.xlu0 %v528
        %v530 = vpop.xlane.xlu0 %529
        %v531 = vmin.f32 %v482, %v483
        %532 = vmin.xlane.f32.xlu0 %v531
        %v533 = vpop.xlane.xlu0 %532
        %v534 = vmin.f32 %v484, %v485
        %535 = vmin.xlane.f32.xlu0 %v534
        %v536 = vpop.xlane.xlu0 %535
        %vm537 = vcmp.eq.f32.partialorder %v454, %v491
        %vm538 = vcmp.eq.f32.partialorder %v455, %v491
        %vm539 = vcmp.eq.f32.partialorder %v456, %v494
        %vm540 = vcmp.eq.f32.partialorder %v457, %v494
        %vm541 = vcmp.eq.f32.partialorder %v458, %v497
        %vm542 = vcmp.eq.f32.partialorder %v459, %v497
        %vm543 = vcmp.eq.f32.partialorder %v460, %v500
        %vm544 = vcmp.eq.f32.partialorder %v461, %v500
        %vm545 = vcmp.eq.f32.partialorder %v462, %v503
        %vm546 = vcmp.eq.f32.partialorder %v463, %v503
        %vm547 = vcmp.eq.f32.partialorder %v464, %v506
        %vm548 = vcmp.eq.f32.partialorder %v465, %v506
        %vm549 = vcmp.eq.f32.partialorder %v466, %v509
        %vm550 = vcmp.eq.f32.partialorder %v467, %v509
        %vm551 = vcmp.eq.f32.partialorder %v468, %v512
        %vm552 = vcmp.eq.f32.partialorder %v469, %v512
        %vm553 = vcmp.eq.f32.partialorder %v470, %v515
        %vm554 = vcmp.eq.f32.partialorder %v471, %v515
        %vm555 = vcmp.eq.f32.partialorder %v472, %v518
        %vm556 = vcmp.eq.f32.partialorder %v473, %v518
        %vm557 = vcmp.eq.f32.partialorder %v474, %v521
        %vm558 = vcmp.eq.f32.partialorder %v475, %v521
        %vm559 = vcmp.eq.f32.partialorder %v476, %v524
        %vm560 = vcmp.eq.f32.partialorder %v477, %v524
        %vm561 = vcmp.eq.f32.partialorder %v478, %v527
        %vm562 = vcmp.eq.f32.partialorder %v479, %v527
        %vm563 = vcmp.eq.f32.partialorder %v480, %v530
        %vm564 = vcmp.eq.f32.partialorder %v481, %v530
        %vm565 = vcmp.eq.f32.partialorder %v482, %v533
        %vm566 = vcmp.eq.f32.partialorder %v483, %v533
        %vm567 = vcmp.eq.f32.partialorder %v484, %v536
        %vm568 = vcmp.eq.f32.partialorder %v485, %v536
        %v569 = vsel %vm537, %v487, 256
        %v570 = vsel %vm538, %v488, 256
        %v571 = vsel %vm539, %v487, 256
        %v572 = vsel %vm540, %v488, 256
        %v573 = vsel %vm541, %v487, 256
        %v574 = vsel %vm542, %v488, 256
        %v575 = vsel %vm543, %v487, 256
        %v576 = vsel %vm544, %v488, 256
        %v577 = vsel %vm545, %v487, 256
        %v578 = vsel %vm546, %v488, 256
        %v579 = vsel %vm547, %v487, 256
        %v580 = vsel %vm548, %v488, 256
        %v581 = vsel %vm549, %v487, 256
        %v582 = vsel %vm550, %v488, 256
        %v583 = vsel %vm551, %v487, 256
        %v584 = vsel %vm552, %v488, 256
        %v585 = vsel %vm553, %v487, 256
        %v586 = vsel %vm554, %v488, 256
        %v587 = vsel %vm555, %v487, 256
        %v588 = vsel %vm556, %v488, 256
        %v589 = vsel %vm557, %v487, 256
        %v590 = vsel %vm558, %v488, 256
        %v591 = vsel %vm559, %v487, 256
        %v592 = vsel %vm560, %v488, 256
        %v593 = vsel %vm561, %v487, 256
        %v594 = vsel %vm562, %v488, 256
        %v595 = vsel %vm563, %v487, 256
        %v596 = vsel %vm564, %v488, 256
        %v597 = vsel %vm565, %v487, 256
        %v598 = vsel %vm566, %v488, 256
        %v599 = vsel %vm567, %v487, 256
        %v600 = vsel %vm568, %v488, 256
        %vm601 = vcmp.lt.s32.totalorder %v569, %v570
        %v602 = vsel %vm601, %v569, %v570
        %v603 = vand.u32 %v602, 65535
        %v604 = vshra.s32 %v602, 16
        %v605 = vcvt.s32.f32 %v603
        %v606 = vcvt.s32.f32 %v604
        %607 = vmin.xlane.f32.xlu0 %v606
        %v608 = vpop.xlane.xlu0 %607
        %vm609 = vcmp.eq.f32.partialorder %v606, %v608
        %v610 = vsel %vm609, %v605, inf
        %611 = vmin.xlane.f32.xlu0 %v610
        %v612 = vpop.xlane.xlu0 %611
        %v613 = vcvt.f32.s32 %v612
        %v614 = vcvt.f32.s32 %v608
        %v615 = vshll.u32 %v614, 16
        %v616 = vadd.s32 %v615, %v613
        %vm617 = vcmp.lt.s32.totalorder %v571, %v572
        %v618 = vsel %vm617, %v571, %v572
        %v619 = vand.u32 %v618, 65535
        %v620 = vshra.s32 %v618, 16
        %v621 = vcvt.s32.f32 %v619
        %v622 = vcvt.s32.f32 %v620
        %623 = vmin.xlane.f32.xlu0 %v622
        %v624 = vpop.xlane.xlu0 %623
        %vm625 = vcmp.eq.f32.partialorder %v622, %v624
        %v626 = vsel %vm625, %v621, inf
        %627 = vmin.xlane.f32.xlu0 %v626
        %v628 = vpop.xlane.xlu0 %627
        %v629 = vcvt.f32.s32 %v628
        %v630 = vcvt.f32.s32 %v624
        %v631 = vshll.u32 %v630, 16
        %v632 = vadd.s32 %v631, %v629
        %vm633 = vcmp.lt.s32.totalorder %v573, %v574
        %v634 = vsel %vm633, %v573, %v574
        %v635 = vand.u32 %v634, 65535
        %v636 = vshra.s32 %v634, 16
        %v637 = vcvt.s32.f32 %v635
        %v638 = vcvt.s32.f32 %v636
        %639 = vmin.xlane.f32.xlu0 %v638
        %v640 = vpop.xlane.xlu0 %639
        %vm641 = vcmp.eq.f32.partialorder %v638, %v640
        %v642 = vsel %vm641, %v637, inf
        %643 = vmin.xlane.f32.xlu0 %v642
        %v644 = vpop.xlane.xlu0 %643
        %v645 = vcvt.f32.s32 %v644
        %v646 = vcvt.f32.s32 %v640
        %v647 = vshll.u32 %v646, 16
        %v648 = vadd.s32 %v647, %v645
        %vm649 = vcmp.lt.s32.totalorder %v575, %v576
        %v650 = vsel %vm649, %v575, %v576
        %v651 = vand.u32 %v650, 65535
        %v652 = vshra.s32 %v650, 16
        %v653 = vcvt.s32.f32 %v651
        %v654 = vcvt.s32.f32 %v652
        %655 = vmin.xlane.f32.xlu0 %v654
        %v656 = vpop.xlane.xlu0 %655
        %vm657 = vcmp.eq.f32.partialorder %v654, %v656
        %v658 = vsel %vm657, %v653, inf
        %659 = vmin.xlane.f32.xlu0 %v658
        %v660 = vpop.xlane.xlu0 %659
        %v661 = vcvt.f32.s32 %v660
        %v662 = vcvt.f32.s32 %v656
        %v663 = vshll.u32 %v662, 16
        %v664 = vadd.s32 %v663, %v661
        %vm665 = vcmp.lt.s32.totalorder %v577, %v578
        %v666 = vsel %vm665, %v577, %v578
        %v667 = vand.u32 %v666, 65535
        %v668 = vshra.s32 %v666, 16
        %v669 = vcvt.s32.f32 %v667
        %v670 = vcvt.s32.f32 %v668
        %671 = vmin.xlane.f32.xlu0 %v670
        %v672 = vpop.xlane.xlu0 %671
        %vm673 = vcmp.eq.f32.partialorder %v670, %v672
        %v674 = vsel %vm673, %v669, inf
        %675 = vmin.xlane.f32.xlu0 %v674
        %v676 = vpop.xlane.xlu0 %675
        %v677 = vcvt.f32.s32 %v676
        %v678 = vcvt.f32.s32 %v672
        %v679 = vshll.u32 %v678, 16
        %v680 = vadd.s32 %v679, %v677
        %vm681 = vcmp.lt.s32.totalorder %v579, %v580
        %v682 = vsel %vm681, %v579, %v580
        %v683 = vand.u32 %v682, 65535
        %v684 = vshra.s32 %v682, 16
        %v685 = vcvt.s32.f32 %v683
        %v686 = vcvt.s32.f32 %v684
        %687 = vmin.xlane.f32.xlu0 %v686
        %v688 = vpop.xlane.xlu0 %687
        %vm689 = vcmp.eq.f32.partialorder %v686, %v688
        %v690 = vsel %vm689, %v685, inf
        %691 = vmin.xlane.f32.xlu0 %v690
        %v692 = vpop.xlane.xlu0 %691
        %v693 = vcvt.f32.s32 %v692
        %v694 = vcvt.f32.s32 %v688
        %v695 = vshll.u32 %v694, 16
        %v696 = vadd.s32 %v695, %v693
        %vm697 = vcmp.lt.s32.totalorder %v581, %v582
        %v698 = vsel %vm697, %v581, %v582
        %v699 = vand.u32 %v698, 65535
        %v700 = vshra.s32 %v698, 16
        %v701 = vcvt.s32.f32 %v699
        %v702 = vcvt.s32.f32 %v700
        %703 = vmin.xlane.f32.xlu0 %v702
        %v704 = vpop.xlane.xlu0 %703
        %vm705 = vcmp.eq.f32.partialorder %v702, %v704
        %v706 = vsel %vm705, %v701, inf
        %707 = vmin.xlane.f32.xlu0 %v706
        %v708 = vpop.xlane.xlu0 %707
        %v709 = vcvt.f32.s32 %v708
        %v710 = vcvt.f32.s32 %v704
        %v711 = vshll.u32 %v710, 16
        %v712 = vadd.s32 %v711, %v709
        %vm713 = vcmp.lt.s32.totalorder %v583, %v584
        %v714 = vsel %vm713, %v583, %v584
        %v715 = vand.u32 %v714, 65535
        %v716 = vshra.s32 %v714, 16
        %v717 = vcvt.s32.f32 %v715
        %v718 = vcvt.s32.f32 %v716
        %719 = vmin.xlane.f32.xlu0 %v718
        %v720 = vpop.xlane.xlu0 %719
        %vm721 = vcmp.eq.f32.partialorder %v718, %v720
        %v722 = vsel %vm721, %v717, inf
        %723 = vmin.xlane.f32.xlu0 %v722
        %v724 = vpop.xlane.xlu0 %723
        %v725 = vcvt.f32.s32 %v724
        %v726 = vcvt.f32.s32 %v720
        %v727 = vshll.u32 %v726, 16
        %v728 = vadd.s32 %v727, %v725
        %vm729 = vcmp.lt.s32.totalorder %v585, %v586
        %v730 = vsel %vm729, %v585, %v586
        %v731 = vand.u32 %v730, 65535
        %v732 = vshra.s32 %v730, 16
        %v733 = vcvt.s32.f32 %v731
        %v734 = vcvt.s32.f32 %v732
        %735 = vmin.xlane.f32.xlu0 %v734
        %v736 = vpop.xlane.xlu0 %735
        %vm737 = vcmp.eq.f32.partialorder %v734, %v736
        %v738 = vsel %vm737, %v733, inf
        %739 = vmin.xlane.f32.xlu0 %v738
        %v740 = vpop.xlane.xlu0 %739
        %v741 = vcvt.f32.s32 %v740
        %v742 = vcvt.f32.s32 %v736
        %v743 = vshll.u32 %v742, 16
        %v744 = vadd.s32 %v743, %v741
        %vm745 = vcmp.lt.s32.totalorder %v587, %v588
        %v746 = vsel %vm745, %v587, %v588
        %v747 = vand.u32 %v746, 65535
        %v748 = vshra.s32 %v746, 16
        %v749 = vcvt.s32.f32 %v747
        %v750 = vcvt.s32.f32 %v748
        %751 = vmin.xlane.f32.xlu0 %v750
        %v752 = vpop.xlane.xlu0 %751
        %vm753 = vcmp.eq.f32.partialorder %v750, %v752
        %v754 = vsel %vm753, %v749, inf
        %755 = vmin.xlane.f32.xlu0 %v754
        %v756 = vpop.xlane.xlu0 %755
        %v757 = vcvt.f32.s32 %v756
        %v758 = vcvt.f32.s32 %v752
        %v759 = vshll.u32 %v758, 16
        %v760 = vadd.s32 %v759, %v757
        %vm761 = vcmp.lt.s32.totalorder %v589, %v590
        %v762 = vsel %vm761, %v589, %v590
        %v763 = vand.u32 %v762, 65535
        %v764 = vshra.s32 %v762, 16
        %v765 = vcvt.s32.f32 %v763
        %v766 = vcvt.s32.f32 %v764
        %767 = vmin.xlane.f32.xlu0 %v766
        %v768 = vpop.xlane.xlu0 %767
        %vm769 = vcmp.eq.f32.partialorder %v766, %v768
        %v770 = vsel %vm769, %v765, inf
        %771 = vmin.xlane.f32.xlu0 %v770
        %v772 = vpop.xlane.xlu0 %771
        %v773 = vcvt.f32.s32 %v772
        %v774 = vcvt.f32.s32 %v768
        %v775 = vshll.u32 %v774, 16
        %v776 = vadd.s32 %v775, %v773
        %vm777 = vcmp.lt.s32.totalorder %v591, %v592
        %v778 = vsel %vm777, %v591, %v592
        %v779 = vand.u32 %v778, 65535
        %v780 = vshra.s32 %v778, 16
        %v781 = vcvt.s32.f32 %v779
        %v782 = vcvt.s32.f32 %v780
        %783 = vmin.xlane.f32.xlu0 %v782
        %v784 = vpop.xlane.xlu0 %783
        %vm785 = vcmp.eq.f32.partialorder %v782, %v784
        %v786 = vsel %vm785, %v781, inf
        %787 = vmin.xlane.f32.xlu0 %v786
        %v788 = vpop.xlane.xlu0 %787
        %v789 = vcvt.f32.s32 %v788
        %v790 = vcvt.f32.s32 %v784
        %v791 = vshll.u32 %v790, 16
        %v792 = vadd.s32 %v791, %v789
        %vm793 = vcmp.lt.s32.totalorder %v593, %v594
        %v794 = vsel %vm793, %v593, %v594
        %v795 = vand.u32 %v794, 65535
        %v796 = vshra.s32 %v794, 16
        %v797 = vcvt.s32.f32 %v795
        %v798 = vcvt.s32.f32 %v796
        %799 = vmin.xlane.f32.xlu0 %v798
        %v800 = vpop.xlane.xlu0 %799
        %vm801 = vcmp.eq.f32.partialorder %v798, %v800
        %v802 = vsel %vm801, %v797, inf
        %803 = vmin.xlane.f32.xlu0 %v802
        %v804 = vpop.xlane.xlu0 %803
        %v805 = vcvt.f32.s32 %v804
        %v806 = vcvt.f32.s32 %v800
        %v807 = vshll.u32 %v806, 16
        %v808 = vadd.s32 %v807, %v805
        %vm809 = vcmp.lt.s32.totalorder %v595, %v596
        %v810 = vsel %vm809, %v595, %v596
        %v811 = vand.u32 %v810, 65535
        %v812 = vshra.s32 %v810, 16
        %v813 = vcvt.s32.f32 %v811
        %v814 = vcvt.s32.f32 %v812
        %815 = vmin.xlane.f32.xlu0 %v814
        %v816 = vpop.xlane.xlu0 %815
        %vm817 = vcmp.eq.f32.partialorder %v814, %v816
        %v818 = vsel %vm817, %v813, inf
        %819 = vmin.xlane.f32.xlu0 %v818
        %v820 = vpop.xlane.xlu0 %819
        %v821 = vcvt.f32.s32 %v820
        %v822 = vcvt.f32.s32 %v816
        %v823 = vshll.u32 %v822, 16
        %v824 = vadd.s32 %v823, %v821
        %vm825 = vcmp.lt.s32.totalorder %v597, %v598
        %v826 = vsel %vm825, %v597, %v598
        %v827 = vand.u32 %v826, 65535
        %v828 = vshra.s32 %v826, 16
        %v829 = vcvt.s32.f32 %v827
        %v830 = vcvt.s32.f32 %v828
        %831 = vmin.xlane.f32.xlu0 %v830
        %v832 = vpop.xlane.xlu0 %831
        %vm833 = vcmp.eq.f32.partialorder %v830, %v832
        %v834 = vsel %vm833, %v829, inf
        %835 = vmin.xlane.f32.xlu0 %v834
        %v836 = vpop.xlane.xlu0 %835
        %v837 = vcvt.f32.s32 %v836
        %v838 = vcvt.f32.s32 %v832
        %v839 = vshll.u32 %v838, 16
        %v840 = vadd.s32 %v839, %v837
        %vm841 = vcmp.lt.s32.totalorder %v599, %v600
        %v842 = vsel %vm841, %v599, %v600
        %v843 = vand.u32 %v842, 65535
        %v844 = vshra.s32 %v842, 16
        %v845 = vcvt.s32.f32 %v843
        %v846 = vcvt.s32.f32 %v844
        %847 = vmin.xlane.f32.xlu0 %v846
        %v848 = vpop.xlane.xlu0 %847
        %vm849 = vcmp.eq.f32.partialorder %v846, %v848
        %v850 = vsel %vm849, %v845, inf
        %851 = vmin.xlane.f32.xlu0 %v850
        %v852 = vpop.xlane.xlu0 %851
        %v853 = vcvt.f32.s32 %v852
        %v854 = vcvt.f32.s32 %v848
        %v855 = vshll.u32 %v854, 16
        %v856 = vadd.s32 %v855, %v853
        %vm857 = vcmp.eq.s32.totalorder %v487, %v616
        %vm858 = vcmp.eq.s32.totalorder %v488, %v616
        %vm859 = vcmp.eq.s32.totalorder %v487, %v632
        %vm860 = vcmp.eq.s32.totalorder %v488, %v632
        %vm861 = vcmp.eq.s32.totalorder %v487, %v648
        %vm862 = vcmp.eq.s32.totalorder %v488, %v648
        %vm863 = vcmp.eq.s32.totalorder %v487, %v664
        %vm864 = vcmp.eq.s32.totalorder %v488, %v664
        %vm865 = vcmp.eq.s32.totalorder %v487, %v680
        %vm866 = vcmp.eq.s32.totalorder %v488, %v680
        %vm867 = vcmp.eq.s32.totalorder %v487, %v696
        %vm868 = vcmp.eq.s32.totalorder %v488, %v696
        %vm869 = vcmp.eq.s32.totalorder %v487, %v712
        %vm870 = vcmp.eq.s32.totalorder %v488, %v712
        %vm871 = vcmp.eq.s32.totalorder %v487, %v728
        %vm872 = vcmp.eq.s32.totalorder %v488, %v728
        %vm873 = vcmp.eq.s32.totalorder %v487, %v744
        %vm874 = vcmp.eq.s32.totalorder %v488, %v744
        %vm875 = vcmp.eq.s32.totalorder %v487, %v760
        %vm876 = vcmp.eq.s32.totalorder %v488, %v760
        %vm877 = vcmp.eq.s32.totalorder %v487, %v776
        %vm878 = vcmp.eq.s32.totalorder %v488, %v776
        %vm879 = vcmp.eq.s32.totalorder %v487, %v792
        %vm880 = vcmp.eq.s32.totalorder %v488, %v792
        %vm881 = vcmp.eq.s32.totalorder %v487, %v808
        %vm882 = vcmp.eq.s32.totalorder %v488, %v808
        %vm883 = vcmp.eq.s32.totalorder %v487, %v824
        %vm884 = vcmp.eq.s32.totalorder %v488, %v824
        %vm885 = vcmp.eq.s32.totalorder %v487, %v840
        %vm886 = vcmp.eq.s32.totalorder %v488, %v840
        %vm887 = vcmp.eq.s32.totalorder %v487, %v856
        %vm888 = vcmp.eq.s32.totalorder %v488, %v856
        %v889 = vsel %vm857, 1, 0
        %v890 = vsel %vm858, 1, 0
        %v891 = vsel %vm859, 1, 0
        %v892 = vsel %vm860, 1, 0
        %v893 = vsel %vm861, 1, 0
        %v894 = vsel %vm862, 1, 0
        %v895 = vsel %vm863, 1, 0
        %v896 = vsel %vm864, 1, 0
        %v897 = vsel %vm865, 1, 0
        %v898 = vsel %vm866, 1, 0
        %v899 = vsel %vm867, 1, 0
        %v900 = vsel %vm868, 1, 0
        %v901 = vsel %vm869, 1, 0
        %v902 = vsel %vm870, 1, 0
        %v903 = vsel %vm871, 1, 0
        %v904 = vsel %vm872, 1, 0
        %v905 = vsel %vm873, 1, 0
        %v906 = vsel %vm874, 1, 0
        %v907 = vsel %vm875, 1, 0
        %v908 = vsel %vm876, 1, 0
        %v909 = vsel %vm877, 1, 0
        %v910 = vsel %vm878, 1, 0
        %v911 = vsel %vm879, 1, 0
        %v912 = vsel %vm880, 1, 0
        %v913 = vsel %vm881, 1, 0
        %v914 = vsel %vm882, 1, 0
        %v915 = vsel %vm883, 1, 0
        %v916 = vsel %vm884, 1, 0
        %v917 = vsel %vm885, 1, 0
        %v918 = vsel %vm886, 1, 0
        %v919 = vsel %vm887, 1, 0
        %v920 = vsel %vm888, 1, 0
        %v921 = vcvt.s32.f32 %v889
        %v922 = vcvt.s32.f32 %v890
        %v923 = vcvt.s32.f32 %v891
        %v924 = vcvt.s32.f32 %v892
        %v925 = vcvt.s32.f32 %v893
        %v926 = vcvt.s32.f32 %v894
        %v927 = vcvt.s32.f32 %v895
        %v928 = vcvt.s32.f32 %v896
        %v929 = vcvt.s32.f32 %v897
        %v930 = vcvt.s32.f32 %v898
        %v931 = vcvt.s32.f32 %v899
        %v932 = vcvt.s32.f32 %v900
        %v933 = vcvt.s32.f32 %v901
        %v934 = vcvt.s32.f32 %v902
        %v935 = vcvt.s32.f32 %v903
        %v936 = vcvt.s32.f32 %v904
        %v937 = vcvt.s32.f32 %v905
        %v938 = vcvt.s32.f32 %v906
        %v939 = vcvt.s32.f32 %v907
        %v940 = vcvt.s32.f32 %v908
        %v941 = vcvt.s32.f32 %v909
        %v942 = vcvt.s32.f32 %v910
        %v943 = vcvt.s32.f32 %v911
        %v944 = vcvt.s32.f32 %v912
        %v945 = vcvt.s32.f32 %v913
        %v946 = vcvt.s32.f32 %v914
        %v947 = vcvt.s32.f32 %v915
        %v948 = vcvt.s32.f32 %v916
        %v949 = vcvt.s32.f32 %v917
        %v950 = vcvt.s32.f32 %v918
        %v951 = vcvt.s32.f32 %v919
        %v952 = vcvt.s32.f32 %v920
        %v953 = vpack.c.bf16 %v922, %v921
        %v954 = vpack.c.bf16 %v924, %v923
        %v955 = vpack.c.bf16 %v926, %v925
        %v956 = vpack.c.bf16 %v928, %v927
        %v957 = vpack.c.bf16 %v930, %v929
        %v958 = vpack.c.bf16 %v932, %v931
        %v959 = vpack.c.bf16 %v934, %v933
        %v960 = vpack.c.bf16 %v936, %v935
        %v961 = vpack.c.bf16 %v938, %v937
        %v962 = vpack.c.bf16 %v940, %v939
        %v963 = vpack.c.bf16 %v942, %v941
        %v964 = vpack.c.bf16 %v944, %v943
        %v965 = vpack.c.bf16 %v946, %v945
        %v966 = vpack.c.bf16 %v948, %v947
        %v967 = vpack.c.bf16 %v950, %v949
        %v968 = vpack.c.bf16 %v952, %v951
        %v969 = vsel %vm857, inf, %v454
        %v970 = vsel %vm858, inf, %v455
        %v971 = vsel %vm859, inf, %v456
        %v972 = vsel %vm860, inf, %v457
        %v973 = vsel %vm861, inf, %v458
        %v974 = vsel %vm862, inf, %v459
        %v975 = vsel %vm863, inf, %v460
        %v976 = vsel %vm864, inf, %v461
        %v977 = vsel %vm865, inf, %v462
        %v978 = vsel %vm866, inf, %v463
        %v979 = vsel %vm867, inf, %v464
        %v980 = vsel %vm868, inf, %v465
        %v981 = vsel %vm869, inf, %v466
        %v982 = vsel %vm870, inf, %v467
        %v983 = vsel %vm871, inf, %v468
        %v984 = vsel %vm872, inf, %v469
        %v985 = vsel %vm873, inf, %v470
        %v986 = vsel %vm874, inf, %v471
        %v987 = vsel %vm875, inf, %v472
        %v988 = vsel %vm876, inf, %v473
        %v989 = vsel %vm877, inf, %v474
        %v990 = vsel %vm878, inf, %v475
        %v991 = vsel %vm879, inf, %v476
        %v992 = vsel %vm880, inf, %v477
        %v993 = vsel %vm881, inf, %v478
        %v994 = vsel %vm882, inf, %v479
        %v995 = vsel %vm883, inf, %v480
        %v996 = vsel %vm884, inf, %v481
        %v997 = vsel %vm885, inf, %v482
        %v998 = vsel %vm886, inf, %v483
        %v999 = vsel %vm887, inf, %v484
        %v1000 = vsel %vm888, inf, %v485
        %v1001 = vmin.f32 %v969, %v970
        %1002 = vmin.xlane.f32.xlu0 %v1001
        %v1003 = vpop.xlane.xlu0 %1002
        %v1004 = vmin.f32 %v971, %v972
        %1005 = vmin.xlane.f32.xlu0 %v1004
        %v1006 = vpop.xlane.xlu0 %1005
        %v1007 = vmin.f32 %v973, %v974
        %1008 = vmin.xlane.f32.xlu0 %v1007
        %v1009 = vpop.xlane.xlu0 %1008
        %v1010 = vmin.f32 %v975, %v976
        %1011 = vmin.xlane.f32.xlu0 %v1010
        %v1012 = vpop.xlane.xlu0 %1011
        %v1013 = vmin.f32 %v977, %v978
        %1014 = vmin.xlane.f32.xlu0 %v1013
        %v1015 = vpop.xlane.xlu0 %1014
        %v1016 = vmin.f32 %v979, %v980
        %1017 = vmin.xlane.f32.xlu0 %v1016
        %v1018 = vpop.xlane.xlu0 %1017
        %v1019 = vmin.f32 %v981, %v982
        %1020 = vmin.xlane.f32.xlu0 %v1019
        %v1021 = vpop.xlane.xlu0 %1020
        %v1022 = vmin.f32 %v983, %v984
        %1023 = vmin.xlane.f32.xlu0 %v1022
        %v1024 = vpop.xlane.xlu0 %1023
        %v1025 = vmin.f32 %v985, %v986
        %1026 = vmin.xlane.f32.xlu0 %v1025
        %v1027 = vpop.xlane.xlu0 %1026
        %v1028 = vmin.f32 %v987, %v988
        %1029 = vmin.xlane.f32.xlu0 %v1028
        %v1030 = vpop.xlane.xlu0 %1029
        %v1031 = vmin.f32 %v989, %v990
        %1032 = vmin.xlane.f32.xlu0 %v1031
        %v1033 = vpop.xlane.xlu0 %1032
        %v1034 = vmin.f32 %v991, %v992
        %1035 = vmin.xlane.f32.xlu0 %v1034
        %v1036 = vpop.xlane.xlu0 %1035
        %v1037 = vmin.f32 %v993, %v994
        %1038 = vmin.xlane.f32.xlu0 %v1037
        %v1039 = vpop.xlane.xlu0 %1038
        %v1040 = vmin.f32 %v995, %v996
        %1041 = vmin.xlane.f32.xlu0 %v1040
        %v1042 = vpop.xlane.xlu0 %1041
        %v1043 = vmin.f32 %v997, %v998
        %1044 = vmin.xlane.f32.xlu0 %v1043
        %v1045 = vpop.xlane.xlu0 %1044
        %v1046 = vmin.f32 %v999, %v1000
        %1047 = vmin.xlane.f32.xlu0 %v1046
        %v1048 = vpop.xlane.xlu0 %1047
        %vm1049 = vcmp.eq.f32.partialorder %v969, %v1003
        %vm1050 = vcmp.eq.f32.partialorder %v970, %v1003
        %vm1051 = vcmp.eq.f32.partialorder %v971, %v1006
        %vm1052 = vcmp.eq.f32.partialorder %v972, %v1006
        %vm1053 = vcmp.eq.f32.partialorder %v973, %v1009
        %vm1054 = vcmp.eq.f32.partialorder %v974, %v1009
        %vm1055 = vcmp.eq.f32.partialorder %v975, %v1012
        %vm1056 = vcmp.eq.f32.partialorder %v976, %v1012
        %vm1057 = vcmp.eq.f32.partialorder %v977, %v1015
        %vm1058 = vcmp.eq.f32.partialorder %v978, %v1015
        %vm1059 = vcmp.eq.f32.partialorder %v979, %v1018
        %vm1060 = vcmp.eq.f32.partialorder %v980, %v1018
        %vm1061 = vcmp.eq.f32.partialorder %v981, %v1021
        %vm1062 = vcmp.eq.f32.partialorder %v982, %v1021
        %vm1063 = vcmp.eq.f32.partialorder %v983, %v1024
        %vm1064 = vcmp.eq.f32.partialorder %v984, %v1024
        %vm1065 = vcmp.eq.f32.partialorder %v985, %v1027
        %vm1066 = vcmp.eq.f32.partialorder %v986, %v1027
        %vm1067 = vcmp.eq.f32.partialorder %v987, %v1030
        %vm1068 = vcmp.eq.f32.partialorder %v988, %v1030
        %vm1069 = vcmp.eq.f32.partialorder %v989, %v1033
        %vm1070 = vcmp.eq.f32.partialorder %v990, %v1033
        %vm1071 = vcmp.eq.f32.partialorder %v991, %v1036
        %vm1072 = vcmp.eq.f32.partialorder %v992, %v1036
        %vm1073 = vcmp.eq.f32.partialorder %v993, %v1039
        %vm1074 = vcmp.eq.f32.partialorder %v994, %v1039
        %vm1075 = vcmp.eq.f32.partialorder %v995, %v1042
        %vm1076 = vcmp.eq.f32.partialorder %v996, %v1042
        %vm1077 = vcmp.eq.f32.partialorder %v997, %v1045
        %vm1078 = vcmp.eq.f32.partialorder %v998, %v1045
        %vm1079 = vcmp.eq.f32.partialorder %v999, %v1048
        %vm1080 = vcmp.eq.f32.partialorder %v1000, %v1048
        %v1081 = vsel %vm1049, %v487, 256
        %v1082 = vsel %vm1050, %v488, 256
        %v1083 = vsel %vm1051, %v487, 256
        %v1084 = vsel %vm1052, %v488, 256
        %v1085 = vsel %vm1053, %v487, 256
        %v1086 = vsel %vm1054, %v488, 256
        %v1087 = vsel %vm1055, %v487, 256
        %v1088 = vsel %vm1056, %v488, 256
        %v1089 = vsel %vm1057, %v487, 256
        %v1090 = vsel %vm1058, %v488, 256
        %v1091 = vsel %vm1059, %v487, 256
        %v1092 = vsel %vm1060, %v488, 256
        %v1093 = vsel %vm1061, %v487, 256
        %v1094 = vsel %vm1062, %v488, 256
        %v1095 = vsel %vm1063, %v487, 256
        %v1096 = vsel %vm1064, %v488, 256
        %v1097 = vsel %vm1065, %v487, 256
        %v1098 = vsel %vm1066, %v488, 256
        %v1099 = vsel %vm1067, %v487, 256
        %v1100 = vsel %vm1068, %v488, 256
        %v1101 = vsel %vm1069, %v487, 256
        %v1102 = vsel %vm1070, %v488, 256
        %v1103 = vsel %vm1071, %v487, 256
        %v1104 = vsel %vm1072, %v488, 256
        %v1105 = vsel %vm1073, %v487, 256
        %v1106 = vsel %vm1074, %v488, 256
        %v1107 = vsel %vm1075, %v487, 256
        %v1108 = vsel %vm1076, %v488, 256
        %v1109 = vsel %vm1077, %v487, 256
        %v1110 = vsel %vm1078, %v488, 256
        %v1111 = vsel %vm1079, %v487, 256
        %v1112 = vsel %vm1080, %v488, 256
        %vm1113 = vcmp.lt.s32.totalorder %v1081, %v1082
        %v1114 = vsel %vm1113, %v1081, %v1082
        %v1115 = vand.u32 %v1114, 65535
        %v1116 = vshra.s32 %v1114, 16
        %v1117 = vcvt.s32.f32 %v1115
        %v1118 = vcvt.s32.f32 %v1116
        %1119 = vmin.xlane.f32.xlu0 %v1118
        %v1120 = vpop.xlane.xlu0 %1119
        %vm1121 = vcmp.eq.f32.partialorder %v1118, %v1120
        %v1122 = vsel %vm1121, %v1117, inf
        %1123 = vmin.xlane.f32.xlu0 %v1122
        %v1124 = vpop.xlane.xlu0 %1123
        %v1125 = vcvt.f32.s32 %v1124
        %v1126 = vcvt.f32.s32 %v1120
        %v1127 = vshll.u32 %v1126, 16
        %v1128 = vadd.s32 %v1127, %v1125
        %vm1129 = vcmp.lt.s32.totalorder %v1083, %v1084
        %v1130 = vsel %vm1129, %v1083, %v1084
        %v1131 = vand.u32 %v1130, 65535
        %v1132 = vshra.s32 %v1130, 16
        %v1133 = vcvt.s32.f32 %v1131
        %v1134 = vcvt.s32.f32 %v1132
        %1135 = vmin.xlane.f32.xlu0 %v1134
        %v1136 = vpop.xlane.xlu0 %1135
        %vm1137 = vcmp.eq.f32.partialorder %v1134, %v1136
        %v1138 = vsel %vm1137, %v1133, inf
        %1139 = vmin.xlane.f32.xlu0 %v1138
        %v1140 = vpop.xlane.xlu0 %1139
        %v1141 = vcvt.f32.s32 %v1140
        %v1142 = vcvt.f32.s32 %v1136
        %v1143 = vshll.u32 %v1142, 16
        %v1144 = vadd.s32 %v1143, %v1141
        %vm1145 = vcmp.lt.s32.totalorder %v1085, %v1086
        %v1146 = vsel %vm1145, %v1085, %v1086
        %v1147 = vand.u32 %v1146, 65535
        %v1148 = vshra.s32 %v1146, 16
        %v1149 = vcvt.s32.f32 %v1147
        %v1150 = vcvt.s32.f32 %v1148
        %1151 = vmin.xlane.f32.xlu0 %v1150
        %v1152 = vpop.xlane.xlu0 %1151
        %vm1153 = vcmp.eq.f32.partialorder %v1150, %v1152
        %v1154 = vsel %vm1153, %v1149, inf
        %1155 = vmin.xlane.f32.xlu0 %v1154
        %v1156 = vpop.xlane.xlu0 %1155
        %v1157 = vcvt.f32.s32 %v1156
        %v1158 = vcvt.f32.s32 %v1152
        %v1159 = vshll.u32 %v1158, 16
        %v1160 = vadd.s32 %v1159, %v1157
        %vm1161 = vcmp.lt.s32.totalorder %v1087, %v1088
        %v1162 = vsel %vm1161, %v1087, %v1088
        %v1163 = vand.u32 %v1162, 65535
        %v1164 = vshra.s32 %v1162, 16
        %v1165 = vcvt.s32.f32 %v1163
        %v1166 = vcvt.s32.f32 %v1164
        %1167 = vmin.xlane.f32.xlu0 %v1166
        %v1168 = vpop.xlane.xlu0 %1167
        %vm1169 = vcmp.eq.f32.partialorder %v1166, %v1168
        %v1170 = vsel %vm1169, %v1165, inf
        %1171 = vmin.xlane.f32.xlu0 %v1170
        %v1172 = vpop.xlane.xlu0 %1171
        %v1173 = vcvt.f32.s32 %v1172
        %v1174 = vcvt.f32.s32 %v1168
        %v1175 = vshll.u32 %v1174, 16
        %v1176 = vadd.s32 %v1175, %v1173
        %vm1177 = vcmp.lt.s32.totalorder %v1089, %v1090
        %v1178 = vsel %vm1177, %v1089, %v1090
        %v1179 = vand.u32 %v1178, 65535
        %v1180 = vshra.s32 %v1178, 16
        %v1181 = vcvt.s32.f32 %v1179
        %v1182 = vcvt.s32.f32 %v1180
        %1183 = vmin.xlane.f32.xlu0 %v1182
        %v1184 = vpop.xlane.xlu0 %1183
        %vm1185 = vcmp.eq.f32.partialorder %v1182, %v1184
        %v1186 = vsel %vm1185, %v1181, inf
        %1187 = vmin.xlane.f32.xlu0 %v1186
        %v1188 = vpop.xlane.xlu0 %1187
        %v1189 = vcvt.f32.s32 %v1188
        %v1190 = vcvt.f32.s32 %v1184
        %v1191 = vshll.u32 %v1190, 16
        %v1192 = vadd.s32 %v1191, %v1189
        %vm1193 = vcmp.lt.s32.totalorder %v1091, %v1092
        %v1194 = vsel %vm1193, %v1091, %v1092
        %v1195 = vand.u32 %v1194, 65535
        %v1196 = vshra.s32 %v1194, 16
        %v1197 = vcvt.s32.f32 %v1195
        %v1198 = vcvt.s32.f32 %v1196
        %1199 = vmin.xlane.f32.xlu0 %v1198
        %v1200 = vpop.xlane.xlu0 %1199
        %vm1201 = vcmp.eq.f32.partialorder %v1198, %v1200
        %v1202 = vsel %vm1201, %v1197, inf
        %1203 = vmin.xlane.f32.xlu0 %v1202
        %v1204 = vpop.xlane.xlu0 %1203
        %v1205 = vcvt.f32.s32 %v1204
        %v1206 = vcvt.f32.s32 %v1200
        %v1207 = vshll.u32 %v1206, 16
        %v1208 = vadd.s32 %v1207, %v1205
        %vm1209 = vcmp.lt.s32.totalorder %v1093, %v1094
        %v1210 = vsel %vm1209, %v1093, %v1094
        %v1211 = vand.u32 %v1210, 65535
        %v1212 = vshra.s32 %v1210, 16
        %v1213 = vcvt.s32.f32 %v1211
        %v1214 = vcvt.s32.f32 %v1212
        %1215 = vmin.xlane.f32.xlu0 %v1214
        %v1216 = vpop.xlane.xlu0 %1215
        %vm1217 = vcmp.eq.f32.partialorder %v1214, %v1216
        %v1218 = vsel %vm1217, %v1213, inf
        %1219 = vmin.xlane.f32.xlu0 %v1218
        %v1220 = vpop.xlane.xlu0 %1219
        %v1221 = vcvt.f32.s32 %v1220
        %v1222 = vcvt.f32.s32 %v1216
        %v1223 = vshll.u32 %v1222, 16
        %v1224 = vadd.s32 %v1223, %v1221
        %vm1225 = vcmp.lt.s32.totalorder %v1095, %v1096
        %v1226 = vsel %vm1225, %v1095, %v1096
        %v1227 = vand.u32 %v1226, 65535
        %v1228 = vshra.s32 %v1226, 16
        %v1229 = vcvt.s32.f32 %v1227
        %v1230 = vcvt.s32.f32 %v1228
        %1231 = vmin.xlane.f32.xlu0 %v1230
        %v1232 = vpop.xlane.xlu0 %1231
        %vm1233 = vcmp.eq.f32.partialorder %v1230, %v1232
        %v1234 = vsel %vm1233, %v1229, inf
        %1235 = vmin.xlane.f32.xlu0 %v1234
        %v1236 = vpop.xlane.xlu0 %1235
        %v1237 = vcvt.f32.s32 %v1236
        %v1238 = vcvt.f32.s32 %v1232
        %v1239 = vshll.u32 %v1238, 16
        %v1240 = vadd.s32 %v1239, %v1237
        %vm1241 = vcmp.lt.s32.totalorder %v1097, %v1098
        %v1242 = vsel %vm1241, %v1097, %v1098
        %v1243 = vand.u32 %v1242, 65535
        %v1244 = vshra.s32 %v1242, 16
        %v1245 = vcvt.s32.f32 %v1243
        %v1246 = vcvt.s32.f32 %v1244
        %1247 = vmin.xlane.f32.xlu0 %v1246
        %v1248 = vpop.xlane.xlu0 %1247
        %vm1249 = vcmp.eq.f32.partialorder %v1246, %v1248
        %v1250 = vsel %vm1249, %v1245, inf
        %1251 = vmin.xlane.f32.xlu0 %v1250
        %v1252 = vpop.xlane.xlu0 %1251
        %v1253 = vcvt.f32.s32 %v1252
        %v1254 = vcvt.f32.s32 %v1248
        %v1255 = vshll.u32 %v1254, 16
        %v1256 = vadd.s32 %v1255, %v1253
        %vm1257 = vcmp.lt.s32.totalorder %v1099, %v1100
        %v1258 = vsel %vm1257, %v1099, %v1100
        %v1259 = vand.u32 %v1258, 65535
        %v1260 = vshra.s32 %v1258, 16
        %v1261 = vcvt.s32.f32 %v1259
        %v1262 = vcvt.s32.f32 %v1260
        %1263 = vmin.xlane.f32.xlu0 %v1262
        %v1264 = vpop.xlane.xlu0 %1263
        %vm1265 = vcmp.eq.f32.partialorder %v1262, %v1264
        %v1266 = vsel %vm1265, %v1261, inf
        %1267 = vmin.xlane.f32.xlu0 %v1266
        %v1268 = vpop.xlane.xlu0 %1267
        %v1269 = vcvt.f32.s32 %v1268
        %v1270 = vcvt.f32.s32 %v1264
        %v1271 = vshll.u32 %v1270, 16
        %v1272 = vadd.s32 %v1271, %v1269
        %vm1273 = vcmp.lt.s32.totalorder %v1101, %v1102
        %v1274 = vsel %vm1273, %v1101, %v1102
        %v1275 = vand.u32 %v1274, 65535
        %v1276 = vshra.s32 %v1274, 16
        %v1277 = vcvt.s32.f32 %v1275
        %v1278 = vcvt.s32.f32 %v1276
        %1279 = vmin.xlane.f32.xlu0 %v1278
        %v1280 = vpop.xlane.xlu0 %1279
        %vm1281 = vcmp.eq.f32.partialorder %v1278, %v1280
        %v1282 = vsel %vm1281, %v1277, inf
        %1283 = vmin.xlane.f32.xlu0 %v1282
        %v1284 = vpop.xlane.xlu0 %1283
        %v1285 = vcvt.f32.s32 %v1284
        %v1286 = vcvt.f32.s32 %v1280
        %v1287 = vshll.u32 %v1286, 16
        %v1288 = vadd.s32 %v1287, %v1285
        %vm1289 = vcmp.lt.s32.totalorder %v1103, %v1104
        %v1290 = vsel %vm1289, %v1103, %v1104
        %v1291 = vand.u32 %v1290, 65535
        %v1292 = vshra.s32 %v1290, 16
        %v1293 = vcvt.s32.f32 %v1291
        %v1294 = vcvt.s32.f32 %v1292
        %1295 = vmin.xlane.f32.xlu0 %v1294
        %v1296 = vpop.xlane.xlu0 %1295
        %vm1297 = vcmp.eq.f32.partialorder %v1294, %v1296
        %v1298 = vsel %vm1297, %v1293, inf
        %1299 = vmin.xlane.f32.xlu0 %v1298
        %v1300 = vpop.xlane.xlu0 %1299
        %v1301 = vcvt.f32.s32 %v1300
        %v1302 = vcvt.f32.s32 %v1296
        %v1303 = vshll.u32 %v1302, 16
        %v1304 = vadd.s32 %v1303, %v1301
        %vm1305 = vcmp.lt.s32.totalorder %v1105, %v1106
        %v1306 = vsel %vm1305, %v1105, %v1106
        %v1307 = vand.u32 %v1306, 65535
        %v1308 = vshra.s32 %v1306, 16
        %v1309 = vcvt.s32.f32 %v1307
        %v1310 = vcvt.s32.f32 %v1308
        %1311 = vmin.xlane.f32.xlu0 %v1310
        %v1312 = vpop.xlane.xlu0 %1311
        %vm1313 = vcmp.eq.f32.partialorder %v1310, %v1312
        %v1314 = vsel %vm1313, %v1309, inf
        %1315 = vmin.xlane.f32.xlu0 %v1314
        %v1316 = vpop.xlane.xlu0 %1315
        %v1317 = vcvt.f32.s32 %v1316
        %v1318 = vcvt.f32.s32 %v1312
        %v1319 = vshll.u32 %v1318, 16
        %v1320 = vadd.s32 %v1319, %v1317
        %vm1321 = vcmp.lt.s32.totalorder %v1107, %v1108
        %v1322 = vsel %vm1321, %v1107, %v1108
        %v1323 = vand.u32 %v1322, 65535
        %v1324 = vshra.s32 %v1322, 16
        %v1325 = vcvt.s32.f32 %v1323
        %v1326 = vcvt.s32.f32 %v1324
        %1327 = vmin.xlane.f32.xlu0 %v1326
        %v1328 = vpop.xlane.xlu0 %1327
        %vm1329 = vcmp.eq.f32.partialorder %v1326, %v1328
        %v1330 = vsel %vm1329, %v1325, inf
        %1331 = vmin.xlane.f32.xlu0 %v1330
        %v1332 = vpop.xlane.xlu0 %1331
        %v1333 = vcvt.f32.s32 %v1332
        %v1334 = vcvt.f32.s32 %v1328
        %v1335 = vshll.u32 %v1334, 16
        %v1336 = vadd.s32 %v1335, %v1333
        %vm1337 = vcmp.lt.s32.totalorder %v1109, %v1110
        %v1338 = vsel %vm1337, %v1109, %v1110
        %v1339 = vand.u32 %v1338, 65535
        %v1340 = vshra.s32 %v1338, 16
        %v1341 = vcvt.s32.f32 %v1339
        %v1342 = vcvt.s32.f32 %v1340
        %1343 = vmin.xlane.f32.xlu0 %v1342
        %v1344 = vpop.xlane.xlu0 %1343
        %vm1345 = vcmp.eq.f32.partialorder %v1342, %v1344
        %v1346 = vsel %vm1345, %v1341, inf
        %1347 = vmin.xlane.f32.xlu0 %v1346
        %v1348 = vpop.xlane.xlu0 %1347
        %v1349 = vcvt.f32.s32 %v1348
        %v1350 = vcvt.f32.s32 %v1344
        %v1351 = vshll.u32 %v1350, 16
        %v1352 = vadd.s32 %v1351, %v1349
        %vm1353 = vcmp.lt.s32.totalorder %v1111, %v1112
        %v1354 = vsel %vm1353, %v1111, %v1112
        %v1355 = vand.u32 %v1354, 65535
        %v1356 = vshra.s32 %v1354, 16
        %v1357 = vcvt.s32.f32 %v1355
        %v1358 = vcvt.s32.f32 %v1356
        %1359 = vmin.xlane.f32.xlu0 %v1358
        %v1360 = vpop.xlane.xlu0 %1359
        %vm1361 = vcmp.eq.f32.partialorder %v1358, %v1360
        %v1362 = vsel %vm1361, %v1357, inf
        %1363 = vmin.xlane.f32.xlu0 %v1362
        %v1364 = vpop.xlane.xlu0 %1363
        %v1365 = vcvt.f32.s32 %v1364
        %v1366 = vcvt.f32.s32 %v1360
        %v1367 = vshll.u32 %v1366, 16
        %v1368 = vadd.s32 %v1367, %v1365
        %vm1369 = vcmp.eq.s32.totalorder %v487, %v1128
        %vm1370 = vcmp.eq.s32.totalorder %v488, %v1128
        %vm1371 = vcmp.eq.s32.totalorder %v487, %v1144
        %vm1372 = vcmp.eq.s32.totalorder %v488, %v1144
        %vm1373 = vcmp.eq.s32.totalorder %v487, %v1160
        %vm1374 = vcmp.eq.s32.totalorder %v488, %v1160
        %vm1375 = vcmp.eq.s32.totalorder %v487, %v1176
        %vm1376 = vcmp.eq.s32.totalorder %v488, %v1176
        %vm1377 = vcmp.eq.s32.totalorder %v487, %v1192
        %vm1378 = vcmp.eq.s32.totalorder %v488, %v1192
        %vm1379 = vcmp.eq.s32.totalorder %v487, %v1208
        %vm1380 = vcmp.eq.s32.totalorder %v488, %v1208
        %vm1381 = vcmp.eq.s32.totalorder %v487, %v1224
        %vm1382 = vcmp.eq.s32.totalorder %v488, %v1224
        %vm1383 = vcmp.eq.s32.totalorder %v487, %v1240
        %vm1384 = vcmp.eq.s32.totalorder %v488, %v1240
        %vm1385 = vcmp.eq.s32.totalorder %v487, %v1256
        %vm1386 = vcmp.eq.s32.totalorder %v488, %v1256
        %vm1387 = vcmp.eq.s32.totalorder %v487, %v1272
        %vm1388 = vcmp.eq.s32.totalorder %v488, %v1272
        %vm1389 = vcmp.eq.s32.totalorder %v487, %v1288
        %vm1390 = vcmp.eq.s32.totalorder %v488, %v1288
        %vm1391 = vcmp.eq.s32.totalorder %v487, %v1304
        %vm1392 = vcmp.eq.s32.totalorder %v488, %v1304
        %vm1393 = vcmp.eq.s32.totalorder %v487, %v1320
        %vm1394 = vcmp.eq.s32.totalorder %v488, %v1320
        %vm1395 = vcmp.eq.s32.totalorder %v487, %v1336
        %vm1396 = vcmp.eq.s32.totalorder %v488, %v1336
        %vm1397 = vcmp.eq.s32.totalorder %v487, %v1352
        %vm1398 = vcmp.eq.s32.totalorder %v488, %v1352
        %vm1399 = vcmp.eq.s32.totalorder %v487, %v1368
        %vm1400 = vcmp.eq.s32.totalorder %v488, %v1368
        %v1401 = vsel %vm1369, 1, 0
        %v1402 = vsel %vm1370, 1, 0
        %v1403 = vsel %vm1371, 1, 0
        %v1404 = vsel %vm1372, 1, 0
        %v1405 = vsel %vm1373, 1, 0
        %v1406 = vsel %vm1374, 1, 0
        %v1407 = vsel %vm1375, 1, 0
        %v1408 = vsel %vm1376, 1, 0
        %v1409 = vsel %vm1377, 1, 0
        %v1410 = vsel %vm1378, 1, 0
        %v1411 = vsel %vm1379, 1, 0
        %v1412 = vsel %vm1380, 1, 0
        %v1413 = vsel %vm1381, 1, 0
        %v1414 = vsel %vm1382, 1, 0
        %v1415 = vsel %vm1383, 1, 0
        %v1416 = vsel %vm1384, 1, 0
        %v1417 = vsel %vm1385, 1, 0
        %v1418 = vsel %vm1386, 1, 0
        %v1419 = vsel %vm1387, 1, 0
        %v1420 = vsel %vm1388, 1, 0
        %v1421 = vsel %vm1389, 1, 0
        %v1422 = vsel %vm1390, 1, 0
        %v1423 = vsel %vm1391, 1, 0
        %v1424 = vsel %vm1392, 1, 0
        %v1425 = vsel %vm1393, 1, 0
        %v1426 = vsel %vm1394, 1, 0
        %v1427 = vsel %vm1395, 1, 0
        %v1428 = vsel %vm1396, 1, 0
        %v1429 = vsel %vm1397, 1, 0
        %v1430 = vsel %vm1398, 1, 0
        %v1431 = vsel %vm1399, 1, 0
        %v1432 = vsel %vm1400, 1, 0
        %v1433 = vcvt.s32.f32 %v1401
        %v1434 = vcvt.s32.f32 %v1402
        %v1435 = vcvt.s32.f32 %v1403
        %v1436 = vcvt.s32.f32 %v1404
        %v1437 = vcvt.s32.f32 %v1405
        %v1438 = vcvt.s32.f32 %v1406
        %v1439 = vcvt.s32.f32 %v1407
        %v1440 = vcvt.s32.f32 %v1408
        %v1441 = vcvt.s32.f32 %v1409
        %v1442 = vcvt.s32.f32 %v1410
        %v1443 = vcvt.s32.f32 %v1411
        %v1444 = vcvt.s32.f32 %v1412
        %v1445 = vcvt.s32.f32 %v1413
        %v1446 = vcvt.s32.f32 %v1414
        %v1447 = vcvt.s32.f32 %v1415
        %v1448 = vcvt.s32.f32 %v1416
        %v1449 = vcvt.s32.f32 %v1417
        %v1450 = vcvt.s32.f32 %v1418
        %v1451 = vcvt.s32.f32 %v1419
        %v1452 = vcvt.s32.f32 %v1420
        %v1453 = vcvt.s32.f32 %v1421
        %v1454 = vcvt.s32.f32 %v1422
        %v1455 = vcvt.s32.f32 %v1423
        %v1456 = vcvt.s32.f32 %v1424
        %v1457 = vcvt.s32.f32 %v1425
        %v1458 = vcvt.s32.f32 %v1426
        %v1459 = vcvt.s32.f32 %v1427
        %v1460 = vcvt.s32.f32 %v1428
        %v1461 = vcvt.s32.f32 %v1429
        %v1462 = vcvt.s32.f32 %v1430
        %v1463 = vcvt.s32.f32 %v1431
        %v1464 = vcvt.s32.f32 %v1432
        %v1465 = vpack.c.bf16 %v1434, %v1433
        %v1466 = vpack.c.bf16 %v1436, %v1435
        %v1467 = vpack.c.bf16 %v1438, %v1437
        %v1468 = vpack.c.bf16 %v1440, %v1439
        %v1469 = vpack.c.bf16 %v1442, %v1441
        %v1470 = vpack.c.bf16 %v1444, %v1443
        %v1471 = vpack.c.bf16 %v1446, %v1445
        %v1472 = vpack.c.bf16 %v1448, %v1447
        %v1473 = vpack.c.bf16 %v1450, %v1449
        %v1474 = vpack.c.bf16 %v1452, %v1451
        %v1475 = vpack.c.bf16 %v1454, %v1453
        %v1476 = vpack.c.bf16 %v1456, %v1455
        %v1477 = vpack.c.bf16 %v1458, %v1457
        %v1478 = vpack.c.bf16 %v1460, %v1459
        %v1479 = vpack.c.bf16 %v1462, %v1461
        %v1480 = vpack.c.bf16 %v1464, %v1463
        %v1481 = vsel %vm1369, inf, %v969
        %v1482 = vsel %vm1370, inf, %v970
        %v1483 = vsel %vm1371, inf, %v971
        %v1484 = vsel %vm1372, inf, %v972
        %v1485 = vsel %vm1373, inf, %v973
        %v1486 = vsel %vm1374, inf, %v974
        %v1487 = vsel %vm1375, inf, %v975
        %v1488 = vsel %vm1376, inf, %v976
        %v1489 = vsel %vm1377, inf, %v977
        %v1490 = vsel %vm1378, inf, %v978
        %v1491 = vsel %vm1379, inf, %v979
        %v1492 = vsel %vm1380, inf, %v980
        %v1493 = vsel %vm1381, inf, %v981
        %v1494 = vsel %vm1382, inf, %v982
        %v1495 = vsel %vm1383, inf, %v983
        %v1496 = vsel %vm1384, inf, %v984
        %v1497 = vsel %vm1385, inf, %v985
        %v1498 = vsel %vm1386, inf, %v986
        %v1499 = vsel %vm1387, inf, %v987
        %v1500 = vsel %vm1388, inf, %v988
        %v1501 = vsel %vm1389, inf, %v989
        %v1502 = vsel %vm1390, inf, %v990
        %v1503 = vsel %vm1391, inf, %v991
        %v1504 = vsel %vm1392, inf, %v992
        %v1505 = vsel %vm1393, inf, %v993
        %v1506 = vsel %vm1394, inf, %v994
        %v1507 = vsel %vm1395, inf, %v995
        %v1508 = vsel %vm1396, inf, %v996
        %v1509 = vsel %vm1397, inf, %v997
        %v1510 = vsel %vm1398, inf, %v998
        %v1511 = vsel %vm1399, inf, %v999
        %v1512 = vsel %vm1400, inf, %v1000
        %v1513 = vmin.f32 %v1481, %v1482
        %1514 = vmin.xlane.f32.xlu0 %v1513
        %v1515 = vpop.xlane.xlu0 %1514
        %v1516 = vmin.f32 %v1483, %v1484
        %1517 = vmin.xlane.f32.xlu0 %v1516
        %v1518 = vpop.xlane.xlu0 %1517
        %v1519 = vmin.f32 %v1485, %v1486
        %1520 = vmin.xlane.f32.xlu0 %v1519
        %v1521 = vpop.xlane.xlu0 %1520
        %v1522 = vmin.f32 %v1487, %v1488
        %1523 = vmin.xlane.f32.xlu0 %v1522
        %v1524 = vpop.xlane.xlu0 %1523
        %v1525 = vmin.f32 %v1489, %v1490
        %1526 = vmin.xlane.f32.xlu0 %v1525
        %v1527 = vpop.xlane.xlu0 %1526
        %v1528 = vmin.f32 %v1491, %v1492
        %1529 = vmin.xlane.f32.xlu0 %v1528
        %v1530 = vpop.xlane.xlu0 %1529
        %v1531 = vmin.f32 %v1493, %v1494
        %1532 = vmin.xlane.f32.xlu0 %v1531
        %v1533 = vpop.xlane.xlu0 %1532
        %v1534 = vmin.f32 %v1495, %v1496
        %1535 = vmin.xlane.f32.xlu0 %v1534
        %v1536 = vpop.xlane.xlu0 %1535
        %v1537 = vmin.f32 %v1497, %v1498
        %1538 = vmin.xlane.f32.xlu0 %v1537
        %v1539 = vpop.xlane.xlu0 %1538
        %v1540 = vmin.f32 %v1499, %v1500
        %1541 = vmin.xlane.f32.xlu0 %v1540
        %v1542 = vpop.xlane.xlu0 %1541
        %v1543 = vmin.f32 %v1501, %v1502
        %1544 = vmin.xlane.f32.xlu0 %v1543
        %v1545 = vpop.xlane.xlu0 %1544
        %v1546 = vmin.f32 %v1503, %v1504
        %1547 = vmin.xlane.f32.xlu0 %v1546
        %v1548 = vpop.xlane.xlu0 %1547
        %v1549 = vmin.f32 %v1505, %v1506
        %1550 = vmin.xlane.f32.xlu0 %v1549
        %v1551 = vpop.xlane.xlu0 %1550
        %v1552 = vmin.f32 %v1507, %v1508
        %1553 = vmin.xlane.f32.xlu0 %v1552
        %v1554 = vpop.xlane.xlu0 %1553
        %v1555 = vmin.f32 %v1509, %v1510
        %1556 = vmin.xlane.f32.xlu0 %v1555
        %v1557 = vpop.xlane.xlu0 %1556
        %v1558 = vmin.f32 %v1511, %v1512
        %1559 = vmin.xlane.f32.xlu0 %v1558
        %v1560 = vpop.xlane.xlu0 %1559
        %vm1561 = vcmp.eq.f32.partialorder %v1481, %v1515
        %vm1562 = vcmp.eq.f32.partialorder %v1482, %v1515
        %vm1563 = vcmp.eq.f32.partialorder %v1483, %v1518
        %vm1564 = vcmp.eq.f32.partialorder %v1484, %v1518
        %vm1565 = vcmp.eq.f32.partialorder %v1485, %v1521
        %vm1566 = vcmp.eq.f32.partialorder %v1486, %v1521
        %vm1567 = vcmp.eq.f32.partialorder %v1487, %v1524
        %vm1568 = vcmp.eq.f32.partialorder %v1488, %v1524
        %vm1569 = vcmp.eq.f32.partialorder %v1489, %v1527
        %vm1570 = vcmp.eq.f32.partialorder %v1490, %v1527
        %vm1571 = vcmp.eq.f32.partialorder %v1491, %v1530
        %vm1572 = vcmp.eq.f32.partialorder %v1492, %v1530
        %vm1573 = vcmp.eq.f32.partialorder %v1493, %v1533
        %vm1574 = vcmp.eq.f32.partialorder %v1494, %v1533
        %vm1575 = vcmp.eq.f32.partialorder %v1495, %v1536
        %vm1576 = vcmp.eq.f32.partialorder %v1496, %v1536
        %vm1577 = vcmp.eq.f32.partialorder %v1497, %v1539
        %vm1578 = vcmp.eq.f32.partialorder %v1498, %v1539
        %vm1579 = vcmp.eq.f32.partialorder %v1499, %v1542
        %vm1580 = vcmp.eq.f32.partialorder %v1500, %v1542
        %vm1581 = vcmp.eq.f32.partialorder %v1501, %v1545
        %vm1582 = vcmp.eq.f32.partialorder %v1502, %v1545
        %vm1583 = vcmp.eq.f32.partialorder %v1503, %v1548
        %vm1584 = vcmp.eq.f32.partialorder %v1504, %v1548
        %vm1585 = vcmp.eq.f32.partialorder %v1505, %v1551
        %vm1586 = vcmp.eq.f32.partialorder %v1506, %v1551
        %vm1587 = vcmp.eq.f32.partialorder %v1507, %v1554
        %vm1588 = vcmp.eq.f32.partialorder %v1508, %v1554
        %vm1589 = vcmp.eq.f32.partialorder %v1509, %v1557
        %vm1590 = vcmp.eq.f32.partialorder %v1510, %v1557
        %vm1591 = vcmp.eq.f32.partialorder %v1511, %v1560
        %vm1592 = vcmp.eq.f32.partialorder %v1512, %v1560
        %v1593 = vsel %vm1561, %v487, 256
        %v1594 = vsel %vm1562, %v488, 256
        %v1595 = vsel %vm1563, %v487, 256
        %v1596 = vsel %vm1564, %v488, 256
        %v1597 = vsel %vm1565, %v487, 256
        %v1598 = vsel %vm1566, %v488, 256
        %v1599 = vsel %vm1567, %v487, 256
        %v1600 = vsel %vm1568, %v488, 256
        %v1601 = vsel %vm1569, %v487, 256
        %v1602 = vsel %vm1570, %v488, 256
        %v1603 = vsel %vm1571, %v487, 256
        %v1604 = vsel %vm1572, %v488, 256
        %v1605 = vsel %vm1573, %v487, 256
        %v1606 = vsel %vm1574, %v488, 256
        %v1607 = vsel %vm1575, %v487, 256
        %v1608 = vsel %vm1576, %v488, 256
        %v1609 = vsel %vm1577, %v487, 256
        %v1610 = vsel %vm1578, %v488, 256
        %v1611 = vsel %vm1579, %v487, 256
        %v1612 = vsel %vm1580, %v488, 256
        %v1613 = vsel %vm1581, %v487, 256
        %v1614 = vsel %vm1582, %v488, 256
        %v1615 = vsel %vm1583, %v487, 256
        %v1616 = vsel %vm1584, %v488, 256
        %v1617 = vsel %vm1585, %v487, 256
        %v1618 = vsel %vm1586, %v488, 256
        %v1619 = vsel %vm1587, %v487, 256
        %v1620 = vsel %vm1588, %v488, 256
        %v1621 = vsel %vm1589, %v487, 256
        %v1622 = vsel %vm1590, %v488, 256
        %v1623 = vsel %vm1591, %v487, 256
        %v1624 = vsel %vm1592, %v488, 256
        %vm1625 = vcmp.lt.s32.totalorder %v1593, %v1594
        %v1626 = vsel %vm1625, %v1593, %v1594
        %v1627 = vand.u32 %v1626, 65535
        %v1628 = vshra.s32 %v1626, 16
        %v1629 = vcvt.s32.f32 %v1627
        %v1630 = vcvt.s32.f32 %v1628
        %1631 = vmin.xlane.f32.xlu0 %v1630
        %v1632 = vpop.xlane.xlu0 %1631
        %vm1633 = vcmp.eq.f32.partialorder %v1630, %v1632
        %v1634 = vsel %vm1633, %v1629, inf
        %1635 = vmin.xlane.f32.xlu0 %v1634
        %v1636 = vpop.xlane.xlu0 %1635
        %v1637 = vcvt.f32.s32 %v1636
        %v1638 = vcvt.f32.s32 %v1632
        %v1639 = vshll.u32 %v1638, 16
        %v1640 = vadd.s32 %v1639, %v1637
        %vm1641 = vcmp.lt.s32.totalorder %v1595, %v1596
        %v1642 = vsel %vm1641, %v1595, %v1596
        %v1643 = vand.u32 %v1642, 65535
        %v1644 = vshra.s32 %v1642, 16
        %v1645 = vcvt.s32.f32 %v1643
        %v1646 = vcvt.s32.f32 %v1644
        %1647 = vmin.xlane.f32.xlu0 %v1646
        %v1648 = vpop.xlane.xlu0 %1647
        %vm1649 = vcmp.eq.f32.partialorder %v1646, %v1648
        %v1650 = vsel %vm1649, %v1645, inf
        %1651 = vmin.xlane.f32.xlu0 %v1650
        %v1652 = vpop.xlane.xlu0 %1651
        %v1653 = vcvt.f32.s32 %v1652
        %v1654 = vcvt.f32.s32 %v1648
        %v1655 = vshll.u32 %v1654, 16
        %v1656 = vadd.s32 %v1655, %v1653
        %vm1657 = vcmp.lt.s32.totalorder %v1597, %v1598
        %v1658 = vsel %vm1657, %v1597, %v1598
        %v1659 = vand.u32 %v1658, 65535
        %v1660 = vshra.s32 %v1658, 16
        %v1661 = vcvt.s32.f32 %v1659
        %v1662 = vcvt.s32.f32 %v1660
        %1663 = vmin.xlane.f32.xlu0 %v1662
        %v1664 = vpop.xlane.xlu0 %1663
        %vm1665 = vcmp.eq.f32.partialorder %v1662, %v1664
        %v1666 = vsel %vm1665, %v1661, inf
        %1667 = vmin.xlane.f32.xlu0 %v1666
        %v1668 = vpop.xlane.xlu0 %1667
        %v1669 = vcvt.f32.s32 %v1668
        %v1670 = vcvt.f32.s32 %v1664
        %v1671 = vshll.u32 %v1670, 16
        %v1672 = vadd.s32 %v1671, %v1669
        %vm1673 = vcmp.lt.s32.totalorder %v1599, %v1600
        %v1674 = vsel %vm1673, %v1599, %v1600
        %v1675 = vand.u32 %v1674, 65535
        %v1676 = vshra.s32 %v1674, 16
        %v1677 = vcvt.s32.f32 %v1675
        %v1678 = vcvt.s32.f32 %v1676
        %1679 = vmin.xlane.f32.xlu0 %v1678
        %v1680 = vpop.xlane.xlu0 %1679
        %vm1681 = vcmp.eq.f32.partialorder %v1678, %v1680
        %v1682 = vsel %vm1681, %v1677, inf
        %1683 = vmin.xlane.f32.xlu0 %v1682
        %v1684 = vpop.xlane.xlu0 %1683
        %v1685 = vcvt.f32.s32 %v1684
        %v1686 = vcvt.f32.s32 %v1680
        %v1687 = vshll.u32 %v1686, 16
        %v1688 = vadd.s32 %v1687, %v1685
        %vm1689 = vcmp.lt.s32.totalorder %v1601, %v1602
        %v1690 = vsel %vm1689, %v1601, %v1602
        %v1691 = vand.u32 %v1690, 65535
        %v1692 = vshra.s32 %v1690, 16
        %v1693 = vcvt.s32.f32 %v1691
        %v1694 = vcvt.s32.f32 %v1692
        %1695 = vmin.xlane.f32.xlu0 %v1694
        %v1696 = vpop.xlane.xlu0 %1695
        %vm1697 = vcmp.eq.f32.partialorder %v1694, %v1696
        %v1698 = vsel %vm1697, %v1693, inf
        %1699 = vmin.xlane.f32.xlu0 %v1698
        %v1700 = vpop.xlane.xlu0 %1699
        %v1701 = vcvt.f32.s32 %v1700
        %v1702 = vcvt.f32.s32 %v1696
        %v1703 = vshll.u32 %v1702, 16
        %v1704 = vadd.s32 %v1703, %v1701
        %vm1705 = vcmp.lt.s32.totalorder %v1603, %v1604
        %v1706 = vsel %vm1705, %v1603, %v1604
        %v1707 = vand.u32 %v1706, 65535
        %v1708 = vshra.s32 %v1706, 16
        %v1709 = vcvt.s32.f32 %v1707
        %v1710 = vcvt.s32.f32 %v1708
        %1711 = vmin.xlane.f32.xlu0 %v1710
        %v1712 = vpop.xlane.xlu0 %1711
        %vm1713 = vcmp.eq.f32.partialorder %v1710, %v1712
        %v1714 = vsel %vm1713, %v1709, inf
        %1715 = vmin.xlane.f32.xlu0 %v1714
        %v1716 = vpop.xlane.xlu0 %1715
        %v1717 = vcvt.f32.s32 %v1716
        %v1718 = vcvt.f32.s32 %v1712
        %v1719 = vshll.u32 %v1718, 16
        %v1720 = vadd.s32 %v1719, %v1717
        %vm1721 = vcmp.lt.s32.totalorder %v1605, %v1606
        %v1722 = vsel %vm1721, %v1605, %v1606
        %v1723 = vand.u32 %v1722, 65535
        %v1724 = vshra.s32 %v1722, 16
        %v1725 = vcvt.s32.f32 %v1723
        %v1726 = vcvt.s32.f32 %v1724
        %1727 = vmin.xlane.f32.xlu0 %v1726
        %v1728 = vpop.xlane.xlu0 %1727
        %vm1729 = vcmp.eq.f32.partialorder %v1726, %v1728
        %v1730 = vsel %vm1729, %v1725, inf
        %1731 = vmin.xlane.f32.xlu0 %v1730
        %v1732 = vpop.xlane.xlu0 %1731
        %v1733 = vcvt.f32.s32 %v1732
        %v1734 = vcvt.f32.s32 %v1728
        %v1735 = vshll.u32 %v1734, 16
        %v1736 = vadd.s32 %v1735, %v1733
        %vm1737 = vcmp.lt.s32.totalorder %v1607, %v1608
        %v1738 = vsel %vm1737, %v1607, %v1608
        %v1739 = vand.u32 %v1738, 65535
        %v1740 = vshra.s32 %v1738, 16
        %v1741 = vcvt.s32.f32 %v1739
        %v1742 = vcvt.s32.f32 %v1740
        %1743 = vmin.xlane.f32.xlu0 %v1742
        %v1744 = vpop.xlane.xlu0 %1743
        %vm1745 = vcmp.eq.f32.partialorder %v1742, %v1744
        %v1746 = vsel %vm1745, %v1741, inf
        %1747 = vmin.xlane.f32.xlu0 %v1746
        %v1748 = vpop.xlane.xlu0 %1747
        %v1749 = vcvt.f32.s32 %v1748
        %v1750 = vcvt.f32.s32 %v1744
        %v1751 = vshll.u32 %v1750, 16
        %v1752 = vadd.s32 %v1751, %v1749
        %vm1753 = vcmp.lt.s32.totalorder %v1609, %v1610
        %v1754 = vsel %vm1753, %v1609, %v1610
        %v1755 = vand.u32 %v1754, 65535
        %v1756 = vshra.s32 %v1754, 16
        %v1757 = vcvt.s32.f32 %v1755
        %v1758 = vcvt.s32.f32 %v1756
        %1759 = vmin.xlane.f32.xlu0 %v1758
        %v1760 = vpop.xlane.xlu0 %1759
        %vm1761 = vcmp.eq.f32.partialorder %v1758, %v1760
        %v1762 = vsel %vm1761, %v1757, inf
        %1763 = vmin.xlane.f32.xlu0 %v1762
        %v1764 = vpop.xlane.xlu0 %1763
        %v1765 = vcvt.f32.s32 %v1764
        %v1766 = vcvt.f32.s32 %v1760
        %v1767 = vshll.u32 %v1766, 16
        %v1768 = vadd.s32 %v1767, %v1765
        %vm1769 = vcmp.lt.s32.totalorder %v1611, %v1612
        %v1770 = vsel %vm1769, %v1611, %v1612
        %v1771 = vand.u32 %v1770, 65535
        %v1772 = vshra.s32 %v1770, 16
        %v1773 = vcvt.s32.f32 %v1771
        %v1774 = vcvt.s32.f32 %v1772
        %1775 = vmin.xlane.f32.xlu0 %v1774
        %v1776 = vpop.xlane.xlu0 %1775
        %vm1777 = vcmp.eq.f32.partialorder %v1774, %v1776
        %v1778 = vsel %vm1777, %v1773, inf
        %1779 = vmin.xlane.f32.xlu0 %v1778
        %v1780 = vpop.xlane.xlu0 %1779
        %v1781 = vcvt.f32.s32 %v1780
        %v1782 = vcvt.f32.s32 %v1776
        %v1783 = vshll.u32 %v1782, 16
        %v1784 = vadd.s32 %v1783, %v1781
        %vm1785 = vcmp.lt.s32.totalorder %v1613, %v1614
        %v1786 = vsel %vm1785, %v1613, %v1614
        %v1787 = vand.u32 %v1786, 65535
        %v1788 = vshra.s32 %v1786, 16
        %v1789 = vcvt.s32.f32 %v1787
        %v1790 = vcvt.s32.f32 %v1788
        %1791 = vmin.xlane.f32.xlu0 %v1790
        %v1792 = vpop.xlane.xlu0 %1791
        %vm1793 = vcmp.eq.f32.partialorder %v1790, %v1792
        %v1794 = vsel %vm1793, %v1789, inf
        %1795 = vmin.xlane.f32.xlu0 %v1794
        %v1796 = vpop.xlane.xlu0 %1795
        %v1797 = vcvt.f32.s32 %v1796
        %v1798 = vcvt.f32.s32 %v1792
        %v1799 = vshll.u32 %v1798, 16
        %v1800 = vadd.s32 %v1799, %v1797
        %vm1801 = vcmp.lt.s32.totalorder %v1615, %v1616
        %v1802 = vsel %vm1801, %v1615, %v1616
        %v1803 = vand.u32 %v1802, 65535
        %v1804 = vshra.s32 %v1802, 16
        %v1805 = vcvt.s32.f32 %v1803
        %v1806 = vcvt.s32.f32 %v1804
        %1807 = vmin.xlane.f32.xlu0 %v1806
        %v1808 = vpop.xlane.xlu0 %1807
        %vm1809 = vcmp.eq.f32.partialorder %v1806, %v1808
        %v1810 = vsel %vm1809, %v1805, inf
        %1811 = vmin.xlane.f32.xlu0 %v1810
        %v1812 = vpop.xlane.xlu0 %1811
        %v1813 = vcvt.f32.s32 %v1812
        %v1814 = vcvt.f32.s32 %v1808
        %v1815 = vshll.u32 %v1814, 16
        %v1816 = vadd.s32 %v1815, %v1813
        %vm1817 = vcmp.lt.s32.totalorder %v1617, %v1618
        %v1818 = vsel %vm1817, %v1617, %v1618
        %v1819 = vand.u32 %v1818, 65535
        %v1820 = vshra.s32 %v1818, 16
        %v1821 = vcvt.s32.f32 %v1819
        %v1822 = vcvt.s32.f32 %v1820
        %1823 = vmin.xlane.f32.xlu0 %v1822
        %v1824 = vpop.xlane.xlu0 %1823
        %vm1825 = vcmp.eq.f32.partialorder %v1822, %v1824
        %v1826 = vsel %vm1825, %v1821, inf
        %1827 = vmin.xlane.f32.xlu0 %v1826
        %v1828 = vpop.xlane.xlu0 %1827
        %v1829 = vcvt.f32.s32 %v1828
        %v1830 = vcvt.f32.s32 %v1824
        %v1831 = vshll.u32 %v1830, 16
        %v1832 = vadd.s32 %v1831, %v1829
        %vm1833 = vcmp.lt.s32.totalorder %v1619, %v1620
        %v1834 = vsel %vm1833, %v1619, %v1620
        %v1835 = vand.u32 %v1834, 65535
        %v1836 = vshra.s32 %v1834, 16
        %v1837 = vcvt.s32.f32 %v1835
        %v1838 = vcvt.s32.f32 %v1836
        %1839 = vmin.xlane.f32.xlu0 %v1838
        %v1840 = vpop.xlane.xlu0 %1839
        %vm1841 = vcmp.eq.f32.partialorder %v1838, %v1840
        %v1842 = vsel %vm1841, %v1837, inf
        %1843 = vmin.xlane.f32.xlu0 %v1842
        %v1844 = vpop.xlane.xlu0 %1843
        %v1845 = vcvt.f32.s32 %v1844
        %v1846 = vcvt.f32.s32 %v1840
        %v1847 = vshll.u32 %v1846, 16
        %v1848 = vadd.s32 %v1847, %v1845
        %vm1849 = vcmp.lt.s32.totalorder %v1621, %v1622
        %v1850 = vsel %vm1849, %v1621, %v1622
        %v1851 = vand.u32 %v1850, 65535
        %v1852 = vshra.s32 %v1850, 16
        %v1853 = vcvt.s32.f32 %v1851
        %v1854 = vcvt.s32.f32 %v1852
        %1855 = vmin.xlane.f32.xlu0 %v1854
        %v1856 = vpop.xlane.xlu0 %1855
        %vm1857 = vcmp.eq.f32.partialorder %v1854, %v1856
        %v1858 = vsel %vm1857, %v1853, inf
        %1859 = vmin.xlane.f32.xlu0 %v1858
        %v1860 = vpop.xlane.xlu0 %1859
        %v1861 = vcvt.f32.s32 %v1860
        %v1862 = vcvt.f32.s32 %v1856
        %v1863 = vshll.u32 %v1862, 16
        %v1864 = vadd.s32 %v1863, %v1861
        %vm1865 = vcmp.lt.s32.totalorder %v1623, %v1624
        %v1866 = vsel %vm1865, %v1623, %v1624
        %v1867 = vand.u32 %v1866, 65535
        %v1868 = vshra.s32 %v1866, 16
        %v1869 = vcvt.s32.f32 %v1867
        %v1870 = vcvt.s32.f32 %v1868
        %1871 = vmin.xlane.f32.xlu0 %v1870
        %v1872 = vpop.xlane.xlu0 %1871
        %vm1873 = vcmp.eq.f32.partialorder %v1870, %v1872
        %v1874 = vsel %vm1873, %v1869, inf
        %1875 = vmin.xlane.f32.xlu0 %v1874
        %v1876 = vpop.xlane.xlu0 %1875
        %v1877 = vcvt.f32.s32 %v1876
        %v1878 = vcvt.f32.s32 %v1872
        %v1879 = vshll.u32 %v1878, 16
        %v1880 = vadd.s32 %v1879, %v1877
        %vm1881 = vcmp.eq.s32.totalorder %v487, %v1640
        %vm1882 = vcmp.eq.s32.totalorder %v488, %v1640
        %vm1883 = vcmp.eq.s32.totalorder %v487, %v1656
        %vm1884 = vcmp.eq.s32.totalorder %v488, %v1656
        %vm1885 = vcmp.eq.s32.totalorder %v487, %v1672
        %vm1886 = vcmp.eq.s32.totalorder %v488, %v1672
        %vm1887 = vcmp.eq.s32.totalorder %v487, %v1688
        %vm1888 = vcmp.eq.s32.totalorder %v488, %v1688
        %vm1889 = vcmp.eq.s32.totalorder %v487, %v1704
        %vm1890 = vcmp.eq.s32.totalorder %v488, %v1704
        %vm1891 = vcmp.eq.s32.totalorder %v487, %v1720
        %vm1892 = vcmp.eq.s32.totalorder %v488, %v1720
        %vm1893 = vcmp.eq.s32.totalorder %v487, %v1736
        %vm1894 = vcmp.eq.s32.totalorder %v488, %v1736
        %vm1895 = vcmp.eq.s32.totalorder %v487, %v1752
        %vm1896 = vcmp.eq.s32.totalorder %v488, %v1752
        %vm1897 = vcmp.eq.s32.totalorder %v487, %v1768
        %vm1898 = vcmp.eq.s32.totalorder %v488, %v1768
        %vm1899 = vcmp.eq.s32.totalorder %v487, %v1784
        %vm1900 = vcmp.eq.s32.totalorder %v488, %v1784
        %vm1901 = vcmp.eq.s32.totalorder %v487, %v1800
        %vm1902 = vcmp.eq.s32.totalorder %v488, %v1800
        %vm1903 = vcmp.eq.s32.totalorder %v487, %v1816
        %vm1904 = vcmp.eq.s32.totalorder %v488, %v1816
        %vm1905 = vcmp.eq.s32.totalorder %v487, %v1832
        %vm1906 = vcmp.eq.s32.totalorder %v488, %v1832
        %vm1907 = vcmp.eq.s32.totalorder %v487, %v1848
        %vm1908 = vcmp.eq.s32.totalorder %v488, %v1848
        %vm1909 = vcmp.eq.s32.totalorder %v487, %v1864
        %vm1910 = vcmp.eq.s32.totalorder %v488, %v1864
        %vm1911 = vcmp.eq.s32.totalorder %v487, %v1880
        %vm1912 = vcmp.eq.s32.totalorder %v488, %v1880
        %v1913 = vsel %vm1881, 1, 0
        %v1914 = vsel %vm1882, 1, 0
        %v1915 = vsel %vm1883, 1, 0
        %v1916 = vsel %vm1884, 1, 0
        %v1917 = vsel %vm1885, 1, 0
        %v1918 = vsel %vm1886, 1, 0
        %v1919 = vsel %vm1887, 1, 0
        %v1920 = vsel %vm1888, 1, 0
        %v1921 = vsel %vm1889, 1, 0
        %v1922 = vsel %vm1890, 1, 0
        %v1923 = vsel %vm1891, 1, 0
        %v1924 = vsel %vm1892, 1, 0
        %v1925 = vsel %vm1893, 1, 0
        %v1926 = vsel %vm1894, 1, 0
        %v1927 = vsel %vm1895, 1, 0
        %v1928 = vsel %vm1896, 1, 0
        %v1929 = vsel %vm1897, 1, 0
        %v1930 = vsel %vm1898, 1, 0
        %v1931 = vsel %vm1899, 1, 0
        %v1932 = vsel %vm1900, 1, 0
        %v1933 = vsel %vm1901, 1, 0
        %v1934 = vsel %vm1902, 1, 0
        %v1935 = vsel %vm1903, 1, 0
        %v1936 = vsel %vm1904, 1, 0
        %v1937 = vsel %vm1905, 1, 0
        %v1938 = vsel %vm1906, 1, 0
        %v1939 = vsel %vm1907, 1, 0
        %v1940 = vsel %vm1908, 1, 0
        %v1941 = vsel %vm1909, 1, 0
        %v1942 = vsel %vm1910, 1, 0
        %v1943 = vsel %vm1911, 1, 0
        %v1944 = vsel %vm1912, 1, 0
        %v1945 = vcvt.s32.f32 %v1913
        %v1946 = vcvt.s32.f32 %v1914
        %v1947 = vcvt.s32.f32 %v1915
        %v1948 = vcvt.s32.f32 %v1916
        %v1949 = vcvt.s32.f32 %v1917
        %v1950 = vcvt.s32.f32 %v1918
        %v1951 = vcvt.s32.f32 %v1919
        %v1952 = vcvt.s32.f32 %v1920
        %v1953 = vcvt.s32.f32 %v1921
        %v1954 = vcvt.s32.f32 %v1922
        %v1955 = vcvt.s32.f32 %v1923
        %v1956 = vcvt.s32.f32 %v1924
        %v1957 = vcvt.s32.f32 %v1925
        %v1958 = vcvt.s32.f32 %v1926
        %v1959 = vcvt.s32.f32 %v1927
        %v1960 = vcvt.s32.f32 %v1928
        %v1961 = vcvt.s32.f32 %v1929
        %v1962 = vcvt.s32.f32 %v1930
        %v1963 = vcvt.s32.f32 %v1931
        %v1964 = vcvt.s32.f32 %v1932
        %v1965 = vcvt.s32.f32 %v1933
        %v1966 = vcvt.s32.f32 %v1934
        %v1967 = vcvt.s32.f32 %v1935
        %v1968 = vcvt.s32.f32 %v1936
        %v1969 = vcvt.s32.f32 %v1937
        %v1970 = vcvt.s32.f32 %v1938
        %v1971 = vcvt.s32.f32 %v1939
        %v1972 = vcvt.s32.f32 %v1940
        %v1973 = vcvt.s32.f32 %v1941
        %v1974 = vcvt.s32.f32 %v1942
        %v1975 = vcvt.s32.f32 %v1943
        %v1976 = vcvt.s32.f32 %v1944
        %v1977 = vpack.c.bf16 %v1946, %v1945
        %v1978 = vpack.c.bf16 %v1948, %v1947
        %v1979 = vpack.c.bf16 %v1950, %v1949
        %v1980 = vpack.c.bf16 %v1952, %v1951
        %v1981 = vpack.c.bf16 %v1954, %v1953
        %v1982 = vpack.c.bf16 %v1956, %v1955
        %v1983 = vpack.c.bf16 %v1958, %v1957
        %v1984 = vpack.c.bf16 %v1960, %v1959
        %v1985 = vpack.c.bf16 %v1962, %v1961
        %v1986 = vpack.c.bf16 %v1964, %v1963
        %v1987 = vpack.c.bf16 %v1966, %v1965
        %v1988 = vpack.c.bf16 %v1968, %v1967
        %v1989 = vpack.c.bf16 %v1970, %v1969
        %v1990 = vpack.c.bf16 %v1972, %v1971
        %v1991 = vpack.c.bf16 %v1974, %v1973
        %v1992 = vpack.c.bf16 %v1976, %v1975
        %v1993 = vsel %vm1881, inf, %v1481
        %v1994 = vsel %vm1882, inf, %v1482
        %v1995 = vsel %vm1883, inf, %v1483
        %v1996 = vsel %vm1884, inf, %v1484
        %v1997 = vsel %vm1885, inf, %v1485
        %v1998 = vsel %vm1886, inf, %v1486
        %v1999 = vsel %vm1887, inf, %v1487
        %v2000 = vsel %vm1888, inf, %v1488
        %v2001 = vsel %vm1889, inf, %v1489
        %v2002 = vsel %vm1890, inf, %v1490
        %v2003 = vsel %vm1891, inf, %v1491
        %v2004 = vsel %vm1892, inf, %v1492
        %v2005 = vsel %vm1893, inf, %v1493
        %v2006 = vsel %vm1894, inf, %v1494
        %v2007 = vsel %vm1895, inf, %v1495
        %v2008 = vsel %vm1896, inf, %v1496
        %v2009 = vsel %vm1897, inf, %v1497
        %v2010 = vsel %vm1898, inf, %v1498
        %v2011 = vsel %vm1899, inf, %v1499
        %v2012 = vsel %vm1900, inf, %v1500
        %v2013 = vsel %vm1901, inf, %v1501
        %v2014 = vsel %vm1902, inf, %v1502
        %v2015 = vsel %vm1903, inf, %v1503
        %v2016 = vsel %vm1904, inf, %v1504
        %v2017 = vsel %vm1905, inf, %v1505
        %v2018 = vsel %vm1906, inf, %v1506
        %v2019 = vsel %vm1907, inf, %v1507
        %v2020 = vsel %vm1908, inf, %v1508
        %v2021 = vsel %vm1909, inf, %v1509
        %v2022 = vsel %vm1910, inf, %v1510
        %v2023 = vsel %vm1911, inf, %v1511
        %v2024 = vsel %vm1912, inf, %v1512
        %v2025 = vmin.f32 %v1993, %v1994
        %2026 = vmin.xlane.f32.xlu0 %v2025
        %v2027 = vpop.xlane.xlu0 %2026
        %v2028 = vmin.f32 %v1995, %v1996
        %2029 = vmin.xlane.f32.xlu0 %v2028
        %v2030 = vpop.xlane.xlu0 %2029
        %v2031 = vmin.f32 %v1997, %v1998
        %2032 = vmin.xlane.f32.xlu0 %v2031
        %v2033 = vpop.xlane.xlu0 %2032
        %v2034 = vmin.f32 %v1999, %v2000
        %2035 = vmin.xlane.f32.xlu0 %v2034
        %v2036 = vpop.xlane.xlu0 %2035
        %v2037 = vmin.f32 %v2001, %v2002
        %2038 = vmin.xlane.f32.xlu0 %v2037
        %v2039 = vpop.xlane.xlu0 %2038
        %v2040 = vmin.f32 %v2003, %v2004
        %2041 = vmin.xlane.f32.xlu0 %v2040
        %v2042 = vpop.xlane.xlu0 %2041
        %v2043 = vmin.f32 %v2005, %v2006
        %2044 = vmin.xlane.f32.xlu0 %v2043
        %v2045 = vpop.xlane.xlu0 %2044
        %v2046 = vmin.f32 %v2007, %v2008
        %2047 = vmin.xlane.f32.xlu0 %v2046
        %v2048 = vpop.xlane.xlu0 %2047
        %v2049 = vmin.f32 %v2009, %v2010
        %2050 = vmin.xlane.f32.xlu0 %v2049
        %v2051 = vpop.xlane.xlu0 %2050
        %v2052 = vmin.f32 %v2011, %v2012
        %2053 = vmin.xlane.f32.xlu0 %v2052
        %v2054 = vpop.xlane.xlu0 %2053
        %v2055 = vmin.f32 %v2013, %v2014
        %2056 = vmin.xlane.f32.xlu0 %v2055
        %v2057 = vpop.xlane.xlu0 %2056
        %v2058 = vmin.f32 %v2015, %v2016
        %2059 = vmin.xlane.f32.xlu0 %v2058
        %v2060 = vpop.xlane.xlu0 %2059
        %v2061 = vmin.f32 %v2017, %v2018
        %2062 = vmin.xlane.f32.xlu0 %v2061
        %v2063 = vpop.xlane.xlu0 %2062
        %v2064 = vmin.f32 %v2019, %v2020
        %2065 = vmin.xlane.f32.xlu0 %v2064
        %v2066 = vpop.xlane.xlu0 %2065
        %v2067 = vmin.f32 %v2021, %v2022
        %2068 = vmin.xlane.f32.xlu0 %v2067
        %v2069 = vpop.xlane.xlu0 %2068
        %v2070 = vmin.f32 %v2023, %v2024
        %2071 = vmin.xlane.f32.xlu0 %v2070
        %v2072 = vpop.xlane.xlu0 %2071
        %vm2073 = vcmp.eq.f32.partialorder %v1993, %v2027
        %vm2074 = vcmp.eq.f32.partialorder %v1994, %v2027
        %vm2075 = vcmp.eq.f32.partialorder %v1995, %v2030
        %vm2076 = vcmp.eq.f32.partialorder %v1996, %v2030
        %vm2077 = vcmp.eq.f32.partialorder %v1997, %v2033
        %vm2078 = vcmp.eq.f32.partialorder %v1998, %v2033
        %vm2079 = vcmp.eq.f32.partialorder %v1999, %v2036
        %vm2080 = vcmp.eq.f32.partialorder %v2000, %v2036
        %vm2081 = vcmp.eq.f32.partialorder %v2001, %v2039
        %vm2082 = vcmp.eq.f32.partialorder %v2002, %v2039
        %vm2083 = vcmp.eq.f32.partialorder %v2003, %v2042
        %vm2084 = vcmp.eq.f32.partialorder %v2004, %v2042
        %vm2085 = vcmp.eq.f32.partialorder %v2005, %v2045
        %vm2086 = vcmp.eq.f32.partialorder %v2006, %v2045
        %vm2087 = vcmp.eq.f32.partialorder %v2007, %v2048
        %vm2088 = vcmp.eq.f32.partialorder %v2008, %v2048
        %vm2089 = vcmp.eq.f32.partialorder %v2009, %v2051
        %vm2090 = vcmp.eq.f32.partialorder %v2010, %v2051
        %vm2091 = vcmp.eq.f32.partialorder %v2011, %v2054
        %vm2092 = vcmp.eq.f32.partialorder %v2012, %v2054
        %vm2093 = vcmp.eq.f32.partialorder %v2013, %v2057
        %vm2094 = vcmp.eq.f32.partialorder %v2014, %v2057
        %vm2095 = vcmp.eq.f32.partialorder %v2015, %v2060
        %vm2096 = vcmp.eq.f32.partialorder %v2016, %v2060
        %vm2097 = vcmp.eq.f32.partialorder %v2017, %v2063
        %vm2098 = vcmp.eq.f32.partialorder %v2018, %v2063
        %vm2099 = vcmp.eq.f32.partialorder %v2019, %v2066
        %vm2100 = vcmp.eq.f32.partialorder %v2020, %v2066
        %vm2101 = vcmp.eq.f32.partialorder %v2021, %v2069
        %vm2102 = vcmp.eq.f32.partialorder %v2022, %v2069
        %vm2103 = vcmp.eq.f32.partialorder %v2023, %v2072
        %vm2104 = vcmp.eq.f32.partialorder %v2024, %v2072
        %v2105 = vsel %vm2073, %v487, 256
        %v2106 = vsel %vm2074, %v488, 256
        %v2107 = vsel %vm2075, %v487, 256
        %v2108 = vsel %vm2076, %v488, 256
        %v2109 = vsel %vm2077, %v487, 256
        %v2110 = vsel %vm2078, %v488, 256
        %v2111 = vsel %vm2079, %v487, 256
        %v2112 = vsel %vm2080, %v488, 256
        %v2113 = vsel %vm2081, %v487, 256
        %v2114 = vsel %vm2082, %v488, 256
        %v2115 = vsel %vm2083, %v487, 256
        %v2116 = vsel %vm2084, %v488, 256
        %v2117 = vsel %vm2085, %v487, 256
        %v2118 = vsel %vm2086, %v488, 256
        %v2119 = vsel %vm2087, %v487, 256
        %v2120 = vsel %vm2088, %v488, 256
        %v2121 = vsel %vm2089, %v487, 256
        %v2122 = vsel %vm2090, %v488, 256
        %v2123 = vsel %vm2091, %v487, 256
        %v2124 = vsel %vm2092, %v488, 256
        %v2125 = vsel %vm2093, %v487, 256
        %v2126 = vsel %vm2094, %v488, 256
        %v2127 = vsel %vm2095, %v487, 256
        %v2128 = vsel %vm2096, %v488, 256
        %v2129 = vsel %vm2097, %v487, 256
        %v2130 = vsel %vm2098, %v488, 256
        %v2131 = vsel %vm2099, %v487, 256
        %v2132 = vsel %vm2100, %v488, 256
        %v2133 = vsel %vm2101, %v487, 256
        %v2134 = vsel %vm2102, %v488, 256
        %v2135 = vsel %vm2103, %v487, 256
        %v2136 = vsel %vm2104, %v488, 256
        %vm2137 = vcmp.lt.s32.totalorder %v2105, %v2106
        %v2138 = vsel %vm2137, %v2105, %v2106
        %v2139 = vand.u32 %v2138, 65535
        %v2140 = vshra.s32 %v2138, 16
        %v2141 = vcvt.s32.f32 %v2139
        %v2142 = vcvt.s32.f32 %v2140
        %2143 = vmin.xlane.f32.xlu0 %v2142
        %v2144 = vpop.xlane.xlu0 %2143
        %vm2145 = vcmp.eq.f32.partialorder %v2142, %v2144
        %v2146 = vsel %vm2145, %v2141, inf
        %2147 = vmin.xlane.f32.xlu0 %v2146
        %v2148 = vpop.xlane.xlu0 %2147
        %v2149 = vcvt.f32.s32 %v2148
        %v2150 = vcvt.f32.s32 %v2144
        %v2151 = vshll.u32 %v2150, 16
        %v2152 = vadd.s32 %v2151, %v2149
        %vm2153 = vcmp.lt.s32.totalorder %v2107, %v2108
        %v2154 = vsel %vm2153, %v2107, %v2108
        %v2155 = vand.u32 %v2154, 65535
        %v2156 = vshra.s32 %v2154, 16
        %v2157 = vcvt.s32.f32 %v2155
        %v2158 = vcvt.s32.f32 %v2156
        %2159 = vmin.xlane.f32.xlu0 %v2158
        %v2160 = vpop.xlane.xlu0 %2159
        %vm2161 = vcmp.eq.f32.partialorder %v2158, %v2160
        %v2162 = vsel %vm2161, %v2157, inf
        %2163 = vmin.xlane.f32.xlu0 %v2162
        %v2164 = vpop.xlane.xlu0 %2163
        %v2165 = vcvt.f32.s32 %v2164
        %v2166 = vcvt.f32.s32 %v2160
        %v2167 = vshll.u32 %v2166, 16
        %v2168 = vadd.s32 %v2167, %v2165
        %vm2169 = vcmp.lt.s32.totalorder %v2109, %v2110
        %v2170 = vsel %vm2169, %v2109, %v2110
        %v2171 = vand.u32 %v2170, 65535
        %v2172 = vshra.s32 %v2170, 16
        %v2173 = vcvt.s32.f32 %v2171
        %v2174 = vcvt.s32.f32 %v2172
        %2175 = vmin.xlane.f32.xlu0 %v2174
        %v2176 = vpop.xlane.xlu0 %2175
        %vm2177 = vcmp.eq.f32.partialorder %v2174, %v2176
        %v2178 = vsel %vm2177, %v2173, inf
        %2179 = vmin.xlane.f32.xlu0 %v2178
        %v2180 = vpop.xlane.xlu0 %2179
        %v2181 = vcvt.f32.s32 %v2180
        %v2182 = vcvt.f32.s32 %v2176
        %v2183 = vshll.u32 %v2182, 16
        %v2184 = vadd.s32 %v2183, %v2181
        %vm2185 = vcmp.lt.s32.totalorder %v2111, %v2112
        %v2186 = vsel %vm2185, %v2111, %v2112
        %v2187 = vand.u32 %v2186, 65535
        %v2188 = vshra.s32 %v2186, 16
        %v2189 = vcvt.s32.f32 %v2187
        %v2190 = vcvt.s32.f32 %v2188
        %2191 = vmin.xlane.f32.xlu0 %v2190
        %v2192 = vpop.xlane.xlu0 %2191
        %vm2193 = vcmp.eq.f32.partialorder %v2190, %v2192
        %v2194 = vsel %vm2193, %v2189, inf
        %2195 = vmin.xlane.f32.xlu0 %v2194
        %v2196 = vpop.xlane.xlu0 %2195
        %v2197 = vcvt.f32.s32 %v2196
        %v2198 = vcvt.f32.s32 %v2192
        %v2199 = vshll.u32 %v2198, 16
        %v2200 = vadd.s32 %v2199, %v2197
        %vm2201 = vcmp.lt.s32.totalorder %v2113, %v2114
        %v2202 = vsel %vm2201, %v2113, %v2114
        %v2203 = vand.u32 %v2202, 65535
        %v2204 = vshra.s32 %v2202, 16
        %v2205 = vcvt.s32.f32 %v2203
        %v2206 = vcvt.s32.f32 %v2204
        %2207 = vmin.xlane.f32.xlu0 %v2206
        %v2208 = vpop.xlane.xlu0 %2207
        %vm2209 = vcmp.eq.f32.partialorder %v2206, %v2208
        %v2210 = vsel %vm2209, %v2205, inf
        %2211 = vmin.xlane.f32.xlu0 %v2210
        %v2212 = vpop.xlane.xlu0 %2211
        %v2213 = vcvt.f32.s32 %v2212
        %v2214 = vcvt.f32.s32 %v2208
        %v2215 = vshll.u32 %v2214, 16
        %v2216 = vadd.s32 %v2215, %v2213
        %vm2217 = vcmp.lt.s32.totalorder %v2115, %v2116
        %v2218 = vsel %vm2217, %v2115, %v2116
        %v2219 = vand.u32 %v2218, 65535
        %v2220 = vshra.s32 %v2218, 16
        %v2221 = vcvt.s32.f32 %v2219
        %v2222 = vcvt.s32.f32 %v2220
        %2223 = vmin.xlane.f32.xlu0 %v2222
        %v2224 = vpop.xlane.xlu0 %2223
        %vm2225 = vcmp.eq.f32.partialorder %v2222, %v2224
        %v2226 = vsel %vm2225, %v2221, inf
        %2227 = vmin.xlane.f32.xlu0 %v2226
        %v2228 = vpop.xlane.xlu0 %2227
        %v2229 = vcvt.f32.s32 %v2228
        %v2230 = vcvt.f32.s32 %v2224
        %v2231 = vshll.u32 %v2230, 16
        %v2232 = vadd.s32 %v2231, %v2229
        %vm2233 = vcmp.lt.s32.totalorder %v2117, %v2118
        %v2234 = vsel %vm2233, %v2117, %v2118
        %v2235 = vand.u32 %v2234, 65535
        %v2236 = vshra.s32 %v2234, 16
        %v2237 = vcvt.s32.f32 %v2235
        %v2238 = vcvt.s32.f32 %v2236
        %2239 = vmin.xlane.f32.xlu0 %v2238
        %v2240 = vpop.xlane.xlu0 %2239
        %vm2241 = vcmp.eq.f32.partialorder %v2238, %v2240
        %v2242 = vsel %vm2241, %v2237, inf
        %2243 = vmin.xlane.f32.xlu0 %v2242
        %v2244 = vpop.xlane.xlu0 %2243
        %v2245 = vcvt.f32.s32 %v2244
        %v2246 = vcvt.f32.s32 %v2240
        %v2247 = vshll.u32 %v2246, 16
        %v2248 = vadd.s32 %v2247, %v2245
        %vm2249 = vcmp.lt.s32.totalorder %v2119, %v2120
        %v2250 = vsel %vm2249, %v2119, %v2120
        %v2251 = vand.u32 %v2250, 65535
        %v2252 = vshra.s32 %v2250, 16
        %v2253 = vcvt.s32.f32 %v2251
        %v2254 = vcvt.s32.f32 %v2252
        %2255 = vmin.xlane.f32.xlu0 %v2254
        %v2256 = vpop.xlane.xlu0 %2255
        %vm2257 = vcmp.eq.f32.partialorder %v2254, %v2256
        %v2258 = vsel %vm2257, %v2253, inf
        %2259 = vmin.xlane.f32.xlu0 %v2258
        %v2260 = vpop.xlane.xlu0 %2259
        %v2261 = vcvt.f32.s32 %v2260
        %v2262 = vcvt.f32.s32 %v2256
        %v2263 = vshll.u32 %v2262, 16
        %v2264 = vadd.s32 %v2263, %v2261
        %vm2265 = vcmp.lt.s32.totalorder %v2121, %v2122
        %v2266 = vsel %vm2265, %v2121, %v2122
        %v2267 = vand.u32 %v2266, 65535
        %v2268 = vshra.s32 %v2266, 16
        %v2269 = vcvt.s32.f32 %v2267
        %v2270 = vcvt.s32.f32 %v2268
        %2271 = vmin.xlane.f32.xlu0 %v2270
        %v2272 = vpop.xlane.xlu0 %2271
        %vm2273 = vcmp.eq.f32.partialorder %v2270, %v2272
        %v2274 = vsel %vm2273, %v2269, inf
        %2275 = vmin.xlane.f32.xlu0 %v2274
        %v2276 = vpop.xlane.xlu0 %2275
        %v2277 = vcvt.f32.s32 %v2276
        %v2278 = vcvt.f32.s32 %v2272
        %v2279 = vshll.u32 %v2278, 16
        %v2280 = vadd.s32 %v2279, %v2277
        %vm2281 = vcmp.lt.s32.totalorder %v2123, %v2124
        %v2282 = vsel %vm2281, %v2123, %v2124
        %v2283 = vand.u32 %v2282, 65535
        %v2284 = vshra.s32 %v2282, 16
        %v2285 = vcvt.s32.f32 %v2283
        %v2286 = vcvt.s32.f32 %v2284
        %2287 = vmin.xlane.f32.xlu0 %v2286
        %v2288 = vpop.xlane.xlu0 %2287
        %vm2289 = vcmp.eq.f32.partialorder %v2286, %v2288
        %v2290 = vsel %vm2289, %v2285, inf
        %2291 = vmin.xlane.f32.xlu0 %v2290
        %v2292 = vpop.xlane.xlu0 %2291
        %v2293 = vcvt.f32.s32 %v2292
        %v2294 = vcvt.f32.s32 %v2288
        %v2295 = vshll.u32 %v2294, 16
        %v2296 = vadd.s32 %v2295, %v2293
        %vm2297 = vcmp.lt.s32.totalorder %v2125, %v2126
        %v2298 = vsel %vm2297, %v2125, %v2126
        %v2299 = vand.u32 %v2298, 65535
        %v2300 = vshra.s32 %v2298, 16
        %v2301 = vcvt.s32.f32 %v2299
        %v2302 = vcvt.s32.f32 %v2300
        %2303 = vmin.xlane.f32.xlu0 %v2302
        %v2304 = vpop.xlane.xlu0 %2303
        %vm2305 = vcmp.eq.f32.partialorder %v2302, %v2304
        %v2306 = vsel %vm2305, %v2301, inf
        %2307 = vmin.xlane.f32.xlu0 %v2306
        %v2308 = vpop.xlane.xlu0 %2307
        %v2309 = vcvt.f32.s32 %v2308
        %v2310 = vcvt.f32.s32 %v2304
        %v2311 = vshll.u32 %v2310, 16
        %v2312 = vadd.s32 %v2311, %v2309
        %vm2313 = vcmp.lt.s32.totalorder %v2127, %v2128
        %v2314 = vsel %vm2313, %v2127, %v2128
        %v2315 = vand.u32 %v2314, 65535
        %v2316 = vshra.s32 %v2314, 16
        %v2317 = vcvt.s32.f32 %v2315
        %v2318 = vcvt.s32.f32 %v2316
        %2319 = vmin.xlane.f32.xlu0 %v2318
        %v2320 = vpop.xlane.xlu0 %2319
        %vm2321 = vcmp.eq.f32.partialorder %v2318, %v2320
        %v2322 = vsel %vm2321, %v2317, inf
        %2323 = vmin.xlane.f32.xlu0 %v2322
        %v2324 = vpop.xlane.xlu0 %2323
        %v2325 = vcvt.f32.s32 %v2324
        %v2326 = vcvt.f32.s32 %v2320
        %v2327 = vshll.u32 %v2326, 16
        %v2328 = vadd.s32 %v2327, %v2325
        %vm2329 = vcmp.lt.s32.totalorder %v2129, %v2130
        %v2330 = vsel %vm2329, %v2129, %v2130
        %v2331 = vand.u32 %v2330, 65535
        %v2332 = vshra.s32 %v2330, 16
        %v2333 = vcvt.s32.f32 %v2331
        %v2334 = vcvt.s32.f32 %v2332
        %2335 = vmin.xlane.f32.xlu0 %v2334
        %v2336 = vpop.xlane.xlu0 %2335
        %vm2337 = vcmp.eq.f32.partialorder %v2334, %v2336
        %v2338 = vsel %vm2337, %v2333, inf
        %2339 = vmin.xlane.f32.xlu0 %v2338
        %v2340 = vpop.xlane.xlu0 %2339
        %v2341 = vcvt.f32.s32 %v2340
        %v2342 = vcvt.f32.s32 %v2336
        %v2343 = vshll.u32 %v2342, 16
        %v2344 = vadd.s32 %v2343, %v2341
        %vm2345 = vcmp.lt.s32.totalorder %v2131, %v2132
        %v2346 = vsel %vm2345, %v2131, %v2132
        %v2347 = vand.u32 %v2346, 65535
        %v2348 = vshra.s32 %v2346, 16
        %v2349 = vcvt.s32.f32 %v2347
        %v2350 = vcvt.s32.f32 %v2348
        %2351 = vmin.xlane.f32.xlu0 %v2350
        %v2352 = vpop.xlane.xlu0 %2351
        %vm2353 = vcmp.eq.f32.partialorder %v2350, %v2352
        %v2354 = vsel %vm2353, %v2349, inf
        %2355 = vmin.xlane.f32.xlu0 %v2354
        %v2356 = vpop.xlane.xlu0 %2355
        %v2357 = vcvt.f32.s32 %v2356
        %v2358 = vcvt.f32.s32 %v2352
        %v2359 = vshll.u32 %v2358, 16
        %v2360 = vadd.s32 %v2359, %v2357
        %vm2361 = vcmp.lt.s32.totalorder %v2133, %v2134
        %v2362 = vsel %vm2361, %v2133, %v2134
        %v2363 = vand.u32 %v2362, 65535
        %v2364 = vshra.s32 %v2362, 16
        %v2365 = vcvt.s32.f32 %v2363
        %v2366 = vcvt.s32.f32 %v2364
        %2367 = vmin.xlane.f32.xlu0 %v2366
        %v2368 = vpop.xlane.xlu0 %2367
        %vm2369 = vcmp.eq.f32.partialorder %v2366, %v2368
        %v2370 = vsel %vm2369, %v2365, inf
        %2371 = vmin.xlane.f32.xlu0 %v2370
        %v2372 = vpop.xlane.xlu0 %2371
        %v2373 = vcvt.f32.s32 %v2372
        %v2374 = vcvt.f32.s32 %v2368
        %v2375 = vshll.u32 %v2374, 16
        %v2376 = vadd.s32 %v2375, %v2373
        %vm2377 = vcmp.lt.s32.totalorder %v2135, %v2136
        %v2378 = vsel %vm2377, %v2135, %v2136
        %v2379 = vand.u32 %v2378, 65535
        %v2380 = vshra.s32 %v2378, 16
        %v2381 = vcvt.s32.f32 %v2379
        %v2382 = vcvt.s32.f32 %v2380
        %2383 = vmin.xlane.f32.xlu0 %v2382
        %v2384 = vpop.xlane.xlu0 %2383
        %vm2385 = vcmp.eq.f32.partialorder %v2382, %v2384
        %v2386 = vsel %vm2385, %v2381, inf
        %2387 = vmin.xlane.f32.xlu0 %v2386
        %v2388 = vpop.xlane.xlu0 %2387
        %v2389 = vcvt.f32.s32 %v2388
        %v2390 = vcvt.f32.s32 %v2384
        %v2391 = vshll.u32 %v2390, 16
        %v2392 = vadd.s32 %v2391, %v2389
        %vm2393 = vcmp.eq.s32.totalorder %v487, %v2152
        %vm2394 = vcmp.eq.s32.totalorder %v488, %v2152
        %vm2395 = vcmp.eq.s32.totalorder %v487, %v2168
        %vm2396 = vcmp.eq.s32.totalorder %v488, %v2168
        %vm2397 = vcmp.eq.s32.totalorder %v487, %v2184
        %vm2398 = vcmp.eq.s32.totalorder %v488, %v2184
        %vm2399 = vcmp.eq.s32.totalorder %v487, %v2200
        %vm2400 = vcmp.eq.s32.totalorder %v488, %v2200
        %vm2401 = vcmp.eq.s32.totalorder %v487, %v2216
        %vm2402 = vcmp.eq.s32.totalorder %v488, %v2216
        %vm2403 = vcmp.eq.s32.totalorder %v487, %v2232
        %vm2404 = vcmp.eq.s32.totalorder %v488, %v2232
        %vm2405 = vcmp.eq.s32.totalorder %v487, %v2248
        %vm2406 = vcmp.eq.s32.totalorder %v488, %v2248
        %vm2407 = vcmp.eq.s32.totalorder %v487, %v2264
        %vm2408 = vcmp.eq.s32.totalorder %v488, %v2264
        %vm2409 = vcmp.eq.s32.totalorder %v487, %v2280
        %vm2410 = vcmp.eq.s32.totalorder %v488, %v2280
        %vm2411 = vcmp.eq.s32.totalorder %v487, %v2296
        %vm2412 = vcmp.eq.s32.totalorder %v488, %v2296
        %vm2413 = vcmp.eq.s32.totalorder %v487, %v2312
        %vm2414 = vcmp.eq.s32.totalorder %v488, %v2312
        %vm2415 = vcmp.eq.s32.totalorder %v487, %v2328
        %vm2416 = vcmp.eq.s32.totalorder %v488, %v2328
        %vm2417 = vcmp.eq.s32.totalorder %v487, %v2344
        %vm2418 = vcmp.eq.s32.totalorder %v488, %v2344
        %vm2419 = vcmp.eq.s32.totalorder %v487, %v2360
        %vm2420 = vcmp.eq.s32.totalorder %v488, %v2360
        %vm2421 = vcmp.eq.s32.totalorder %v487, %v2376
        %vm2422 = vcmp.eq.s32.totalorder %v488, %v2376
        %vm2423 = vcmp.eq.s32.totalorder %v487, %v2392
        %vm2424 = vcmp.eq.s32.totalorder %v488, %v2392
        %v2425 = vsel %vm2393, 1, 0
        %v2426 = vsel %vm2394, 1, 0
        %v2427 = vsel %vm2395, 1, 0
        %v2428 = vsel %vm2396, 1, 0
        %v2429 = vsel %vm2397, 1, 0
        %v2430 = vsel %vm2398, 1, 0
        %v2431 = vsel %vm2399, 1, 0
        %v2432 = vsel %vm2400, 1, 0
        %v2433 = vsel %vm2401, 1, 0
        %v2434 = vsel %vm2402, 1, 0
        %v2435 = vsel %vm2403, 1, 0
        %v2436 = vsel %vm2404, 1, 0
        %v2437 = vsel %vm2405, 1, 0
        %v2438 = vsel %vm2406, 1, 0
        %v2439 = vsel %vm2407, 1, 0
        %v2440 = vsel %vm2408, 1, 0
        %v2441 = vsel %vm2409, 1, 0
        %v2442 = vsel %vm2410, 1, 0
        %v2443 = vsel %vm2411, 1, 0
        %v2444 = vsel %vm2412, 1, 0
        %v2445 = vsel %vm2413, 1, 0
        %v2446 = vsel %vm2414, 1, 0
        %v2447 = vsel %vm2415, 1, 0
        %v2448 = vsel %vm2416, 1, 0
        %v2449 = vsel %vm2417, 1, 0
        %v2450 = vsel %vm2418, 1, 0
        %v2451 = vsel %vm2419, 1, 0
        %v2452 = vsel %vm2420, 1, 0
        %v2453 = vsel %vm2421, 1, 0
        %v2454 = vsel %vm2422, 1, 0
        %v2455 = vsel %vm2423, 1, 0
        %v2456 = vsel %vm2424, 1, 0
        %v2457 = vcvt.s32.f32 %v2425
        %v2458 = vcvt.s32.f32 %v2426
        %v2459 = vcvt.s32.f32 %v2427
        %v2460 = vcvt.s32.f32 %v2428
        %v2461 = vcvt.s32.f32 %v2429
        %v2462 = vcvt.s32.f32 %v2430
        %v2463 = vcvt.s32.f32 %v2431
        %v2464 = vcvt.s32.f32 %v2432
        %v2465 = vcvt.s32.f32 %v2433
        %v2466 = vcvt.s32.f32 %v2434
        %v2467 = vcvt.s32.f32 %v2435
        %v2468 = vcvt.s32.f32 %v2436
        %v2469 = vcvt.s32.f32 %v2437
        %v2470 = vcvt.s32.f32 %v2438
        %v2471 = vcvt.s32.f32 %v2439
        %v2472 = vcvt.s32.f32 %v2440
        %v2473 = vcvt.s32.f32 %v2441
        %v2474 = vcvt.s32.f32 %v2442
        %v2475 = vcvt.s32.f32 %v2443
        %v2476 = vcvt.s32.f32 %v2444
        %v2477 = vcvt.s32.f32 %v2445
        %v2478 = vcvt.s32.f32 %v2446
        %v2479 = vcvt.s32.f32 %v2447
        %v2480 = vcvt.s32.f32 %v2448
        %v2481 = vcvt.s32.f32 %v2449
        %v2482 = vcvt.s32.f32 %v2450
        %v2483 = vcvt.s32.f32 %v2451
        %v2484 = vcvt.s32.f32 %v2452
        %v2485 = vcvt.s32.f32 %v2453
        %v2486 = vcvt.s32.f32 %v2454
        %v2487 = vcvt.s32.f32 %v2455
        %v2488 = vcvt.s32.f32 %v2456
        %v2489 = vpack.c.bf16 %v2458, %v2457
        %v2490 = vpack.c.bf16 %v2460, %v2459
        %v2491 = vpack.c.bf16 %v2462, %v2461
        %v2492 = vpack.c.bf16 %v2464, %v2463
        %v2493 = vpack.c.bf16 %v2466, %v2465
        %v2494 = vpack.c.bf16 %v2468, %v2467
        %v2495 = vpack.c.bf16 %v2470, %v2469
        %v2496 = vpack.c.bf16 %v2472, %v2471
        %v2497 = vpack.c.bf16 %v2474, %v2473
        %v2498 = vpack.c.bf16 %v2476, %v2475
        %v2499 = vpack.c.bf16 %v2478, %v2477
        %v2500 = vpack.c.bf16 %v2480, %v2479
        %v2501 = vpack.c.bf16 %v2482, %v2481
        %v2502 = vpack.c.bf16 %v2484, %v2483
        %v2503 = vpack.c.bf16 %v2486, %v2485
        %v2504 = vpack.c.bf16 %v2488, %v2487
        %v2505 = vsel %vm2393, inf, %v1993
        %v2506 = vsel %vm2394, inf, %v1994
        %v2507 = vsel %vm2395, inf, %v1995
        %v2508 = vsel %vm2396, inf, %v1996
        %v2509 = vsel %vm2397, inf, %v1997
        %v2510 = vsel %vm2398, inf, %v1998
        %v2511 = vsel %vm2399, inf, %v1999
        %v2512 = vsel %vm2400, inf, %v2000
        %v2513 = vsel %vm2401, inf, %v2001
        %v2514 = vsel %vm2402, inf, %v2002
        %v2515 = vsel %vm2403, inf, %v2003
        %v2516 = vsel %vm2404, inf, %v2004
        %v2517 = vsel %vm2405, inf, %v2005
        %v2518 = vsel %vm2406, inf, %v2006
        %v2519 = vsel %vm2407, inf, %v2007
        %v2520 = vsel %vm2408, inf, %v2008
        %v2521 = vsel %vm2409, inf, %v2009
        %v2522 = vsel %vm2410, inf, %v2010
        %v2523 = vsel %vm2411, inf, %v2011
        %v2524 = vsel %vm2412, inf, %v2012
        %v2525 = vsel %vm2413, inf, %v2013
        %v2526 = vsel %vm2414, inf, %v2014
        %v2527 = vsel %vm2415, inf, %v2015
        %v2528 = vsel %vm2416, inf, %v2016
        %v2529 = vsel %vm2417, inf, %v2017
        %v2530 = vsel %vm2418, inf, %v2018
        %v2531 = vsel %vm2419, inf, %v2019
        %v2532 = vsel %vm2420, inf, %v2020
        %v2533 = vsel %vm2421, inf, %v2021
        %v2534 = vsel %vm2422, inf, %v2022
        %v2535 = vsel %vm2423, inf, %v2023
        %v2536 = vsel %vm2424, inf, %v2024
        %v2537 = vmin.f32 %v2505, %v2506
        %2538 = vmin.xlane.f32.xlu0 %v2537
        %v2539 = vpop.xlane.xlu0 %2538
        %v2540 = vmin.f32 %v2507, %v2508
        %2541 = vmin.xlane.f32.xlu0 %v2540
        %v2542 = vpop.xlane.xlu0 %2541
        %v2543 = vmin.f32 %v2509, %v2510
        %2544 = vmin.xlane.f32.xlu0 %v2543
        %v2545 = vpop.xlane.xlu0 %2544
        %v2546 = vmin.f32 %v2511, %v2512
        %2547 = vmin.xlane.f32.xlu0 %v2546
        %v2548 = vpop.xlane.xlu0 %2547
        %v2549 = vmin.f32 %v2513, %v2514
        %2550 = vmin.xlane.f32.xlu0 %v2549
        %v2551 = vpop.xlane.xlu0 %2550
        %v2552 = vmin.f32 %v2515, %v2516
        %2553 = vmin.xlane.f32.xlu0 %v2552
        %v2554 = vpop.xlane.xlu0 %2553
        %v2555 = vmin.f32 %v2517, %v2518
        %2556 = vmin.xlane.f32.xlu0 %v2555
        %v2557 = vpop.xlane.xlu0 %2556
        %v2558 = vmin.f32 %v2519, %v2520
        %2559 = vmin.xlane.f32.xlu0 %v2558
        %v2560 = vpop.xlane.xlu0 %2559
        %v2561 = vmin.f32 %v2521, %v2522
        %2562 = vmin.xlane.f32.xlu0 %v2561
        %v2563 = vpop.xlane.xlu0 %2562
        %v2564 = vmin.f32 %v2523, %v2524
        %2565 = vmin.xlane.f32.xlu0 %v2564
        %v2566 = vpop.xlane.xlu0 %2565
        %v2567 = vmin.f32 %v2525, %v2526
        %2568 = vmin.xlane.f32.xlu0 %v2567
        %v2569 = vpop.xlane.xlu0 %2568
        %v2570 = vmin.f32 %v2527, %v2528
        %2571 = vmin.xlane.f32.xlu0 %v2570
        %v2572 = vpop.xlane.xlu0 %2571
        %v2573 = vmin.f32 %v2529, %v2530
        %2574 = vmin.xlane.f32.xlu0 %v2573
        %v2575 = vpop.xlane.xlu0 %2574
        %v2576 = vmin.f32 %v2531, %v2532
        %2577 = vmin.xlane.f32.xlu0 %v2576
        %v2578 = vpop.xlane.xlu0 %2577
        %v2579 = vmin.f32 %v2533, %v2534
        %2580 = vmin.xlane.f32.xlu0 %v2579
        %v2581 = vpop.xlane.xlu0 %2580
        %v2582 = vmin.f32 %v2535, %v2536
        %2583 = vmin.xlane.f32.xlu0 %v2582
        %v2584 = vpop.xlane.xlu0 %2583
        %vm2585 = vcmp.eq.f32.partialorder %v2505, %v2539
        %vm2586 = vcmp.eq.f32.partialorder %v2506, %v2539
        %vm2587 = vcmp.eq.f32.partialorder %v2507, %v2542
        %vm2588 = vcmp.eq.f32.partialorder %v2508, %v2542
        %vm2589 = vcmp.eq.f32.partialorder %v2509, %v2545
        %vm2590 = vcmp.eq.f32.partialorder %v2510, %v2545
        %vm2591 = vcmp.eq.f32.partialorder %v2511, %v2548
        %vm2592 = vcmp.eq.f32.partialorder %v2512, %v2548
        %vm2593 = vcmp.eq.f32.partialorder %v2513, %v2551
        %vm2594 = vcmp.eq.f32.partialorder %v2514, %v2551
        %vm2595 = vcmp.eq.f32.partialorder %v2515, %v2554
        %vm2596 = vcmp.eq.f32.partialorder %v2516, %v2554
        %vm2597 = vcmp.eq.f32.partialorder %v2517, %v2557
        %vm2598 = vcmp.eq.f32.partialorder %v2518, %v2557
        %vm2599 = vcmp.eq.f32.partialorder %v2519, %v2560
        %vm2600 = vcmp.eq.f32.partialorder %v2520, %v2560
        %vm2601 = vcmp.eq.f32.partialorder %v2521, %v2563
        %vm2602 = vcmp.eq.f32.partialorder %v2522, %v2563
        %vm2603 = vcmp.eq.f32.partialorder %v2523, %v2566
        %vm2604 = vcmp.eq.f32.partialorder %v2524, %v2566
        %vm2605 = vcmp.eq.f32.partialorder %v2525, %v2569
        %vm2606 = vcmp.eq.f32.partialorder %v2526, %v2569
        %vm2607 = vcmp.eq.f32.partialorder %v2527, %v2572
        %vm2608 = vcmp.eq.f32.partialorder %v2528, %v2572
        %vm2609 = vcmp.eq.f32.partialorder %v2529, %v2575
        %vm2610 = vcmp.eq.f32.partialorder %v2530, %v2575
        %vm2611 = vcmp.eq.f32.partialorder %v2531, %v2578
        %vm2612 = vcmp.eq.f32.partialorder %v2532, %v2578
        %vm2613 = vcmp.eq.f32.partialorder %v2533, %v2581
        %vm2614 = vcmp.eq.f32.partialorder %v2534, %v2581
        %vm2615 = vcmp.eq.f32.partialorder %v2535, %v2584
        %vm2616 = vcmp.eq.f32.partialorder %v2536, %v2584
        %v2617 = vsel %vm2585, %v487, 256
        %v2618 = vsel %vm2586, %v488, 256
        %v2619 = vsel %vm2587, %v487, 256
        %v2620 = vsel %vm2588, %v488, 256
        %v2621 = vsel %vm2589, %v487, 256
        %v2622 = vsel %vm2590, %v488, 256
        %v2623 = vsel %vm2591, %v487, 256
        %v2624 = vsel %vm2592, %v488, 256
        %v2625 = vsel %vm2593, %v487, 256
        %v2626 = vsel %vm2594, %v488, 256
        %v2627 = vsel %vm2595, %v487, 256
        %v2628 = vsel %vm2596, %v488, 256
        %v2629 = vsel %vm2597, %v487, 256
        %v2630 = vsel %vm2598, %v488, 256
        %v2631 = vsel %vm2599, %v487, 256
        %v2632 = vsel %vm2600, %v488, 256
        %v2633 = vsel %vm2601, %v487, 256
        %v2634 = vsel %vm2602, %v488, 256
        %v2635 = vsel %vm2603, %v487, 256
        %v2636 = vsel %vm2604, %v488, 256
        %v2637 = vsel %vm2605, %v487, 256
        %v2638 = vsel %vm2606, %v488, 256
        %v2639 = vsel %vm2607, %v487, 256
        %v2640 = vsel %vm2608, %v488, 256
        %v2641 = vsel %vm2609, %v487, 256
        %v2642 = vsel %vm2610, %v488, 256
        %v2643 = vsel %vm2611, %v487, 256
        %v2644 = vsel %vm2612, %v488, 256
        %v2645 = vsel %vm2613, %v487, 256
        %v2646 = vsel %vm2614, %v488, 256
        %v2647 = vsel %vm2615, %v487, 256
        %v2648 = vsel %vm2616, %v488, 256
        %vm2649 = vcmp.lt.s32.totalorder %v2617, %v2618
        %v2650 = vsel %vm2649, %v2617, %v2618
        %v2651 = vand.u32 %v2650, 65535
        %v2652 = vshra.s32 %v2650, 16
        %v2653 = vcvt.s32.f32 %v2651
        %v2654 = vcvt.s32.f32 %v2652
        %2655 = vmin.xlane.f32.xlu0 %v2654
        %v2656 = vpop.xlane.xlu0 %2655
        %vm2657 = vcmp.eq.f32.partialorder %v2654, %v2656
        %v2658 = vsel %vm2657, %v2653, inf
        %2659 = vmin.xlane.f32.xlu0 %v2658
        %v2660 = vpop.xlane.xlu0 %2659
        %v2661 = vcvt.f32.s32 %v2660
        %v2662 = vcvt.f32.s32 %v2656
        %v2663 = vshll.u32 %v2662, 16
        %v2664 = vadd.s32 %v2663, %v2661
        %vm2665 = vcmp.lt.s32.totalorder %v2619, %v2620
        %v2666 = vsel %vm2665, %v2619, %v2620
        %v2667 = vand.u32 %v2666, 65535
        %v2668 = vshra.s32 %v2666, 16
        %v2669 = vcvt.s32.f32 %v2667
        %v2670 = vcvt.s32.f32 %v2668
        %2671 = vmin.xlane.f32.xlu0 %v2670
        %v2672 = vpop.xlane.xlu0 %2671
        %vm2673 = vcmp.eq.f32.partialorder %v2670, %v2672
        %v2674 = vsel %vm2673, %v2669, inf
        %2675 = vmin.xlane.f32.xlu0 %v2674
        %v2676 = vpop.xlane.xlu0 %2675
        %v2677 = vcvt.f32.s32 %v2676
        %v2678 = vcvt.f32.s32 %v2672
        %v2679 = vshll.u32 %v2678, 16
        %v2680 = vadd.s32 %v2679, %v2677
        %vm2681 = vcmp.lt.s32.totalorder %v2621, %v2622
        %v2682 = vsel %vm2681, %v2621, %v2622
        %v2683 = vand.u32 %v2682, 65535
        %v2684 = vshra.s32 %v2682, 16
        %v2685 = vcvt.s32.f32 %v2683
        %v2686 = vcvt.s32.f32 %v2684
        %2687 = vmin.xlane.f32.xlu0 %v2686
        %v2688 = vpop.xlane.xlu0 %2687
        %vm2689 = vcmp.eq.f32.partialorder %v2686, %v2688
        %v2690 = vsel %vm2689, %v2685, inf
        %2691 = vmin.xlane.f32.xlu0 %v2690
        %v2692 = vpop.xlane.xlu0 %2691
        %v2693 = vcvt.f32.s32 %v2692
        %v2694 = vcvt.f32.s32 %v2688
        %v2695 = vshll.u32 %v2694, 16
        %v2696 = vadd.s32 %v2695, %v2693
        %vm2697 = vcmp.lt.s32.totalorder %v2623, %v2624
        %v2698 = vsel %vm2697, %v2623, %v2624
        %v2699 = vand.u32 %v2698, 65535
        %v2700 = vshra.s32 %v2698, 16
        %v2701 = vcvt.s32.f32 %v2699
        %v2702 = vcvt.s32.f32 %v2700
        %2703 = vmin.xlane.f32.xlu0 %v2702
        %v2704 = vpop.xlane.xlu0 %2703
        %vm2705 = vcmp.eq.f32.partialorder %v2702, %v2704
        %v2706 = vsel %vm2705, %v2701, inf
        %2707 = vmin.xlane.f32.xlu0 %v2706
        %v2708 = vpop.xlane.xlu0 %2707
        %v2709 = vcvt.f32.s32 %v2708
        %v2710 = vcvt.f32.s32 %v2704
        %v2711 = vshll.u32 %v2710, 16
        %v2712 = vadd.s32 %v2711, %v2709
        %vm2713 = vcmp.lt.s32.totalorder %v2625, %v2626
        %v2714 = vsel %vm2713, %v2625, %v2626
        %v2715 = vand.u32 %v2714, 65535
        %v2716 = vshra.s32 %v2714, 16
        %v2717 = vcvt.s32.f32 %v2715
        %v2718 = vcvt.s32.f32 %v2716
        %2719 = vmin.xlane.f32.xlu0 %v2718
        %v2720 = vpop.xlane.xlu0 %2719
        %vm2721 = vcmp.eq.f32.partialorder %v2718, %v2720
        %v2722 = vsel %vm2721, %v2717, inf
        %2723 = vmin.xlane.f32.xlu0 %v2722
        %v2724 = vpop.xlane.xlu0 %2723
        %v2725 = vcvt.f32.s32 %v2724
        %v2726 = vcvt.f32.s32 %v2720
        %v2727 = vshll.u32 %v2726, 16
        %v2728 = vadd.s32 %v2727, %v2725
        %vm2729 = vcmp.lt.s32.totalorder %v2627, %v2628
        %v2730 = vsel %vm2729, %v2627, %v2628
        %v2731 = vand.u32 %v2730, 65535
        %v2732 = vshra.s32 %v2730, 16
        %v2733 = vcvt.s32.f32 %v2731
        %v2734 = vcvt.s32.f32 %v2732
        %2735 = vmin.xlane.f32.xlu0 %v2734
        %v2736 = vpop.xlane.xlu0 %2735
        %vm2737 = vcmp.eq.f32.partialorder %v2734, %v2736
        %v2738 = vsel %vm2737, %v2733, inf
        %2739 = vmin.xlane.f32.xlu0 %v2738
        %v2740 = vpop.xlane.xlu0 %2739
        %v2741 = vcvt.f32.s32 %v2740
        %v2742 = vcvt.f32.s32 %v2736
        %v2743 = vshll.u32 %v2742, 16
        %v2744 = vadd.s32 %v2743, %v2741
        %vm2745 = vcmp.lt.s32.totalorder %v2629, %v2630
        %v2746 = vsel %vm2745, %v2629, %v2630
        %v2747 = vand.u32 %v2746, 65535
        %v2748 = vshra.s32 %v2746, 16
        %v2749 = vcvt.s32.f32 %v2747
        %v2750 = vcvt.s32.f32 %v2748
        %2751 = vmin.xlane.f32.xlu0 %v2750
        %v2752 = vpop.xlane.xlu0 %2751
        %vm2753 = vcmp.eq.f32.partialorder %v2750, %v2752
        %v2754 = vsel %vm2753, %v2749, inf
        %2755 = vmin.xlane.f32.xlu0 %v2754
        %v2756 = vpop.xlane.xlu0 %2755
        %v2757 = vcvt.f32.s32 %v2756
        %v2758 = vcvt.f32.s32 %v2752
        %v2759 = vshll.u32 %v2758, 16
        %v2760 = vadd.s32 %v2759, %v2757
        %vm2761 = vcmp.lt.s32.totalorder %v2631, %v2632
        %v2762 = vsel %vm2761, %v2631, %v2632
        %v2763 = vand.u32 %v2762, 65535
        %v2764 = vshra.s32 %v2762, 16
        %v2765 = vcvt.s32.f32 %v2763
        %v2766 = vcvt.s32.f32 %v2764
        %2767 = vmin.xlane.f32.xlu0 %v2766
        %v2768 = vpop.xlane.xlu0 %2767
        %vm2769 = vcmp.eq.f32.partialorder %v2766, %v2768
        %v2770 = vsel %vm2769, %v2765, inf
        %2771 = vmin.xlane.f32.xlu0 %v2770
        %v2772 = vpop.xlane.xlu0 %2771
        %v2773 = vcvt.f32.s32 %v2772
        %v2774 = vcvt.f32.s32 %v2768
        %v2775 = vshll.u32 %v2774, 16
        %v2776 = vadd.s32 %v2775, %v2773
        %vm2777 = vcmp.lt.s32.totalorder %v2633, %v2634
        %v2778 = vsel %vm2777, %v2633, %v2634
        %v2779 = vand.u32 %v2778, 65535
        %v2780 = vshra.s32 %v2778, 16
        %v2781 = vcvt.s32.f32 %v2779
        %v2782 = vcvt.s32.f32 %v2780
        %2783 = vmin.xlane.f32.xlu0 %v2782
        %v2784 = vpop.xlane.xlu0 %2783
        %vm2785 = vcmp.eq.f32.partialorder %v2782, %v2784
        %v2786 = vsel %vm2785, %v2781, inf
        %2787 = vmin.xlane.f32.xlu0 %v2786
        %v2788 = vpop.xlane.xlu0 %2787
        %v2789 = vcvt.f32.s32 %v2788
        %v2790 = vcvt.f32.s32 %v2784
        %v2791 = vshll.u32 %v2790, 16
        %v2792 = vadd.s32 %v2791, %v2789
        %vm2793 = vcmp.lt.s32.totalorder %v2635, %v2636
        %v2794 = vsel %vm2793, %v2635, %v2636
        %v2795 = vand.u32 %v2794, 65535
        %v2796 = vshra.s32 %v2794, 16
        %v2797 = vcvt.s32.f32 %v2795
        %v2798 = vcvt.s32.f32 %v2796
        %2799 = vmin.xlane.f32.xlu0 %v2798
        %v2800 = vpop.xlane.xlu0 %2799
        %vm2801 = vcmp.eq.f32.partialorder %v2798, %v2800
        %v2802 = vsel %vm2801, %v2797, inf
        %2803 = vmin.xlane.f32.xlu0 %v2802
        %v2804 = vpop.xlane.xlu0 %2803
        %v2805 = vcvt.f32.s32 %v2804
        %v2806 = vcvt.f32.s32 %v2800
        %v2807 = vshll.u32 %v2806, 16
        %v2808 = vadd.s32 %v2807, %v2805
        %vm2809 = vcmp.lt.s32.totalorder %v2637, %v2638
        %v2810 = vsel %vm2809, %v2637, %v2638
        %v2811 = vand.u32 %v2810, 65535
        %v2812 = vshra.s32 %v2810, 16
        %v2813 = vcvt.s32.f32 %v2811
        %v2814 = vcvt.s32.f32 %v2812
        %2815 = vmin.xlane.f32.xlu0 %v2814
        %v2816 = vpop.xlane.xlu0 %2815
        %vm2817 = vcmp.eq.f32.partialorder %v2814, %v2816
        %v2818 = vsel %vm2817, %v2813, inf
        %2819 = vmin.xlane.f32.xlu0 %v2818
        %v2820 = vpop.xlane.xlu0 %2819
        %v2821 = vcvt.f32.s32 %v2820
        %v2822 = vcvt.f32.s32 %v2816
        %v2823 = vshll.u32 %v2822, 16
        %v2824 = vadd.s32 %v2823, %v2821
        %vm2825 = vcmp.lt.s32.totalorder %v2639, %v2640
        %v2826 = vsel %vm2825, %v2639, %v2640
        %v2827 = vand.u32 %v2826, 65535
        %v2828 = vshra.s32 %v2826, 16
        %v2829 = vcvt.s32.f32 %v2827
        %v2830 = vcvt.s32.f32 %v2828
        %2831 = vmin.xlane.f32.xlu0 %v2830
        %v2832 = vpop.xlane.xlu0 %2831
        %vm2833 = vcmp.eq.f32.partialorder %v2830, %v2832
        %v2834 = vsel %vm2833, %v2829, inf
        %2835 = vmin.xlane.f32.xlu0 %v2834
        %v2836 = vpop.xlane.xlu0 %2835
        %v2837 = vcvt.f32.s32 %v2836
        %v2838 = vcvt.f32.s32 %v2832
        %v2839 = vshll.u32 %v2838, 16
        %v2840 = vadd.s32 %v2839, %v2837
        %vm2841 = vcmp.lt.s32.totalorder %v2641, %v2642
        %v2842 = vsel %vm2841, %v2641, %v2642
        %v2843 = vand.u32 %v2842, 65535
        %v2844 = vshra.s32 %v2842, 16
        %v2845 = vcvt.s32.f32 %v2843
        %v2846 = vcvt.s32.f32 %v2844
        %2847 = vmin.xlane.f32.xlu0 %v2846
        %v2848 = vpop.xlane.xlu0 %2847
        %vm2849 = vcmp.eq.f32.partialorder %v2846, %v2848
        %v2850 = vsel %vm2849, %v2845, inf
        %2851 = vmin.xlane.f32.xlu0 %v2850
        %v2852 = vpop.xlane.xlu0 %2851
        %v2853 = vcvt.f32.s32 %v2852
        %v2854 = vcvt.f32.s32 %v2848
        %v2855 = vshll.u32 %v2854, 16
        %v2856 = vadd.s32 %v2855, %v2853
        %vm2857 = vcmp.lt.s32.totalorder %v2643, %v2644
        %v2858 = vsel %vm2857, %v2643, %v2644
        %v2859 = vand.u32 %v2858, 65535
        %v2860 = vshra.s32 %v2858, 16
        %v2861 = vcvt.s32.f32 %v2859
        %v2862 = vcvt.s32.f32 %v2860
        %2863 = vmin.xlane.f32.xlu0 %v2862
        %v2864 = vpop.xlane.xlu0 %2863
        %vm2865 = vcmp.eq.f32.partialorder %v2862, %v2864
        %v2866 = vsel %vm2865, %v2861, inf
        %2867 = vmin.xlane.f32.xlu0 %v2866
        %v2868 = vpop.xlane.xlu0 %2867
        %v2869 = vcvt.f32.s32 %v2868
        %v2870 = vcvt.f32.s32 %v2864
        %v2871 = vshll.u32 %v2870, 16
        %v2872 = vadd.s32 %v2871, %v2869
        %vm2873 = vcmp.lt.s32.totalorder %v2645, %v2646
        %v2874 = vsel %vm2873, %v2645, %v2646
        %v2875 = vand.u32 %v2874, 65535
        %v2876 = vshra.s32 %v2874, 16
        %v2877 = vcvt.s32.f32 %v2875
        %v2878 = vcvt.s32.f32 %v2876
        %2879 = vmin.xlane.f32.xlu0 %v2878
        %v2880 = vpop.xlane.xlu0 %2879
        %vm2881 = vcmp.eq.f32.partialorder %v2878, %v2880
        %v2882 = vsel %vm2881, %v2877, inf
        %2883 = vmin.xlane.f32.xlu0 %v2882
        %v2884 = vpop.xlane.xlu0 %2883
        %v2885 = vcvt.f32.s32 %v2884
        %v2886 = vcvt.f32.s32 %v2880
        %v2887 = vshll.u32 %v2886, 16
        %v2888 = vadd.s32 %v2887, %v2885
        %vm2889 = vcmp.lt.s32.totalorder %v2647, %v2648
        %v2890 = vsel %vm2889, %v2647, %v2648
        %v2891 = vand.u32 %v2890, 65535
        %v2892 = vshra.s32 %v2890, 16
        %v2893 = vcvt.s32.f32 %v2891
        %v2894 = vcvt.s32.f32 %v2892
        %2895 = vmin.xlane.f32.xlu0 %v2894
        %v2896 = vpop.xlane.xlu0 %2895
        %vm2897 = vcmp.eq.f32.partialorder %v2894, %v2896
        %v2898 = vsel %vm2897, %v2893, inf
        %2899 = vmin.xlane.f32.xlu0 %v2898
        %v2900 = vpop.xlane.xlu0 %2899
        %v2901 = vcvt.f32.s32 %v2900
        %v2902 = vcvt.f32.s32 %v2896
        %v2903 = vshll.u32 %v2902, 16
        %v2904 = vadd.s32 %v2903, %v2901
        %vm2905 = vcmp.eq.s32.totalorder %v487, %v2664
        %vm2906 = vcmp.eq.s32.totalorder %v488, %v2664
        %vm2907 = vcmp.eq.s32.totalorder %v487, %v2680
        %vm2908 = vcmp.eq.s32.totalorder %v488, %v2680
        %vm2909 = vcmp.eq.s32.totalorder %v487, %v2696
        %vm2910 = vcmp.eq.s32.totalorder %v488, %v2696
        %vm2911 = vcmp.eq.s32.totalorder %v487, %v2712
        %vm2912 = vcmp.eq.s32.totalorder %v488, %v2712
        %vm2913 = vcmp.eq.s32.totalorder %v487, %v2728
        %vm2914 = vcmp.eq.s32.totalorder %v488, %v2728
        %vm2915 = vcmp.eq.s32.totalorder %v487, %v2744
        %vm2916 = vcmp.eq.s32.totalorder %v488, %v2744
        %vm2917 = vcmp.eq.s32.totalorder %v487, %v2760
        %vm2918 = vcmp.eq.s32.totalorder %v488, %v2760
        %vm2919 = vcmp.eq.s32.totalorder %v487, %v2776
        %vm2920 = vcmp.eq.s32.totalorder %v488, %v2776
        %vm2921 = vcmp.eq.s32.totalorder %v487, %v2792
        %vm2922 = vcmp.eq.s32.totalorder %v488, %v2792
        %vm2923 = vcmp.eq.s32.totalorder %v487, %v2808
        %vm2924 = vcmp.eq.s32.totalorder %v488, %v2808
        %vm2925 = vcmp.eq.s32.totalorder %v487, %v2824
        %vm2926 = vcmp.eq.s32.totalorder %v488, %v2824
        %vm2927 = vcmp.eq.s32.totalorder %v487, %v2840
        %vm2928 = vcmp.eq.s32.totalorder %v488, %v2840
        %vm2929 = vcmp.eq.s32.totalorder %v487, %v2856
        %vm2930 = vcmp.eq.s32.totalorder %v488, %v2856
        %vm2931 = vcmp.eq.s32.totalorder %v487, %v2872
        %vm2932 = vcmp.eq.s32.totalorder %v488, %v2872
        %vm2933 = vcmp.eq.s32.totalorder %v487, %v2888
        %vm2934 = vcmp.eq.s32.totalorder %v488, %v2888
        %vm2935 = vcmp.eq.s32.totalorder %v487, %v2904
        %vm2936 = vcmp.eq.s32.totalorder %v488, %v2904
        %v2937 = vsel %vm2905, 1, 0
        %v2938 = vsel %vm2906, 1, 0
        %v2939 = vsel %vm2907, 1, 0
        %v2940 = vsel %vm2908, 1, 0
        %v2941 = vsel %vm2909, 1, 0
        %v2942 = vsel %vm2910, 1, 0
        %v2943 = vsel %vm2911, 1, 0
        %v2944 = vsel %vm2912, 1, 0
        %v2945 = vsel %vm2913, 1, 0
        %v2946 = vsel %vm2914, 1, 0
        %v2947 = vsel %vm2915, 1, 0
        %v2948 = vsel %vm2916, 1, 0
        %v2949 = vsel %vm2917, 1, 0
        %v2950 = vsel %vm2918, 1, 0
        %v2951 = vsel %vm2919, 1, 0
        %v2952 = vsel %vm2920, 1, 0
        %v2953 = vsel %vm2921, 1, 0
        %v2954 = vsel %vm2922, 1, 0
        %v2955 = vsel %vm2923, 1, 0
        %v2956 = vsel %vm2924, 1, 0
        %v2957 = vsel %vm2925, 1, 0
        %v2958 = vsel %vm2926, 1, 0
        %v2959 = vsel %vm2927, 1, 0
        %v2960 = vsel %vm2928, 1, 0
        %v2961 = vsel %vm2929, 1, 0
        %v2962 = vsel %vm2930, 1, 0
        %v2963 = vsel %vm2931, 1, 0
        %v2964 = vsel %vm2932, 1, 0
        %v2965 = vsel %vm2933, 1, 0
        %v2966 = vsel %vm2934, 1, 0
        %v2967 = vsel %vm2935, 1, 0
        %v2968 = vsel %vm2936, 1, 0
        %v2969 = vcvt.s32.f32 %v2937
        %v2970 = vcvt.s32.f32 %v2938
        %v2971 = vcvt.s32.f32 %v2939
        %v2972 = vcvt.s32.f32 %v2940
        %v2973 = vcvt.s32.f32 %v2941
        %v2974 = vcvt.s32.f32 %v2942
        %v2975 = vcvt.s32.f32 %v2943
        %v2976 = vcvt.s32.f32 %v2944
        %v2977 = vcvt.s32.f32 %v2945
        %v2978 = vcvt.s32.f32 %v2946
        %v2979 = vcvt.s32.f32 %v2947
        %v2980 = vcvt.s32.f32 %v2948
        %v2981 = vcvt.s32.f32 %v2949
        %v2982 = vcvt.s32.f32 %v2950
        %v2983 = vcvt.s32.f32 %v2951
        %v2984 = vcvt.s32.f32 %v2952
        %v2985 = vcvt.s32.f32 %v2953
        %v2986 = vcvt.s32.f32 %v2954
        %v2987 = vcvt.s32.f32 %v2955
        %v2988 = vcvt.s32.f32 %v2956
        %v2989 = vcvt.s32.f32 %v2957
        %v2990 = vcvt.s32.f32 %v2958
        %v2991 = vcvt.s32.f32 %v2959
        %v2992 = vcvt.s32.f32 %v2960
        %v2993 = vcvt.s32.f32 %v2961
        %v2994 = vcvt.s32.f32 %v2962
        %v2995 = vcvt.s32.f32 %v2963
        %v2996 = vcvt.s32.f32 %v2964
        %v2997 = vcvt.s32.f32 %v2965
        %v2998 = vcvt.s32.f32 %v2966
        %v2999 = vcvt.s32.f32 %v2967
        %v3000 = vcvt.s32.f32 %v2968
        %v3001 = vpack.c.bf16 %v2970, %v2969
        %v3002 = vpack.c.bf16 %v2972, %v2971
        %v3003 = vpack.c.bf16 %v2974, %v2973
        %v3004 = vpack.c.bf16 %v2976, %v2975
        %v3005 = vpack.c.bf16 %v2978, %v2977
        %v3006 = vpack.c.bf16 %v2980, %v2979
        %v3007 = vpack.c.bf16 %v2982, %v2981
        %v3008 = vpack.c.bf16 %v2984, %v2983
        %v3009 = vpack.c.bf16 %v2986, %v2985
        %v3010 = vpack.c.bf16 %v2988, %v2987
        %v3011 = vpack.c.bf16 %v2990, %v2989
        %v3012 = vpack.c.bf16 %v2992, %v2991
        %v3013 = vpack.c.bf16 %v2994, %v2993
        %v3014 = vpack.c.bf16 %v2996, %v2995
        %v3015 = vpack.c.bf16 %v2998, %v2997
        %v3016 = vpack.c.bf16 %v3000, %v2999
        %v3017 = vsel %vm2905, inf, %v2505
        %v3018 = vsel %vm2906, inf, %v2506
        %v3019 = vsel %vm2907, inf, %v2507
        %v3020 = vsel %vm2908, inf, %v2508
        %v3021 = vsel %vm2909, inf, %v2509
        %v3022 = vsel %vm2910, inf, %v2510
        %v3023 = vsel %vm2911, inf, %v2511
        %v3024 = vsel %vm2912, inf, %v2512
        %v3025 = vsel %vm2913, inf, %v2513
        %v3026 = vsel %vm2914, inf, %v2514
        %v3027 = vsel %vm2915, inf, %v2515
        %v3028 = vsel %vm2916, inf, %v2516
        %v3029 = vsel %vm2917, inf, %v2517
        %v3030 = vsel %vm2918, inf, %v2518
        %v3031 = vsel %vm2919, inf, %v2519
        %v3032 = vsel %vm2920, inf, %v2520
        %v3033 = vsel %vm2921, inf, %v2521
        %v3034 = vsel %vm2922, inf, %v2522
        %v3035 = vsel %vm2923, inf, %v2523
        %v3036 = vsel %vm2924, inf, %v2524
        %v3037 = vsel %vm2925, inf, %v2525
        %v3038 = vsel %vm2926, inf, %v2526
        %v3039 = vsel %vm2927, inf, %v2527
        %v3040 = vsel %vm2928, inf, %v2528
        %v3041 = vsel %vm2929, inf, %v2529
        %v3042 = vsel %vm2930, inf, %v2530
        %v3043 = vsel %vm2931, inf, %v2531
        %v3044 = vsel %vm2932, inf, %v2532
        %v3045 = vsel %vm2933, inf, %v2533
        %v3046 = vsel %vm2934, inf, %v2534
        %v3047 = vsel %vm2935, inf, %v2535
        %v3048 = vsel %vm2936, inf, %v2536
        %v3049 = vmin.f32 %v3017, %v3018
        %3050 = vmin.xlane.f32.xlu0 %v3049
        %v3051 = vpop.xlane.xlu0 %3050
        %v3052 = vmin.f32 %v3019, %v3020
        %3053 = vmin.xlane.f32.xlu0 %v3052
        %v3054 = vpop.xlane.xlu0 %3053
        %v3055 = vmin.f32 %v3021, %v3022
        %3056 = vmin.xlane.f32.xlu0 %v3055
        %v3057 = vpop.xlane.xlu0 %3056
        %v3058 = vmin.f32 %v3023, %v3024
        %3059 = vmin.xlane.f32.xlu0 %v3058
        %v3060 = vpop.xlane.xlu0 %3059
        %v3061 = vmin.f32 %v3025, %v3026
        %3062 = vmin.xlane.f32.xlu0 %v3061
        %v3063 = vpop.xlane.xlu0 %3062
        %v3064 = vmin.f32 %v3027, %v3028
        %3065 = vmin.xlane.f32.xlu0 %v3064
        %v3066 = vpop.xlane.xlu0 %3065
        %v3067 = vmin.f32 %v3029, %v3030
        %3068 = vmin.xlane.f32.xlu0 %v3067
        %v3069 = vpop.xlane.xlu0 %3068
        %v3070 = vmin.f32 %v3031, %v3032
        %3071 = vmin.xlane.f32.xlu0 %v3070
        %v3072 = vpop.xlane.xlu0 %3071
        %v3073 = vmin.f32 %v3033, %v3034
        %3074 = vmin.xlane.f32.xlu0 %v3073
        %v3075 = vpop.xlane.xlu0 %3074
        %v3076 = vmin.f32 %v3035, %v3036
        %3077 = vmin.xlane.f32.xlu0 %v3076
        %v3078 = vpop.xlane.xlu0 %3077
        %v3079 = vmin.f32 %v3037, %v3038
        %3080 = vmin.xlane.f32.xlu0 %v3079
        %v3081 = vpop.xlane.xlu0 %3080
        %v3082 = vmin.f32 %v3039, %v3040
        %3083 = vmin.xlane.f32.xlu0 %v3082
        %v3084 = vpop.xlane.xlu0 %3083
        %v3085 = vmin.f32 %v3041, %v3042
        %3086 = vmin.xlane.f32.xlu0 %v3085
        %v3087 = vpop.xlane.xlu0 %3086
        %v3088 = vmin.f32 %v3043, %v3044
        %3089 = vmin.xlane.f32.xlu0 %v3088
        %v3090 = vpop.xlane.xlu0 %3089
        %v3091 = vmin.f32 %v3045, %v3046
        %3092 = vmin.xlane.f32.xlu0 %v3091
        %v3093 = vpop.xlane.xlu0 %3092
        %v3094 = vmin.f32 %v3047, %v3048
        %3095 = vmin.xlane.f32.xlu0 %v3094
        %v3096 = vpop.xlane.xlu0 %3095
        %vm3097 = vcmp.eq.f32.partialorder %v3017, %v3051
        %vm3098 = vcmp.eq.f32.partialorder %v3018, %v3051
        %vm3099 = vcmp.eq.f32.partialorder %v3019, %v3054
        %vm3100 = vcmp.eq.f32.partialorder %v3020, %v3054
        %vm3101 = vcmp.eq.f32.partialorder %v3021, %v3057
        %vm3102 = vcmp.eq.f32.partialorder %v3022, %v3057
        %vm3103 = vcmp.eq.f32.partialorder %v3023, %v3060
        %vm3104 = vcmp.eq.f32.partialorder %v3024, %v3060
        %vm3105 = vcmp.eq.f32.partialorder %v3025, %v3063
        %vm3106 = vcmp.eq.f32.partialorder %v3026, %v3063
        %vm3107 = vcmp.eq.f32.partialorder %v3027, %v3066
        %vm3108 = vcmp.eq.f32.partialorder %v3028, %v3066
        %vm3109 = vcmp.eq.f32.partialorder %v3029, %v3069
        %vm3110 = vcmp.eq.f32.partialorder %v3030, %v3069
        %vm3111 = vcmp.eq.f32.partialorder %v3031, %v3072
        %vm3112 = vcmp.eq.f32.partialorder %v3032, %v3072
        %vm3113 = vcmp.eq.f32.partialorder %v3033, %v3075
        %vm3114 = vcmp.eq.f32.partialorder %v3034, %v3075
        %vm3115 = vcmp.eq.f32.partialorder %v3035, %v3078
        %vm3116 = vcmp.eq.f32.partialorder %v3036, %v3078
        %vm3117 = vcmp.eq.f32.partialorder %v3037, %v3081
        %vm3118 = vcmp.eq.f32.partialorder %v3038, %v3081
        %vm3119 = vcmp.eq.f32.partialorder %v3039, %v3084
        %vm3120 = vcmp.eq.f32.partialorder %v3040, %v3084
        %vm3121 = vcmp.eq.f32.partialorder %v3041, %v3087
        %vm3122 = vcmp.eq.f32.partialorder %v3042, %v3087
        %vm3123 = vcmp.eq.f32.partialorder %v3043, %v3090
        %vm3124 = vcmp.eq.f32.partialorder %v3044, %v3090
        %vm3125 = vcmp.eq.f32.partialorder %v3045, %v3093
        %vm3126 = vcmp.eq.f32.partialorder %v3046, %v3093
        %vm3127 = vcmp.eq.f32.partialorder %v3047, %v3096
        %vm3128 = vcmp.eq.f32.partialorder %v3048, %v3096
        %v3129 = vsel %vm3097, %v487, 256
        %v3130 = vsel %vm3098, %v488, 256
        %v3131 = vsel %vm3099, %v487, 256
        %v3132 = vsel %vm3100, %v488, 256
        %v3133 = vsel %vm3101, %v487, 256
        %v3134 = vsel %vm3102, %v488, 256
        %v3135 = vsel %vm3103, %v487, 256
        %v3136 = vsel %vm3104, %v488, 256
        %v3137 = vsel %vm3105, %v487, 256
        %v3138 = vsel %vm3106, %v488, 256
        %v3139 = vsel %vm3107, %v487, 256
        %v3140 = vsel %vm3108, %v488, 256
        %v3141 = vsel %vm3109, %v487, 256
        %v3142 = vsel %vm3110, %v488, 256
        %v3143 = vsel %vm3111, %v487, 256
        %v3144 = vsel %vm3112, %v488, 256
        %v3145 = vsel %vm3113, %v487, 256
        %v3146 = vsel %vm3114, %v488, 256
        %v3147 = vsel %vm3115, %v487, 256
        %v3148 = vsel %vm3116, %v488, 256
        %v3149 = vsel %vm3117, %v487, 256
        %v3150 = vsel %vm3118, %v488, 256
        %v3151 = vsel %vm3119, %v487, 256
        %v3152 = vsel %vm3120, %v488, 256
        %v3153 = vsel %vm3121, %v487, 256
        %v3154 = vsel %vm3122, %v488, 256
        %v3155 = vsel %vm3123, %v487, 256
        %v3156 = vsel %vm3124, %v488, 256
        %v3157 = vsel %vm3125, %v487, 256
        %v3158 = vsel %vm3126, %v488, 256
        %v3159 = vsel %vm3127, %v487, 256
        %v3160 = vsel %vm3128, %v488, 256
        %vm3161 = vcmp.lt.s32.totalorder %v3129, %v3130
        %v3162 = vsel %vm3161, %v3129, %v3130
        %v3163 = vand.u32 %v3162, 65535
        %v3164 = vshra.s32 %v3162, 16
        %v3165 = vcvt.s32.f32 %v3163
        %v3166 = vcvt.s32.f32 %v3164
        %3167 = vmin.xlane.f32.xlu0 %v3166
        %v3168 = vpop.xlane.xlu0 %3167
        %vm3169 = vcmp.eq.f32.partialorder %v3166, %v3168
        %v3170 = vsel %vm3169, %v3165, inf
        %3171 = vmin.xlane.f32.xlu0 %v3170
        %v3172 = vpop.xlane.xlu0 %3171
        %v3173 = vcvt.f32.s32 %v3172
        %v3174 = vcvt.f32.s32 %v3168
        %v3175 = vshll.u32 %v3174, 16
        %v3176 = vadd.s32 %v3175, %v3173
        %vm3177 = vcmp.lt.s32.totalorder %v3131, %v3132
        %v3178 = vsel %vm3177, %v3131, %v3132
        %v3179 = vand.u32 %v3178, 65535
        %v3180 = vshra.s32 %v3178, 16
        %v3181 = vcvt.s32.f32 %v3179
        %v3182 = vcvt.s32.f32 %v3180
        %3183 = vmin.xlane.f32.xlu0 %v3182
        %v3184 = vpop.xlane.xlu0 %3183
        %vm3185 = vcmp.eq.f32.partialorder %v3182, %v3184
        %v3186 = vsel %vm3185, %v3181, inf
        %3187 = vmin.xlane.f32.xlu0 %v3186
        %v3188 = vpop.xlane.xlu0 %3187
        %v3189 = vcvt.f32.s32 %v3188
        %v3190 = vcvt.f32.s32 %v3184
        %v3191 = vshll.u32 %v3190, 16
        %v3192 = vadd.s32 %v3191, %v3189
        %vm3193 = vcmp.lt.s32.totalorder %v3133, %v3134
        %v3194 = vsel %vm3193, %v3133, %v3134
        %v3195 = vand.u32 %v3194, 65535
        %v3196 = vshra.s32 %v3194, 16
        %v3197 = vcvt.s32.f32 %v3195
        %v3198 = vcvt.s32.f32 %v3196
        %3199 = vmin.xlane.f32.xlu0 %v3198
        %v3200 = vpop.xlane.xlu0 %3199
        %vm3201 = vcmp.eq.f32.partialorder %v3198, %v3200
        %v3202 = vsel %vm3201, %v3197, inf
        %3203 = vmin.xlane.f32.xlu0 %v3202
        %v3204 = vpop.xlane.xlu0 %3203
        %v3205 = vcvt.f32.s32 %v3204
        %v3206 = vcvt.f32.s32 %v3200
        %v3207 = vshll.u32 %v3206, 16
        %v3208 = vadd.s32 %v3207, %v3205
        %vm3209 = vcmp.lt.s32.totalorder %v3135, %v3136
        %v3210 = vsel %vm3209, %v3135, %v3136
        %v3211 = vand.u32 %v3210, 65535
        %v3212 = vshra.s32 %v3210, 16
        %v3213 = vcvt.s32.f32 %v3211
        %v3214 = vcvt.s32.f32 %v3212
        %3215 = vmin.xlane.f32.xlu0 %v3214
        %v3216 = vpop.xlane.xlu0 %3215
        %vm3217 = vcmp.eq.f32.partialorder %v3214, %v3216
        %v3218 = vsel %vm3217, %v3213, inf
        %3219 = vmin.xlane.f32.xlu0 %v3218
        %v3220 = vpop.xlane.xlu0 %3219
        %v3221 = vcvt.f32.s32 %v3220
        %v3222 = vcvt.f32.s32 %v3216
        %v3223 = vshll.u32 %v3222, 16
        %v3224 = vadd.s32 %v3223, %v3221
        %vm3225 = vcmp.lt.s32.totalorder %v3137, %v3138
        %v3226 = vsel %vm3225, %v3137, %v3138
        %v3227 = vand.u32 %v3226, 65535
        %v3228 = vshra.s32 %v3226, 16
        %v3229 = vcvt.s32.f32 %v3227
        %v3230 = vcvt.s32.f32 %v3228
        %3231 = vmin.xlane.f32.xlu0 %v3230
        %v3232 = vpop.xlane.xlu0 %3231
        %vm3233 = vcmp.eq.f32.partialorder %v3230, %v3232
        %v3234 = vsel %vm3233, %v3229, inf
        %3235 = vmin.xlane.f32.xlu0 %v3234
        %v3236 = vpop.xlane.xlu0 %3235
        %v3237 = vcvt.f32.s32 %v3236
        %v3238 = vcvt.f32.s32 %v3232
        %v3239 = vshll.u32 %v3238, 16
        %v3240 = vadd.s32 %v3239, %v3237
        %vm3241 = vcmp.lt.s32.totalorder %v3139, %v3140
        %v3242 = vsel %vm3241, %v3139, %v3140
        %v3243 = vand.u32 %v3242, 65535
        %v3244 = vshra.s32 %v3242, 16
        %v3245 = vcvt.s32.f32 %v3243
        %v3246 = vcvt.s32.f32 %v3244
        %3247 = vmin.xlane.f32.xlu0 %v3246
        %v3248 = vpop.xlane.xlu0 %3247
        %vm3249 = vcmp.eq.f32.partialorder %v3246, %v3248
        %v3250 = vsel %vm3249, %v3245, inf
        %3251 = vmin.xlane.f32.xlu0 %v3250
        %v3252 = vpop.xlane.xlu0 %3251
        %v3253 = vcvt.f32.s32 %v3252
        %v3254 = vcvt.f32.s32 %v3248
        %v3255 = vshll.u32 %v3254, 16
        %v3256 = vadd.s32 %v3255, %v3253
        %vm3257 = vcmp.lt.s32.totalorder %v3141, %v3142
        %v3258 = vsel %vm3257, %v3141, %v3142
        %v3259 = vand.u32 %v3258, 65535
        %v3260 = vshra.s32 %v3258, 16
        %v3261 = vcvt.s32.f32 %v3259
        %v3262 = vcvt.s32.f32 %v3260
        %3263 = vmin.xlane.f32.xlu0 %v3262
        %v3264 = vpop.xlane.xlu0 %3263
        %vm3265 = vcmp.eq.f32.partialorder %v3262, %v3264
        %v3266 = vsel %vm3265, %v3261, inf
        %3267 = vmin.xlane.f32.xlu0 %v3266
        %v3268 = vpop.xlane.xlu0 %3267
        %v3269 = vcvt.f32.s32 %v3268
        %v3270 = vcvt.f32.s32 %v3264
        %v3271 = vshll.u32 %v3270, 16
        %v3272 = vadd.s32 %v3271, %v3269
        %vm3273 = vcmp.lt.s32.totalorder %v3143, %v3144
        %v3274 = vsel %vm3273, %v3143, %v3144
        %v3275 = vand.u32 %v3274, 65535
        %v3276 = vshra.s32 %v3274, 16
        %v3277 = vcvt.s32.f32 %v3275
        %v3278 = vcvt.s32.f32 %v3276
        %3279 = vmin.xlane.f32.xlu0 %v3278
        %v3280 = vpop.xlane.xlu0 %3279
        %vm3281 = vcmp.eq.f32.partialorder %v3278, %v3280
        %v3282 = vsel %vm3281, %v3277, inf
        %3283 = vmin.xlane.f32.xlu0 %v3282
        %v3284 = vpop.xlane.xlu0 %3283
        %v3285 = vcvt.f32.s32 %v3284
        %v3286 = vcvt.f32.s32 %v3280
        %v3287 = vshll.u32 %v3286, 16
        %v3288 = vadd.s32 %v3287, %v3285
        %vm3289 = vcmp.lt.s32.totalorder %v3145, %v3146
        %v3290 = vsel %vm3289, %v3145, %v3146
        %v3291 = vand.u32 %v3290, 65535
        %v3292 = vshra.s32 %v3290, 16
        %v3293 = vcvt.s32.f32 %v3291
        %v3294 = vcvt.s32.f32 %v3292
        %3295 = vmin.xlane.f32.xlu0 %v3294
        %v3296 = vpop.xlane.xlu0 %3295
        %vm3297 = vcmp.eq.f32.partialorder %v3294, %v3296
        %v3298 = vsel %vm3297, %v3293, inf
        %3299 = vmin.xlane.f32.xlu0 %v3298
        %v3300 = vpop.xlane.xlu0 %3299
        %v3301 = vcvt.f32.s32 %v3300
        %v3302 = vcvt.f32.s32 %v3296
        %v3303 = vshll.u32 %v3302, 16
        %v3304 = vadd.s32 %v3303, %v3301
        %vm3305 = vcmp.lt.s32.totalorder %v3147, %v3148
        %v3306 = vsel %vm3305, %v3147, %v3148
        %v3307 = vand.u32 %v3306, 65535
        %v3308 = vshra.s32 %v3306, 16
        %v3309 = vcvt.s32.f32 %v3307
        %v3310 = vcvt.s32.f32 %v3308
        %3311 = vmin.xlane.f32.xlu0 %v3310
        %v3312 = vpop.xlane.xlu0 %3311
        %vm3313 = vcmp.eq.f32.partialorder %v3310, %v3312
        %v3314 = vsel %vm3313, %v3309, inf
        %3315 = vmin.xlane.f32.xlu0 %v3314
        %v3316 = vpop.xlane.xlu0 %3315
        %v3317 = vcvt.f32.s32 %v3316
        %v3318 = vcvt.f32.s32 %v3312
        %v3319 = vshll.u32 %v3318, 16
        %v3320 = vadd.s32 %v3319, %v3317
        %vm3321 = vcmp.lt.s32.totalorder %v3149, %v3150
        %v3322 = vsel %vm3321, %v3149, %v3150
        %v3323 = vand.u32 %v3322, 65535
        %v3324 = vshra.s32 %v3322, 16
        %v3325 = vcvt.s32.f32 %v3323
        %v3326 = vcvt.s32.f32 %v3324
        %3327 = vmin.xlane.f32.xlu0 %v3326
        %v3328 = vpop.xlane.xlu0 %3327
        %vm3329 = vcmp.eq.f32.partialorder %v3326, %v3328
        %v3330 = vsel %vm3329, %v3325, inf
        %3331 = vmin.xlane.f32.xlu0 %v3330
        %v3332 = vpop.xlane.xlu0 %3331
        %v3333 = vcvt.f32.s32 %v3332
        %v3334 = vcvt.f32.s32 %v3328
        %v3335 = vshll.u32 %v3334, 16
        %v3336 = vadd.s32 %v3335, %v3333
        %vm3337 = vcmp.lt.s32.totalorder %v3151, %v3152
        %v3338 = vsel %vm3337, %v3151, %v3152
        %v3339 = vand.u32 %v3338, 65535
        %v3340 = vshra.s32 %v3338, 16
        %v3341 = vcvt.s32.f32 %v3339
        %v3342 = vcvt.s32.f32 %v3340
        %3343 = vmin.xlane.f32.xlu0 %v3342
        %v3344 = vpop.xlane.xlu0 %3343
        %vm3345 = vcmp.eq.f32.partialorder %v3342, %v3344
        %v3346 = vsel %vm3345, %v3341, inf
        %3347 = vmin.xlane.f32.xlu0 %v3346
        %v3348 = vpop.xlane.xlu0 %3347
        %v3349 = vcvt.f32.s32 %v3348
        %v3350 = vcvt.f32.s32 %v3344
        %v3351 = vshll.u32 %v3350, 16
        %v3352 = vadd.s32 %v3351, %v3349
        %vm3353 = vcmp.lt.s32.totalorder %v3153, %v3154
        %v3354 = vsel %vm3353, %v3153, %v3154
        %v3355 = vand.u32 %v3354, 65535
        %v3356 = vshra.s32 %v3354, 16
        %v3357 = vcvt.s32.f32 %v3355
        %v3358 = vcvt.s32.f32 %v3356
        %3359 = vmin.xlane.f32.xlu0 %v3358
        %v3360 = vpop.xlane.xlu0 %3359
        %vm3361 = vcmp.eq.f32.partialorder %v3358, %v3360
        %v3362 = vsel %vm3361, %v3357, inf
        %3363 = vmin.xlane.f32.xlu0 %v3362
        %v3364 = vpop.xlane.xlu0 %3363
        %v3365 = vcvt.f32.s32 %v3364
        %v3366 = vcvt.f32.s32 %v3360
        %v3367 = vshll.u32 %v3366, 16
        %v3368 = vadd.s32 %v3367, %v3365
        %vm3369 = vcmp.lt.s32.totalorder %v3155, %v3156
        %v3370 = vsel %vm3369, %v3155, %v3156
        %v3371 = vand.u32 %v3370, 65535
        %v3372 = vshra.s32 %v3370, 16
        %v3373 = vcvt.s32.f32 %v3371
        %v3374 = vcvt.s32.f32 %v3372
        %3375 = vmin.xlane.f32.xlu0 %v3374
        %v3376 = vpop.xlane.xlu0 %3375
        %vm3377 = vcmp.eq.f32.partialorder %v3374, %v3376
        %v3378 = vsel %vm3377, %v3373, inf
        %3379 = vmin.xlane.f32.xlu0 %v3378
        %v3380 = vpop.xlane.xlu0 %3379
        %v3381 = vcvt.f32.s32 %v3380
        %v3382 = vcvt.f32.s32 %v3376
        %v3383 = vshll.u32 %v3382, 16
        %v3384 = vadd.s32 %v3383, %v3381
        %vm3385 = vcmp.lt.s32.totalorder %v3157, %v3158
        %v3386 = vsel %vm3385, %v3157, %v3158
        %v3387 = vand.u32 %v3386, 65535
        %v3388 = vshra.s32 %v3386, 16
        %v3389 = vcvt.s32.f32 %v3387
        %v3390 = vcvt.s32.f32 %v3388
        %3391 = vmin.xlane.f32.xlu0 %v3390
        %v3392 = vpop.xlane.xlu0 %3391
        %vm3393 = vcmp.eq.f32.partialorder %v3390, %v3392
        %v3394 = vsel %vm3393, %v3389, inf
        %3395 = vmin.xlane.f32.xlu0 %v3394
        %v3396 = vpop.xlane.xlu0 %3395
        %v3397 = vcvt.f32.s32 %v3396
        %v3398 = vcvt.f32.s32 %v3392
        %v3399 = vshll.u32 %v3398, 16
        %v3400 = vadd.s32 %v3399, %v3397
        %vm3401 = vcmp.lt.s32.totalorder %v3159, %v3160
        %v3402 = vsel %vm3401, %v3159, %v3160
        %v3403 = vand.u32 %v3402, 65535
        %v3404 = vshra.s32 %v3402, 16
        %v3405 = vcvt.s32.f32 %v3403
        %v3406 = vcvt.s32.f32 %v3404
        %3407 = vmin.xlane.f32.xlu0 %v3406
        %v3408 = vpop.xlane.xlu0 %3407
        %vm3409 = vcmp.eq.f32.partialorder %v3406, %v3408
        %v3410 = vsel %vm3409, %v3405, inf
        %3411 = vmin.xlane.f32.xlu0 %v3410
        %v3412 = vpop.xlane.xlu0 %3411
        %v3413 = vcvt.f32.s32 %v3412
        %v3414 = vcvt.f32.s32 %v3408
        %v3415 = vshll.u32 %v3414, 16
        %v3416 = vadd.s32 %v3415, %v3413
        %vm3417 = vcmp.eq.s32.totalorder %v487, %v3176
        %vm3418 = vcmp.eq.s32.totalorder %v488, %v3176
        %vm3419 = vcmp.eq.s32.totalorder %v487, %v3192
        %vm3420 = vcmp.eq.s32.totalorder %v488, %v3192
        %vm3421 = vcmp.eq.s32.totalorder %v487, %v3208
        %vm3422 = vcmp.eq.s32.totalorder %v488, %v3208
        %vm3423 = vcmp.eq.s32.totalorder %v487, %v3224
        %vm3424 = vcmp.eq.s32.totalorder %v488, %v3224
        %vm3425 = vcmp.eq.s32.totalorder %v487, %v3240
        %vm3426 = vcmp.eq.s32.totalorder %v488, %v3240
        %vm3427 = vcmp.eq.s32.totalorder %v487, %v3256
        %vm3428 = vcmp.eq.s32.totalorder %v488, %v3256
        %vm3429 = vcmp.eq.s32.totalorder %v487, %v3272
        %vm3430 = vcmp.eq.s32.totalorder %v488, %v3272
        %vm3431 = vcmp.eq.s32.totalorder %v487, %v3288
        %vm3432 = vcmp.eq.s32.totalorder %v488, %v3288
        %vm3433 = vcmp.eq.s32.totalorder %v487, %v3304
        %vm3434 = vcmp.eq.s32.totalorder %v488, %v3304
        %vm3435 = vcmp.eq.s32.totalorder %v487, %v3320
        %vm3436 = vcmp.eq.s32.totalorder %v488, %v3320
        %vm3437 = vcmp.eq.s32.totalorder %v487, %v3336
        %vm3438 = vcmp.eq.s32.totalorder %v488, %v3336
        %vm3439 = vcmp.eq.s32.totalorder %v487, %v3352
        %vm3440 = vcmp.eq.s32.totalorder %v488, %v3352
        %vm3441 = vcmp.eq.s32.totalorder %v487, %v3368
        %vm3442 = vcmp.eq.s32.totalorder %v488, %v3368
        %vm3443 = vcmp.eq.s32.totalorder %v487, %v3384
        %vm3444 = vcmp.eq.s32.totalorder %v488, %v3384
        %vm3445 = vcmp.eq.s32.totalorder %v487, %v3400
        %vm3446 = vcmp.eq.s32.totalorder %v488, %v3400
        %vm3447 = vcmp.eq.s32.totalorder %v487, %v3416
        %vm3448 = vcmp.eq.s32.totalorder %v488, %v3416
        %v3449 = vsel %vm3417, 1, 0
        %v3450 = vsel %vm3418, 1, 0
        %v3451 = vsel %vm3419, 1, 0
        %v3452 = vsel %vm3420, 1, 0
        %v3453 = vsel %vm3421, 1, 0
        %v3454 = vsel %vm3422, 1, 0
        %v3455 = vsel %vm3423, 1, 0
        %v3456 = vsel %vm3424, 1, 0
        %v3457 = vsel %vm3425, 1, 0
        %v3458 = vsel %vm3426, 1, 0
        %v3459 = vsel %vm3427, 1, 0
        %v3460 = vsel %vm3428, 1, 0
        %v3461 = vsel %vm3429, 1, 0
        %v3462 = vsel %vm3430, 1, 0
        %v3463 = vsel %vm3431, 1, 0
        %v3464 = vsel %vm3432, 1, 0
        %v3465 = vsel %vm3433, 1, 0
        %v3466 = vsel %vm3434, 1, 0
        %v3467 = vsel %vm3435, 1, 0
        %v3468 = vsel %vm3436, 1, 0
        %v3469 = vsel %vm3437, 1, 0
        %v3470 = vsel %vm3438, 1, 0
        %v3471 = vsel %vm3439, 1, 0
        %v3472 = vsel %vm3440, 1, 0
        %v3473 = vsel %vm3441, 1, 0
        %v3474 = vsel %vm3442, 1, 0
        %v3475 = vsel %vm3443, 1, 0
        %v3476 = vsel %vm3444, 1, 0
        %v3477 = vsel %vm3445, 1, 0
        %v3478 = vsel %vm3446, 1, 0
        %v3479 = vsel %vm3447, 1, 0
        %v3480 = vsel %vm3448, 1, 0
        %v3481 = vcvt.s32.f32 %v3449
        %v3482 = vcvt.s32.f32 %v3450
        %v3483 = vcvt.s32.f32 %v3451
        %v3484 = vcvt.s32.f32 %v3452
        %v3485 = vcvt.s32.f32 %v3453
        %v3486 = vcvt.s32.f32 %v3454
        %v3487 = vcvt.s32.f32 %v3455
        %v3488 = vcvt.s32.f32 %v3456
        %v3489 = vcvt.s32.f32 %v3457
        %v3490 = vcvt.s32.f32 %v3458
        %v3491 = vcvt.s32.f32 %v3459
        %v3492 = vcvt.s32.f32 %v3460
        %v3493 = vcvt.s32.f32 %v3461
        %v3494 = vcvt.s32.f32 %v3462
        %v3495 = vcvt.s32.f32 %v3463
        %v3496 = vcvt.s32.f32 %v3464
        %v3497 = vcvt.s32.f32 %v3465
        %v3498 = vcvt.s32.f32 %v3466
        %v3499 = vcvt.s32.f32 %v3467
        %v3500 = vcvt.s32.f32 %v3468
        %v3501 = vcvt.s32.f32 %v3469
        %v3502 = vcvt.s32.f32 %v3470
        %v3503 = vcvt.s32.f32 %v3471
        %v3504 = vcvt.s32.f32 %v3472
        %v3505 = vcvt.s32.f32 %v3473
        %v3506 = vcvt.s32.f32 %v3474
        %v3507 = vcvt.s32.f32 %v3475
        %v3508 = vcvt.s32.f32 %v3476
        %v3509 = vcvt.s32.f32 %v3477
        %v3510 = vcvt.s32.f32 %v3478
        %v3511 = vcvt.s32.f32 %v3479
        %v3512 = vcvt.s32.f32 %v3480
        %v3513 = vpack.c.bf16 %v3482, %v3481
        %v3514 = vpack.c.bf16 %v3484, %v3483
        %v3515 = vpack.c.bf16 %v3486, %v3485
        %v3516 = vpack.c.bf16 %v3488, %v3487
        %v3517 = vpack.c.bf16 %v3490, %v3489
        %v3518 = vpack.c.bf16 %v3492, %v3491
        %v3519 = vpack.c.bf16 %v3494, %v3493
        %v3520 = vpack.c.bf16 %v3496, %v3495
        %v3521 = vpack.c.bf16 %v3498, %v3497
        %v3522 = vpack.c.bf16 %v3500, %v3499
        %v3523 = vpack.c.bf16 %v3502, %v3501
        %v3524 = vpack.c.bf16 %v3504, %v3503
        %v3525 = vpack.c.bf16 %v3506, %v3505
        %v3526 = vpack.c.bf16 %v3508, %v3507
        %v3527 = vpack.c.bf16 %v3510, %v3509
        %v3528 = vpack.c.bf16 %v3512, %v3511
        %v3529 = vsel %vm3417, inf, %v3017
        %v3530 = vsel %vm3418, inf, %v3018
        %v3531 = vsel %vm3419, inf, %v3019
        %v3532 = vsel %vm3420, inf, %v3020
        %v3533 = vsel %vm3421, inf, %v3021
        %v3534 = vsel %vm3422, inf, %v3022
        %v3535 = vsel %vm3423, inf, %v3023
        %v3536 = vsel %vm3424, inf, %v3024
        %v3537 = vsel %vm3425, inf, %v3025
        %v3538 = vsel %vm3426, inf, %v3026
        %v3539 = vsel %vm3427, inf, %v3027
        %v3540 = vsel %vm3428, inf, %v3028
        %v3541 = vsel %vm3429, inf, %v3029
        %v3542 = vsel %vm3430, inf, %v3030
        %v3543 = vsel %vm3431, inf, %v3031
        %v3544 = vsel %vm3432, inf, %v3032
        %v3545 = vsel %vm3433, inf, %v3033
        %v3546 = vsel %vm3434, inf, %v3034
        %v3547 = vsel %vm3435, inf, %v3035
        %v3548 = vsel %vm3436, inf, %v3036
        %v3549 = vsel %vm3437, inf, %v3037
        %v3550 = vsel %vm3438, inf, %v3038
        %v3551 = vsel %vm3439, inf, %v3039
        %v3552 = vsel %vm3440, inf, %v3040
        %v3553 = vsel %vm3441, inf, %v3041
        %v3554 = vsel %vm3442, inf, %v3042
        %v3555 = vsel %vm3443, inf, %v3043
        %v3556 = vsel %vm3444, inf, %v3044
        %v3557 = vsel %vm3445, inf, %v3045
        %v3558 = vsel %vm3446, inf, %v3046
        %v3559 = vsel %vm3447, inf, %v3047
        %v3560 = vsel %vm3448, inf, %v3048
        %v3561 = vmin.f32 %v3529, %v3530
        %3562 = vmin.xlane.f32.xlu0 %v3561
        %v3563 = vpop.xlane.xlu0 %3562
        %v3564 = vmin.f32 %v3531, %v3532
        %3565 = vmin.xlane.f32.xlu0 %v3564
        %v3566 = vpop.xlane.xlu0 %3565
        %v3567 = vmin.f32 %v3533, %v3534
        %3568 = vmin.xlane.f32.xlu0 %v3567
        %v3569 = vpop.xlane.xlu0 %3568
        %v3570 = vmin.f32 %v3535, %v3536
        %3571 = vmin.xlane.f32.xlu0 %v3570
        %v3572 = vpop.xlane.xlu0 %3571
        %v3573 = vmin.f32 %v3537, %v3538
        %3574 = vmin.xlane.f32.xlu0 %v3573
        %v3575 = vpop.xlane.xlu0 %3574
        %v3576 = vmin.f32 %v3539, %v3540
        %3577 = vmin.xlane.f32.xlu0 %v3576
        %v3578 = vpop.xlane.xlu0 %3577
        %v3579 = vmin.f32 %v3541, %v3542
        %3580 = vmin.xlane.f32.xlu0 %v3579
        %v3581 = vpop.xlane.xlu0 %3580
        %v3582 = vmin.f32 %v3543, %v3544
        %3583 = vmin.xlane.f32.xlu0 %v3582
        %v3584 = vpop.xlane.xlu0 %3583
        %v3585 = vmin.f32 %v3545, %v3546
        %3586 = vmin.xlane.f32.xlu0 %v3585
        %v3587 = vpop.xlane.xlu0 %3586
        %v3588 = vmin.f32 %v3547, %v3548
        %3589 = vmin.xlane.f32.xlu0 %v3588
        %v3590 = vpop.xlane.xlu0 %3589
        %v3591 = vmin.f32 %v3549, %v3550
        %3592 = vmin.xlane.f32.xlu0 %v3591
        %v3593 = vpop.xlane.xlu0 %3592
        %v3594 = vmin.f32 %v3551, %v3552
        %3595 = vmin.xlane.f32.xlu0 %v3594
        %v3596 = vpop.xlane.xlu0 %3595
        %v3597 = vmin.f32 %v3553, %v3554
        %3598 = vmin.xlane.f32.xlu0 %v3597
        %v3599 = vpop.xlane.xlu0 %3598
        %v3600 = vmin.f32 %v3555, %v3556
        %3601 = vmin.xlane.f32.xlu0 %v3600
        %v3602 = vpop.xlane.xlu0 %3601
        %v3603 = vmin.f32 %v3557, %v3558
        %3604 = vmin.xlane.f32.xlu0 %v3603
        %v3605 = vpop.xlane.xlu0 %3604
        %v3606 = vmin.f32 %v3559, %v3560
        %3607 = vmin.xlane.f32.xlu0 %v3606
        %v3608 = vpop.xlane.xlu0 %3607
        %vm3609 = vcmp.eq.f32.partialorder %v3529, %v3563
        %vm3610 = vcmp.eq.f32.partialorder %v3530, %v3563
        %vm3611 = vcmp.eq.f32.partialorder %v3531, %v3566
        %vm3612 = vcmp.eq.f32.partialorder %v3532, %v3566
        %vm3613 = vcmp.eq.f32.partialorder %v3533, %v3569
        %vm3614 = vcmp.eq.f32.partialorder %v3534, %v3569
        %vm3615 = vcmp.eq.f32.partialorder %v3535, %v3572
        %vm3616 = vcmp.eq.f32.partialorder %v3536, %v3572
        %vm3617 = vcmp.eq.f32.partialorder %v3537, %v3575
        %vm3618 = vcmp.eq.f32.partialorder %v3538, %v3575
        %vm3619 = vcmp.eq.f32.partialorder %v3539, %v3578
        %vm3620 = vcmp.eq.f32.partialorder %v3540, %v3578
        %vm3621 = vcmp.eq.f32.partialorder %v3541, %v3581
        %vm3622 = vcmp.eq.f32.partialorder %v3542, %v3581
        %vm3623 = vcmp.eq.f32.partialorder %v3543, %v3584
        %vm3624 = vcmp.eq.f32.partialorder %v3544, %v3584
        %vm3625 = vcmp.eq.f32.partialorder %v3545, %v3587
        %vm3626 = vcmp.eq.f32.partialorder %v3546, %v3587
        %vm3627 = vcmp.eq.f32.partialorder %v3547, %v3590
        %vm3628 = vcmp.eq.f32.partialorder %v3548, %v3590
        %vm3629 = vcmp.eq.f32.partialorder %v3549, %v3593
        %vm3630 = vcmp.eq.f32.partialorder %v3550, %v3593
        %vm3631 = vcmp.eq.f32.partialorder %v3551, %v3596
        %vm3632 = vcmp.eq.f32.partialorder %v3552, %v3596
        %vm3633 = vcmp.eq.f32.partialorder %v3553, %v3599
        %vm3634 = vcmp.eq.f32.partialorder %v3554, %v3599
        %vm3635 = vcmp.eq.f32.partialorder %v3555, %v3602
        %vm3636 = vcmp.eq.f32.partialorder %v3556, %v3602
        %vm3637 = vcmp.eq.f32.partialorder %v3557, %v3605
        %vm3638 = vcmp.eq.f32.partialorder %v3558, %v3605
        %vm3639 = vcmp.eq.f32.partialorder %v3559, %v3608
        %vm3640 = vcmp.eq.f32.partialorder %v3560, %v3608
        %v3641 = vsel %vm3609, %v487, 256
        %v3642 = vsel %vm3610, %v488, 256
        %v3643 = vsel %vm3611, %v487, 256
        %v3644 = vsel %vm3612, %v488, 256
        %v3645 = vsel %vm3613, %v487, 256
        %v3646 = vsel %vm3614, %v488, 256
        %v3647 = vsel %vm3615, %v487, 256
        %v3648 = vsel %vm3616, %v488, 256
        %v3649 = vsel %vm3617, %v487, 256
        %v3650 = vsel %vm3618, %v488, 256
        %v3651 = vsel %vm3619, %v487, 256
        %v3652 = vsel %vm3620, %v488, 256
        %v3653 = vsel %vm3621, %v487, 256
        %v3654 = vsel %vm3622, %v488, 256
        %v3655 = vsel %vm3623, %v487, 256
        %v3656 = vsel %vm3624, %v488, 256
        %v3657 = vsel %vm3625, %v487, 256
        %v3658 = vsel %vm3626, %v488, 256
        %v3659 = vsel %vm3627, %v487, 256
        %v3660 = vsel %vm3628, %v488, 256
        %v3661 = vsel %vm3629, %v487, 256
        %v3662 = vsel %vm3630, %v488, 256
        %v3663 = vsel %vm3631, %v487, 256
        %v3664 = vsel %vm3632, %v488, 256
        %v3665 = vsel %vm3633, %v487, 256
        %v3666 = vsel %vm3634, %v488, 256
        %v3667 = vsel %vm3635, %v487, 256
        %v3668 = vsel %vm3636, %v488, 256
        %v3669 = vsel %vm3637, %v487, 256
        %v3670 = vsel %vm3638, %v488, 256
        %v3671 = vsel %vm3639, %v487, 256
        %v3672 = vsel %vm3640, %v488, 256
        %vm3673 = vcmp.lt.s32.totalorder %v3641, %v3642
        %v3674 = vsel %vm3673, %v3641, %v3642
        %v3675 = vand.u32 %v3674, 65535
        %v3676 = vshra.s32 %v3674, 16
        %v3677 = vcvt.s32.f32 %v3675
        %v3678 = vcvt.s32.f32 %v3676
        %3679 = vmin.xlane.f32.xlu0 %v3678
        %v3680 = vpop.xlane.xlu0 %3679
        %vm3681 = vcmp.eq.f32.partialorder %v3678, %v3680
        %v3682 = vsel %vm3681, %v3677, inf
        %3683 = vmin.xlane.f32.xlu0 %v3682
        %v3684 = vpop.xlane.xlu0 %3683
        %v3685 = vcvt.f32.s32 %v3684
        %v3686 = vcvt.f32.s32 %v3680
        %v3687 = vshll.u32 %v3686, 16
        %v3688 = vadd.s32 %v3687, %v3685
        %vm3689 = vcmp.lt.s32.totalorder %v3643, %v3644
        %v3690 = vsel %vm3689, %v3643, %v3644
        %v3691 = vand.u32 %v3690, 65535
        %v3692 = vshra.s32 %v3690, 16
        %v3693 = vcvt.s32.f32 %v3691
        %v3694 = vcvt.s32.f32 %v3692
        %3695 = vmin.xlane.f32.xlu0 %v3694
        %v3696 = vpop.xlane.xlu0 %3695
        %vm3697 = vcmp.eq.f32.partialorder %v3694, %v3696
        %v3698 = vsel %vm3697, %v3693, inf
        %3699 = vmin.xlane.f32.xlu0 %v3698
        %v3700 = vpop.xlane.xlu0 %3699
        %v3701 = vcvt.f32.s32 %v3700
        %v3702 = vcvt.f32.s32 %v3696
        %v3703 = vshll.u32 %v3702, 16
        %v3704 = vadd.s32 %v3703, %v3701
        %vm3705 = vcmp.lt.s32.totalorder %v3645, %v3646
        %v3706 = vsel %vm3705, %v3645, %v3646
        %v3707 = vand.u32 %v3706, 65535
        %v3708 = vshra.s32 %v3706, 16
        %v3709 = vcvt.s32.f32 %v3707
        %v3710 = vcvt.s32.f32 %v3708
        %3711 = vmin.xlane.f32.xlu0 %v3710
        %v3712 = vpop.xlane.xlu0 %3711
        %vm3713 = vcmp.eq.f32.partialorder %v3710, %v3712
        %v3714 = vsel %vm3713, %v3709, inf
        %3715 = vmin.xlane.f32.xlu0 %v3714
        %v3716 = vpop.xlane.xlu0 %3715
        %v3717 = vcvt.f32.s32 %v3716
        %v3718 = vcvt.f32.s32 %v3712
        %v3719 = vshll.u32 %v3718, 16
        %v3720 = vadd.s32 %v3719, %v3717
        %vm3721 = vcmp.lt.s32.totalorder %v3647, %v3648
        %v3722 = vsel %vm3721, %v3647, %v3648
        %v3723 = vand.u32 %v3722, 65535
        %v3724 = vshra.s32 %v3722, 16
        %v3725 = vcvt.s32.f32 %v3723
        %v3726 = vcvt.s32.f32 %v3724
        %3727 = vmin.xlane.f32.xlu0 %v3726
        %v3728 = vpop.xlane.xlu0 %3727
        %vm3729 = vcmp.eq.f32.partialorder %v3726, %v3728
        %v3730 = vsel %vm3729, %v3725, inf
        %3731 = vmin.xlane.f32.xlu0 %v3730
        %v3732 = vpop.xlane.xlu0 %3731
        %v3733 = vcvt.f32.s32 %v3732
        %v3734 = vcvt.f32.s32 %v3728
        %v3735 = vshll.u32 %v3734, 16
        %v3736 = vadd.s32 %v3735, %v3733
        %vm3737 = vcmp.lt.s32.totalorder %v3649, %v3650
        %v3738 = vsel %vm3737, %v3649, %v3650
        %v3739 = vand.u32 %v3738, 65535
        %v3740 = vshra.s32 %v3738, 16
        %v3741 = vcvt.s32.f32 %v3739
        %v3742 = vcvt.s32.f32 %v3740
        %3743 = vmin.xlane.f32.xlu0 %v3742
        %v3744 = vpop.xlane.xlu0 %3743
        %vm3745 = vcmp.eq.f32.partialorder %v3742, %v3744
        %v3746 = vsel %vm3745, %v3741, inf
        %3747 = vmin.xlane.f32.xlu0 %v3746
        %v3748 = vpop.xlane.xlu0 %3747
        %v3749 = vcvt.f32.s32 %v3748
        %v3750 = vcvt.f32.s32 %v3744
        %v3751 = vshll.u32 %v3750, 16
        %v3752 = vadd.s32 %v3751, %v3749
        %vm3753 = vcmp.lt.s32.totalorder %v3651, %v3652
        %v3754 = vsel %vm3753, %v3651, %v3652
        %v3755 = vand.u32 %v3754, 65535
        %v3756 = vshra.s32 %v3754, 16
        %v3757 = vcvt.s32.f32 %v3755
        %v3758 = vcvt.s32.f32 %v3756
        %3759 = vmin.xlane.f32.xlu0 %v3758
        %v3760 = vpop.xlane.xlu0 %3759
        %vm3761 = vcmp.eq.f32.partialorder %v3758, %v3760
        %v3762 = vsel %vm3761, %v3757, inf
        %3763 = vmin.xlane.f32.xlu0 %v3762
        %v3764 = vpop.xlane.xlu0 %3763
        %v3765 = vcvt.f32.s32 %v3764
        %v3766 = vcvt.f32.s32 %v3760
        %v3767 = vshll.u32 %v3766, 16
        %v3768 = vadd.s32 %v3767, %v3765
        %vm3769 = vcmp.lt.s32.totalorder %v3653, %v3654
        %v3770 = vsel %vm3769, %v3653, %v3654
        %v3771 = vand.u32 %v3770, 65535
        %v3772 = vshra.s32 %v3770, 16
        %v3773 = vcvt.s32.f32 %v3771
        %v3774 = vcvt.s32.f32 %v3772
        %3775 = vmin.xlane.f32.xlu0 %v3774
        %v3776 = vpop.xlane.xlu0 %3775
        %vm3777 = vcmp.eq.f32.partialorder %v3774, %v3776
        %v3778 = vsel %vm3777, %v3773, inf
        %3779 = vmin.xlane.f32.xlu0 %v3778
        %v3780 = vpop.xlane.xlu0 %3779
        %v3781 = vcvt.f32.s32 %v3780
        %v3782 = vcvt.f32.s32 %v3776
        %v3783 = vshll.u32 %v3782, 16
        %v3784 = vadd.s32 %v3783, %v3781
        %vm3785 = vcmp.lt.s32.totalorder %v3655, %v3656
        %v3786 = vsel %vm3785, %v3655, %v3656
        %v3787 = vand.u32 %v3786, 65535
        %v3788 = vshra.s32 %v3786, 16
        %v3789 = vcvt.s32.f32 %v3787
        %v3790 = vcvt.s32.f32 %v3788
        %3791 = vmin.xlane.f32.xlu0 %v3790
        %v3792 = vpop.xlane.xlu0 %3791
        %vm3793 = vcmp.eq.f32.partialorder %v3790, %v3792
        %v3794 = vsel %vm3793, %v3789, inf
        %3795 = vmin.xlane.f32.xlu0 %v3794
        %v3796 = vpop.xlane.xlu0 %3795
        %v3797 = vcvt.f32.s32 %v3796
        %v3798 = vcvt.f32.s32 %v3792
        %v3799 = vshll.u32 %v3798, 16
        %v3800 = vadd.s32 %v3799, %v3797
        %vm3801 = vcmp.lt.s32.totalorder %v3657, %v3658
        %v3802 = vsel %vm3801, %v3657, %v3658
        %v3803 = vand.u32 %v3802, 65535
        %v3804 = vshra.s32 %v3802, 16
        %v3805 = vcvt.s32.f32 %v3803
        %v3806 = vcvt.s32.f32 %v3804
        %3807 = vmin.xlane.f32.xlu0 %v3806
        %v3808 = vpop.xlane.xlu0 %3807
        %vm3809 = vcmp.eq.f32.partialorder %v3806, %v3808
        %v3810 = vsel %vm3809, %v3805, inf
        %3811 = vmin.xlane.f32.xlu0 %v3810
        %v3812 = vpop.xlane.xlu0 %3811
        %v3813 = vcvt.f32.s32 %v3812
        %v3814 = vcvt.f32.s32 %v3808
        %v3815 = vshll.u32 %v3814, 16
        %v3816 = vadd.s32 %v3815, %v3813
        %vm3817 = vcmp.lt.s32.totalorder %v3659, %v3660
        %v3818 = vsel %vm3817, %v3659, %v3660
        %v3819 = vand.u32 %v3818, 65535
        %v3820 = vshra.s32 %v3818, 16
        %v3821 = vcvt.s32.f32 %v3819
        %v3822 = vcvt.s32.f32 %v3820
        %3823 = vmin.xlane.f32.xlu0 %v3822
        %v3824 = vpop.xlane.xlu0 %3823
        %vm3825 = vcmp.eq.f32.partialorder %v3822, %v3824
        %v3826 = vsel %vm3825, %v3821, inf
        %3827 = vmin.xlane.f32.xlu0 %v3826
        %v3828 = vpop.xlane.xlu0 %3827
        %v3829 = vcvt.f32.s32 %v3828
        %v3830 = vcvt.f32.s32 %v3824
        %v3831 = vshll.u32 %v3830, 16
        %v3832 = vadd.s32 %v3831, %v3829
        %vm3833 = vcmp.lt.s32.totalorder %v3661, %v3662
        %v3834 = vsel %vm3833, %v3661, %v3662
        %v3835 = vand.u32 %v3834, 65535
        %v3836 = vshra.s32 %v3834, 16
        %v3837 = vcvt.s32.f32 %v3835
        %v3838 = vcvt.s32.f32 %v3836
        %3839 = vmin.xlane.f32.xlu0 %v3838
        %v3840 = vpop.xlane.xlu0 %3839
        %vm3841 = vcmp.eq.f32.partialorder %v3838, %v3840
        %v3842 = vsel %vm3841, %v3837, inf
        %3843 = vmin.xlane.f32.xlu0 %v3842
        %v3844 = vpop.xlane.xlu0 %3843
        %v3845 = vcvt.f32.s32 %v3844
        %v3846 = vcvt.f32.s32 %v3840
        %v3847 = vshll.u32 %v3846, 16
        %v3848 = vadd.s32 %v3847, %v3845
        %vm3849 = vcmp.lt.s32.totalorder %v3663, %v3664
        %v3850 = vsel %vm3849, %v3663, %v3664
        %v3851 = vand.u32 %v3850, 65535
        %v3852 = vshra.s32 %v3850, 16
        %v3853 = vcvt.s32.f32 %v3851
        %v3854 = vcvt.s32.f32 %v3852
        %3855 = vmin.xlane.f32.xlu0 %v3854
        %v3856 = vpop.xlane.xlu0 %3855
        %vm3857 = vcmp.eq.f32.partialorder %v3854, %v3856
        %v3858 = vsel %vm3857, %v3853, inf
        %3859 = vmin.xlane.f32.xlu0 %v3858
        %v3860 = vpop.xlane.xlu0 %3859
        %v3861 = vcvt.f32.s32 %v3860
        %v3862 = vcvt.f32.s32 %v3856
        %v3863 = vshll.u32 %v3862, 16
        %v3864 = vadd.s32 %v3863, %v3861
        %vm3865 = vcmp.lt.s32.totalorder %v3665, %v3666
        %v3866 = vsel %vm3865, %v3665, %v3666
        %v3867 = vand.u32 %v3866, 65535
        %v3868 = vshra.s32 %v3866, 16
        %v3869 = vcvt.s32.f32 %v3867
        %v3870 = vcvt.s32.f32 %v3868
        %3871 = vmin.xlane.f32.xlu0 %v3870
        %v3872 = vpop.xlane.xlu0 %3871
        %vm3873 = vcmp.eq.f32.partialorder %v3870, %v3872
        %v3874 = vsel %vm3873, %v3869, inf
        %3875 = vmin.xlane.f32.xlu0 %v3874
        %v3876 = vpop.xlane.xlu0 %3875
        %v3877 = vcvt.f32.s32 %v3876
        %v3878 = vcvt.f32.s32 %v3872
        %v3879 = vshll.u32 %v3878, 16
        %v3880 = vadd.s32 %v3879, %v3877
        %vm3881 = vcmp.lt.s32.totalorder %v3667, %v3668
        %v3882 = vsel %vm3881, %v3667, %v3668
        %v3883 = vand.u32 %v3882, 65535
        %v3884 = vshra.s32 %v3882, 16
        %v3885 = vcvt.s32.f32 %v3883
        %v3886 = vcvt.s32.f32 %v3884
        %3887 = vmin.xlane.f32.xlu0 %v3886
        %v3888 = vpop.xlane.xlu0 %3887
        %vm3889 = vcmp.eq.f32.partialorder %v3886, %v3888
        %v3890 = vsel %vm3889, %v3885, inf
        %3891 = vmin.xlane.f32.xlu0 %v3890
        %v3892 = vpop.xlane.xlu0 %3891
        %v3893 = vcvt.f32.s32 %v3892
        %v3894 = vcvt.f32.s32 %v3888
        %v3895 = vshll.u32 %v3894, 16
        %v3896 = vadd.s32 %v3895, %v3893
        %vm3897 = vcmp.lt.s32.totalorder %v3669, %v3670
        %v3898 = vsel %vm3897, %v3669, %v3670
        %v3899 = vand.u32 %v3898, 65535
        %v3900 = vshra.s32 %v3898, 16
        %v3901 = vcvt.s32.f32 %v3899
        %v3902 = vcvt.s32.f32 %v3900
        %3903 = vmin.xlane.f32.xlu0 %v3902
        %v3904 = vpop.xlane.xlu0 %3903
        %vm3905 = vcmp.eq.f32.partialorder %v3902, %v3904
        %v3906 = vsel %vm3905, %v3901, inf
        %3907 = vmin.xlane.f32.xlu0 %v3906
        %v3908 = vpop.xlane.xlu0 %3907
        %v3909 = vcvt.f32.s32 %v3908
        %v3910 = vcvt.f32.s32 %v3904
        %v3911 = vshll.u32 %v3910, 16
        %v3912 = vadd.s32 %v3911, %v3909
        %vm3913 = vcmp.lt.s32.totalorder %v3671, %v3672
        %v3914 = vsel %vm3913, %v3671, %v3672
        %v3915 = vand.u32 %v3914, 65535
        %v3916 = vshra.s32 %v3914, 16
        %v3917 = vcvt.s32.f32 %v3915
        %v3918 = vcvt.s32.f32 %v3916
        %3919 = vmin.xlane.f32.xlu0 %v3918
        %v3920 = vpop.xlane.xlu0 %3919
        %vm3921 = vcmp.eq.f32.partialorder %v3918, %v3920
        %v3922 = vsel %vm3921, %v3917, inf
        %3923 = vmin.xlane.f32.xlu0 %v3922
        %v3924 = vpop.xlane.xlu0 %3923
        %v3925 = vcvt.f32.s32 %v3924
        %v3926 = vcvt.f32.s32 %v3920
        %v3927 = vshll.u32 %v3926, 16
        %v3928 = vadd.s32 %v3927, %v3925
        %vm3929 = vcmp.eq.s32.totalorder %v487, %v3688
        %vm3930 = vcmp.eq.s32.totalorder %v488, %v3688
        %vm3931 = vcmp.eq.s32.totalorder %v487, %v3704
        %vm3932 = vcmp.eq.s32.totalorder %v488, %v3704
        %vm3933 = vcmp.eq.s32.totalorder %v487, %v3720
        %vm3934 = vcmp.eq.s32.totalorder %v488, %v3720
        %vm3935 = vcmp.eq.s32.totalorder %v487, %v3736
        %vm3936 = vcmp.eq.s32.totalorder %v488, %v3736
        %vm3937 = vcmp.eq.s32.totalorder %v487, %v3752
        %vm3938 = vcmp.eq.s32.totalorder %v488, %v3752
        %vm3939 = vcmp.eq.s32.totalorder %v487, %v3768
        %vm3940 = vcmp.eq.s32.totalorder %v488, %v3768
        %vm3941 = vcmp.eq.s32.totalorder %v487, %v3784
        %vm3942 = vcmp.eq.s32.totalorder %v488, %v3784
        %vm3943 = vcmp.eq.s32.totalorder %v487, %v3800
        %vm3944 = vcmp.eq.s32.totalorder %v488, %v3800
        %vm3945 = vcmp.eq.s32.totalorder %v487, %v3816
        %vm3946 = vcmp.eq.s32.totalorder %v488, %v3816
        %vm3947 = vcmp.eq.s32.totalorder %v487, %v3832
        %vm3948 = vcmp.eq.s32.totalorder %v488, %v3832
        %vm3949 = vcmp.eq.s32.totalorder %v487, %v3848
        %vm3950 = vcmp.eq.s32.totalorder %v488, %v3848
        %vm3951 = vcmp.eq.s32.totalorder %v487, %v3864
        %vm3952 = vcmp.eq.s32.totalorder %v488, %v3864
        %vm3953 = vcmp.eq.s32.totalorder %v487, %v3880
        %vm3954 = vcmp.eq.s32.totalorder %v488, %v3880
        %vm3955 = vcmp.eq.s32.totalorder %v487, %v3896
        %vm3956 = vcmp.eq.s32.totalorder %v488, %v3896
        %vm3957 = vcmp.eq.s32.totalorder %v487, %v3912
        %vm3958 = vcmp.eq.s32.totalorder %v488, %v3912
        %vm3959 = vcmp.eq.s32.totalorder %v487, %v3928
        %vm3960 = vcmp.eq.s32.totalorder %v488, %v3928
        %v3961 = vsel %vm3929, 1, 0
        %v3962 = vsel %vm3930, 1, 0
        %v3963 = vsel %vm3931, 1, 0
        %v3964 = vsel %vm3932, 1, 0
        %v3965 = vsel %vm3933, 1, 0
        %v3966 = vsel %vm3934, 1, 0
        %v3967 = vsel %vm3935, 1, 0
        %v3968 = vsel %vm3936, 1, 0
        %v3969 = vsel %vm3937, 1, 0
        %v3970 = vsel %vm3938, 1, 0
        %v3971 = vsel %vm3939, 1, 0
        %v3972 = vsel %vm3940, 1, 0
        %v3973 = vsel %vm3941, 1, 0
        %v3974 = vsel %vm3942, 1, 0
        %v3975 = vsel %vm3943, 1, 0
        %v3976 = vsel %vm3944, 1, 0
        %v3977 = vsel %vm3945, 1, 0
        %v3978 = vsel %vm3946, 1, 0
        %v3979 = vsel %vm3947, 1, 0
        %v3980 = vsel %vm3948, 1, 0
        %v3981 = vsel %vm3949, 1, 0
        %v3982 = vsel %vm3950, 1, 0
        %v3983 = vsel %vm3951, 1, 0
        %v3984 = vsel %vm3952, 1, 0
        %v3985 = vsel %vm3953, 1, 0
        %v3986 = vsel %vm3954, 1, 0
        %v3987 = vsel %vm3955, 1, 0
        %v3988 = vsel %vm3956, 1, 0
        %v3989 = vsel %vm3957, 1, 0
        %v3990 = vsel %vm3958, 1, 0
        %v3991 = vsel %vm3959, 1, 0
        %v3992 = vsel %vm3960, 1, 0
        %v3993 = vcvt.s32.f32 %v3961
        %v3994 = vcvt.s32.f32 %v3962
        %v3995 = vcvt.s32.f32 %v3963
        %v3996 = vcvt.s32.f32 %v3964
        %v3997 = vcvt.s32.f32 %v3965
        %v3998 = vcvt.s32.f32 %v3966
        %v3999 = vcvt.s32.f32 %v3967
        %v4000 = vcvt.s32.f32 %v3968
        %v4001 = vcvt.s32.f32 %v3969
        %v4002 = vcvt.s32.f32 %v3970
        %v4003 = vcvt.s32.f32 %v3971
        %v4004 = vcvt.s32.f32 %v3972
        %v4005 = vcvt.s32.f32 %v3973
        %v4006 = vcvt.s32.f32 %v3974
        %v4007 = vcvt.s32.f32 %v3975
        %v4008 = vcvt.s32.f32 %v3976
        %v4009 = vcvt.s32.f32 %v3977
        %v4010 = vcvt.s32.f32 %v3978
        %v4011 = vcvt.s32.f32 %v3979
        %v4012 = vcvt.s32.f32 %v3980
        %v4013 = vcvt.s32.f32 %v3981
        %v4014 = vcvt.s32.f32 %v3982
        %v4015 = vcvt.s32.f32 %v3983
        %v4016 = vcvt.s32.f32 %v3984
        %v4017 = vcvt.s32.f32 %v3985
        %v4018 = vcvt.s32.f32 %v3986
        %v4019 = vcvt.s32.f32 %v3987
        %v4020 = vcvt.s32.f32 %v3988
        %v4021 = vcvt.s32.f32 %v3989
        %v4022 = vcvt.s32.f32 %v3990
        %v4023 = vcvt.s32.f32 %v3991
        %v4024 = vcvt.s32.f32 %v3992
        %v4025 = vpack.c.bf16 %v3994, %v3993
        %v4026 = vpack.c.bf16 %v3996, %v3995
        %v4027 = vpack.c.bf16 %v3998, %v3997
        %v4028 = vpack.c.bf16 %v4000, %v3999
        %v4029 = vpack.c.bf16 %v4002, %v4001
        %v4030 = vpack.c.bf16 %v4004, %v4003
        %v4031 = vpack.c.bf16 %v4006, %v4005
        %v4032 = vpack.c.bf16 %v4008, %v4007
        %v4033 = vpack.c.bf16 %v4010, %v4009
        %v4034 = vpack.c.bf16 %v4012, %v4011
        %v4035 = vpack.c.bf16 %v4014, %v4013
        %v4036 = vpack.c.bf16 %v4016, %v4015
        %v4037 = vpack.c.bf16 %v4018, %v4017
        %v4038 = vpack.c.bf16 %v4020, %v4019
        %v4039 = vpack.c.bf16 %v4022, %v4021
        %v4040 = vpack.c.bf16 %v4024, %v4023
        %v4041 = vsel %vm3929, inf, %v3529
        %v4042 = vsel %vm3930, inf, %v3530
        %v4043 = vsel %vm3931, inf, %v3531
        %v4044 = vsel %vm3932, inf, %v3532
        %v4045 = vsel %vm3933, inf, %v3533
        %v4046 = vsel %vm3934, inf, %v3534
        %v4047 = vsel %vm3935, inf, %v3535
        %v4048 = vsel %vm3936, inf, %v3536
        %v4049 = vsel %vm3937, inf, %v3537
        %v4050 = vsel %vm3938, inf, %v3538
        %v4051 = vsel %vm3939, inf, %v3539
        %v4052 = vsel %vm3940, inf, %v3540
        %v4053 = vsel %vm3941, inf, %v3541
        %v4054 = vsel %vm3942, inf, %v3542
        %v4055 = vsel %vm3943, inf, %v3543
        %v4056 = vsel %vm3944, inf, %v3544
        %v4057 = vsel %vm3945, inf, %v3545
        %v4058 = vsel %vm3946, inf, %v3546
        %v4059 = vsel %vm3947, inf, %v3547
        %v4060 = vsel %vm3948, inf, %v3548
        %v4061 = vsel %vm3949, inf, %v3549
        %v4062 = vsel %vm3950, inf, %v3550
        %v4063 = vsel %vm3951, inf, %v3551
        %v4064 = vsel %vm3952, inf, %v3552
        %v4065 = vsel %vm3953, inf, %v3553
        %v4066 = vsel %vm3954, inf, %v3554
        %v4067 = vsel %vm3955, inf, %v3555
        %v4068 = vsel %vm3956, inf, %v3556
        %v4069 = vsel %vm3957, inf, %v3557
        %v4070 = vsel %vm3958, inf, %v3558
        %v4071 = vsel %vm3959, inf, %v3559
        %v4072 = vsel %vm3960, inf, %v3560
        %v4073 = vmin.f32 %v4041, %v4042
        %4074 = vmin.xlane.f32.xlu0 %v4073
        %v4075 = vpop.xlane.xlu0 %4074
        %v4076 = vmin.f32 %v4043, %v4044
        %4077 = vmin.xlane.f32.xlu0 %v4076
        %v4078 = vpop.xlane.xlu0 %4077
        %v4079 = vmin.f32 %v4045, %v4046
        %4080 = vmin.xlane.f32.xlu0 %v4079
        %v4081 = vpop.xlane.xlu0 %4080
        %v4082 = vmin.f32 %v4047, %v4048
        %4083 = vmin.xlane.f32.xlu0 %v4082
        %v4084 = vpop.xlane.xlu0 %4083
        %v4085 = vmin.f32 %v4049, %v4050
        %4086 = vmin.xlane.f32.xlu0 %v4085
        %v4087 = vpop.xlane.xlu0 %4086
        %v4088 = vmin.f32 %v4051, %v4052
        %4089 = vmin.xlane.f32.xlu0 %v4088
        %v4090 = vpop.xlane.xlu0 %4089
        %v4091 = vmin.f32 %v4053, %v4054
        %4092 = vmin.xlane.f32.xlu0 %v4091
        %v4093 = vpop.xlane.xlu0 %4092
        %v4094 = vmin.f32 %v4055, %v4056
        %4095 = vmin.xlane.f32.xlu0 %v4094
        %v4096 = vpop.xlane.xlu0 %4095
        %v4097 = vmin.f32 %v4057, %v4058
        %4098 = vmin.xlane.f32.xlu0 %v4097
        %v4099 = vpop.xlane.xlu0 %4098
        %v4100 = vmin.f32 %v4059, %v4060
        %4101 = vmin.xlane.f32.xlu0 %v4100
        %v4102 = vpop.xlane.xlu0 %4101
        %v4103 = vmin.f32 %v4061, %v4062
        %4104 = vmin.xlane.f32.xlu0 %v4103
        %v4105 = vpop.xlane.xlu0 %4104
        %v4106 = vmin.f32 %v4063, %v4064
        %4107 = vmin.xlane.f32.xlu0 %v4106
        %v4108 = vpop.xlane.xlu0 %4107
        %v4109 = vmin.f32 %v4065, %v4066
        %4110 = vmin.xlane.f32.xlu0 %v4109
        %v4111 = vpop.xlane.xlu0 %4110
        %v4112 = vmin.f32 %v4067, %v4068
        %4113 = vmin.xlane.f32.xlu0 %v4112
        %v4114 = vpop.xlane.xlu0 %4113
        %v4115 = vmin.f32 %v4069, %v4070
        %4116 = vmin.xlane.f32.xlu0 %v4115
        %v4117 = vpop.xlane.xlu0 %4116
        %v4118 = vmin.f32 %v4071, %v4072
        %4119 = vmin.xlane.f32.xlu0 %v4118
        %v4120 = vpop.xlane.xlu0 %4119
        %vm4121 = vcmp.eq.f32.partialorder %v4041, %v4075
        %vm4122 = vcmp.eq.f32.partialorder %v4042, %v4075
        %vm4123 = vcmp.eq.f32.partialorder %v4043, %v4078
        %vm4124 = vcmp.eq.f32.partialorder %v4044, %v4078
        %vm4125 = vcmp.eq.f32.partialorder %v4045, %v4081
        %vm4126 = vcmp.eq.f32.partialorder %v4046, %v4081
        %vm4127 = vcmp.eq.f32.partialorder %v4047, %v4084
        %vm4128 = vcmp.eq.f32.partialorder %v4048, %v4084
        %vm4129 = vcmp.eq.f32.partialorder %v4049, %v4087
        %vm4130 = vcmp.eq.f32.partialorder %v4050, %v4087
        %vm4131 = vcmp.eq.f32.partialorder %v4051, %v4090
        %vm4132 = vcmp.eq.f32.partialorder %v4052, %v4090
        %vm4133 = vcmp.eq.f32.partialorder %v4053, %v4093
        %vm4134 = vcmp.eq.f32.partialorder %v4054, %v4093
        %vm4135 = vcmp.eq.f32.partialorder %v4055, %v4096
        %vm4136 = vcmp.eq.f32.partialorder %v4056, %v4096
        %vm4137 = vcmp.eq.f32.partialorder %v4057, %v4099
        %vm4138 = vcmp.eq.f32.partialorder %v4058, %v4099
        %vm4139 = vcmp.eq.f32.partialorder %v4059, %v4102
        %vm4140 = vcmp.eq.f32.partialorder %v4060, %v4102
        %vm4141 = vcmp.eq.f32.partialorder %v4061, %v4105
        %vm4142 = vcmp.eq.f32.partialorder %v4062, %v4105
        %vm4143 = vcmp.eq.f32.partialorder %v4063, %v4108
        %vm4144 = vcmp.eq.f32.partialorder %v4064, %v4108
        %vm4145 = vcmp.eq.f32.partialorder %v4065, %v4111
        %vm4146 = vcmp.eq.f32.partialorder %v4066, %v4111
        %vm4147 = vcmp.eq.f32.partialorder %v4067, %v4114
        %vm4148 = vcmp.eq.f32.partialorder %v4068, %v4114
        %vm4149 = vcmp.eq.f32.partialorder %v4069, %v4117
        %vm4150 = vcmp.eq.f32.partialorder %v4070, %v4117
        %vm4151 = vcmp.eq.f32.partialorder %v4071, %v4120
        %vm4152 = vcmp.eq.f32.partialorder %v4072, %v4120
        %v4153 = vsel %vm4121, %v487, 256
        %v4154 = vsel %vm4122, %v488, 256
        %v4155 = vsel %vm4123, %v487, 256
        %v4156 = vsel %vm4124, %v488, 256
        %v4157 = vsel %vm4125, %v487, 256
        %v4158 = vsel %vm4126, %v488, 256
        %v4159 = vsel %vm4127, %v487, 256
        %v4160 = vsel %vm4128, %v488, 256
        %v4161 = vsel %vm4129, %v487, 256
        %v4162 = vsel %vm4130, %v488, 256
        %v4163 = vsel %vm4131, %v487, 256
        %v4164 = vsel %vm4132, %v488, 256
        %v4165 = vsel %vm4133, %v487, 256
        %v4166 = vsel %vm4134, %v488, 256
        %v4167 = vsel %vm4135, %v487, 256
        %v4168 = vsel %vm4136, %v488, 256
        %v4169 = vsel %vm4137, %v487, 256
        %v4170 = vsel %vm4138, %v488, 256
        %v4171 = vsel %vm4139, %v487, 256
        %v4172 = vsel %vm4140, %v488, 256
        %v4173 = vsel %vm4141, %v487, 256
        %v4174 = vsel %vm4142, %v488, 256
        %v4175 = vsel %vm4143, %v487, 256
        %v4176 = vsel %vm4144, %v488, 256
        %v4177 = vsel %vm4145, %v487, 256
        %v4178 = vsel %vm4146, %v488, 256
        %v4179 = vsel %vm4147, %v487, 256
        %v4180 = vsel %vm4148, %v488, 256
        %v4181 = vsel %vm4149, %v487, 256
        %v4182 = vsel %vm4150, %v488, 256
        %v4183 = vsel %vm4151, %v487, 256
        %v4184 = vsel %vm4152, %v488, 256
        %vm4185 = vcmp.lt.s32.totalorder %v4153, %v4154
        %v4186 = vsel %vm4185, %v4153, %v4154
        %v4187 = vand.u32 %v4186, 65535
        %v4188 = vshra.s32 %v4186, 16
        %v4189 = vcvt.s32.f32 %v4187
        %v4190 = vcvt.s32.f32 %v4188
        %4191 = vmin.xlane.f32.xlu0 %v4190
        %v4192 = vpop.xlane.xlu0 %4191
        %vm4193 = vcmp.eq.f32.partialorder %v4190, %v4192
        %v4194 = vsel %vm4193, %v4189, inf
        %4195 = vmin.xlane.f32.xlu0 %v4194
        %v4196 = vpop.xlane.xlu0 %4195
        %v4197 = vcvt.f32.s32 %v4196
        %v4198 = vcvt.f32.s32 %v4192
        %v4199 = vshll.u32 %v4198, 16
        %v4200 = vadd.s32 %v4199, %v4197
        %vm4201 = vcmp.lt.s32.totalorder %v4155, %v4156
        %v4202 = vsel %vm4201, %v4155, %v4156
        %v4203 = vand.u32 %v4202, 65535
        %v4204 = vshra.s32 %v4202, 16
        %v4205 = vcvt.s32.f32 %v4203
        %v4206 = vcvt.s32.f32 %v4204
        %4207 = vmin.xlane.f32.xlu0 %v4206
        %v4208 = vpop.xlane.xlu0 %4207
        %vm4209 = vcmp.eq.f32.partialorder %v4206, %v4208
        %v4210 = vsel %vm4209, %v4205, inf
        %4211 = vmin.xlane.f32.xlu0 %v4210
        %v4212 = vpop.xlane.xlu0 %4211
        %v4213 = vcvt.f32.s32 %v4212
        %v4214 = vcvt.f32.s32 %v4208
        %v4215 = vshll.u32 %v4214, 16
        %v4216 = vadd.s32 %v4215, %v4213
        %vm4217 = vcmp.lt.s32.totalorder %v4157, %v4158
        %v4218 = vsel %vm4217, %v4157, %v4158
        %v4219 = vand.u32 %v4218, 65535
        %v4220 = vshra.s32 %v4218, 16
        %v4221 = vcvt.s32.f32 %v4219
        %v4222 = vcvt.s32.f32 %v4220
        %4223 = vmin.xlane.f32.xlu0 %v4222
        %v4224 = vpop.xlane.xlu0 %4223
        %vm4225 = vcmp.eq.f32.partialorder %v4222, %v4224
        %v4226 = vsel %vm4225, %v4221, inf
        %4227 = vmin.xlane.f32.xlu0 %v4226
        %v4228 = vpop.xlane.xlu0 %4227
        %v4229 = vcvt.f32.s32 %v4228
        %v4230 = vcvt.f32.s32 %v4224
        %v4231 = vshll.u32 %v4230, 16
        %v4232 = vadd.s32 %v4231, %v4229
        %vm4233 = vcmp.lt.s32.totalorder %v4159, %v4160
        %v4234 = vsel %vm4233, %v4159, %v4160
        %v4235 = vand.u32 %v4234, 65535
        %v4236 = vshra.s32 %v4234, 16
        %v4237 = vcvt.s32.f32 %v4235
        %v4238 = vcvt.s32.f32 %v4236
        %4239 = vmin.xlane.f32.xlu0 %v4238
        %v4240 = vpop.xlane.xlu0 %4239
        %vm4241 = vcmp.eq.f32.partialorder %v4238, %v4240
        %v4242 = vsel %vm4241, %v4237, inf
        %4243 = vmin.xlane.f32.xlu0 %v4242
        %v4244 = vpop.xlane.xlu0 %4243
        %v4245 = vcvt.f32.s32 %v4244
        %v4246 = vcvt.f32.s32 %v4240
        %v4247 = vshll.u32 %v4246, 16
        %v4248 = vadd.s32 %v4247, %v4245
        %vm4249 = vcmp.lt.s32.totalorder %v4161, %v4162
        %v4250 = vsel %vm4249, %v4161, %v4162
        %v4251 = vand.u32 %v4250, 65535
        %v4252 = vshra.s32 %v4250, 16
        %v4253 = vcvt.s32.f32 %v4251
        %v4254 = vcvt.s32.f32 %v4252
        %4255 = vmin.xlane.f32.xlu0 %v4254
        %v4256 = vpop.xlane.xlu0 %4255
        %vm4257 = vcmp.eq.f32.partialorder %v4254, %v4256
        %v4258 = vsel %vm4257, %v4253, inf
        %4259 = vmin.xlane.f32.xlu0 %v4258
        %v4260 = vpop.xlane.xlu0 %4259
        %v4261 = vcvt.f32.s32 %v4260
        %v4262 = vcvt.f32.s32 %v4256
        %v4263 = vshll.u32 %v4262, 16
        %v4264 = vadd.s32 %v4263, %v4261
        %vm4265 = vcmp.lt.s32.totalorder %v4163, %v4164
        %v4266 = vsel %vm4265, %v4163, %v4164
        %v4267 = vand.u32 %v4266, 65535
        %v4268 = vshra.s32 %v4266, 16
        %v4269 = vcvt.s32.f32 %v4267
        %v4270 = vcvt.s32.f32 %v4268
        %4271 = vmin.xlane.f32.xlu0 %v4270
        %v4272 = vpop.xlane.xlu0 %4271
        %vm4273 = vcmp.eq.f32.partialorder %v4270, %v4272
        %v4274 = vsel %vm4273, %v4269, inf
        %4275 = vmin.xlane.f32.xlu0 %v4274
        %v4276 = vpop.xlane.xlu0 %4275
        %v4277 = vcvt.f32.s32 %v4276
        %v4278 = vcvt.f32.s32 %v4272
        %v4279 = vshll.u32 %v4278, 16
        %v4280 = vadd.s32 %v4279, %v4277
        %vm4281 = vcmp.lt.s32.totalorder %v4165, %v4166
        %v4282 = vsel %vm4281, %v4165, %v4166
        %v4283 = vand.u32 %v4282, 65535
        %v4284 = vshra.s32 %v4282, 16
        %v4285 = vcvt.s32.f32 %v4283
        %v4286 = vcvt.s32.f32 %v4284
        %4287 = vmin.xlane.f32.xlu0 %v4286
        %v4288 = vpop.xlane.xlu0 %4287
        %vm4289 = vcmp.eq.f32.partialorder %v4286, %v4288
        %v4290 = vsel %vm4289, %v4285, inf
        %4291 = vmin.xlane.f32.xlu0 %v4290
        %v4292 = vpop.xlane.xlu0 %4291
        %v4293 = vcvt.f32.s32 %v4292
        %v4294 = vcvt.f32.s32 %v4288
        %v4295 = vshll.u32 %v4294, 16
        %v4296 = vadd.s32 %v4295, %v4293
        %vm4297 = vcmp.lt.s32.totalorder %v4167, %v4168
        %v4298 = vsel %vm4297, %v4167, %v4168
        %v4299 = vand.u32 %v4298, 65535
        %v4300 = vshra.s32 %v4298, 16
        %v4301 = vcvt.s32.f32 %v4299
        %v4302 = vcvt.s32.f32 %v4300
        %4303 = vmin.xlane.f32.xlu0 %v4302
        %v4304 = vpop.xlane.xlu0 %4303
        %vm4305 = vcmp.eq.f32.partialorder %v4302, %v4304
        %v4306 = vsel %vm4305, %v4301, inf
        %4307 = vmin.xlane.f32.xlu0 %v4306
        %v4308 = vpop.xlane.xlu0 %4307
        %v4309 = vcvt.f32.s32 %v4308
        %v4310 = vcvt.f32.s32 %v4304
        %v4311 = vshll.u32 %v4310, 16
        %v4312 = vadd.s32 %v4311, %v4309
        %vm4313 = vcmp.lt.s32.totalorder %v4169, %v4170
        %v4314 = vsel %vm4313, %v4169, %v4170
        %v4315 = vand.u32 %v4314, 65535
        %v4316 = vshra.s32 %v4314, 16
        %v4317 = vcvt.s32.f32 %v4315
        %v4318 = vcvt.s32.f32 %v4316
        %4319 = vmin.xlane.f32.xlu0 %v4318
        %v4320 = vpop.xlane.xlu0 %4319
        %vm4321 = vcmp.eq.f32.partialorder %v4318, %v4320
        %v4322 = vsel %vm4321, %v4317, inf
        %4323 = vmin.xlane.f32.xlu0 %v4322
        %v4324 = vpop.xlane.xlu0 %4323
        %v4325 = vcvt.f32.s32 %v4324
        %v4326 = vcvt.f32.s32 %v4320
        %v4327 = vshll.u32 %v4326, 16
        %v4328 = vadd.s32 %v4327, %v4325
        %vm4329 = vcmp.lt.s32.totalorder %v4171, %v4172
        %v4330 = vsel %vm4329, %v4171, %v4172
        %v4331 = vand.u32 %v4330, 65535
        %v4332 = vshra.s32 %v4330, 16
        %v4333 = vcvt.s32.f32 %v4331
        %v4334 = vcvt.s32.f32 %v4332
        %4335 = vmin.xlane.f32.xlu0 %v4334
        %v4336 = vpop.xlane.xlu0 %4335
        %vm4337 = vcmp.eq.f32.partialorder %v4334, %v4336
        %v4338 = vsel %vm4337, %v4333, inf
        %4339 = vmin.xlane.f32.xlu0 %v4338
        %v4340 = vpop.xlane.xlu0 %4339
        %v4341 = vcvt.f32.s32 %v4340
        %v4342 = vcvt.f32.s32 %v4336
        %v4343 = vshll.u32 %v4342, 16
        %v4344 = vadd.s32 %v4343, %v4341
        %vm4345 = vcmp.lt.s32.totalorder %v4173, %v4174
        %v4346 = vsel %vm4345, %v4173, %v4174
        %v4347 = vand.u32 %v4346, 65535
        %v4348 = vshra.s32 %v4346, 16
        %v4349 = vcvt.s32.f32 %v4347
        %v4350 = vcvt.s32.f32 %v4348
        %4351 = vmin.xlane.f32.xlu0 %v4350
        %v4352 = vpop.xlane.xlu0 %4351
        %vm4353 = vcmp.eq.f32.partialorder %v4350, %v4352
        %v4354 = vsel %vm4353, %v4349, inf
        %4355 = vmin.xlane.f32.xlu0 %v4354
        %v4356 = vpop.xlane.xlu0 %4355
        %v4357 = vcvt.f32.s32 %v4356
        %v4358 = vcvt.f32.s32 %v4352
        %v4359 = vshll.u32 %v4358, 16
        %v4360 = vadd.s32 %v4359, %v4357
        %vm4361 = vcmp.lt.s32.totalorder %v4175, %v4176
        %v4362 = vsel %vm4361, %v4175, %v4176
        %v4363 = vand.u32 %v4362, 65535
        %v4364 = vshra.s32 %v4362, 16
        %v4365 = vcvt.s32.f32 %v4363
        %v4366 = vcvt.s32.f32 %v4364
        %4367 = vmin.xlane.f32.xlu0 %v4366
        %v4368 = vpop.xlane.xlu0 %4367
        %vm4369 = vcmp.eq.f32.partialorder %v4366, %v4368
        %v4370 = vsel %vm4369, %v4365, inf
        %4371 = vmin.xlane.f32.xlu0 %v4370
        %v4372 = vpop.xlane.xlu0 %4371
        %v4373 = vcvt.f32.s32 %v4372
        %v4374 = vcvt.f32.s32 %v4368
        %v4375 = vshll.u32 %v4374, 16
        %v4376 = vadd.s32 %v4375, %v4373
        %vm4377 = vcmp.lt.s32.totalorder %v4177, %v4178
        %v4378 = vsel %vm4377, %v4177, %v4178
        %v4379 = vand.u32 %v4378, 65535
        %v4380 = vshra.s32 %v4378, 16
        %v4381 = vcvt.s32.f32 %v4379
        %v4382 = vcvt.s32.f32 %v4380
        %4383 = vmin.xlane.f32.xlu0 %v4382
        %v4384 = vpop.xlane.xlu0 %4383
        %vm4385 = vcmp.eq.f32.partialorder %v4382, %v4384
        %v4386 = vsel %vm4385, %v4381, inf
        %4387 = vmin.xlane.f32.xlu0 %v4386
        %v4388 = vpop.xlane.xlu0 %4387
        %v4389 = vcvt.f32.s32 %v4388
        %v4390 = vcvt.f32.s32 %v4384
        %v4391 = vshll.u32 %v4390, 16
        %v4392 = vadd.s32 %v4391, %v4389
        %vm4393 = vcmp.lt.s32.totalorder %v4179, %v4180
        %v4394 = vsel %vm4393, %v4179, %v4180
        %v4395 = vand.u32 %v4394, 65535
        %v4396 = vshra.s32 %v4394, 16
        %v4397 = vcvt.s32.f32 %v4395
        %v4398 = vcvt.s32.f32 %v4396
        %4399 = vmin.xlane.f32.xlu0 %v4398
        %v4400 = vpop.xlane.xlu0 %4399
        %vm4401 = vcmp.eq.f32.partialorder %v4398, %v4400
        %v4402 = vsel %vm4401, %v4397, inf
        %4403 = vmin.xlane.f32.xlu0 %v4402
        %v4404 = vpop.xlane.xlu0 %4403
        %v4405 = vcvt.f32.s32 %v4404
        %v4406 = vcvt.f32.s32 %v4400
        %v4407 = vshll.u32 %v4406, 16
        %v4408 = vadd.s32 %v4407, %v4405
        %vm4409 = vcmp.lt.s32.totalorder %v4181, %v4182
        %v4410 = vsel %vm4409, %v4181, %v4182
        %v4411 = vand.u32 %v4410, 65535
        %v4412 = vshra.s32 %v4410, 16
        %v4413 = vcvt.s32.f32 %v4411
        %v4414 = vcvt.s32.f32 %v4412
        %4415 = vmin.xlane.f32.xlu0 %v4414
        %v4416 = vpop.xlane.xlu0 %4415
        %vm4417 = vcmp.eq.f32.partialorder %v4414, %v4416
        %v4418 = vsel %vm4417, %v4413, inf
        %4419 = vmin.xlane.f32.xlu0 %v4418
        %v4420 = vpop.xlane.xlu0 %4419
        %v4421 = vcvt.f32.s32 %v4420
        %v4422 = vcvt.f32.s32 %v4416
        %v4423 = vshll.u32 %v4422, 16
        %v4424 = vadd.s32 %v4423, %v4421
        %vm4425 = vcmp.lt.s32.totalorder %v4183, %v4184
        %v4426 = vsel %vm4425, %v4183, %v4184
        %v4427 = vand.u32 %v4426, 65535
        %v4428 = vshra.s32 %v4426, 16
        %v4429 = vcvt.s32.f32 %v4427
        %v4430 = vcvt.s32.f32 %v4428
        %4431 = vmin.xlane.f32.xlu0 %v4430
        %v4432 = vpop.xlane.xlu0 %4431
        %vm4433 = vcmp.eq.f32.partialorder %v4430, %v4432
        %v4434 = vsel %vm4433, %v4429, inf
        %4435 = vmin.xlane.f32.xlu0 %v4434
        %v4436 = vpop.xlane.xlu0 %4435
        %v4437 = vcvt.f32.s32 %v4436
        %v4438 = vcvt.f32.s32 %v4432
        %v4439 = vshll.u32 %v4438, 16
        %v4440 = vadd.s32 %v4439, %v4437
        %vm4441 = vcmp.eq.s32.totalorder %v487, %v4200
        %vm4442 = vcmp.eq.s32.totalorder %v488, %v4200
        %vm4443 = vcmp.eq.s32.totalorder %v487, %v4216
        %vm4444 = vcmp.eq.s32.totalorder %v488, %v4216
        %vm4445 = vcmp.eq.s32.totalorder %v487, %v4232
        %vm4446 = vcmp.eq.s32.totalorder %v488, %v4232
        %vm4447 = vcmp.eq.s32.totalorder %v487, %v4248
        %vm4448 = vcmp.eq.s32.totalorder %v488, %v4248
        %vm4449 = vcmp.eq.s32.totalorder %v487, %v4264
        %vm4450 = vcmp.eq.s32.totalorder %v488, %v4264
        %vm4451 = vcmp.eq.s32.totalorder %v487, %v4280
        %vm4452 = vcmp.eq.s32.totalorder %v488, %v4280
        %vm4453 = vcmp.eq.s32.totalorder %v487, %v4296
        %vm4454 = vcmp.eq.s32.totalorder %v488, %v4296
        %vm4455 = vcmp.eq.s32.totalorder %v487, %v4312
        %vm4456 = vcmp.eq.s32.totalorder %v488, %v4312
        %vm4457 = vcmp.eq.s32.totalorder %v487, %v4328
        %vm4458 = vcmp.eq.s32.totalorder %v488, %v4328
        %vm4459 = vcmp.eq.s32.totalorder %v487, %v4344
        %vm4460 = vcmp.eq.s32.totalorder %v488, %v4344
        %vm4461 = vcmp.eq.s32.totalorder %v487, %v4360
        %vm4462 = vcmp.eq.s32.totalorder %v488, %v4360
        %vm4463 = vcmp.eq.s32.totalorder %v487, %v4376
        %vm4464 = vcmp.eq.s32.totalorder %v488, %v4376
        %vm4465 = vcmp.eq.s32.totalorder %v487, %v4392
        %vm4466 = vcmp.eq.s32.totalorder %v488, %v4392
        %vm4467 = vcmp.eq.s32.totalorder %v487, %v4408
        %vm4468 = vcmp.eq.s32.totalorder %v488, %v4408
        %vm4469 = vcmp.eq.s32.totalorder %v487, %v4424
        %vm4470 = vcmp.eq.s32.totalorder %v488, %v4424
        %vm4471 = vcmp.eq.s32.totalorder %v487, %v4440
        %vm4472 = vcmp.eq.s32.totalorder %v488, %v4440
        %v4473 = vsel %vm4441, 1, 0
        %v4474 = vsel %vm4442, 1, 0
        %v4475 = vsel %vm4443, 1, 0
        %v4476 = vsel %vm4444, 1, 0
        %v4477 = vsel %vm4445, 1, 0
        %v4478 = vsel %vm4446, 1, 0
        %v4479 = vsel %vm4447, 1, 0
        %v4480 = vsel %vm4448, 1, 0
        %v4481 = vsel %vm4449, 1, 0
        %v4482 = vsel %vm4450, 1, 0
        %v4483 = vsel %vm4451, 1, 0
        %v4484 = vsel %vm4452, 1, 0
        %v4485 = vsel %vm4453, 1, 0
        %v4486 = vsel %vm4454, 1, 0
        %v4487 = vsel %vm4455, 1, 0
        %v4488 = vsel %vm4456, 1, 0
        %v4489 = vsel %vm4457, 1, 0
        %v4490 = vsel %vm4458, 1, 0
        %v4491 = vsel %vm4459, 1, 0
        %v4492 = vsel %vm4460, 1, 0
        %v4493 = vsel %vm4461, 1, 0
        %v4494 = vsel %vm4462, 1, 0
        %v4495 = vsel %vm4463, 1, 0
        %v4496 = vsel %vm4464, 1, 0
        %v4497 = vsel %vm4465, 1, 0
        %v4498 = vsel %vm4466, 1, 0
        %v4499 = vsel %vm4467, 1, 0
        %v4500 = vsel %vm4468, 1, 0
        %v4501 = vsel %vm4469, 1, 0
        %v4502 = vsel %vm4470, 1, 0
        %v4503 = vsel %vm4471, 1, 0
        %v4504 = vsel %vm4472, 1, 0
        %v4505 = vcvt.s32.f32 %v4473
        %v4506 = vcvt.s32.f32 %v4474
        %v4507 = vcvt.s32.f32 %v4475
        %v4508 = vcvt.s32.f32 %v4476
        %v4509 = vcvt.s32.f32 %v4477
        %v4510 = vcvt.s32.f32 %v4478
        %v4511 = vcvt.s32.f32 %v4479
        %v4512 = vcvt.s32.f32 %v4480
        %v4513 = vcvt.s32.f32 %v4481
        %v4514 = vcvt.s32.f32 %v4482
        %v4515 = vcvt.s32.f32 %v4483
        %v4516 = vcvt.s32.f32 %v4484
        %v4517 = vcvt.s32.f32 %v4485
        %v4518 = vcvt.s32.f32 %v4486
        %v4519 = vcvt.s32.f32 %v4487
        %v4520 = vcvt.s32.f32 %v4488
        %v4521 = vcvt.s32.f32 %v4489
        %v4522 = vcvt.s32.f32 %v4490
        %v4523 = vcvt.s32.f32 %v4491
        %v4524 = vcvt.s32.f32 %v4492
        %v4525 = vcvt.s32.f32 %v4493
        %v4526 = vcvt.s32.f32 %v4494
        %v4527 = vcvt.s32.f32 %v4495
        %v4528 = vcvt.s32.f32 %v4496
        %v4529 = vcvt.s32.f32 %v4497
        %v4530 = vcvt.s32.f32 %v4498
        %v4531 = vcvt.s32.f32 %v4499
        %v4532 = vcvt.s32.f32 %v4500
        %v4533 = vcvt.s32.f32 %v4501
        %v4534 = vcvt.s32.f32 %v4502
        %v4535 = vcvt.s32.f32 %v4503
        %v4536 = vcvt.s32.f32 %v4504
        %v4537 = vpack.c.bf16 %v4506, %v4505
        %v4538 = vpack.c.bf16 %v4508, %v4507
        %v4539 = vpack.c.bf16 %v4510, %v4509
        %v4540 = vpack.c.bf16 %v4512, %v4511
        %v4541 = vpack.c.bf16 %v4514, %v4513
        %v4542 = vpack.c.bf16 %v4516, %v4515
        %v4543 = vpack.c.bf16 %v4518, %v4517
        %v4544 = vpack.c.bf16 %v4520, %v4519
        %v4545 = vpack.c.bf16 %v4522, %v4521
        %v4546 = vpack.c.bf16 %v4524, %v4523
        %v4547 = vpack.c.bf16 %v4526, %v4525
        %v4548 = vpack.c.bf16 %v4528, %v4527
        %v4549 = vpack.c.bf16 %v4530, %v4529
        %v4550 = vpack.c.bf16 %v4532, %v4531
        %v4551 = vpack.c.bf16 %v4534, %v4533
        %v4552 = vpack.c.bf16 %v4536, %v4535
        %v4553 = vsel %vm4441, inf, %v4041
        %v4554 = vsel %vm4442, inf, %v4042
        %v4555 = vsel %vm4443, inf, %v4043
        %v4556 = vsel %vm4444, inf, %v4044
        %v4557 = vsel %vm4445, inf, %v4045
        %v4558 = vsel %vm4446, inf, %v4046
        %v4559 = vsel %vm4447, inf, %v4047
        %v4560 = vsel %vm4448, inf, %v4048
        %v4561 = vsel %vm4449, inf, %v4049
        %v4562 = vsel %vm4450, inf, %v4050
        %v4563 = vsel %vm4451, inf, %v4051
        %v4564 = vsel %vm4452, inf, %v4052
        %v4565 = vsel %vm4453, inf, %v4053
        %v4566 = vsel %vm4454, inf, %v4054
        %v4567 = vsel %vm4455, inf, %v4055
        %v4568 = vsel %vm4456, inf, %v4056
        %v4569 = vsel %vm4457, inf, %v4057
        %v4570 = vsel %vm4458, inf, %v4058
        %v4571 = vsel %vm4459, inf, %v4059
        %v4572 = vsel %vm4460, inf, %v4060
        %v4573 = vsel %vm4461, inf, %v4061
        %v4574 = vsel %vm4462, inf, %v4062
        %v4575 = vsel %vm4463, inf, %v4063
        %v4576 = vsel %vm4464, inf, %v4064
        %v4577 = vsel %vm4465, inf, %v4065
        %v4578 = vsel %vm4466, inf, %v4066
        %v4579 = vsel %vm4467, inf, %v4067
        %v4580 = vsel %vm4468, inf, %v4068
        %v4581 = vsel %vm4469, inf, %v4069
        %v4582 = vsel %vm4470, inf, %v4070
        %v4583 = vsel %vm4471, inf, %v4071
        %v4584 = vsel %vm4472, inf, %v4072
        %v4585 = vmin.f32 %v4553, %v4554
        %4586 = vmin.xlane.f32.xlu0 %v4585
        %v4587 = vpop.xlane.xlu0 %4586
        %v4588 = vmin.f32 %v4555, %v4556
        %4589 = vmin.xlane.f32.xlu0 %v4588
        %v4590 = vpop.xlane.xlu0 %4589
        %v4591 = vmin.f32 %v4557, %v4558
        %4592 = vmin.xlane.f32.xlu0 %v4591
        %v4593 = vpop.xlane.xlu0 %4592
        %v4594 = vmin.f32 %v4559, %v4560
        %4595 = vmin.xlane.f32.xlu0 %v4594
        %v4596 = vpop.xlane.xlu0 %4595
        %v4597 = vmin.f32 %v4561, %v4562
        %4598 = vmin.xlane.f32.xlu0 %v4597
        %v4599 = vpop.xlane.xlu0 %4598
        %v4600 = vmin.f32 %v4563, %v4564
        %4601 = vmin.xlane.f32.xlu0 %v4600
        %v4602 = vpop.xlane.xlu0 %4601
        %v4603 = vmin.f32 %v4565, %v4566
        %4604 = vmin.xlane.f32.xlu0 %v4603
        %v4605 = vpop.xlane.xlu0 %4604
        %v4606 = vmin.f32 %v4567, %v4568
        %4607 = vmin.xlane.f32.xlu0 %v4606
        %v4608 = vpop.xlane.xlu0 %4607
        %v4609 = vmin.f32 %v4569, %v4570
        %4610 = vmin.xlane.f32.xlu0 %v4609
        %v4611 = vpop.xlane.xlu0 %4610
        %v4612 = vmin.f32 %v4571, %v4572
        %4613 = vmin.xlane.f32.xlu0 %v4612
        %v4614 = vpop.xlane.xlu0 %4613
        %v4615 = vmin.f32 %v4573, %v4574
        %4616 = vmin.xlane.f32.xlu0 %v4615
        %v4617 = vpop.xlane.xlu0 %4616
        %v4618 = vmin.f32 %v4575, %v4576
        %4619 = vmin.xlane.f32.xlu0 %v4618
        %v4620 = vpop.xlane.xlu0 %4619
        %v4621 = vmin.f32 %v4577, %v4578
        %4622 = vmin.xlane.f32.xlu0 %v4621
        %v4623 = vpop.xlane.xlu0 %4622
        %v4624 = vmin.f32 %v4579, %v4580
        %4625 = vmin.xlane.f32.xlu0 %v4624
        %v4626 = vpop.xlane.xlu0 %4625
        %v4627 = vmin.f32 %v4581, %v4582
        %4628 = vmin.xlane.f32.xlu0 %v4627
        %v4629 = vpop.xlane.xlu0 %4628
        %v4630 = vmin.f32 %v4583, %v4584
        %4631 = vmin.xlane.f32.xlu0 %v4630
        %v4632 = vpop.xlane.xlu0 %4631
        %vm4633 = vcmp.eq.f32.partialorder %v4553, %v4587
        %vm4634 = vcmp.eq.f32.partialorder %v4554, %v4587
        %vm4635 = vcmp.eq.f32.partialorder %v4555, %v4590
        %vm4636 = vcmp.eq.f32.partialorder %v4556, %v4590
        %vm4637 = vcmp.eq.f32.partialorder %v4557, %v4593
        %vm4638 = vcmp.eq.f32.partialorder %v4558, %v4593
        %vm4639 = vcmp.eq.f32.partialorder %v4559, %v4596
        %vm4640 = vcmp.eq.f32.partialorder %v4560, %v4596
        %vm4641 = vcmp.eq.f32.partialorder %v4561, %v4599
        %vm4642 = vcmp.eq.f32.partialorder %v4562, %v4599
        %vm4643 = vcmp.eq.f32.partialorder %v4563, %v4602
        %vm4644 = vcmp.eq.f32.partialorder %v4564, %v4602
        %vm4645 = vcmp.eq.f32.partialorder %v4565, %v4605
        %vm4646 = vcmp.eq.f32.partialorder %v4566, %v4605
        %vm4647 = vcmp.eq.f32.partialorder %v4567, %v4608
        %vm4648 = vcmp.eq.f32.partialorder %v4568, %v4608
        %vm4649 = vcmp.eq.f32.partialorder %v4569, %v4611
        %vm4650 = vcmp.eq.f32.partialorder %v4570, %v4611
        %vm4651 = vcmp.eq.f32.partialorder %v4571, %v4614
        %vm4652 = vcmp.eq.f32.partialorder %v4572, %v4614
        %vm4653 = vcmp.eq.f32.partialorder %v4573, %v4617
        %vm4654 = vcmp.eq.f32.partialorder %v4574, %v4617
        %vm4655 = vcmp.eq.f32.partialorder %v4575, %v4620
        %vm4656 = vcmp.eq.f32.partialorder %v4576, %v4620
        %vm4657 = vcmp.eq.f32.partialorder %v4577, %v4623
        %vm4658 = vcmp.eq.f32.partialorder %v4578, %v4623
        %vm4659 = vcmp.eq.f32.partialorder %v4579, %v4626
        %vm4660 = vcmp.eq.f32.partialorder %v4580, %v4626
        %vm4661 = vcmp.eq.f32.partialorder %v4581, %v4629
        %vm4662 = vcmp.eq.f32.partialorder %v4582, %v4629
        %vm4663 = vcmp.eq.f32.partialorder %v4583, %v4632
        %vm4664 = vcmp.eq.f32.partialorder %v4584, %v4632
        %v4665 = vsel %vm4633, %v487, 256
        %v4666 = vsel %vm4634, %v488, 256
        %v4667 = vsel %vm4635, %v487, 256
        %v4668 = vsel %vm4636, %v488, 256
        %v4669 = vsel %vm4637, %v487, 256
        %v4670 = vsel %vm4638, %v488, 256
        %v4671 = vsel %vm4639, %v487, 256
        %v4672 = vsel %vm4640, %v488, 256
        %v4673 = vsel %vm4641, %v487, 256
        %v4674 = vsel %vm4642, %v488, 256
        %v4675 = vsel %vm4643, %v487, 256
        %v4676 = vsel %vm4644, %v488, 256
        %v4677 = vsel %vm4645, %v487, 256
        %v4678 = vsel %vm4646, %v488, 256
        %v4679 = vsel %vm4647, %v487, 256
        %v4680 = vsel %vm4648, %v488, 256
        %v4681 = vsel %vm4649, %v487, 256
        %v4682 = vsel %vm4650, %v488, 256
        %v4683 = vsel %vm4651, %v487, 256
        %v4684 = vsel %vm4652, %v488, 256
        %v4685 = vsel %vm4653, %v487, 256
        %v4686 = vsel %vm4654, %v488, 256
        %v4687 = vsel %vm4655, %v487, 256
        %v4688 = vsel %vm4656, %v488, 256
        %v4689 = vsel %vm4657, %v487, 256
        %v4690 = vsel %vm4658, %v488, 256
        %v4691 = vsel %vm4659, %v487, 256
        %v4692 = vsel %vm4660, %v488, 256
        %v4693 = vsel %vm4661, %v487, 256
        %v4694 = vsel %vm4662, %v488, 256
        %v4695 = vsel %vm4663, %v487, 256
        %v4696 = vsel %vm4664, %v488, 256
        %vm4697 = vcmp.lt.s32.totalorder %v4665, %v4666
        %v4698 = vsel %vm4697, %v4665, %v4666
        %v4699 = vand.u32 %v4698, 65535
        %v4700 = vshra.s32 %v4698, 16
        %v4701 = vcvt.s32.f32 %v4699
        %v4702 = vcvt.s32.f32 %v4700
        %4703 = vmin.xlane.f32.xlu0 %v4702
        %v4704 = vpop.xlane.xlu0 %4703
        %vm4705 = vcmp.eq.f32.partialorder %v4702, %v4704
        %v4706 = vsel %vm4705, %v4701, inf
        %4707 = vmin.xlane.f32.xlu0 %v4706
        %v4708 = vpop.xlane.xlu0 %4707
        %v4709 = vcvt.f32.s32 %v4708
        %v4710 = vcvt.f32.s32 %v4704
        %v4711 = vshll.u32 %v4710, 16
        %v4712 = vadd.s32 %v4711, %v4709
        %vm4713 = vcmp.lt.s32.totalorder %v4667, %v4668
        %v4714 = vsel %vm4713, %v4667, %v4668
        %v4715 = vand.u32 %v4714, 65535
        %v4716 = vshra.s32 %v4714, 16
        %v4717 = vcvt.s32.f32 %v4715
        %v4718 = vcvt.s32.f32 %v4716
        %4719 = vmin.xlane.f32.xlu0 %v4718
        %v4720 = vpop.xlane.xlu0 %4719
        %vm4721 = vcmp.eq.f32.partialorder %v4718, %v4720
        %v4722 = vsel %vm4721, %v4717, inf
        %4723 = vmin.xlane.f32.xlu0 %v4722
        %v4724 = vpop.xlane.xlu0 %4723
        %v4725 = vcvt.f32.s32 %v4724
        %v4726 = vcvt.f32.s32 %v4720
        %v4727 = vshll.u32 %v4726, 16
        %v4728 = vadd.s32 %v4727, %v4725
        %vm4729 = vcmp.lt.s32.totalorder %v4669, %v4670
        %v4730 = vsel %vm4729, %v4669, %v4670
        %v4731 = vand.u32 %v4730, 65535
        %v4732 = vshra.s32 %v4730, 16
        %v4733 = vcvt.s32.f32 %v4731
        %v4734 = vcvt.s32.f32 %v4732
        %4735 = vmin.xlane.f32.xlu0 %v4734
        %v4736 = vpop.xlane.xlu0 %4735
        %vm4737 = vcmp.eq.f32.partialorder %v4734, %v4736
        %v4738 = vsel %vm4737, %v4733, inf
        %4739 = vmin.xlane.f32.xlu0 %v4738
        %v4740 = vpop.xlane.xlu0 %4739
        %v4741 = vcvt.f32.s32 %v4740
        %v4742 = vcvt.f32.s32 %v4736
        %v4743 = vshll.u32 %v4742, 16
        %v4744 = vadd.s32 %v4743, %v4741
        %vm4745 = vcmp.lt.s32.totalorder %v4671, %v4672
        %v4746 = vsel %vm4745, %v4671, %v4672
        %v4747 = vand.u32 %v4746, 65535
        %v4748 = vshra.s32 %v4746, 16
        %v4749 = vcvt.s32.f32 %v4747
        %v4750 = vcvt.s32.f32 %v4748
        %4751 = vmin.xlane.f32.xlu0 %v4750
        %v4752 = vpop.xlane.xlu0 %4751
        %vm4753 = vcmp.eq.f32.partialorder %v4750, %v4752
        %v4754 = vsel %vm4753, %v4749, inf
        %4755 = vmin.xlane.f32.xlu0 %v4754
        %v4756 = vpop.xlane.xlu0 %4755
        %v4757 = vcvt.f32.s32 %v4756
        %v4758 = vcvt.f32.s32 %v4752
        %v4759 = vshll.u32 %v4758, 16
        %v4760 = vadd.s32 %v4759, %v4757
        %vm4761 = vcmp.lt.s32.totalorder %v4673, %v4674
        %v4762 = vsel %vm4761, %v4673, %v4674
        %v4763 = vand.u32 %v4762, 65535
        %v4764 = vshra.s32 %v4762, 16
        %v4765 = vcvt.s32.f32 %v4763
        %v4766 = vcvt.s32.f32 %v4764
        %4767 = vmin.xlane.f32.xlu0 %v4766
        %v4768 = vpop.xlane.xlu0 %4767
        %vm4769 = vcmp.eq.f32.partialorder %v4766, %v4768
        %v4770 = vsel %vm4769, %v4765, inf
        %4771 = vmin.xlane.f32.xlu0 %v4770
        %v4772 = vpop.xlane.xlu0 %4771
        %v4773 = vcvt.f32.s32 %v4772
        %v4774 = vcvt.f32.s32 %v4768
        %v4775 = vshll.u32 %v4774, 16
        %v4776 = vadd.s32 %v4775, %v4773
        %vm4777 = vcmp.lt.s32.totalorder %v4675, %v4676
        %v4778 = vsel %vm4777, %v4675, %v4676
        %v4779 = vand.u32 %v4778, 65535
        %v4780 = vshra.s32 %v4778, 16
        %v4781 = vcvt.s32.f32 %v4779
        %v4782 = vcvt.s32.f32 %v4780
        %4783 = vmin.xlane.f32.xlu0 %v4782
        %v4784 = vpop.xlane.xlu0 %4783
        %vm4785 = vcmp.eq.f32.partialorder %v4782, %v4784
        %v4786 = vsel %vm4785, %v4781, inf
        %4787 = vmin.xlane.f32.xlu0 %v4786
        %v4788 = vpop.xlane.xlu0 %4787
        %v4789 = vcvt.f32.s32 %v4788
        %v4790 = vcvt.f32.s32 %v4784
        %v4791 = vshll.u32 %v4790, 16
        %v4792 = vadd.s32 %v4791, %v4789
        %vm4793 = vcmp.lt.s32.totalorder %v4677, %v4678
        %v4794 = vsel %vm4793, %v4677, %v4678
        %v4795 = vand.u32 %v4794, 65535
        %v4796 = vshra.s32 %v4794, 16
        %v4797 = vcvt.s32.f32 %v4795
        %v4798 = vcvt.s32.f32 %v4796
        %4799 = vmin.xlane.f32.xlu0 %v4798
        %v4800 = vpop.xlane.xlu0 %4799
        %vm4801 = vcmp.eq.f32.partialorder %v4798, %v4800
        %v4802 = vsel %vm4801, %v4797, inf
        %4803 = vmin.xlane.f32.xlu0 %v4802
        %v4804 = vpop.xlane.xlu0 %4803
        %v4805 = vcvt.f32.s32 %v4804
        %v4806 = vcvt.f32.s32 %v4800
        %v4807 = vshll.u32 %v4806, 16
        %v4808 = vadd.s32 %v4807, %v4805
        %vm4809 = vcmp.lt.s32.totalorder %v4679, %v4680
        %v4810 = vsel %vm4809, %v4679, %v4680
        %v4811 = vand.u32 %v4810, 65535
        %v4812 = vshra.s32 %v4810, 16
        %v4813 = vcvt.s32.f32 %v4811
        %v4814 = vcvt.s32.f32 %v4812
        %4815 = vmin.xlane.f32.xlu0 %v4814
        %v4816 = vpop.xlane.xlu0 %4815
        %vm4817 = vcmp.eq.f32.partialorder %v4814, %v4816
        %v4818 = vsel %vm4817, %v4813, inf
        %4819 = vmin.xlane.f32.xlu0 %v4818
        %v4820 = vpop.xlane.xlu0 %4819
        %v4821 = vcvt.f32.s32 %v4820
        %v4822 = vcvt.f32.s32 %v4816
        %v4823 = vshll.u32 %v4822, 16
        %v4824 = vadd.s32 %v4823, %v4821
        %vm4825 = vcmp.lt.s32.totalorder %v4681, %v4682
        %v4826 = vsel %vm4825, %v4681, %v4682
        %v4827 = vand.u32 %v4826, 65535
        %v4828 = vshra.s32 %v4826, 16
        %v4829 = vcvt.s32.f32 %v4827
        %v4830 = vcvt.s32.f32 %v4828
        %4831 = vmin.xlane.f32.xlu0 %v4830
        %v4832 = vpop.xlane.xlu0 %4831
        %vm4833 = vcmp.eq.f32.partialorder %v4830, %v4832
        %v4834 = vsel %vm4833, %v4829, inf
        %4835 = vmin.xlane.f32.xlu0 %v4834
        %v4836 = vpop.xlane.xlu0 %4835
        %v4837 = vcvt.f32.s32 %v4836
        %v4838 = vcvt.f32.s32 %v4832
        %v4839 = vshll.u32 %v4838, 16
        %v4840 = vadd.s32 %v4839, %v4837
        %vm4841 = vcmp.lt.s32.totalorder %v4683, %v4684
        %v4842 = vsel %vm4841, %v4683, %v4684
        %v4843 = vand.u32 %v4842, 65535
        %v4844 = vshra.s32 %v4842, 16
        %v4845 = vcvt.s32.f32 %v4843
        %v4846 = vcvt.s32.f32 %v4844
        %4847 = vmin.xlane.f32.xlu0 %v4846
        %v4848 = vpop.xlane.xlu0 %4847
        %vm4849 = vcmp.eq.f32.partialorder %v4846, %v4848
        %v4850 = vsel %vm4849, %v4845, inf
        %4851 = vmin.xlane.f32.xlu0 %v4850
        %v4852 = vpop.xlane.xlu0 %4851
        %v4853 = vcvt.f32.s32 %v4852
        %v4854 = vcvt.f32.s32 %v4848
        %v4855 = vshll.u32 %v4854, 16
        %v4856 = vadd.s32 %v4855, %v4853
        %vm4857 = vcmp.lt.s32.totalorder %v4685, %v4686
        %v4858 = vsel %vm4857, %v4685, %v4686
        %v4859 = vand.u32 %v4858, 65535
        %v4860 = vshra.s32 %v4858, 16
        %v4861 = vcvt.s32.f32 %v4859
        %v4862 = vcvt.s32.f32 %v4860
        %4863 = vmin.xlane.f32.xlu0 %v4862
        %v4864 = vpop.xlane.xlu0 %4863
        %vm4865 = vcmp.eq.f32.partialorder %v4862, %v4864
        %v4866 = vsel %vm4865, %v4861, inf
        %4867 = vmin.xlane.f32.xlu0 %v4866
        %v4868 = vpop.xlane.xlu0 %4867
        %v4869 = vcvt.f32.s32 %v4868
        %v4870 = vcvt.f32.s32 %v4864
        %v4871 = vshll.u32 %v4870, 16
        %v4872 = vadd.s32 %v4871, %v4869
        %vm4873 = vcmp.lt.s32.totalorder %v4687, %v4688
        %v4874 = vsel %vm4873, %v4687, %v4688
        %v4875 = vand.u32 %v4874, 65535
        %v4876 = vshra.s32 %v4874, 16
        %v4877 = vcvt.s32.f32 %v4875
        %v4878 = vcvt.s32.f32 %v4876
        %4879 = vmin.xlane.f32.xlu0 %v4878
        %v4880 = vpop.xlane.xlu0 %4879
        %vm4881 = vcmp.eq.f32.partialorder %v4878, %v4880
        %v4882 = vsel %vm4881, %v4877, inf
        %4883 = vmin.xlane.f32.xlu0 %v4882
        %v4884 = vpop.xlane.xlu0 %4883
        %v4885 = vcvt.f32.s32 %v4884
        %v4886 = vcvt.f32.s32 %v4880
        %v4887 = vshll.u32 %v4886, 16
        %v4888 = vadd.s32 %v4887, %v4885
        %vm4889 = vcmp.lt.s32.totalorder %v4689, %v4690
        %v4890 = vsel %vm4889, %v4689, %v4690
        %v4891 = vand.u32 %v4890, 65535
        %v4892 = vshra.s32 %v4890, 16
        %v4893 = vcvt.s32.f32 %v4891
        %v4894 = vcvt.s32.f32 %v4892
        %4895 = vmin.xlane.f32.xlu0 %v4894
        %v4896 = vpop.xlane.xlu0 %4895
        %vm4897 = vcmp.eq.f32.partialorder %v4894, %v4896
        %v4898 = vsel %vm4897, %v4893, inf
        %4899 = vmin.xlane.f32.xlu0 %v4898
        %v4900 = vpop.xlane.xlu0 %4899
        %v4901 = vcvt.f32.s32 %v4900
        %v4902 = vcvt.f32.s32 %v4896
        %v4903 = vshll.u32 %v4902, 16
        %v4904 = vadd.s32 %v4903, %v4901
        %vm4905 = vcmp.lt.s32.totalorder %v4691, %v4692
        %v4906 = vsel %vm4905, %v4691, %v4692
        %v4907 = vand.u32 %v4906, 65535
        %v4908 = vshra.s32 %v4906, 16
        %v4909 = vcvt.s32.f32 %v4907
        %v4910 = vcvt.s32.f32 %v4908
        %4911 = vmin.xlane.f32.xlu0 %v4910
        %v4912 = vpop.xlane.xlu0 %4911
        %vm4913 = vcmp.eq.f32.partialorder %v4910, %v4912
        %v4914 = vsel %vm4913, %v4909, inf
        %4915 = vmin.xlane.f32.xlu0 %v4914
        %v4916 = vpop.xlane.xlu0 %4915
        %v4917 = vcvt.f32.s32 %v4916
        %v4918 = vcvt.f32.s32 %v4912
        %v4919 = vshll.u32 %v4918, 16
        %v4920 = vadd.s32 %v4919, %v4917
        %vm4921 = vcmp.lt.s32.totalorder %v4693, %v4694
        %v4922 = vsel %vm4921, %v4693, %v4694
        %v4923 = vand.u32 %v4922, 65535
        %v4924 = vshra.s32 %v4922, 16
        %v4925 = vcvt.s32.f32 %v4923
        %v4926 = vcvt.s32.f32 %v4924
        %4927 = vmin.xlane.f32.xlu0 %v4926
        %v4928 = vpop.xlane.xlu0 %4927
        %vm4929 = vcmp.eq.f32.partialorder %v4926, %v4928
        %v4930 = vsel %vm4929, %v4925, inf
        %4931 = vmin.xlane.f32.xlu0 %v4930
        %v4932 = vpop.xlane.xlu0 %4931
        %v4933 = vcvt.f32.s32 %v4932
        %v4934 = vcvt.f32.s32 %v4928
        %v4935 = vshll.u32 %v4934, 16
        %v4936 = vadd.s32 %v4935, %v4933
        %vm4937 = vcmp.lt.s32.totalorder %v4695, %v4696
        %v4938 = vsel %vm4937, %v4695, %v4696
        %v4939 = vand.u32 %v4938, 65535
        %v4940 = vshra.s32 %v4938, 16
        %v4941 = vcvt.s32.f32 %v4939
        %v4942 = vcvt.s32.f32 %v4940
        %4943 = vmin.xlane.f32.xlu0 %v4942
        %v4944 = vpop.xlane.xlu0 %4943
        %vm4945 = vcmp.eq.f32.partialorder %v4942, %v4944
        %v4946 = vsel %vm4945, %v4941, inf
        %4947 = vmin.xlane.f32.xlu0 %v4946
        %v4948 = vpop.xlane.xlu0 %4947
        %v4949 = vcvt.f32.s32 %v4948
        %v4950 = vcvt.f32.s32 %v4944
        %v4951 = vshll.u32 %v4950, 16
        %v4952 = vadd.s32 %v4951, %v4949
        %vm4953 = vcmp.eq.s32.totalorder %v487, %v4712
        %vm4954 = vcmp.eq.s32.totalorder %v488, %v4712
        %vm4955 = vcmp.eq.s32.totalorder %v487, %v4728
        %vm4956 = vcmp.eq.s32.totalorder %v488, %v4728
        %vm4957 = vcmp.eq.s32.totalorder %v487, %v4744
        %vm4958 = vcmp.eq.s32.totalorder %v488, %v4744
        %vm4959 = vcmp.eq.s32.totalorder %v487, %v4760
        %vm4960 = vcmp.eq.s32.totalorder %v488, %v4760
        %vm4961 = vcmp.eq.s32.totalorder %v487, %v4776
        %vm4962 = vcmp.eq.s32.totalorder %v488, %v4776
        %vm4963 = vcmp.eq.s32.totalorder %v487, %v4792
        %vm4964 = vcmp.eq.s32.totalorder %v488, %v4792
        %vm4965 = vcmp.eq.s32.totalorder %v487, %v4808
        %vm4966 = vcmp.eq.s32.totalorder %v488, %v4808
        %vm4967 = vcmp.eq.s32.totalorder %v487, %v4824
        %vm4968 = vcmp.eq.s32.totalorder %v488, %v4824
        %vm4969 = vcmp.eq.s32.totalorder %v487, %v4840
        %vm4970 = vcmp.eq.s32.totalorder %v488, %v4840
        %vm4971 = vcmp.eq.s32.totalorder %v487, %v4856
        %vm4972 = vcmp.eq.s32.totalorder %v488, %v4856
        %vm4973 = vcmp.eq.s32.totalorder %v487, %v4872
        %vm4974 = vcmp.eq.s32.totalorder %v488, %v4872
        %vm4975 = vcmp.eq.s32.totalorder %v487, %v4888
        %vm4976 = vcmp.eq.s32.totalorder %v488, %v4888
        %vm4977 = vcmp.eq.s32.totalorder %v487, %v4904
        %vm4978 = vcmp.eq.s32.totalorder %v488, %v4904
        %vm4979 = vcmp.eq.s32.totalorder %v487, %v4920
        %vm4980 = vcmp.eq.s32.totalorder %v488, %v4920
        %vm4981 = vcmp.eq.s32.totalorder %v487, %v4936
        %vm4982 = vcmp.eq.s32.totalorder %v488, %v4936
        %vm4983 = vcmp.eq.s32.totalorder %v487, %v4952
        %vm4984 = vcmp.eq.s32.totalorder %v488, %v4952
        %v4985 = vsel %vm4953, 1, 0
        %v4986 = vsel %vm4954, 1, 0
        %v4987 = vsel %vm4955, 1, 0
        %v4988 = vsel %vm4956, 1, 0
        %v4989 = vsel %vm4957, 1, 0
        %v4990 = vsel %vm4958, 1, 0
        %v4991 = vsel %vm4959, 1, 0
        %v4992 = vsel %vm4960, 1, 0
        %v4993 = vsel %vm4961, 1, 0
        %v4994 = vsel %vm4962, 1, 0
        %v4995 = vsel %vm4963, 1, 0
        %v4996 = vsel %vm4964, 1, 0
        %v4997 = vsel %vm4965, 1, 0
        %v4998 = vsel %vm4966, 1, 0
        %v4999 = vsel %vm4967, 1, 0
        %v5000 = vsel %vm4968, 1, 0
        %v5001 = vsel %vm4969, 1, 0
        %v5002 = vsel %vm4970, 1, 0
        %v5003 = vsel %vm4971, 1, 0
        %v5004 = vsel %vm4972, 1, 0
        %v5005 = vsel %vm4973, 1, 0
        %v5006 = vsel %vm4974, 1, 0
        %v5007 = vsel %vm4975, 1, 0
        %v5008 = vsel %vm4976, 1, 0
        %v5009 = vsel %vm4977, 1, 0
        %v5010 = vsel %vm4978, 1, 0
        %v5011 = vsel %vm4979, 1, 0
        %v5012 = vsel %vm4980, 1, 0
        %v5013 = vsel %vm4981, 1, 0
        %v5014 = vsel %vm4982, 1, 0
        %v5015 = vsel %vm4983, 1, 0
        %v5016 = vsel %vm4984, 1, 0
        %v5017 = vcvt.s32.f32 %v4985
        %v5018 = vcvt.s32.f32 %v4986
        %v5019 = vcvt.s32.f32 %v4987
        %v5020 = vcvt.s32.f32 %v4988
        %v5021 = vcvt.s32.f32 %v4989
        %v5022 = vcvt.s32.f32 %v4990
        %v5023 = vcvt.s32.f32 %v4991
        %v5024 = vcvt.s32.f32 %v4992
        %v5025 = vcvt.s32.f32 %v4993
        %v5026 = vcvt.s32.f32 %v4994
        %v5027 = vcvt.s32.f32 %v4995
        %v5028 = vcvt.s32.f32 %v4996
        %v5029 = vcvt.s32.f32 %v4997
        %v5030 = vcvt.s32.f32 %v4998
        %v5031 = vcvt.s32.f32 %v4999
        %v5032 = vcvt.s32.f32 %v5000
        %v5033 = vcvt.s32.f32 %v5001
        %v5034 = vcvt.s32.f32 %v5002
        %v5035 = vcvt.s32.f32 %v5003
        %v5036 = vcvt.s32.f32 %v5004
        %v5037 = vcvt.s32.f32 %v5005
        %v5038 = vcvt.s32.f32 %v5006
        %v5039 = vcvt.s32.f32 %v5007
        %v5040 = vcvt.s32.f32 %v5008
        %v5041 = vcvt.s32.f32 %v5009
        %v5042 = vcvt.s32.f32 %v5010
        %v5043 = vcvt.s32.f32 %v5011
        %v5044 = vcvt.s32.f32 %v5012
        %v5045 = vcvt.s32.f32 %v5013
        %v5046 = vcvt.s32.f32 %v5014
        %v5047 = vcvt.s32.f32 %v5015
        %v5048 = vcvt.s32.f32 %v5016
        %v5049 = vpack.c.bf16 %v5018, %v5017
        %v5050 = vpack.c.bf16 %v5020, %v5019
        %v5051 = vpack.c.bf16 %v5022, %v5021
        %v5052 = vpack.c.bf16 %v5024, %v5023
        %v5053 = vpack.c.bf16 %v5026, %v5025
        %v5054 = vpack.c.bf16 %v5028, %v5027
        %v5055 = vpack.c.bf16 %v5030, %v5029
        %v5056 = vpack.c.bf16 %v5032, %v5031
        %v5057 = vpack.c.bf16 %v5034, %v5033
        %v5058 = vpack.c.bf16 %v5036, %v5035
        %v5059 = vpack.c.bf16 %v5038, %v5037
        %v5060 = vpack.c.bf16 %v5040, %v5039
        %v5061 = vpack.c.bf16 %v5042, %v5041
        %v5062 = vpack.c.bf16 %v5044, %v5043
        %v5063 = vpack.c.bf16 %v5046, %v5045
        %v5064 = vpack.c.bf16 %v5048, %v5047
        %v5081 = vunpack.c.l.b16 %v953
        %v5082 = vunpack.c.h.b16 %v953
        %v5083 = vunpack.c.l.b16 %v954
        %v5084 = vunpack.c.h.b16 %v954
        %v5085 = vunpack.c.l.b16 %v955
        %v5086 = vunpack.c.h.b16 %v955
        %v5087 = vunpack.c.l.b16 %v956
        %v5088 = vunpack.c.h.b16 %v956
        %v5089 = vunpack.c.l.b16 %v957
        %v5090 = vunpack.c.h.b16 %v957
        %v5091 = vunpack.c.l.b16 %v958
        %v5092 = vunpack.c.h.b16 %v958
        %v5093 = vunpack.c.l.b16 %v959
        %v5094 = vunpack.c.h.b16 %v959
        %v5095 = vunpack.c.l.b16 %v960
        %v5096 = vunpack.c.h.b16 %v960
        %v5097 = vunpack.c.l.b16 %v961
        %v5098 = vunpack.c.h.b16 %v961
        %v5099 = vunpack.c.l.b16 %v962
        %v5100 = vunpack.c.h.b16 %v962
        %v5101 = vunpack.c.l.b16 %v963
        %v5102 = vunpack.c.h.b16 %v963
        %v5103 = vunpack.c.l.b16 %v964
        %v5104 = vunpack.c.h.b16 %v964
        %v5105 = vunpack.c.l.b16 %v965
        %v5106 = vunpack.c.h.b16 %v965
        %v5107 = vunpack.c.l.b16 %v966
        %v5108 = vunpack.c.h.b16 %v966
        %v5109 = vunpack.c.l.b16 %v967
        %v5110 = vunpack.c.h.b16 %v967
        %v5111 = vunpack.c.l.b16 %v968
        %v5112 = vunpack.c.h.b16 %v968
        %v5113 = vpack.c.b16 %v5083, %v5081
        %v5114 = vpack.c.b16 %v5084, %v5082
        %v5115 = vpack.c.b16 %v5087, %v5085
        %v5116 = vpack.c.b16 %v5088, %v5086
        %v5117 = vpack.c.b16 %v5091, %v5089
        %v5118 = vpack.c.b16 %v5092, %v5090
        %v5119 = vpack.c.b16 %v5095, %v5093
        %v5120 = vpack.c.b16 %v5096, %v5094
        %v5121 = vpack.c.b16 %v5099, %v5097
        %v5122 = vpack.c.b16 %v5100, %v5098
        %v5123 = vpack.c.b16 %v5103, %v5101
        %v5124 = vpack.c.b16 %v5104, %v5102
        %v5125 = vpack.c.b16 %v5107, %v5105
        %v5126 = vpack.c.b16 %v5108, %v5106
        %v5127 = vpack.c.b16 %v5111, %v5109
        %v5128 = vpack.c.b16 %v5112, %v5110
        %v5161 = vunpack.c.l.b16 %v1465
        %v5162 = vunpack.c.h.b16 %v1465
        %v5163 = vunpack.c.l.b16 %v1466
        %v5164 = vunpack.c.h.b16 %v1466
        %v5165 = vunpack.c.l.b16 %v1467
        %v5166 = vunpack.c.h.b16 %v1467
        %v5167 = vunpack.c.l.b16 %v1468
        %v5168 = vunpack.c.h.b16 %v1468
        %v5169 = vunpack.c.l.b16 %v1469
        %v5170 = vunpack.c.h.b16 %v1469
        %v5171 = vunpack.c.l.b16 %v1470
        %v5172 = vunpack.c.h.b16 %v1470
        %v5173 = vunpack.c.l.b16 %v1471
        %v5174 = vunpack.c.h.b16 %v1471
        %v5175 = vunpack.c.l.b16 %v1472
        %v5176 = vunpack.c.h.b16 %v1472
        %v5177 = vunpack.c.l.b16 %v1473
        %v5178 = vunpack.c.h.b16 %v1473
        %v5179 = vunpack.c.l.b16 %v1474
        %v5180 = vunpack.c.h.b16 %v1474
        %v5181 = vunpack.c.l.b16 %v1475
        %v5182 = vunpack.c.h.b16 %v1475
        %v5183 = vunpack.c.l.b16 %v1476
        %v5184 = vunpack.c.h.b16 %v1476
        %v5185 = vunpack.c.l.b16 %v1477
        %v5186 = vunpack.c.h.b16 %v1477
        %v5187 = vunpack.c.l.b16 %v1478
        %v5188 = vunpack.c.h.b16 %v1478
        %v5189 = vunpack.c.l.b16 %v1479
        %v5190 = vunpack.c.h.b16 %v1479
        %v5191 = vunpack.c.l.b16 %v1480
        %v5192 = vunpack.c.h.b16 %v1480
        %v5193 = vpack.c.b16 %v5163, %v5161
        %v5194 = vpack.c.b16 %v5164, %v5162
        %v5195 = vpack.c.b16 %v5167, %v5165
        %v5196 = vpack.c.b16 %v5168, %v5166
        %v5197 = vpack.c.b16 %v5171, %v5169
        %v5198 = vpack.c.b16 %v5172, %v5170
        %v5199 = vpack.c.b16 %v5175, %v5173
        %v5200 = vpack.c.b16 %v5176, %v5174
        %v5201 = vpack.c.b16 %v5179, %v5177
        %v5202 = vpack.c.b16 %v5180, %v5178
        %v5203 = vpack.c.b16 %v5183, %v5181
        %v5204 = vpack.c.b16 %v5184, %v5182
        %v5205 = vpack.c.b16 %v5187, %v5185
        %v5206 = vpack.c.b16 %v5188, %v5186
        %v5207 = vpack.c.b16 %v5191, %v5189
        %v5208 = vpack.c.b16 %v5192, %v5190
        %v5241 = vunpack.c.l.b16 %v1977
        %v5242 = vunpack.c.h.b16 %v1977
        %v5243 = vunpack.c.l.b16 %v1978
        %v5244 = vunpack.c.h.b16 %v1978
        %v5245 = vunpack.c.l.b16 %v1979
        %v5246 = vunpack.c.h.b16 %v1979
        %v5247 = vunpack.c.l.b16 %v1980
        %v5248 = vunpack.c.h.b16 %v1980
        %v5249 = vunpack.c.l.b16 %v1981
        %v5250 = vunpack.c.h.b16 %v1981
        %v5251 = vunpack.c.l.b16 %v1982
        %v5252 = vunpack.c.h.b16 %v1982
        %v5253 = vunpack.c.l.b16 %v1983
        %v5254 = vunpack.c.h.b16 %v1983
        %v5255 = vunpack.c.l.b16 %v1984
        %v5256 = vunpack.c.h.b16 %v1984
        %v5257 = vunpack.c.l.b16 %v1985
        %v5258 = vunpack.c.h.b16 %v1985
        %v5259 = vunpack.c.l.b16 %v1986
        %v5260 = vunpack.c.h.b16 %v1986
        %v5261 = vunpack.c.l.b16 %v1987
        %v5262 = vunpack.c.h.b16 %v1987
        %v5263 = vunpack.c.l.b16 %v1988
        %v5264 = vunpack.c.h.b16 %v1988
        %v5265 = vunpack.c.l.b16 %v1989
        %v5266 = vunpack.c.h.b16 %v1989
        %v5267 = vunpack.c.l.b16 %v1990
        %v5268 = vunpack.c.h.b16 %v1990
        %v5269 = vunpack.c.l.b16 %v1991
        %v5270 = vunpack.c.h.b16 %v1991
        %v5271 = vunpack.c.l.b16 %v1992
        %v5272 = vunpack.c.h.b16 %v1992
        %v5273 = vpack.c.b16 %v5243, %v5241
        %v5274 = vpack.c.b16 %v5244, %v5242
        %v5275 = vpack.c.b16 %v5247, %v5245
        %v5276 = vpack.c.b16 %v5248, %v5246
        %v5277 = vpack.c.b16 %v5251, %v5249
        %v5278 = vpack.c.b16 %v5252, %v5250
        %v5279 = vpack.c.b16 %v5255, %v5253
        %v5280 = vpack.c.b16 %v5256, %v5254
        %v5281 = vpack.c.b16 %v5259, %v5257
        %v5282 = vpack.c.b16 %v5260, %v5258
        %v5283 = vpack.c.b16 %v5263, %v5261
        %v5284 = vpack.c.b16 %v5264, %v5262
        %v5285 = vpack.c.b16 %v5267, %v5265
        %v5286 = vpack.c.b16 %v5268, %v5266
        %v5287 = vpack.c.b16 %v5271, %v5269
        %v5288 = vpack.c.b16 %v5272, %v5270
        %v5321 = vunpack.c.l.b16 %v2489
        %v5322 = vunpack.c.h.b16 %v2489
        %v5323 = vunpack.c.l.b16 %v2490
        %v5324 = vunpack.c.h.b16 %v2490
        %v5325 = vunpack.c.l.b16 %v2491
        %v5326 = vunpack.c.h.b16 %v2491
        %v5327 = vunpack.c.l.b16 %v2492
        %v5328 = vunpack.c.h.b16 %v2492
        %v5329 = vunpack.c.l.b16 %v2493
        %v5330 = vunpack.c.h.b16 %v2493
        %v5331 = vunpack.c.l.b16 %v2494
        %v5332 = vunpack.c.h.b16 %v2494
        %v5333 = vunpack.c.l.b16 %v2495
        %v5334 = vunpack.c.h.b16 %v2495
        %v5335 = vunpack.c.l.b16 %v2496
        %v5336 = vunpack.c.h.b16 %v2496
        %v5337 = vunpack.c.l.b16 %v2497
        %v5338 = vunpack.c.h.b16 %v2497
        %v5339 = vunpack.c.l.b16 %v2498
        %v5340 = vunpack.c.h.b16 %v2498
        %v5341 = vunpack.c.l.b16 %v2499
        %v5342 = vunpack.c.h.b16 %v2499
        %v5343 = vunpack.c.l.b16 %v2500
        %v5344 = vunpack.c.h.b16 %v2500
        %v5345 = vunpack.c.l.b16 %v2501
        %v5346 = vunpack.c.h.b16 %v2501
        %v5347 = vunpack.c.l.b16 %v2502
        %v5348 = vunpack.c.h.b16 %v2502
        %v5349 = vunpack.c.l.b16 %v2503
        %v5350 = vunpack.c.h.b16 %v2503
        %v5351 = vunpack.c.l.b16 %v2504
        %v5352 = vunpack.c.h.b16 %v2504
        %v5353 = vpack.c.b16 %v5323, %v5321
        %v5354 = vpack.c.b16 %v5324, %v5322
        %v5355 = vpack.c.b16 %v5327, %v5325
        %v5356 = vpack.c.b16 %v5328, %v5326
        %v5357 = vpack.c.b16 %v5331, %v5329
        %v5358 = vpack.c.b16 %v5332, %v5330
        %v5359 = vpack.c.b16 %v5335, %v5333
        %v5360 = vpack.c.b16 %v5336, %v5334
        %v5361 = vpack.c.b16 %v5339, %v5337
        %v5362 = vpack.c.b16 %v5340, %v5338
        %v5363 = vpack.c.b16 %v5343, %v5341
        %v5364 = vpack.c.b16 %v5344, %v5342
        %v5365 = vpack.c.b16 %v5347, %v5345
        %v5366 = vpack.c.b16 %v5348, %v5346
        %v5367 = vpack.c.b16 %v5351, %v5349
        %v5368 = vpack.c.b16 %v5352, %v5350
        %v5401 = vunpack.c.l.b16 %v3001
        %v5402 = vunpack.c.h.b16 %v3001
        %v5403 = vunpack.c.l.b16 %v3002
        %v5404 = vunpack.c.h.b16 %v3002
        %v5405 = vunpack.c.l.b16 %v3003
        %v5406 = vunpack.c.h.b16 %v3003
        %v5407 = vunpack.c.l.b16 %v3004
        %v5408 = vunpack.c.h.b16 %v3004
        %v5409 = vunpack.c.l.b16 %v3005
        %v5410 = vunpack.c.h.b16 %v3005
        %v5411 = vunpack.c.l.b16 %v3006
        %v5412 = vunpack.c.h.b16 %v3006
        %v5413 = vunpack.c.l.b16 %v3007
        %v5414 = vunpack.c.h.b16 %v3007
        %v5415 = vunpack.c.l.b16 %v3008
        %v5416 = vunpack.c.h.b16 %v3008
        %v5417 = vunpack.c.l.b16 %v3009
        %v5418 = vunpack.c.h.b16 %v3009
        %v5419 = vunpack.c.l.b16 %v3010
        %v5420 = vunpack.c.h.b16 %v3010
        %v5421 = vunpack.c.l.b16 %v3011
        %v5422 = vunpack.c.h.b16 %v3011
        %v5423 = vunpack.c.l.b16 %v3012
        %v5424 = vunpack.c.h.b16 %v3012
        %v5425 = vunpack.c.l.b16 %v3013
        %v5426 = vunpack.c.h.b16 %v3013
        %v5427 = vunpack.c.l.b16 %v3014
        %v5428 = vunpack.c.h.b16 %v3014
        %v5429 = vunpack.c.l.b16 %v3015
        %v5430 = vunpack.c.h.b16 %v3015
        %v5431 = vunpack.c.l.b16 %v3016
        %v5432 = vunpack.c.h.b16 %v3016
        %v5433 = vpack.c.b16 %v5403, %v5401
        %v5434 = vpack.c.b16 %v5404, %v5402
        %v5435 = vpack.c.b16 %v5407, %v5405
        %v5436 = vpack.c.b16 %v5408, %v5406
        %v5437 = vpack.c.b16 %v5411, %v5409
        %v5438 = vpack.c.b16 %v5412, %v5410
        %v5439 = vpack.c.b16 %v5415, %v5413
        %v5440 = vpack.c.b16 %v5416, %v5414
        %v5441 = vpack.c.b16 %v5419, %v5417
        %v5442 = vpack.c.b16 %v5420, %v5418
        %v5443 = vpack.c.b16 %v5423, %v5421
        %v5444 = vpack.c.b16 %v5424, %v5422
        %v5445 = vpack.c.b16 %v5427, %v5425
        %v5446 = vpack.c.b16 %v5428, %v5426
        %v5447 = vpack.c.b16 %v5431, %v5429
        %v5448 = vpack.c.b16 %v5432, %v5430
        %v5481 = vunpack.c.l.b16 %v3513
        %v5482 = vunpack.c.h.b16 %v3513
        %v5483 = vunpack.c.l.b16 %v3514
        %v5484 = vunpack.c.h.b16 %v3514
        %v5485 = vunpack.c.l.b16 %v3515
        %v5486 = vunpack.c.h.b16 %v3515
        %v5487 = vunpack.c.l.b16 %v3516
        %v5488 = vunpack.c.h.b16 %v3516
        %v5489 = vunpack.c.l.b16 %v3517
        %v5490 = vunpack.c.h.b16 %v3517
        %v5491 = vunpack.c.l.b16 %v3518
        %v5492 = vunpack.c.h.b16 %v3518
        %v5493 = vunpack.c.l.b16 %v3519
        %v5494 = vunpack.c.h.b16 %v3519
        %v5495 = vunpack.c.l.b16 %v3520
        %v5496 = vunpack.c.h.b16 %v3520
        %v5497 = vunpack.c.l.b16 %v3521
        %v5498 = vunpack.c.h.b16 %v3521
        %v5499 = vunpack.c.l.b16 %v3522
        %v5500 = vunpack.c.h.b16 %v3522
        %v5501 = vunpack.c.l.b16 %v3523
        %v5502 = vunpack.c.h.b16 %v3523
        %v5503 = vunpack.c.l.b16 %v3524
        %v5504 = vunpack.c.h.b16 %v3524
        %v5505 = vunpack.c.l.b16 %v3525
        %v5506 = vunpack.c.h.b16 %v3525
        %v5507 = vunpack.c.l.b16 %v3526
        %v5508 = vunpack.c.h.b16 %v3526
        %v5509 = vunpack.c.l.b16 %v3527
        %v5510 = vunpack.c.h.b16 %v3527
        %v5511 = vunpack.c.l.b16 %v3528
        %v5512 = vunpack.c.h.b16 %v3528
        %v5513 = vpack.c.b16 %v5483, %v5481
        %v5514 = vpack.c.b16 %v5484, %v5482
        %v5515 = vpack.c.b16 %v5487, %v5485
        %v5516 = vpack.c.b16 %v5488, %v5486
        %v5517 = vpack.c.b16 %v5491, %v5489
        %v5518 = vpack.c.b16 %v5492, %v5490
        %v5519 = vpack.c.b16 %v5495, %v5493
        %v5520 = vpack.c.b16 %v5496, %v5494
        %v5521 = vpack.c.b16 %v5499, %v5497
        %v5522 = vpack.c.b16 %v5500, %v5498
        %v5523 = vpack.c.b16 %v5503, %v5501
        %v5524 = vpack.c.b16 %v5504, %v5502
        %v5525 = vpack.c.b16 %v5507, %v5505
        %v5526 = vpack.c.b16 %v5508, %v5506
        %v5527 = vpack.c.b16 %v5511, %v5509
        %v5528 = vpack.c.b16 %v5512, %v5510
        %v5561 = vunpack.c.l.b16 %v4025
        %v5562 = vunpack.c.h.b16 %v4025
        %v5563 = vunpack.c.l.b16 %v4026
        %v5564 = vunpack.c.h.b16 %v4026
        %v5565 = vunpack.c.l.b16 %v4027
        %v5566 = vunpack.c.h.b16 %v4027
        %v5567 = vunpack.c.l.b16 %v4028
        %v5568 = vunpack.c.h.b16 %v4028
        %v5569 = vunpack.c.l.b16 %v4029
        %v5570 = vunpack.c.h.b16 %v4029
        %v5571 = vunpack.c.l.b16 %v4030
        %v5572 = vunpack.c.h.b16 %v4030
        %v5573 = vunpack.c.l.b16 %v4031
        %v5574 = vunpack.c.h.b16 %v4031
        %v5575 = vunpack.c.l.b16 %v4032
        %v5576 = vunpack.c.h.b16 %v4032
        %v5577 = vunpack.c.l.b16 %v4033
        %v5578 = vunpack.c.h.b16 %v4033
        %v5579 = vunpack.c.l.b16 %v4034
        %v5580 = vunpack.c.h.b16 %v4034
        %v5581 = vunpack.c.l.b16 %v4035
        %v5582 = vunpack.c.h.b16 %v4035
        %v5583 = vunpack.c.l.b16 %v4036
        %v5584 = vunpack.c.h.b16 %v4036
        %v5585 = vunpack.c.l.b16 %v4037
        %v5586 = vunpack.c.h.b16 %v4037
        %v5587 = vunpack.c.l.b16 %v4038
        %v5588 = vunpack.c.h.b16 %v4038
        %v5589 = vunpack.c.l.b16 %v4039
        %v5590 = vunpack.c.h.b16 %v4039
        %v5591 = vunpack.c.l.b16 %v4040
        %v5592 = vunpack.c.h.b16 %v4040
        %v5593 = vpack.c.b16 %v5563, %v5561
        %v5594 = vpack.c.b16 %v5564, %v5562
        %v5595 = vpack.c.b16 %v5567, %v5565
        %v5596 = vpack.c.b16 %v5568, %v5566
        %v5597 = vpack.c.b16 %v5571, %v5569
        %v5598 = vpack.c.b16 %v5572, %v5570
        %v5599 = vpack.c.b16 %v5575, %v5573
        %v5600 = vpack.c.b16 %v5576, %v5574
        %v5601 = vpack.c.b16 %v5579, %v5577
        %v5602 = vpack.c.b16 %v5580, %v5578
        %v5603 = vpack.c.b16 %v5583, %v5581
        %v5604 = vpack.c.b16 %v5584, %v5582
        %v5605 = vpack.c.b16 %v5587, %v5585
        %v5606 = vpack.c.b16 %v5588, %v5586
        %v5607 = vpack.c.b16 %v5591, %v5589
        %v5608 = vpack.c.b16 %v5592, %v5590
        %v5641 = vunpack.c.l.b16 %v4537
        %v5642 = vunpack.c.h.b16 %v4537
        %v5643 = vunpack.c.l.b16 %v4538
        %v5644 = vunpack.c.h.b16 %v4538
        %v5645 = vunpack.c.l.b16 %v4539
        %v5646 = vunpack.c.h.b16 %v4539
        %v5647 = vunpack.c.l.b16 %v4540
        %v5648 = vunpack.c.h.b16 %v4540
        %v5649 = vunpack.c.l.b16 %v4541
        %v5650 = vunpack.c.h.b16 %v4541
        %v5651 = vunpack.c.l.b16 %v4542
        %v5652 = vunpack.c.h.b16 %v4542
        %v5653 = vunpack.c.l.b16 %v4543
        %v5654 = vunpack.c.h.b16 %v4543
        %v5655 = vunpack.c.l.b16 %v4544
        %v5656 = vunpack.c.h.b16 %v4544
        %v5657 = vunpack.c.l.b16 %v4545
        %v5658 = vunpack.c.h.b16 %v4545
        %v5659 = vunpack.c.l.b16 %v4546
        %v5660 = vunpack.c.h.b16 %v4546
        %v5661 = vunpack.c.l.b16 %v4547
        %v5662 = vunpack.c.h.b16 %v4547
        %v5663 = vunpack.c.l.b16 %v4548
        %v5664 = vunpack.c.h.b16 %v4548
        %v5665 = vunpack.c.l.b16 %v4549
        %v5666 = vunpack.c.h.b16 %v4549
        %v5667 = vunpack.c.l.b16 %v4550
        %v5668 = vunpack.c.h.b16 %v4550
        %v5669 = vunpack.c.l.b16 %v4551
        %v5670 = vunpack.c.h.b16 %v4551
        %v5671 = vunpack.c.l.b16 %v4552
        %v5672 = vunpack.c.h.b16 %v4552
        %v5673 = vpack.c.b16 %v5643, %v5641
        %v5674 = vpack.c.b16 %v5644, %v5642
        %v5675 = vpack.c.b16 %v5647, %v5645
        %v5676 = vpack.c.b16 %v5648, %v5646
        %v5677 = vpack.c.b16 %v5651, %v5649
        %v5678 = vpack.c.b16 %v5652, %v5650
        %v5679 = vpack.c.b16 %v5655, %v5653
        %v5680 = vpack.c.b16 %v5656, %v5654
        %v5681 = vpack.c.b16 %v5659, %v5657
        %v5682 = vpack.c.b16 %v5660, %v5658
        %v5683 = vpack.c.b16 %v5663, %v5661
        %v5684 = vpack.c.b16 %v5664, %v5662
        %v5685 = vpack.c.b16 %v5667, %v5665
        %v5686 = vpack.c.b16 %v5668, %v5666
        %v5687 = vpack.c.b16 %v5671, %v5669
        %v5688 = vpack.c.b16 %v5672, %v5670
        %v5721 = vunpack.c.l.b16 %v5049
        %v5722 = vunpack.c.h.b16 %v5049
        %v5723 = vunpack.c.l.b16 %v5050
        %v5724 = vunpack.c.h.b16 %v5050
        %v5725 = vunpack.c.l.b16 %v5051
        %v5726 = vunpack.c.h.b16 %v5051
        %v5727 = vunpack.c.l.b16 %v5052
        %v5728 = vunpack.c.h.b16 %v5052
        %v5729 = vunpack.c.l.b16 %v5053
        %v5730 = vunpack.c.h.b16 %v5053
        %v5731 = vunpack.c.l.b16 %v5054
        %v5732 = vunpack.c.h.b16 %v5054
        %v5733 = vunpack.c.l.b16 %v5055
        %v5734 = vunpack.c.h.b16 %v5055
        %v5735 = vunpack.c.l.b16 %v5056
        %v5736 = vunpack.c.h.b16 %v5056
        %v5737 = vunpack.c.l.b16 %v5057
        %v5738 = vunpack.c.h.b16 %v5057
        %v5739 = vunpack.c.l.b16 %v5058
        %v5740 = vunpack.c.h.b16 %v5058
        %v5741 = vunpack.c.l.b16 %v5059
        %v5742 = vunpack.c.h.b16 %v5059
        %v5743 = vunpack.c.l.b16 %v5060
        %v5744 = vunpack.c.h.b16 %v5060
        %v5745 = vunpack.c.l.b16 %v5061
        %v5746 = vunpack.c.h.b16 %v5061
        %v5747 = vunpack.c.l.b16 %v5062
        %v5748 = vunpack.c.h.b16 %v5062
        %v5749 = vunpack.c.l.b16 %v5063
        %v5750 = vunpack.c.h.b16 %v5063
        %v5751 = vunpack.c.l.b16 %v5064
        %v5752 = vunpack.c.h.b16 %v5064
        %v5753 = vpack.c.b16 %v5723, %v5721
        %v5754 = vpack.c.b16 %v5724, %v5722
        %v5755 = vpack.c.b16 %v5727, %v5725
        %v5756 = vpack.c.b16 %v5728, %v5726
        %v5757 = vpack.c.b16 %v5731, %v5729
        %v5758 = vpack.c.b16 %v5732, %v5730
        %v5759 = vpack.c.b16 %v5735, %v5733
        %v5760 = vpack.c.b16 %v5736, %v5734
        %v5761 = vpack.c.b16 %v5739, %v5737
        %v5762 = vpack.c.b16 %v5740, %v5738
        %v5763 = vpack.c.b16 %v5743, %v5741
        %v5764 = vpack.c.b16 %v5744, %v5742
        %v5765 = vpack.c.b16 %v5747, %v5745
        %v5766 = vpack.c.b16 %v5748, %v5746
        %v5767 = vpack.c.b16 %v5751, %v5749
        %v5768 = vpack.c.b16 %v5752, %v5750
        %v5785 = vld [vmem:[#allocation7] sm:$0xf]
        %v5786 = vld [vmem:[#allocation7 + $0x4] sm:$0xf]
        %v5787 = vld [vmem:[#allocation7 + $0x8] sm:$0xf]
        %v5788 = vld [vmem:[#allocation7 + $0xc] sm:$0xf]
        %v5789 = vld [vmem:[#allocation7 + $0x10] sm:$0xf]
        %v5790 = vld [vmem:[#allocation7 + $0x14] sm:$0xf]
        %v5791 = vld [vmem:[#allocation7 + $0x18] sm:$0xf]
        %v5792 = vld [vmem:[#allocation7 + $0x1c] sm:$0xf]
        %v5793 = vld [vmem:[#allocation7 + $0x20] sm:$0xf]
        %v5794 = vld [vmem:[#allocation7 + $0x24] sm:$0xf]
        %v5795 = vld [vmem:[#allocation7 + $0x28] sm:$0xf]
        %v5796 = vld [vmem:[#allocation7 + $0x2c] sm:$0xf]
        %v5797 = vld [vmem:[#allocation7 + $0x30] sm:$0xf]
        %v5798 = vld [vmem:[#allocation7 + $0x34] sm:$0xf]
        %v5799 = vld [vmem:[#allocation7 + $0x38] sm:$0xf]
        %v5800 = vld [vmem:[#allocation7 + $0x3c] sm:$0xf]
        %v5801 = vld [vmem:[#allocation7 + $0x40] sm:$0xf]
        %v5802 = vld [vmem:[#allocation7 + $0x44] sm:$0xf]
        %v5803 = vld [vmem:[#allocation7 + $0x48] sm:$0xf]
        %v5804 = vld [vmem:[#allocation7 + $0x4c] sm:$0xf]
        %v5805 = vld [vmem:[#allocation7 + $0x50] sm:$0xf]
        %v5806 = vld [vmem:[#allocation7 + $0x54] sm:$0xf]
        %v5807 = vld [vmem:[#allocation7 + $0x58] sm:$0xf]
        %v5808 = vld [vmem:[#allocation7 + $0x5c] sm:$0xf]
        %v5809 = vld [vmem:[#allocation7 + $0x60] sm:$0xf]
        %v5810 = vld [vmem:[#allocation7 + $0x64] sm:$0xf]
        %v5811 = vld [vmem:[#allocation7 + $0x68] sm:$0xf]
        %v5812 = vld [vmem:[#allocation7 + $0x6c] sm:$0xf]
        %v5813 = vld [vmem:[#allocation7 + $0x70] sm:$0xf]
        %v5814 = vld [vmem:[#allocation7 + $0x74] sm:$0xf]
        %v5815 = vld [vmem:[#allocation7 + $0x78] sm:$0xf]
        %v5816 = vld [vmem:[#allocation7 + $0x7c] sm:$0xf]
        %v5849 = vunpack.c.l.b16 %v5785
        %v5850 = vunpack.c.l.b16 %v5786
        %v5851 = vunpack.c.l.b16 %v5787
        %v5852 = vunpack.c.l.b16 %v5788
        %v5853 = vunpack.c.l.b16 %v5789
        %v5854 = vunpack.c.l.b16 %v5790
        %v5855 = vunpack.c.l.b16 %v5791
        %v5856 = vunpack.c.l.b16 %v5792
        %v5857 = vunpack.c.l.b16 %v5793
        %v5858 = vunpack.c.l.b16 %v5794
        %v5859 = vunpack.c.l.b16 %v5795
        %v5860 = vunpack.c.l.b16 %v5796
        %v5861 = vunpack.c.l.b16 %v5797
        %v5862 = vunpack.c.l.b16 %v5798
        %v5863 = vunpack.c.l.b16 %v5799
        %v5864 = vunpack.c.l.b16 %v5800
        %v5865 = vunpack.c.l.b16 %v5801
        %v5866 = vunpack.c.l.b16 %v5802
        %v5867 = vunpack.c.l.b16 %v5803
        %v5868 = vunpack.c.l.b16 %v5804
        %v5869 = vunpack.c.l.b16 %v5805
        %v5870 = vunpack.c.l.b16 %v5806
        %v5871 = vunpack.c.l.b16 %v5807
        %v5872 = vunpack.c.l.b16 %v5808
        %v5873 = vunpack.c.l.b16 %v5809
        %v5874 = vunpack.c.l.b16 %v5810
        %v5875 = vunpack.c.l.b16 %v5811
        %v5876 = vunpack.c.l.b16 %v5812
        %v5877 = vunpack.c.l.b16 %v5813
        %v5878 = vunpack.c.l.b16 %v5814
        %v5879 = vunpack.c.l.b16 %v5815
        %v5880 = vunpack.c.l.b16 %v5816
        %v5881 = vpack.c.b16 %v5850, %v5849
        %v5882 = vpack.c.b16 %v5852, %v5851
        %v5883 = vpack.c.b16 %v5854, %v5853
        %v5884 = vpack.c.b16 %v5856, %v5855
        %v5885 = vpack.c.b16 %v5858, %v5857
        %v5886 = vpack.c.b16 %v5860, %v5859
        %v5887 = vpack.c.b16 %v5862, %v5861
        %v5888 = vpack.c.b16 %v5864, %v5863
        %v5889 = vpack.c.b16 %v5866, %v5865
        %v5890 = vpack.c.b16 %v5868, %v5867
        %v5891 = vpack.c.b16 %v5870, %v5869
        %v5892 = vpack.c.b16 %v5872, %v5871
        %v5893 = vpack.c.b16 %v5874, %v5873
        %v5894 = vpack.c.b16 %v5876, %v5875
        %v5895 = vpack.c.b16 %v5878, %v5877
        %v5896 = vpack.c.b16 %v5880, %v5879
        %5913 = vmatpush.bf16.msra.mxu0 %v5888
        %5914 = vmatpush.bf16.msra.mxu0 %v5887
        %5915 = vmatpush.bf16.msra.mxu0 %v5886
        %5916 = vmatpush.bf16.msra.mxu0 %v5885
        %5917 = vmatpush.bf16.msra.mxu0 %v5884
        %5918 = vmatpush.bf16.msra.mxu0 %v5883
        %5919 = vmatpush.bf16.msra.mxu0 %v5882
        %5920 = vmatpush.bf16.msra.mxu0 %v5881
        %5921 = vmatmul.bf16.gmra.mxu0 %v5113
        %v5922 = vpop.f32.mrf.mxu0
        %v5923 = vadd.f32 0.0, %v5922
        %v5924 = vpop.f32.mrf.mxu0
        %v5925 = vadd.f32 0.0, %v5924
        %5926 = vmatmul.bf16.gmra.mxu0 %v5115
        %v5927 = vpop.f32.mrf.mxu0
        %v5928 = vadd.f32 0.0, %v5927
        %v5929 = vpop.f32.mrf.mxu0
        %v5930 = vadd.f32 0.0, %v5929
        %5931 = vmatmul.bf16.gmra.mxu0 %v5117
        %v5932 = vpop.f32.mrf.mxu0
        %v5933 = vadd.f32 0.0, %v5932
        %v5934 = vpop.f32.mrf.mxu0
        %v5935 = vadd.f32 0.0, %v5934
        %5936 = vmatmul.bf16.gmra.mxu0 %v5119
        %v5937 = vpop.f32.mrf.mxu0
        %v5938 = vadd.f32 0.0, %v5937
        %v5939 = vpop.f32.mrf.mxu0
        %v5940 = vadd.f32 0.0, %v5939
        %5941 = vmatmul.bf16.gmra.mxu0 %v5121
        %v5942 = vpop.f32.mrf.mxu0
        %v5943 = vadd.f32 0.0, %v5942
        %v5944 = vpop.f32.mrf.mxu0
        %v5945 = vadd.f32 0.0, %v5944
        %5946 = vmatmul.bf16.gmra.mxu0 %v5123
        %v5947 = vpop.f32.mrf.mxu0
        %v5948 = vadd.f32 0.0, %v5947
        %v5949 = vpop.f32.mrf.mxu0
        %v5950 = vadd.f32 0.0, %v5949
        %5951 = vmatmul.bf16.gmra.mxu0 %v5125
        %v5952 = vpop.f32.mrf.mxu0
        %v5953 = vadd.f32 0.0, %v5952
        %v5954 = vpop.f32.mrf.mxu0
        %v5955 = vadd.f32 0.0, %v5954
        %5956 = vmatmul.bf16.gmra.mxu0 %v5127
        %v5957 = vpop.f32.mrf.mxu0
        %v5958 = vadd.f32 0.0, %v5957
        %v5959 = vpop.f32.mrf.mxu0
        %v5960 = vadd.f32 0.0, %v5959
        %5961 = vmatmul.bf16.gmra.mxu0 %v5193
        %v5962 = vpop.f32.mrf.mxu0
        %v5963 = vadd.f32 0.0, %v5962
        %v5964 = vpop.f32.mrf.mxu0
        %v5965 = vadd.f32 0.0, %v5964
        %5966 = vmatmul.bf16.gmra.mxu0 %v5195
        %v5967 = vpop.f32.mrf.mxu0
        %v5968 = vadd.f32 0.0, %v5967
        %v5969 = vpop.f32.mrf.mxu0
        %v5970 = vadd.f32 0.0, %v5969
        %5971 = vmatmul.bf16.gmra.mxu0 %v5197
        %v5972 = vpop.f32.mrf.mxu0
        %v5973 = vadd.f32 0.0, %v5972
        %v5974 = vpop.f32.mrf.mxu0
        %v5975 = vadd.f32 0.0, %v5974
        %5976 = vmatmul.bf16.gmra.mxu0 %v5199
        %v5977 = vpop.f32.mrf.mxu0
        %v5978 = vadd.f32 0.0, %v5977
        %v5979 = vpop.f32.mrf.mxu0
        %v5980 = vadd.f32 0.0, %v5979
        %5981 = vmatmul.bf16.gmra.mxu0 %v5201
        %v5982 = vpop.f32.mrf.mxu0
        %v5983 = vadd.f32 0.0, %v5982
        %v5984 = vpop.f32.mrf.mxu0
        %v5985 = vadd.f32 0.0, %v5984
        %5986 = vmatmul.bf16.gmra.mxu0 %v5203
        %v5987 = vpop.f32.mrf.mxu0
        %v5988 = vadd.f32 0.0, %v5987
        %v5989 = vpop.f32.mrf.mxu0
        %v5990 = vadd.f32 0.0, %v5989
        %5991 = vmatmul.bf16.gmra.mxu0 %v5205
        %v5992 = vpop.f32.mrf.mxu0
        %v5993 = vadd.f32 0.0, %v5992
        %v5994 = vpop.f32.mrf.mxu0
        %v5995 = vadd.f32 0.0, %v5994
        %5996 = vmatmul.bf16.gmra.mxu0 %v5207
        %v5997 = vpop.f32.mrf.mxu0
        %v5998 = vadd.f32 0.0, %v5997
        %v5999 = vpop.f32.mrf.mxu0
        %v6000 = vadd.f32 0.0, %v5999
        %6001 = vmatmul.bf16.gmra.mxu0 %v5273
        %v6002 = vpop.f32.mrf.mxu0
        %v6003 = vadd.f32 0.0, %v6002
        %v6004 = vpop.f32.mrf.mxu0
        %v6005 = vadd.f32 0.0, %v6004
        %6006 = vmatmul.bf16.gmra.mxu0 %v5275
        %v6007 = vpop.f32.mrf.mxu0
        %v6008 = vadd.f32 0.0, %v6007
        %v6009 = vpop.f32.mrf.mxu0
        %v6010 = vadd.f32 0.0, %v6009
        %6011 = vmatmul.bf16.gmra.mxu0 %v5277
        %v6012 = vpop.f32.mrf.mxu0
        %v6013 = vadd.f32 0.0, %v6012
        %v6014 = vpop.f32.mrf.mxu0
        %v6015 = vadd.f32 0.0, %v6014
        %6016 = vmatmul.bf16.gmra.mxu0 %v5279
        %v6017 = vpop.f32.mrf.mxu0
        %v6018 = vadd.f32 0.0, %v6017
        %v6019 = vpop.f32.mrf.mxu0
        %v6020 = vadd.f32 0.0, %v6019
        %6021 = vmatmul.bf16.gmra.mxu0 %v5281
        %v6022 = vpop.f32.mrf.mxu0
        %v6023 = vadd.f32 0.0, %v6022
        %v6024 = vpop.f32.mrf.mxu0
        %v6025 = vadd.f32 0.0, %v6024
        %6026 = vmatmul.bf16.gmra.mxu0 %v5283
        %v6027 = vpop.f32.mrf.mxu0
        %v6028 = vadd.f32 0.0, %v6027
        %v6029 = vpop.f32.mrf.mxu0
        %v6030 = vadd.f32 0.0, %v6029
        %6031 = vmatmul.bf16.gmra.mxu0 %v5285
        %v6032 = vpop.f32.mrf.mxu0
        %v6033 = vadd.f32 0.0, %v6032
        %v6034 = vpop.f32.mrf.mxu0
        %v6035 = vadd.f32 0.0, %v6034
        %6036 = vmatmul.bf16.gmra.mxu0 %v5287
        %v6037 = vpop.f32.mrf.mxu0
        %v6038 = vadd.f32 0.0, %v6037
        %v6039 = vpop.f32.mrf.mxu0
        %v6040 = vadd.f32 0.0, %v6039
        %6041 = vmatmul.bf16.gmra.mxu0 %v5353
        %v6042 = vpop.f32.mrf.mxu0
        %v6043 = vadd.f32 0.0, %v6042
        %v6044 = vpop.f32.mrf.mxu0
        %v6045 = vadd.f32 0.0, %v6044
        %6046 = vmatmul.bf16.gmra.mxu0 %v5355
        %v6047 = vpop.f32.mrf.mxu0
        %v6048 = vadd.f32 0.0, %v6047
        %v6049 = vpop.f32.mrf.mxu0
        %v6050 = vadd.f32 0.0, %v6049
        %6051 = vmatmul.bf16.gmra.mxu0 %v5357
        %v6052 = vpop.f32.mrf.mxu0
        %v6053 = vadd.f32 0.0, %v6052
        %v6054 = vpop.f32.mrf.mxu0
        %v6055 = vadd.f32 0.0, %v6054
        %6056 = vmatmul.bf16.gmra.mxu0 %v5359
        %v6057 = vpop.f32.mrf.mxu0
        %v6058 = vadd.f32 0.0, %v6057
        %v6059 = vpop.f32.mrf.mxu0
        %v6060 = vadd.f32 0.0, %v6059
        %6061 = vmatmul.bf16.gmra.mxu0 %v5361
        %v6062 = vpop.f32.mrf.mxu0
        %v6063 = vadd.f32 0.0, %v6062
        %v6064 = vpop.f32.mrf.mxu0
        %v6065 = vadd.f32 0.0, %v6064
        %6066 = vmatmul.bf16.gmra.mxu0 %v5363
        %v6067 = vpop.f32.mrf.mxu0
        %v6068 = vadd.f32 0.0, %v6067
        %v6069 = vpop.f32.mrf.mxu0
        %v6070 = vadd.f32 0.0, %v6069
        %6071 = vmatmul.bf16.gmra.mxu0 %v5365
        %v6072 = vpop.f32.mrf.mxu0
        %v6073 = vadd.f32 0.0, %v6072
        %v6074 = vpop.f32.mrf.mxu0
        %v6075 = vadd.f32 0.0, %v6074
        %6076 = vmatmul.bf16.gmra.mxu0 %v5367
        %v6077 = vpop.f32.mrf.mxu0
        %v6078 = vadd.f32 0.0, %v6077
        %v6079 = vpop.f32.mrf.mxu0
        %v6080 = vadd.f32 0.0, %v6079
        %6081 = vmatmul.bf16.gmra.mxu0 %v5433
        %v6082 = vpop.f32.mrf.mxu0
        %v6083 = vadd.f32 0.0, %v6082
        %v6084 = vpop.f32.mrf.mxu0
        %v6085 = vadd.f32 0.0, %v6084
        %6086 = vmatmul.bf16.gmra.mxu0 %v5435
        %v6087 = vpop.f32.mrf.mxu0
        %v6088 = vadd.f32 0.0, %v6087
        %v6089 = vpop.f32.mrf.mxu0
        %v6090 = vadd.f32 0.0, %v6089
        %6091 = vmatmul.bf16.gmra.mxu0 %v5437
        %v6092 = vpop.f32.mrf.mxu0
        %v6093 = vadd.f32 0.0, %v6092
        %v6094 = vpop.f32.mrf.mxu0
        %v6095 = vadd.f32 0.0, %v6094
        %6096 = vmatmul.bf16.gmra.mxu0 %v5439
        %v6097 = vpop.f32.mrf.mxu0
        %v6098 = vadd.f32 0.0, %v6097
        %v6099 = vpop.f32.mrf.mxu0
        %v6100 = vadd.f32 0.0, %v6099
        %6101 = vmatmul.bf16.gmra.mxu0 %v5441
        %v6102 = vpop.f32.mrf.mxu0
        %v6103 = vadd.f32 0.0, %v6102
        %v6104 = vpop.f32.mrf.mxu0
        %v6105 = vadd.f32 0.0, %v6104
        %6106 = vmatmul.bf16.gmra.mxu0 %v5443
        %v6107 = vpop.f32.mrf.mxu0
        %v6108 = vadd.f32 0.0, %v6107
        %v6109 = vpop.f32.mrf.mxu0
        %v6110 = vadd.f32 0.0, %v6109
        %6111 = vmatmul.bf16.gmra.mxu0 %v5445
        %v6112 = vpop.f32.mrf.mxu0
        %v6113 = vadd.f32 0.0, %v6112
        %v6114 = vpop.f32.mrf.mxu0
        %v6115 = vadd.f32 0.0, %v6114
        %6116 = vmatmul.bf16.gmra.mxu0 %v5447
        %v6117 = vpop.f32.mrf.mxu0
        %v6118 = vadd.f32 0.0, %v6117
        %v6119 = vpop.f32.mrf.mxu0
        %v6120 = vadd.f32 0.0, %v6119
        %6121 = vmatmul.bf16.gmra.mxu0 %v5513
        %v6122 = vpop.f32.mrf.mxu0
        %v6123 = vadd.f32 0.0, %v6122
        %v6124 = vpop.f32.mrf.mxu0
        %v6125 = vadd.f32 0.0, %v6124
        %6126 = vmatmul.bf16.gmra.mxu0 %v5515
        %v6127 = vpop.f32.mrf.mxu0
        %v6128 = vadd.f32 0.0, %v6127
        %v6129 = vpop.f32.mrf.mxu0
        %v6130 = vadd.f32 0.0, %v6129
        %6131 = vmatmul.bf16.gmra.mxu0 %v5517
        %v6132 = vpop.f32.mrf.mxu0
        %v6133 = vadd.f32 0.0, %v6132
        %v6134 = vpop.f32.mrf.mxu0
        %v6135 = vadd.f32 0.0, %v6134
        %6136 = vmatmul.bf16.gmra.mxu0 %v5519
        %v6137 = vpop.f32.mrf.mxu0
        %v6138 = vadd.f32 0.0, %v6137
        %v6139 = vpop.f32.mrf.mxu0
        %v6140 = vadd.f32 0.0, %v6139
        %6141 = vmatmul.bf16.gmra.mxu0 %v5521
        %v6142 = vpop.f32.mrf.mxu0
        %v6143 = vadd.f32 0.0, %v6142
        %v6144 = vpop.f32.mrf.mxu0
        %v6145 = vadd.f32 0.0, %v6144
        %6146 = vmatmul.bf16.gmra.mxu0 %v5523
        %v6147 = vpop.f32.mrf.mxu0
        %v6148 = vadd.f32 0.0, %v6147
        %v6149 = vpop.f32.mrf.mxu0
        %v6150 = vadd.f32 0.0, %v6149
        %6151 = vmatmul.bf16.gmra.mxu0 %v5525
        %v6152 = vpop.f32.mrf.mxu0
        %v6153 = vadd.f32 0.0, %v6152
        %v6154 = vpop.f32.mrf.mxu0
        %v6155 = vadd.f32 0.0, %v6154
        %6156 = vmatmul.bf16.gmra.mxu0 %v5527
        %v6157 = vpop.f32.mrf.mxu0
        %v6158 = vadd.f32 0.0, %v6157
        %v6159 = vpop.f32.mrf.mxu0
        %v6160 = vadd.f32 0.0, %v6159
        %6161 = vmatmul.bf16.gmra.mxu0 %v5593
        %v6162 = vpop.f32.mrf.mxu0
        %v6163 = vadd.f32 0.0, %v6162
        %v6164 = vpop.f32.mrf.mxu0
        %v6165 = vadd.f32 0.0, %v6164
        %6166 = vmatmul.bf16.gmra.mxu0 %v5595
        %v6167 = vpop.f32.mrf.mxu0
        %v6168 = vadd.f32 0.0, %v6167
        %v6169 = vpop.f32.mrf.mxu0
        %v6170 = vadd.f32 0.0, %v6169
        %6171 = vmatmul.bf16.gmra.mxu0 %v5597
        %v6172 = vpop.f32.mrf.mxu0
        %v6173 = vadd.f32 0.0, %v6172
        %v6174 = vpop.f32.mrf.mxu0
        %v6175 = vadd.f32 0.0, %v6174
        %6176 = vmatmul.bf16.gmra.mxu0 %v5599
        %v6177 = vpop.f32.mrf.mxu0
        %v6178 = vadd.f32 0.0, %v6177
        %v6179 = vpop.f32.mrf.mxu0
        %v6180 = vadd.f32 0.0, %v6179
        %6181 = vmatmul.bf16.gmra.mxu0 %v5601
        %v6182 = vpop.f32.mrf.mxu0
        %v6183 = vadd.f32 0.0, %v6182
        %v6184 = vpop.f32.mrf.mxu0
        %v6185 = vadd.f32 0.0, %v6184
        %6186 = vmatmul.bf16.gmra.mxu0 %v5603
        %v6187 = vpop.f32.mrf.mxu0
        %v6188 = vadd.f32 0.0, %v6187
        %v6189 = vpop.f32.mrf.mxu0
        %v6190 = vadd.f32 0.0, %v6189
        %6191 = vmatmul.bf16.gmra.mxu0 %v5605
        %v6192 = vpop.f32.mrf.mxu0
        %v6193 = vadd.f32 0.0, %v6192
        %v6194 = vpop.f32.mrf.mxu0
        %v6195 = vadd.f32 0.0, %v6194
        %6196 = vmatmul.bf16.gmra.mxu0 %v5607
        %v6197 = vpop.f32.mrf.mxu0
        %v6198 = vadd.f32 0.0, %v6197
        %v6199 = vpop.f32.mrf.mxu0
        %v6200 = vadd.f32 0.0, %v6199
        %6201 = vmatmul.bf16.gmra.mxu0 %v5673
        %v6202 = vpop.f32.mrf.mxu0
        %v6203 = vadd.f32 0.0, %v6202
        %v6204 = vpop.f32.mrf.mxu0
        %v6205 = vadd.f32 0.0, %v6204
        %6206 = vmatmul.bf16.gmra.mxu0 %v5675
        %v6207 = vpop.f32.mrf.mxu0
        %v6208 = vadd.f32 0.0, %v6207
        %v6209 = vpop.f32.mrf.mxu0
        %v6210 = vadd.f32 0.0, %v6209
        %6211 = vmatmul.bf16.gmra.mxu0 %v5677
        %v6212 = vpop.f32.mrf.mxu0
        %v6213 = vadd.f32 0.0, %v6212
        %v6214 = vpop.f32.mrf.mxu0
        %v6215 = vadd.f32 0.0, %v6214
        %6216 = vmatmul.bf16.gmra.mxu0 %v5679
        %v6217 = vpop.f32.mrf.mxu0
        %v6218 = vadd.f32 0.0, %v6217
        %v6219 = vpop.f32.mrf.mxu0
        %v6220 = vadd.f32 0.0, %v6219
        %6221 = vmatmul.bf16.gmra.mxu0 %v5681
        %v6222 = vpop.f32.mrf.mxu0
        %v6223 = vadd.f32 0.0, %v6222
        %v6224 = vpop.f32.mrf.mxu0
        %v6225 = vadd.f32 0.0, %v6224
        %6226 = vmatmul.bf16.gmra.mxu0 %v5683
        %v6227 = vpop.f32.mrf.mxu0
        %v6228 = vadd.f32 0.0, %v6227
        %v6229 = vpop.f32.mrf.mxu0
        %v6230 = vadd.f32 0.0, %v6229
        %6231 = vmatmul.bf16.gmra.mxu0 %v5685
        %v6232 = vpop.f32.mrf.mxu0
        %v6233 = vadd.f32 0.0, %v6232
        %v6234 = vpop.f32.mrf.mxu0
        %v6235 = vadd.f32 0.0, %v6234
        %6236 = vmatmul.bf16.gmra.mxu0 %v5687
        %v6237 = vpop.f32.mrf.mxu0
        %v6238 = vadd.f32 0.0, %v6237
        %v6239 = vpop.f32.mrf.mxu0
        %v6240 = vadd.f32 0.0, %v6239
        %6241 = vmatmul.bf16.gmra.mxu0 %v5753
        %v6242 = vpop.f32.mrf.mxu0
        %v6243 = vadd.f32 0.0, %v6242
        %v6244 = vpop.f32.mrf.mxu0
        %v6245 = vadd.f32 0.0, %v6244
        %6246 = vmatmul.bf16.gmra.mxu0 %v5755
        %v6247 = vpop.f32.mrf.mxu0
        %v6248 = vadd.f32 0.0, %v6247
        %v6249 = vpop.f32.mrf.mxu0
        %v6250 = vadd.f32 0.0, %v6249
        %6251 = vmatmul.bf16.gmra.mxu0 %v5757
        %v6252 = vpop.f32.mrf.mxu0
        %v6253 = vadd.f32 0.0, %v6252
        %v6254 = vpop.f32.mrf.mxu0
        %v6255 = vadd.f32 0.0, %v6254
        %6256 = vmatmul.bf16.gmra.mxu0 %v5759
        %v6257 = vpop.f32.mrf.mxu0
        %v6258 = vadd.f32 0.0, %v6257
        %v6259 = vpop.f32.mrf.mxu0
        %v6260 = vadd.f32 0.0, %v6259
        %6261 = vmatmul.bf16.gmra.mxu0 %v5761
        %v6262 = vpop.f32.mrf.mxu0
        %v6263 = vadd.f32 0.0, %v6262
        %v6264 = vpop.f32.mrf.mxu0
        %v6265 = vadd.f32 0.0, %v6264
        %6266 = vmatmul.bf16.gmra.mxu0 %v5763
        %v6267 = vpop.f32.mrf.mxu0
        %v6268 = vadd.f32 0.0, %v6267
        %v6269 = vpop.f32.mrf.mxu0
        %v6270 = vadd.f32 0.0, %v6269
        %6271 = vmatmul.bf16.gmra.mxu0 %v5765
        %v6272 = vpop.f32.mrf.mxu0
        %v6273 = vadd.f32 0.0, %v6272
        %v6274 = vpop.f32.mrf.mxu0
        %v6275 = vadd.f32 0.0, %v6274
        %6276 = vmatmul.bf16.gmra.mxu0 %v5767
        %v6277 = vpop.f32.mrf.mxu0
        %v6278 = vadd.f32 0.0, %v6277
        %v6279 = vpop.f32.mrf.mxu0
        %v6280 = vadd.f32 0.0, %v6279
        %6281 = vdwg.mxu0
        %6282 = vmatpush.bf16.msra.mxu0 %v5896
        %6283 = vmatpush.bf16.msra.mxu0 %v5895
        %6284 = vmatpush.bf16.msra.mxu0 %v5894
        %6285 = vmatpush.bf16.msra.mxu0 %v5893
        %6286 = vmatpush.bf16.msra.mxu0 %v5892
        %6287 = vmatpush.bf16.msra.mxu0 %v5891
        %6288 = vmatpush.bf16.msra.mxu0 %v5890
        %6289 = vmatpush.bf16.msra.mxu0 %v5889
        %6290 = vmatmul.bf16.gmra.mxu0 %v5114
        %v6291 = vpop.f32.mrf.mxu0
        %v6292 = vadd.f32 %v5923, %v6291
        %v6293 = vpop.f32.mrf.mxu0
        %v6294 = vadd.f32 %v5925, %v6293
        %6295 = vmatmul.bf16.gmra.mxu0 %v5116
        %v6296 = vpop.f32.mrf.mxu0
        %v6297 = vadd.f32 %v5928, %v6296
        %v6298 = vpop.f32.mrf.mxu0
        %v6299 = vadd.f32 %v5930, %v6298
        %6300 = vmatmul.bf16.gmra.mxu0 %v5118
        %v6301 = vpop.f32.mrf.mxu0
        %v6302 = vadd.f32 %v5933, %v6301
        %v6303 = vpop.f32.mrf.mxu0
        %v6304 = vadd.f32 %v5935, %v6303
        %6305 = vmatmul.bf16.gmra.mxu0 %v5120
        %v6306 = vpop.f32.mrf.mxu0
        %v6307 = vadd.f32 %v5938, %v6306
        %v6308 = vpop.f32.mrf.mxu0
        %v6309 = vadd.f32 %v5940, %v6308
        %6310 = vmatmul.bf16.gmra.mxu0 %v5122
        %v6311 = vpop.f32.mrf.mxu0
        %v6312 = vadd.f32 %v5943, %v6311
        %v6313 = vpop.f32.mrf.mxu0
        %v6314 = vadd.f32 %v5945, %v6313
        %6315 = vmatmul.bf16.gmra.mxu0 %v5124
        %v6316 = vpop.f32.mrf.mxu0
        %v6317 = vadd.f32 %v5948, %v6316
        %v6318 = vpop.f32.mrf.mxu0
        %v6319 = vadd.f32 %v5950, %v6318
        %6320 = vmatmul.bf16.gmra.mxu0 %v5126
        %v6321 = vpop.f32.mrf.mxu0
        %v6322 = vadd.f32 %v5953, %v6321
        %v6323 = vpop.f32.mrf.mxu0
        %v6324 = vadd.f32 %v5955, %v6323
        %6325 = vmatmul.bf16.gmra.mxu0 %v5128
        %v6326 = vpop.f32.mrf.mxu0
        %v6327 = vadd.f32 %v5958, %v6326
        %v6328 = vpop.f32.mrf.mxu0
        %v6329 = vadd.f32 %v5960, %v6328
        %6330 = vmatmul.bf16.gmra.mxu0 %v5194
        %v6331 = vpop.f32.mrf.mxu0
        %v6332 = vadd.f32 %v5963, %v6331
        %v6333 = vpop.f32.mrf.mxu0
        %v6334 = vadd.f32 %v5965, %v6333
        %6335 = vmatmul.bf16.gmra.mxu0 %v5196
        %v6336 = vpop.f32.mrf.mxu0
        %v6337 = vadd.f32 %v5968, %v6336
        %v6338 = vpop.f32.mrf.mxu0
        %v6339 = vadd.f32 %v5970, %v6338
        %6340 = vmatmul.bf16.gmra.mxu0 %v5198
        %v6341 = vpop.f32.mrf.mxu0
        %v6342 = vadd.f32 %v5973, %v6341
        %v6343 = vpop.f32.mrf.mxu0
        %v6344 = vadd.f32 %v5975, %v6343
        %6345 = vmatmul.bf16.gmra.mxu0 %v5200
        %v6346 = vpop.f32.mrf.mxu0
        %v6347 = vadd.f32 %v5978, %v6346
        %v6348 = vpop.f32.mrf.mxu0
        %v6349 = vadd.f32 %v5980, %v6348
        %6350 = vmatmul.bf16.gmra.mxu0 %v5202
        %v6351 = vpop.f32.mrf.mxu0
        %v6352 = vadd.f32 %v5983, %v6351
        %v6353 = vpop.f32.mrf.mxu0
        %v6354 = vadd.f32 %v5985, %v6353
        %6355 = vmatmul.bf16.gmra.mxu0 %v5204
        %v6356 = vpop.f32.mrf.mxu0
        %v6357 = vadd.f32 %v5988, %v6356
        %v6358 = vpop.f32.mrf.mxu0
        %v6359 = vadd.f32 %v5990, %v6358
        %6360 = vmatmul.bf16.gmra.mxu0 %v5206
        %v6361 = vpop.f32.mrf.mxu0
        %v6362 = vadd.f32 %v5993, %v6361
        %v6363 = vpop.f32.mrf.mxu0
        %v6364 = vadd.f32 %v5995, %v6363
        %6365 = vmatmul.bf16.gmra.mxu0 %v5208
        %v6366 = vpop.f32.mrf.mxu0
        %v6367 = vadd.f32 %v5998, %v6366
        %v6368 = vpop.f32.mrf.mxu0
        %v6369 = vadd.f32 %v6000, %v6368
        %6370 = vmatmul.bf16.gmra.mxu0 %v5274
        %v6371 = vpop.f32.mrf.mxu0
        %v6372 = vadd.f32 %v6003, %v6371
        %v6373 = vpop.f32.mrf.mxu0
        %v6374 = vadd.f32 %v6005, %v6373
        %6375 = vmatmul.bf16.gmra.mxu0 %v5276
        %v6376 = vpop.f32.mrf.mxu0
        %v6377 = vadd.f32 %v6008, %v6376
        %v6378 = vpop.f32.mrf.mxu0
        %v6379 = vadd.f32 %v6010, %v6378
        %6380 = vmatmul.bf16.gmra.mxu0 %v5278
        %v6381 = vpop.f32.mrf.mxu0
        %v6382 = vadd.f32 %v6013, %v6381
        %v6383 = vpop.f32.mrf.mxu0
        %v6384 = vadd.f32 %v6015, %v6383
        %6385 = vmatmul.bf16.gmra.mxu0 %v5280
        %v6386 = vpop.f32.mrf.mxu0
        %v6387 = vadd.f32 %v6018, %v6386
        %v6388 = vpop.f32.mrf.mxu0
        %v6389 = vadd.f32 %v6020, %v6388
        %6390 = vmatmul.bf16.gmra.mxu0 %v5282
        %v6391 = vpop.f32.mrf.mxu0
        %v6392 = vadd.f32 %v6023, %v6391
        %v6393 = vpop.f32.mrf.mxu0
        %v6394 = vadd.f32 %v6025, %v6393
        %6395 = vmatmul.bf16.gmra.mxu0 %v5284
        %v6396 = vpop.f32.mrf.mxu0
        %v6397 = vadd.f32 %v6028, %v6396
        %v6398 = vpop.f32.mrf.mxu0
        %v6399 = vadd.f32 %v6030, %v6398
        %6400 = vmatmul.bf16.gmra.mxu0 %v5286
        %v6401 = vpop.f32.mrf.mxu0
        %v6402 = vadd.f32 %v6033, %v6401
        %v6403 = vpop.f32.mrf.mxu0
        %v6404 = vadd.f32 %v6035, %v6403
        %6405 = vmatmul.bf16.gmra.mxu0 %v5288
        %v6406 = vpop.f32.mrf.mxu0
        %v6407 = vadd.f32 %v6038, %v6406
        %v6408 = vpop.f32.mrf.mxu0
        %v6409 = vadd.f32 %v6040, %v6408
        %6410 = vmatmul.bf16.gmra.mxu0 %v5354
        %v6411 = vpop.f32.mrf.mxu0
        %v6412 = vadd.f32 %v6043, %v6411
        %v6413 = vpop.f32.mrf.mxu0
        %v6414 = vadd.f32 %v6045, %v6413
        %6415 = vmatmul.bf16.gmra.mxu0 %v5356
        %v6416 = vpop.f32.mrf.mxu0
        %v6417 = vadd.f32 %v6048, %v6416
        %v6418 = vpop.f32.mrf.mxu0
        %v6419 = vadd.f32 %v6050, %v6418
        %6420 = vmatmul.bf16.gmra.mxu0 %v5358
        %v6421 = vpop.f32.mrf.mxu0
        %v6422 = vadd.f32 %v6053, %v6421
        %v6423 = vpop.f32.mrf.mxu0
        %v6424 = vadd.f32 %v6055, %v6423
        %6425 = vmatmul.bf16.gmra.mxu0 %v5360
        %v6426 = vpop.f32.mrf.mxu0
        %v6427 = vadd.f32 %v6058, %v6426
        %v6428 = vpop.f32.mrf.mxu0
        %v6429 = vadd.f32 %v6060, %v6428
        %6430 = vmatmul.bf16.gmra.mxu0 %v5362
        %v6431 = vpop.f32.mrf.mxu0
        %v6432 = vadd.f32 %v6063, %v6431
        %v6433 = vpop.f32.mrf.mxu0
        %v6434 = vadd.f32 %v6065, %v6433
        %6435 = vmatmul.bf16.gmra.mxu0 %v5364
        %v6436 = vpop.f32.mrf.mxu0
        %v6437 = vadd.f32 %v6068, %v6436
        %v6438 = vpop.f32.mrf.mxu0
        %v6439 = vadd.f32 %v6070, %v6438
        %6440 = vmatmul.bf16.gmra.mxu0 %v5366
        %v6441 = vpop.f32.mrf.mxu0
        %v6442 = vadd.f32 %v6073, %v6441
        %v6443 = vpop.f32.mrf.mxu0
        %v6444 = vadd.f32 %v6075, %v6443
        %6445 = vmatmul.bf16.gmra.mxu0 %v5368
        %v6446 = vpop.f32.mrf.mxu0
        %v6447 = vadd.f32 %v6078, %v6446
        %v6448 = vpop.f32.mrf.mxu0
        %v6449 = vadd.f32 %v6080, %v6448
        %6450 = vmatmul.bf16.gmra.mxu0 %v5434
        %v6451 = vpop.f32.mrf.mxu0
        %v6452 = vadd.f32 %v6083, %v6451
        %v6453 = vpop.f32.mrf.mxu0
        %v6454 = vadd.f32 %v6085, %v6453
        %6455 = vmatmul.bf16.gmra.mxu0 %v5436
        %v6456 = vpop.f32.mrf.mxu0
        %v6457 = vadd.f32 %v6088, %v6456
        %v6458 = vpop.f32.mrf.mxu0
        %v6459 = vadd.f32 %v6090, %v6458
        %6460 = vmatmul.bf16.gmra.mxu0 %v5438
        %v6461 = vpop.f32.mrf.mxu0
        %v6462 = vadd.f32 %v6093, %v6461
        %v6463 = vpop.f32.mrf.mxu0
        %v6464 = vadd.f32 %v6095, %v6463
        %6465 = vmatmul.bf16.gmra.mxu0 %v5440
        %v6466 = vpop.f32.mrf.mxu0
        %v6467 = vadd.f32 %v6098, %v6466
        %v6468 = vpop.f32.mrf.mxu0
        %v6469 = vadd.f32 %v6100, %v6468
        %6470 = vmatmul.bf16.gmra.mxu0 %v5442
        %v6471 = vpop.f32.mrf.mxu0
        %v6472 = vadd.f32 %v6103, %v6471
        %v6473 = vpop.f32.mrf.mxu0
        %v6474 = vadd.f32 %v6105, %v6473
        %6475 = vmatmul.bf16.gmra.mxu0 %v5444
        %v6476 = vpop.f32.mrf.mxu0
        %v6477 = vadd.f32 %v6108, %v6476
        %v6478 = vpop.f32.mrf.mxu0
        %v6479 = vadd.f32 %v6110, %v6478
        %6480 = vmatmul.bf16.gmra.mxu0 %v5446
        %v6481 = vpop.f32.mrf.mxu0
        %v6482 = vadd.f32 %v6113, %v6481
        %v6483 = vpop.f32.mrf.mxu0
        %v6484 = vadd.f32 %v6115, %v6483
        %6485 = vmatmul.bf16.gmra.mxu0 %v5448
        %v6486 = vpop.f32.mrf.mxu0
        %v6487 = vadd.f32 %v6118, %v6486
        %v6488 = vpop.f32.mrf.mxu0
        %v6489 = vadd.f32 %v6120, %v6488
        %6490 = vmatmul.bf16.gmra.mxu0 %v5514
        %v6491 = vpop.f32.mrf.mxu0
        %v6492 = vadd.f32 %v6123, %v6491
        %v6493 = vpop.f32.mrf.mxu0
        %v6494 = vadd.f32 %v6125, %v6493
        %6495 = vmatmul.bf16.gmra.mxu0 %v5516
        %v6496 = vpop.f32.mrf.mxu0
        %v6497 = vadd.f32 %v6128, %v6496
        %v6498 = vpop.f32.mrf.mxu0
        %v6499 = vadd.f32 %v6130, %v6498
        %6500 = vmatmul.bf16.gmra.mxu0 %v5518
        %v6501 = vpop.f32.mrf.mxu0
        %v6502 = vadd.f32 %v6133, %v6501
        %v6503 = vpop.f32.mrf.mxu0
        %v6504 = vadd.f32 %v6135, %v6503
        %6505 = vmatmul.bf16.gmra.mxu0 %v5520
        %v6506 = vpop.f32.mrf.mxu0
        %v6507 = vadd.f32 %v6138, %v6506
        %v6508 = vpop.f32.mrf.mxu0
        %v6509 = vadd.f32 %v6140, %v6508
        %6510 = vmatmul.bf16.gmra.mxu0 %v5522
        %v6511 = vpop.f32.mrf.mxu0
        %v6512 = vadd.f32 %v6143, %v6511
        %v6513 = vpop.f32.mrf.mxu0
        %v6514 = vadd.f32 %v6145, %v6513
        %6515 = vmatmul.bf16.gmra.mxu0 %v5524
        %v6516 = vpop.f32.mrf.mxu0
        %v6517 = vadd.f32 %v6148, %v6516
        %v6518 = vpop.f32.mrf.mxu0
        %v6519 = vadd.f32 %v6150, %v6518
        %6520 = vmatmul.bf16.gmra.mxu0 %v5526
        %v6521 = vpop.f32.mrf.mxu0
        %v6522 = vadd.f32 %v6153, %v6521
        %v6523 = vpop.f32.mrf.mxu0
        %v6524 = vadd.f32 %v6155, %v6523
        %6525 = vmatmul.bf16.gmra.mxu0 %v5528
        %v6526 = vpop.f32.mrf.mxu0
        %v6527 = vadd.f32 %v6158, %v6526
        %v6528 = vpop.f32.mrf.mxu0
        %v6529 = vadd.f32 %v6160, %v6528
        %6530 = vmatmul.bf16.gmra.mxu0 %v5594
        %v6531 = vpop.f32.mrf.mxu0
        %v6532 = vadd.f32 %v6163, %v6531
        %v6533 = vpop.f32.mrf.mxu0
        %v6534 = vadd.f32 %v6165, %v6533
        %6535 = vmatmul.bf16.gmra.mxu0 %v5596
        %v6536 = vpop.f32.mrf.mxu0
        %v6537 = vadd.f32 %v6168, %v6536
        %v6538 = vpop.f32.mrf.mxu0
        %v6539 = vadd.f32 %v6170, %v6538
        %6540 = vmatmul.bf16.gmra.mxu0 %v5598
        %v6541 = vpop.f32.mrf.mxu0
        %v6542 = vadd.f32 %v6173, %v6541
        %v6543 = vpop.f32.mrf.mxu0
        %v6544 = vadd.f32 %v6175, %v6543
        %6545 = vmatmul.bf16.gmra.mxu0 %v5600
        %v6546 = vpop.f32.mrf.mxu0
        %v6547 = vadd.f32 %v6178, %v6546
        %v6548 = vpop.f32.mrf.mxu0
        %v6549 = vadd.f32 %v6180, %v6548
        %6550 = vmatmul.bf16.gmra.mxu0 %v5602
        %v6551 = vpop.f32.mrf.mxu0
        %v6552 = vadd.f32 %v6183, %v6551
        %v6553 = vpop.f32.mrf.mxu0
        %v6554 = vadd.f32 %v6185, %v6553
        %6555 = vmatmul.bf16.gmra.mxu0 %v5604
        %v6556 = vpop.f32.mrf.mxu0
        %v6557 = vadd.f32 %v6188, %v6556
        %v6558 = vpop.f32.mrf.mxu0
        %v6559 = vadd.f32 %v6190, %v6558
        %6560 = vmatmul.bf16.gmra.mxu0 %v5606
        %v6561 = vpop.f32.mrf.mxu0
        %v6562 = vadd.f32 %v6193, %v6561
        %v6563 = vpop.f32.mrf.mxu0
        %v6564 = vadd.f32 %v6195, %v6563
        %6565 = vmatmul.bf16.gmra.mxu0 %v5608
        %v6566 = vpop.f32.mrf.mxu0
        %v6567 = vadd.f32 %v6198, %v6566
        %v6568 = vpop.f32.mrf.mxu0
        %v6569 = vadd.f32 %v6200, %v6568
        %6570 = vmatmul.bf16.gmra.mxu0 %v5674
        %v6571 = vpop.f32.mrf.mxu0
        %v6572 = vadd.f32 %v6203, %v6571
        %v6573 = vpop.f32.mrf.mxu0
        %v6574 = vadd.f32 %v6205, %v6573
        %6575 = vmatmul.bf16.gmra.mxu0 %v5676
        %v6576 = vpop.f32.mrf.mxu0
        %v6577 = vadd.f32 %v6208, %v6576
        %v6578 = vpop.f32.mrf.mxu0
        %v6579 = vadd.f32 %v6210, %v6578
        %6580 = vmatmul.bf16.gmra.mxu0 %v5678
        %v6581 = vpop.f32.mrf.mxu0
        %v6582 = vadd.f32 %v6213, %v6581
        %v6583 = vpop.f32.mrf.mxu0
        %v6584 = vadd.f32 %v6215, %v6583
        %6585 = vmatmul.bf16.gmra.mxu0 %v5680
        %v6586 = vpop.f32.mrf.mxu0
        %v6587 = vadd.f32 %v6218, %v6586
        %v6588 = vpop.f32.mrf.mxu0
        %v6589 = vadd.f32 %v6220, %v6588
        %6590 = vmatmul.bf16.gmra.mxu0 %v5682
        %v6591 = vpop.f32.mrf.mxu0
        %v6592 = vadd.f32 %v6223, %v6591
        %v6593 = vpop.f32.mrf.mxu0
        %v6594 = vadd.f32 %v6225, %v6593
        %6595 = vmatmul.bf16.gmra.mxu0 %v5684
        %v6596 = vpop.f32.mrf.mxu0
        %v6597 = vadd.f32 %v6228, %v6596
        %v6598 = vpop.f32.mrf.mxu0
        %v6599 = vadd.f32 %v6230, %v6598
        %6600 = vmatmul.bf16.gmra.mxu0 %v5686
        %v6601 = vpop.f32.mrf.mxu0
        %v6602 = vadd.f32 %v6233, %v6601
        %v6603 = vpop.f32.mrf.mxu0
        %v6604 = vadd.f32 %v6235, %v6603
        %6605 = vmatmul.bf16.gmra.mxu0 %v5688
        %v6606 = vpop.f32.mrf.mxu0
        %v6607 = vadd.f32 %v6238, %v6606
        %v6608 = vpop.f32.mrf.mxu0
        %v6609 = vadd.f32 %v6240, %v6608
        %6610 = vmatmul.bf16.gmra.mxu0 %v5754
        %v6611 = vpop.f32.mrf.mxu0
        %v6612 = vadd.f32 %v6243, %v6611
        %v6613 = vpop.f32.mrf.mxu0
        %v6614 = vadd.f32 %v6245, %v6613
        %6615 = vmatmul.bf16.gmra.mxu0 %v5756
        %v6616 = vpop.f32.mrf.mxu0
        %v6617 = vadd.f32 %v6248, %v6616
        %v6618 = vpop.f32.mrf.mxu0
        %v6619 = vadd.f32 %v6250, %v6618
        %6620 = vmatmul.bf16.gmra.mxu0 %v5758
        %v6621 = vpop.f32.mrf.mxu0
        %v6622 = vadd.f32 %v6253, %v6621
        %v6623 = vpop.f32.mrf.mxu0
        %v6624 = vadd.f32 %v6255, %v6623
        %6625 = vmatmul.bf16.gmra.mxu0 %v5760
        %v6626 = vpop.f32.mrf.mxu0
        %v6627 = vadd.f32 %v6258, %v6626
        %v6628 = vpop.f32.mrf.mxu0
        %v6629 = vadd.f32 %v6260, %v6628
        %6630 = vmatmul.bf16.gmra.mxu0 %v5762
        %v6631 = vpop.f32.mrf.mxu0
        %v6632 = vadd.f32 %v6263, %v6631
        %v6633 = vpop.f32.mrf.mxu0
        %v6634 = vadd.f32 %v6265, %v6633
        %6635 = vmatmul.bf16.gmra.mxu0 %v5764
        %v6636 = vpop.f32.mrf.mxu0
        %v6637 = vadd.f32 %v6268, %v6636
        %v6638 = vpop.f32.mrf.mxu0
        %v6639 = vadd.f32 %v6270, %v6638
        %6640 = vmatmul.bf16.gmra.mxu0 %v5766
        %v6641 = vpop.f32.mrf.mxu0
        %v6642 = vadd.f32 %v6273, %v6641
        %v6643 = vpop.f32.mrf.mxu0
        %v6644 = vadd.f32 %v6275, %v6643
        %6645 = vmatmul.bf16.gmra.mxu0 %v5768
        %v6646 = vpop.f32.mrf.mxu0
        %v6647 = vadd.f32 %v6278, %v6646
        %v6648 = vpop.f32.mrf.mxu0
        %v6649 = vadd.f32 %v6280, %v6648
        %6650 = vdwg.mxu0
        %v6651 = vmax.f32 %v6292, %v6332
        %v6652 = vmax.f32 %v6294, %v6334
        %v6653 = vmax.f32 %v6297, %v6337
        %v6654 = vmax.f32 %v6299, %v6339
        %v6655 = vmax.f32 %v6302, %v6342
        %v6656 = vmax.f32 %v6304, %v6344
        %v6657 = vmax.f32 %v6307, %v6347
        %v6658 = vmax.f32 %v6309, %v6349
        %v6659 = vmax.f32 %v6312, %v6352
        %v6660 = vmax.f32 %v6314, %v6354
        %v6661 = vmax.f32 %v6317, %v6357
        %v6662 = vmax.f32 %v6319, %v6359
        %v6663 = vmax.f32 %v6322, %v6362
        %v6664 = vmax.f32 %v6324, %v6364
        %v6665 = vmax.f32 %v6327, %v6367
        %v6666 = vmax.f32 %v6329, %v6369
        %v6667 = vmax.f32 %v6651, %v6372
        %v6668 = vmax.f32 %v6652, %v6374
        %v6669 = vmax.f32 %v6653, %v6377
        %v6670 = vmax.f32 %v6654, %v6379
        %v6671 = vmax.f32 %v6655, %v6382
        %v6672 = vmax.f32 %v6656, %v6384
        %v6673 = vmax.f32 %v6657, %v6387
        %v6674 = vmax.f32 %v6658, %v6389
        %v6675 = vmax.f32 %v6659, %v6392
        %v6676 = vmax.f32 %v6660, %v6394
        %v6677 = vmax.f32 %v6661, %v6397
        %v6678 = vmax.f32 %v6662, %v6399
        %v6679 = vmax.f32 %v6663, %v6402
        %v6680 = vmax.f32 %v6664, %v6404
        %v6681 = vmax.f32 %v6665, %v6407
        %v6682 = vmax.f32 %v6666, %v6409
        %v6683 = vmax.f32 %v6667, %v6412
        %v6684 = vmax.f32 %v6668, %v6414
        %v6685 = vmax.f32 %v6669, %v6417
        %v6686 = vmax.f32 %v6670, %v6419
        %v6687 = vmax.f32 %v6671, %v6422
        %v6688 = vmax.f32 %v6672, %v6424
        %v6689 = vmax.f32 %v6673, %v6427
        %v6690 = vmax.f32 %v6674, %v6429
        %v6691 = vmax.f32 %v6675, %v6432
        %v6692 = vmax.f32 %v6676, %v6434
        %v6693 = vmax.f32 %v6677, %v6437
        %v6694 = vmax.f32 %v6678, %v6439
        %v6695 = vmax.f32 %v6679, %v6442
        %v6696 = vmax.f32 %v6680, %v6444
        %v6697 = vmax.f32 %v6681, %v6447
        %v6698 = vmax.f32 %v6682, %v6449
        %v6699 = vmax.f32 %v6683, %v6452
        %v6700 = vmax.f32 %v6684, %v6454
        %v6701 = vmax.f32 %v6685, %v6457
        %v6702 = vmax.f32 %v6686, %v6459
        %v6703 = vmax.f32 %v6687, %v6462
        %v6704 = vmax.f32 %v6688, %v6464
        %v6705 = vmax.f32 %v6689, %v6467
        %v6706 = vmax.f32 %v6690, %v6469
        %v6707 = vmax.f32 %v6691, %v6472
        %v6708 = vmax.f32 %v6692, %v6474
        %v6709 = vmax.f32 %v6693, %v6477
        %v6710 = vmax.f32 %v6694, %v6479
        %v6711 = vmax.f32 %v6695, %v6482
        %v6712 = vmax.f32 %v6696, %v6484
        %v6713 = vmax.f32 %v6697, %v6487
        %v6714 = vmax.f32 %v6698, %v6489
        %v6715 = vmax.f32 %v6699, %v6492
        %v6716 = vmax.f32 %v6700, %v6494
        %v6717 = vmax.f32 %v6701, %v6497
        %v6718 = vmax.f32 %v6702, %v6499
        %v6719 = vmax.f32 %v6703, %v6502
        %v6720 = vmax.f32 %v6704, %v6504
        %v6721 = vmax.f32 %v6705, %v6507
        %v6722 = vmax.f32 %v6706, %v6509
        %v6723 = vmax.f32 %v6707, %v6512
        %v6724 = vmax.f32 %v6708, %v6514
        %v6725 = vmax.f32 %v6709, %v6517
        %v6726 = vmax.f32 %v6710, %v6519
        %v6727 = vmax.f32 %v6711, %v6522
        %v6728 = vmax.f32 %v6712, %v6524
        %v6729 = vmax.f32 %v6713, %v6527
        %v6730 = vmax.f32 %v6714, %v6529
        %v6731 = vmax.f32 %v6715, %v6532
        %v6732 = vmax.f32 %v6716, %v6534
        %v6733 = vmax.f32 %v6717, %v6537
        %v6734 = vmax.f32 %v6718, %v6539
        %v6735 = vmax.f32 %v6719, %v6542
        %v6736 = vmax.f32 %v6720, %v6544
        %v6737 = vmax.f32 %v6721, %v6547
        %v6738 = vmax.f32 %v6722, %v6549
        %v6739 = vmax.f32 %v6723, %v6552
        %v6740 = vmax.f32 %v6724, %v6554
        %v6741 = vmax.f32 %v6725, %v6557
        %v6742 = vmax.f32 %v6726, %v6559
        %v6743 = vmax.f32 %v6727, %v6562
        %v6744 = vmax.f32 %v6728, %v6564
        %v6745 = vmax.f32 %v6729, %v6567
        %v6746 = vmax.f32 %v6730, %v6569
        %v6747 = vmax.f32 %v6731, %v6572
        %v6748 = vmax.f32 %v6732, %v6574
        %v6749 = vmax.f32 %v6733, %v6577
        %v6750 = vmax.f32 %v6734, %v6579
        %v6751 = vmax.f32 %v6735, %v6582
        %v6752 = vmax.f32 %v6736, %v6584
        %v6753 = vmax.f32 %v6737, %v6587
        %v6754 = vmax.f32 %v6738, %v6589
        %v6755 = vmax.f32 %v6739, %v6592
        %v6756 = vmax.f32 %v6740, %v6594
        %v6757 = vmax.f32 %v6741, %v6597
        %v6758 = vmax.f32 %v6742, %v6599
        %v6759 = vmax.f32 %v6743, %v6602
        %v6760 = vmax.f32 %v6744, %v6604
        %v6761 = vmax.f32 %v6745, %v6607
        %v6762 = vmax.f32 %v6746, %v6609
        %v6763 = vmax.f32 %v6747, %v6612
        %v6764 = vmax.f32 %v6748, %v6614
        %v6765 = vmax.f32 %v6749, %v6617
        %v6766 = vmax.f32 %v6750, %v6619
        %v6767 = vmax.f32 %v6751, %v6622
        %v6768 = vmax.f32 %v6752, %v6624
        %v6769 = vmax.f32 %v6753, %v6627
        %v6770 = vmax.f32 %v6754, %v6629
        %v6771 = vmax.f32 %v6755, %v6632
        %v6772 = vmax.f32 %v6756, %v6634
        %v6773 = vmax.f32 %v6757, %v6637
        %v6774 = vmax.f32 %v6758, %v6639
        %v6775 = vmax.f32 %v6759, %v6642
        %v6776 = vmax.f32 %v6760, %v6644
        %v6777 = vmax.f32 %v6761, %v6647
        %v6778 = vmax.f32 %v6762, %v6649
        %v6779 = vld [vmem:[%s240] sm:$0xff]
        %v6780 = vld [vmem:[%s240 + $0x8] sm:$0xff]
        %v6781 = vld [vmem:[%s240 + $0x10] sm:$0xff]
        %v6782 = vld [vmem:[%s240 + $0x18] sm:$0xff]
        %v6783 = vld [vmem:[%s240 + $0x20] sm:$0xff]
        %v6784 = vld [vmem:[%s240 + $0x28] sm:$0xff]
        %v6785 = vld [vmem:[%s240 + $0x30] sm:$0xff]
        %v6786 = vld [vmem:[%s240 + $0x38] sm:$0xff]
        %v6787 = vld [vmem:[%s240 + $0x40] sm:$0xff]
        %v6788 = vld [vmem:[%s240 + $0x48] sm:$0xff]
        %v6789 = vld [vmem:[%s240 + $0x50] sm:$0xff]
        %v6790 = vld [vmem:[%s240 + $0x58] sm:$0xff]
        %v6791 = vld [vmem:[%s240 + $0x60] sm:$0xff]
        %v6792 = vld [vmem:[%s240 + $0x68] sm:$0xff]
        %v6793 = vld [vmem:[%s240 + $0x70] sm:$0xff]
        %v6794 = vld [vmem:[%s240 + $0x78] sm:$0xff]
        %v6795 = vadd.f32 %v6779, %v6763
        %v6796 = vadd.f32 %v6780, %v6764
        %v6797 = vadd.f32 %v6781, %v6765
        %v6798 = vadd.f32 %v6782, %v6766
        %v6799 = vadd.f32 %v6783, %v6767
        %v6800 = vadd.f32 %v6784, %v6768
        %v6801 = vadd.f32 %v6785, %v6769
        %v6802 = vadd.f32 %v6786, %v6770
        %v6803 = vadd.f32 %v6787, %v6771
        %v6804 = vadd.f32 %v6788, %v6772
        %v6805 = vadd.f32 %v6789, %v6773
        %v6806 = vadd.f32 %v6790, %v6774
        %v6807 = vadd.f32 %v6791, %v6775
        %v6808 = vadd.f32 %v6792, %v6776
        %v6809 = vadd.f32 %v6793, %v6777
        %v6810 = vadd.f32 %v6794, %v6778
        %v6811 = vmax.f32 %v6795, 0.0
        %v6812 = vmax.f32 %v6796, 0.0
        %v6813 = vmax.f32 %v6797, 0.0
        %v6814 = vmax.f32 %v6798, 0.0
        %v6815 = vmax.f32 %v6799, 0.0
        %v6816 = vmax.f32 %v6800, 0.0
        %v6817 = vmax.f32 %v6801, 0.0
        %v6818 = vmax.f32 %v6802, 0.0
        %v6819 = vmax.f32 %v6803, 0.0
        %v6820 = vmax.f32 %v6804, 0.0
        %v6821 = vmax.f32 %v6805, 0.0
        %v6822 = vmax.f32 %v6806, 0.0
        %v6823 = vmax.f32 %v6807, 0.0
        %v6824 = vmax.f32 %v6808, 0.0
        %v6825 = vmax.f32 %v6809, 0.0
        %v6826 = vmax.f32 %v6810, 0.0
        %6827 = vst [vmem:[%s265] sm:$0xff] %v6811
        %6828 = vst [vmem:[%s265 + $0x8] sm:$0xff] %v6812
        %6829 = vst [vmem:[%s265 + $0x10] sm:$0xff] %v6813
        %6830 = vst [vmem:[%s265 + $0x18] sm:$0xff] %v6814
        %6831 = vst [vmem:[%s265 + $0x20] sm:$0xff] %v6815
        %6832 = vst [vmem:[%s265 + $0x28] sm:$0xff] %v6816
        %6833 = vst [vmem:[%s265 + $0x30] sm:$0xff] %v6817
        %6834 = vst [vmem:[%s265 + $0x38] sm:$0xff] %v6818
        %6835 = vst [vmem:[%s265 + $0x40] sm:$0xff] %v6819
        %6836 = vst [vmem:[%s265 + $0x48] sm:$0xff] %v6820
        %6837 = vst [vmem:[%s265 + $0x50] sm:$0xff] %v6821
        %6838 = vst [vmem:[%s265 + $0x58] sm:$0xff] %v6822
        %6839 = vst [vmem:[%s265 + $0x60] sm:$0xff] %v6823
        %6840 = vst [vmem:[%s265 + $0x68] sm:$0xff] %v6824
        %6841 = vst [vmem:[%s265 + $0x70] sm:$0xff] %v6825
        %6842 = vst [vmem:[%s265 + $0x78] sm:$0xff] %v6826
        %s6843 = sand.u32 %s120, 1
        %s6844 = scalar_lea.sflag [#allocation4], %s6843
        %s6845 = sand.u32 %s120, 1
        %s6846 = smul.addr %s6845, 128
        %s6847 = scalar_lea.vmem [#allocation10], %s6846
        // Predicated region
        $region53: #{tpu_custom_call.1} parent=35 // pred_check
          %p6848 = pneg %p130
        $region54: #{tpu_custom_call.1} parent=35 // pred_check_branch
          %6850 = sbr.rel (%p6848) target = $region56
        $region55: #{tpu_custom_call.1} parent=35 // pred_region
          %s6851 = smul.u32 16, %s23
          %6853 = vsyncadd %s6844, 0
          %s6854 = smul.addr %s6851, 8
          %s6855 = scalar_lea.hbm %s4, %s6854
          %s6856 = sshll.u32 %s6847, 4
          %s6857 = int_to_ptr.vmem [resolvable:$true] %s6856
          %s6858 = sshll.u32 %s6855, 4
          %s6859 = int_to_ptr.hbm [resolvable:$true] %s6858
          %6864 = dma.vmem_to_hbm [thread:$0]  %s6857, 2048, %s6859, %s6844, 128, 128, 8
        $region56: #{tpu_custom_call.1} parent=35 // pred_fallthru
          _
      $region36: #{tpu_custom_call.1} parent=5 // pred_fallthru
        _
      %p6865 = scmp.le.s32.totalorder 2, %s18
      // Predicated region
      $region57: #{tpu_custom_call.1} parent=5 // pred_check
        %p6866 = pneg %p6865
      $region58: #{tpu_custom_call.1} parent=5 // pred_check_branch
        %6868 = sbr.rel (%p6866) target = $region60
      $region59: #{tpu_custom_call.1} parent=5 // pred_region
        %s6869 = ssub.s32 %s18, 2
        // Predicated region
        $region61: #{tpu_custom_call.1} parent=59 // pred_check
          %p6870 = pneg %p136
        $region62: #{tpu_custom_call.1} parent=59 // pred_check_branch
          %6872 = sbr.rel (%p6870) target = $region64
        $region63: #{tpu_custom_call.1} parent=59 // pred_region
          %s6873 = sand.u32 %s121, 1
          %s6874 = scalar_lea.sflag [#allocation4], %s6873
          %s6875 = sand.u32 %s121, 1
          %s6876 = smul.addr %s6875, 128
          %s6877 = scalar_lea.vmem [#allocation10], %s6876
          %6879 = dma.done %s6874, 2048
        $region64: #{tpu_custom_call.1} parent=59 // pred_fallthru
          _
      $region60: #{tpu_custom_call.1} parent=5 // pred_fallthru
        _
    $region6: #{tpu_custom_call.1} parent=1 // loop_footer
      %s22 = sadd.s32 1, %s18
    $region7: #{tpu_custom_call.1} parent=1 // loop_footer_branch
      %17 = sbr.rel target = $region3
    $region8: #{tpu_custom_call.1} parent=1 // loop_exit
      _
    %6880 = vsyncpa [#allocation3], 1
    %s6881 = scalar_lea.sflag [#allocation3], 1
    %6882 = vsyncpa %s6881, 1
    %6883 = vsyncpa [#allocation6], 1
    %6884 = vsyncpa [#allocation9], 1
    %s6885 = scalar_lea.sflag [#allocation9], 1
    %6886 = vsyncpa %s6885, 1
    %6887 = vsyncpa [#allocation4], 1
    %s6888 = scalar_lea.sflag [#allocation4], 1
    %6889 = vsyncpa %s6888, 1

</llo_original>
